<compile_context>
chip_gen: v5e
topology: v5e:2x2
jax: 0.10.0
libtpu: 0.0.40
codegen_flags: <defaults>
</compile_context>

<pallas_src>
import functools

import numpy as np
import jax
import jax.numpy as jnp
from jax.experimental import pallas as pl
from jax.experimental.pallas import tpu as pltpu


# (Cin, Cout, (pool_kh, pool_kw)) per block -- conv/bn/relu + AvgPool
CFG = [(4, 8, (2, 2)), (8, 16, (2, 1))]
HIDDEN = 32
BN_EPS = 1e-5


# ----------------------------------------------------------------------------
# Static geometry of the "margined flat padded grid" layout.
#
# A conv-block input with spatial (H, W) and batch N lives as a 2-D (rows, C)
# buffer whose rows enumerate the zero-padded (H+2, W+2) grid in (h, w, n)
# order, with `marg` extra zero rows on both ends.  In that layout the 3x3
# conv tap (dy, dx) is the contiguous row window
#     buf[marg + delta : marg + delta + Mp],  delta = ((dy-1)*Wp + (dx-1))*N
# so every tap is a plain slice load feeding one MXU dot (9 taps per block).
# Border/garbage rows are never read by the pooling matrices.
# ----------------------------------------------------------------------------
def _block_geom(H, W, N):
    Hp, Wp = H + 2, W + 2
    Mp = Hp * Wp * N
    marg = (Wp + 1) * N
    deltas = tuple(((dy - 1) * Wp + (dx - 1)) * N
                   for dy in range(3) for dx in range(3))
    return dict(H=H, W=W, Hp=Hp, Wp=Wp, Mp=Mp, marg=marg,
                Mtot=Mp + 2 * marg, deltas=deltas)


def _pool_matrix_to_padded(H_in, W_in, ph, pw, N, marg_out):
    """AvgPool(ph,pw) + scatter into the next block's margined padded layout."""
    Hp_i, Wp_i = H_in + 2, W_in + 2
    Ho, Wo = H_in // ph, W_in // pw            # floor-div, as in nn.AvgPool2d
    Hp_o, Wp_o = Ho + 2, Wo + 2
    Mp_i = Hp_i * Wp_i * N
    Mp_o = Hp_o * Wp_o * N
    P = np.zeros((Mp_o + 2 * marg_out, Mp_i), np.float32)
    inv = 1.0 / (ph * pw)
    for i in range(Ho):
        for j in range(Wo):
            for n in range(N):
                r_out = marg_out + ((i + 1) * Wp_o + (j + 1)) * N + n
                for oy in range(ph):
                    for ox in range(pw):
                        r_in = ((1 + i * ph + oy) * Wp_i +
                                (1 + j * pw + ox)) * N + n
                        P[r_out, r_in] = inv
    return P


def _pool_matrix_to_seq(H_in, W_in, ph, pw, N):
    """Final AvgPool + reorder straight into PyTorch's (W'*H', N) sequence."""
    Hp_i, Wp_i = H_in + 2, W_in + 2
    Ho, Wo = H_in // ph, W_in // pw
    Mp_i = Hp_i * Wp_i * N
    P = np.zeros((Ho * Wo * N, Mp_i), np.float32)
    inv = 1.0 / (ph * pw)
    for hp in range(Ho):
        for wp in range(Wo):
            for n in range(N):
                r_out = (wp * Ho + hp) * N + n       # s = w' * H' + h'
                for oy in range(ph):
                    for ox in range(pw):
                        r_in = ((1 + hp * ph + oy) * Wp_i +
                                (1 + wp * pw + ox)) * N + n
                        P[r_out, r_in] = inv
    return P


# ----------------------------------------------------------------------------
# Fused Pallas kernel: conv3x3+BN+ReLU+AvgPool blocks + 1x1 conv, all in VMEM.
# ----------------------------------------------------------------------------
def _cnn_fused_kernel(*refs, geoms, n_blocks):
    """ref order: x_buf,
                  [w(9,Cin,Cout) bf16, scale(1,Cout), shift(1,Cout), P bf16] * n_blocks,
                  last_w(Cl,HID) bf16, last_b(1,HID),
                  o_ref(seq*N, HID),
                  [VMEM scratch (Mtot_b, Cin_b) f32 for blocks 1..n-1]"""
    idx = 0
    x_buf = refs[idx]; idx += 1
    blocks = []
    for _ in range(n_blocks):
        blocks.append(refs[idx:idx + 4]); idx += 4
    lw_ref, lb_ref = refs[idx], refs[idx + 1]; idx += 2
    o_ref = refs[idx]; idx += 1
    scratches = refs[idx:]

    src = x_buf
    feat = None
    for b in range(n_blocks):
        g = geoms[b]
        w_ref, scale_ref, shift_ref, pool_ref = blocks[b]
        cout = w_ref.shape[-1]

        # 3x3 conv: 9 contiguous tap slices -> 9 accumulating MXU dots,
        # batch folded into M (= padded-grid rows), f32 accumulation.
        acc = jnp.zeros((g["Mp"], cout), jnp.float32)
        for k, delta in enumerate(g["deltas"]):
            off = g["marg"] + delta
            tap = src[off:off + g["Mp"], :].astype(jnp.bfloat16)
            acc = acc + jnp.dot(tap, w_ref[k],
                                preferred_element_type=jnp.float32)

        # Folded BatchNorm + ReLU epilogue in f32.
        y = jnp.maximum(acc * scale_ref[...] + shift_ref[...], 0.0)

        # AvgPool (+ layout scatter / final sequence reorder) as one MXU dot.
        pooled = jnp.dot(pool_ref[...], y.astype(jnp.bfloat16),
                         preferred_element_type=jnp.float32)

        if b + 1 < n_blocks:
            scratches[b][...] = pooled       # next block's padded input (VMEM)
            src = scratches[b]
        else:
            feat = pooled                    # (seq*N, C_last), PyTorch row order

    # nn.Dropout is identity at inference; last_conv_1x1 = channel matmul+bias.
    out = jnp.dot(feat.astype(jnp.bfloat16), lw_ref[...],
                  preferred_element_type=jnp.float32) + lb_ref[...]
    o_ref[...] = out.astype(o_ref.dtype)


def _full_spec(shape):
    zeros = (0,) * len(shape)
    return pl.BlockSpec(shape, lambda i: zeros)


# ----------------------------------------------------------------------------
# Wrapper
# ----------------------------------------------------------------------------
def cnn_forward(x_nchw, params):
    """Equivalent of CNN.forward(x): (N, C, H, W) -> (W'*H', N, HIDDEN)."""
    N, C0, H, W = x_nchw.shape
    n_blocks = len(CFG)

    # Static geometry per block.
    geoms, spatial = [], (H, W)
    for (_, _, (ph, pw)) in CFG:
        geoms.append(_block_geom(spatial[0], spatial[1], N))
        spatial = (spatial[0] // ph, spatial[1] // pw)
    Hf, Wf = spatial
    seq = Wf * Hf

    # One-time input prep (network input only, ~KBs): NCHW -> (h, w, n, c),
    # zero-pad spatially, flatten to the padded-grid row order, add margins.
    g0 = geoms[0]
    x_hwnc = jnp.transpose(x_nchw, (2, 3, 0, 1))
    x_pad = jnp.pad(x_hwnc, ((1, 1), (1, 1), (0, 0), (0, 0)))
    x_buf = jnp.pad(x_pad.reshape(g0["Mp"], C0),
                    ((g0["marg"], g0["marg"]), (0, 0)))

    # Constant pooling / layout matrices (shape-only, baked at trace time).
    pools, spatial = [], (H, W)
    for b, (_, _, (ph, pw)) in enumerate(CFG):
        if b + 1 < n_blocks:
            P = _pool_matrix_to_padded(spatial[0], spatial[1], ph, pw, N,
                                       geoms[b + 1]["marg"])
        else:
            P = _pool_matrix_to_seq(spatial[0], spatial[1], ph, pw, N)
        pools.append(jnp.asarray(P, jnp.bfloat16))
        spatial = (spatial[0] // ph, spatial[1] // pw)

    inputs = [x_buf]
    for b, blk in enumerate(params["blocks"]):
        w9 = blk["w"].reshape(9, blk["w"].shape[2], blk["w"].shape[3])
        inputs += [w9.astype(jnp.bfloat16), blk["scale"], blk["shift"], pools[b]]
    inputs += [params["last_w"].astype(jnp.bfloat16), params["last_b"]]

    out_flat = pl.pallas_call(
        functools.partial(_cnn_fused_kernel, geoms=tuple(geoms),
                          n_blocks=n_blocks),
        out_shape=jax.ShapeDtypeStruct((seq * N, HIDDEN), x_nchw.dtype),
        grid=(1,),
        in_specs=[_full_spec(a.shape) for a in inputs],
        out_specs=_full_spec((seq * N, HIDDEN)),
        scratch_shapes=[pltpu.VMEM((geoms[b]["Mtot"], CFG[b][0]), jnp.float32)
                        for b in range(1, n_blocks)],
        compiler_params=pltpu.CompilerParams(
            dimension_semantics=("arbitrary",)),
    )(*inputs)

    # Rows are already ordered (s, n) with s = w'*H' + h'; just split the dim.
    return out_flat.reshape(seq, N, HIDDEN)


# ----------------------------------------------------------------------------
# Deterministic parameters (scaled-down vgg*_bn-style backbone)
# ----------------------------------------------------------------------------
def init_params(key):
    params = {"blocks": []}
    for li, (cin, cout, _) in enumerate(CFG):
        key, kw_, kb, kg, kbe, km, kv = jax.random.split(key, 7)
        w = 0.1 * jax.random.normal(kw_, (3, 3, cin, cout), jnp.float32)
        bias = 0.1 * jax.random.normal(kb, (cout,), jnp.float32)
        gamma = 1.0 + 0.1 * jax.random.normal(kg, (cout,), jnp.float32)
        beta = 0.1 * jax.random.normal(kbe, (cout,), jnp.float32)
        mean = 0.1 * jax.random.normal(km, (cout,), jnp.float32)
        var = jnp.abs(jax.random.normal(kv, (cout,), jnp.float32)) + 0.5
        # Fold BatchNorm (inference) + conv bias into per-channel scale/shift.
        scale = gamma / jnp.sqrt(var + BN_EPS)
        shift = beta + (bias - mean) * scale
        params["blocks"].append(
            {"w": w, "scale": scale.reshape(1, cout), "shift": shift.reshape(1, cout)}
        )
    key, kw1, kb1 = jax.random.split(key, 3)
    cin_last = CFG[-1][1]
    params["last_w"] = 0.1 * jax.random.normal(kw1, (cin_last, HIDDEN), jnp.float32)
    params["last_b"] = 0.1 * jax.random.normal(kb1, (1, HIDDEN), jnp.float32)
    return params


if __name__ == "__main__":
    key = jax.random.PRNGKey(0)
    kx, kp = jax.random.split(key)
    x = jax.random.normal(kx, (2, 4, 16, 16), jnp.float32)  # (N, C, H, W), NCHW
    params = init_params(kp)

    out = jax.jit(cnn_forward)(x, params)
    jax.block_until_ready(out)

    assert out.shape == (8 * 4, 2, HIDDEN), out.shape  # (seq, N, hidden)
    assert jnp.all(jnp.isfinite(out))
    print("KERNEL_OK")
</pallas_src>

<mosaic_0001>
module attributes {stable_mosaic.version = 11 : i64} {
  func.func @_cnn_fused_kernel(%arg0: i32, %arg1: memref<724x4xf32, #tpu.memory_space<vmem>>, %arg2: memref<9x4x8xbf16, #tpu.memory_space<vmem>>, %arg3: memref<1x8xf32, #tpu.memory_space<vmem>>, %arg4: memref<1x8xf32, #tpu.memory_space<vmem>>, %arg5: memref<244x648xbf16, #tpu.memory_space<vmem>>, %arg6: memref<9x8x16xbf16, #tpu.memory_space<vmem>>, %arg7: memref<1x16xf32, #tpu.memory_space<vmem>>, %arg8: memref<1x16xf32, #tpu.memory_space<vmem>>, %arg9: memref<64x200xbf16, #tpu.memory_space<vmem>>, %arg10: memref<16x32xbf16, #tpu.memory_space<vmem>>, %arg11: memref<1x32xf32, #tpu.memory_space<vmem>>, %arg12: memref<64x32xf32, #tpu.memory_space<vmem>>, %arg13: memref<244x8xf32, #tpu.memory_space<vmem>>) attributes {dimension_semantics = [#tpu.dimension_semantics<arbitrary>], iteration_bounds = array<i64: 1>, scalar_prefetch = 0 : i64, scratch_operands = 1 : i64, tpu.core_type = #tpu.core_type<tc>, window_params = [{pipeline_mode = #tpu.pipeline_mode<synchronous>, transform_indices = @transform_0, window_bounds = array<i64: 724, 4>}, {pipeline_mode = #tpu.pipeline_mode<synchronous>, transform_indices = @transform_1, window_bounds = array<i64: 9, 4, 8>}, {pipeline_mode = #tpu.pipeline_mode<synchronous>, transform_indices = @transform_2, window_bounds = array<i64: 1, 8>}, {pipeline_mode = #tpu.pipeline_mode<synchronous>, transform_indices = @transform_3, window_bounds = array<i64: 1, 8>}, {pipeline_mode = #tpu.pipeline_mode<synchronous>, transform_indices = @transform_4, window_bounds = array<i64: 244, 648>}, {pipeline_mode = #tpu.pipeline_mode<synchronous>, transform_indices = @transform_5, window_bounds = array<i64: 9, 8, 16>}, {pipeline_mode = #tpu.pipeline_mode<synchronous>, transform_indices = @transform_6, window_bounds = array<i64: 1, 16>}, {pipeline_mode = #tpu.pipeline_mode<synchronous>, transform_indices = @transform_7, window_bounds = array<i64: 1, 16>}, {pipeline_mode = #tpu.pipeline_mode<synchronous>, transform_indices = @transform_8, window_bounds = array<i64: 64, 200>}, {pipeline_mode = #tpu.pipeline_mode<synchronous>, transform_indices = @transform_9, window_bounds = array<i64: 16, 32>}, {pipeline_mode = #tpu.pipeline_mode<synchronous>, transform_indices = @transform_10, window_bounds = array<i64: 1, 32>}, {pipeline_mode = #tpu.pipeline_mode<synchronous>, transform_indices = @transform_11, window_bounds = array<i64: 64, 32>}]} {
    %cst = arith.constant 0.000000e+00 : f32
    %0 = vector.broadcast %cst : f32 to vector<648x8xf32>
    %c0 = arith.constant 0 : index
    %c0_0 = arith.constant 0 : index
    %1 = vector.load %arg1[%c0, %c0_0] : memref<724x4xf32, #tpu.memory_space<vmem>>, vector<648x4xf32>
    %2 = arith.truncf %1 : vector<648x4xf32> to vector<648x4xbf16>
    %c0_1 = arith.constant 0 : index
    %c0_2 = arith.constant 0 : index
    %c0_3 = arith.constant 0 : index
    %3 = vector.load %arg2[%c0_1, %c0_2, %c0_3] : memref<9x4x8xbf16, #tpu.memory_space<vmem>>, vector<1x4x8xbf16>
    %4 = vector.shape_cast %3 : vector<1x4x8xbf16> to vector<4x8xbf16>
    %cst_4 = arith.constant dense<0.000000e+00> : vector<648x8xf32>
    %5 = tpu.matmul %2, %4, %cst_4 {dimension_numbers = #tpu.dot_dimension_numbers<[1], [0], [0], [1], [0, 0, 1, 1], [], []>} : vector<648x4xbf16>, vector<4x8xbf16>, vector<648x8xf32> -> vector<648x8xf32>
    %6 = arith.addf %0, %5 : vector<648x8xf32>
    %c2 = arith.constant 2 : index
    %c0_5 = arith.constant 0 : index
    %7 = vector.load %arg1[%c2, %c0_5] : memref<724x4xf32, #tpu.memory_space<vmem>>, vector<648x4xf32>
    %8 = arith.truncf %7 : vector<648x4xf32> to vector<648x4xbf16>
    %c1 = arith.constant 1 : index
    %c0_6 = arith.constant 0 : index
    %c0_7 = arith.constant 0 : index
    %9 = vector.load %arg2[%c1, %c0_6, %c0_7] : memref<9x4x8xbf16, #tpu.memory_space<vmem>>, vector<1x4x8xbf16>
    %10 = vector.shape_cast %9 : vector<1x4x8xbf16> to vector<4x8xbf16>
    %cst_8 = arith.constant dense<0.000000e+00> : vector<648x8xf32>
    %11 = tpu.matmul %8, %10, %cst_8 {dimension_numbers = #tpu.dot_dimension_numbers<[1], [0], [0], [1], [0, 0, 1, 1], [], []>} : vector<648x4xbf16>, vector<4x8xbf16>, vector<648x8xf32> -> vector<648x8xf32>
    %12 = arith.addf %6, %11 : vector<648x8xf32>
    %c4 = arith.constant 4 : index
    %c0_9 = arith.constant 0 : index
    %13 = vector.load %arg1[%c4, %c0_9] : memref<724x4xf32, #tpu.memory_space<vmem>>, vector<648x4xf32>
    %14 = arith.truncf %13 : vector<648x4xf32> to vector<648x4xbf16>
    %c2_10 = arith.constant 2 : index
    %c0_11 = arith.constant 0 : index
    %c0_12 = arith.constant 0 : index
    %15 = vector.load %arg2[%c2_10, %c0_11, %c0_12] : memref<9x4x8xbf16, #tpu.memory_space<vmem>>, vector<1x4x8xbf16>
    %16 = vector.shape_cast %15 : vector<1x4x8xbf16> to vector<4x8xbf16>
    %cst_13 = arith.constant dense<0.000000e+00> : vector<648x8xf32>
    %17 = tpu.matmul %14, %16, %cst_13 {dimension_numbers = #tpu.dot_dimension_numbers<[1], [0], [0], [1], [0, 0, 1, 1], [], []>} : vector<648x4xbf16>, vector<4x8xbf16>, vector<648x8xf32> -> vector<648x8xf32>
    %18 = arith.addf %12, %17 : vector<648x8xf32>
    %c36 = arith.constant 36 : index
    %c0_14 = arith.constant 0 : index
    %19 = vector.load %arg1[%c36, %c0_14] : memref<724x4xf32, #tpu.memory_space<vmem>>, vector<648x4xf32>
    %20 = arith.truncf %19 : vector<648x4xf32> to vector<648x4xbf16>
    %c3 = arith.constant 3 : index
    %c0_15 = arith.constant 0 : index
    %c0_16 = arith.constant 0 : index
    %21 = vector.load %arg2[%c3, %c0_15, %c0_16] : memref<9x4x8xbf16, #tpu.memory_space<vmem>>, vector<1x4x8xbf16>
    %22 = vector.shape_cast %21 : vector<1x4x8xbf16> to vector<4x8xbf16>
    %cst_17 = arith.constant dense<0.000000e+00> : vector<648x8xf32>
    %23 = tpu.matmul %20, %22, %cst_17 {dimension_numbers = #tpu.dot_dimension_numbers<[1], [0], [0], [1], [0, 0, 1, 1], [], []>} : vector<648x4xbf16>, vector<4x8xbf16>, vector<648x8xf32> -> vector<648x8xf32>
    %24 = arith.addf %18, %23 : vector<648x8xf32>
    %c38 = arith.constant 38 : index
    %c0_18 = arith.constant 0 : index
    %25 = vector.load %arg1[%c38, %c0_18] : memref<724x4xf32, #tpu.memory_space<vmem>>, vector<648x4xf32>
    %26 = arith.truncf %25 : vector<648x4xf32> to vector<648x4xbf16>
    %c4_19 = arith.constant 4 : index
    %c0_20 = arith.constant 0 : index
    %c0_21 = arith.constant 0 : index
    %27 = vector.load %arg2[%c4_19, %c0_20, %c0_21] : memref<9x4x8xbf16, #tpu.memory_space<vmem>>, vector<1x4x8xbf16>
    %28 = vector.shape_cast %27 : vector<1x4x8xbf16> to vector<4x8xbf16>
    %cst_22 = arith.constant dense<0.000000e+00> : vector<648x8xf32>
    %29 = tpu.matmul %26, %28, %cst_22 {dimension_numbers = #tpu.dot_dimension_numbers<[1], [0], [0], [1], [0, 0, 1, 1], [], []>} : vector<648x4xbf16>, vector<4x8xbf16>, vector<648x8xf32> -> vector<648x8xf32>
    %30 = arith.addf %24, %29 : vector<648x8xf32>
    %c40 = arith.constant 40 : index
    %c0_23 = arith.constant 0 : index
    %31 = vector.load %arg1[%c40, %c0_23] : memref<724x4xf32, #tpu.memory_space<vmem>>, vector<648x4xf32>
    %32 = arith.truncf %31 : vector<648x4xf32> to vector<648x4xbf16>
    %c5 = arith.constant 5 : index
    %c0_24 = arith.constant 0 : index
    %c0_25 = arith.constant 0 : index
    %33 = vector.load %arg2[%c5, %c0_24, %c0_25] : memref<9x4x8xbf16, #tpu.memory_space<vmem>>, vector<1x4x8xbf16>
    %34 = vector.shape_cast %33 : vector<1x4x8xbf16> to vector<4x8xbf16>
    %cst_26 = arith.constant dense<0.000000e+00> : vector<648x8xf32>
    %35 = tpu.matmul %32, %34, %cst_26 {dimension_numbers = #tpu.dot_dimension_numbers<[1], [0], [0], [1], [0, 0, 1, 1], [], []>} : vector<648x4xbf16>, vector<4x8xbf16>, vector<648x8xf32> -> vector<648x8xf32>
    %36 = arith.addf %30, %35 : vector<648x8xf32>
    %c72 = arith.constant 72 : index
    %c0_27 = arith.constant 0 : index
    %37 = vector.load %arg1[%c72, %c0_27] : memref<724x4xf32, #tpu.memory_space<vmem>>, vector<648x4xf32>
    %38 = arith.truncf %37 : vector<648x4xf32> to vector<648x4xbf16>
    %c6 = arith.constant 6 : index
    %c0_28 = arith.constant 0 : index
    %c0_29 = arith.constant 0 : index
    %39 = vector.load %arg2[%c6, %c0_28, %c0_29] : memref<9x4x8xbf16, #tpu.memory_space<vmem>>, vector<1x4x8xbf16>
    %40 = vector.shape_cast %39 : vector<1x4x8xbf16> to vector<4x8xbf16>
    %cst_30 = arith.constant dense<0.000000e+00> : vector<648x8xf32>
    %41 = tpu.matmul %38, %40, %cst_30 {dimension_numbers = #tpu.dot_dimension_numbers<[1], [0], [0], [1], [0, 0, 1, 1], [], []>} : vector<648x4xbf16>, vector<4x8xbf16>, vector<648x8xf32> -> vector<648x8xf32>
    %42 = arith.addf %36, %41 : vector<648x8xf32>
    %c74 = arith.constant 74 : index
    %c0_31 = arith.constant 0 : index
    %43 = vector.load %arg1[%c74, %c0_31] : memref<724x4xf32, #tpu.memory_space<vmem>>, vector<648x4xf32>
    %44 = arith.truncf %43 : vector<648x4xf32> to vector<648x4xbf16>
    %c7 = arith.constant 7 : index
    %c0_32 = arith.constant 0 : index
    %c0_33 = arith.constant 0 : index
    %45 = vector.load %arg2[%c7, %c0_32, %c0_33] : memref<9x4x8xbf16, #tpu.memory_space<vmem>>, vector<1x4x8xbf16>
    %46 = vector.shape_cast %45 : vector<1x4x8xbf16> to vector<4x8xbf16>
    %cst_34 = arith.constant dense<0.000000e+00> : vector<648x8xf32>
    %47 = tpu.matmul %44, %46, %cst_34 {dimension_numbers = #tpu.dot_dimension_numbers<[1], [0], [0], [1], [0, 0, 1, 1], [], []>} : vector<648x4xbf16>, vector<4x8xbf16>, vector<648x8xf32> -> vector<648x8xf32>
    %48 = arith.addf %42, %47 : vector<648x8xf32>
    %c76 = arith.constant 76 : index
    %c0_35 = arith.constant 0 : index
    %49 = vector.load %arg1[%c76, %c0_35] : memref<724x4xf32, #tpu.memory_space<vmem>>, vector<648x4xf32>
    %50 = arith.truncf %49 : vector<648x4xf32> to vector<648x4xbf16>
    %c8 = arith.constant 8 : index
    %c0_36 = arith.constant 0 : index
    %c0_37 = arith.constant 0 : index
    %51 = vector.load %arg2[%c8, %c0_36, %c0_37] : memref<9x4x8xbf16, #tpu.memory_space<vmem>>, vector<1x4x8xbf16>
    %52 = vector.shape_cast %51 : vector<1x4x8xbf16> to vector<4x8xbf16>
    %cst_38 = arith.constant dense<0.000000e+00> : vector<648x8xf32>
    %53 = tpu.matmul %50, %52, %cst_38 {dimension_numbers = #tpu.dot_dimension_numbers<[1], [0], [0], [1], [0, 0, 1, 1], [], []>} : vector<648x4xbf16>, vector<4x8xbf16>, vector<648x8xf32> -> vector<648x8xf32>
    %54 = arith.addf %48, %53 : vector<648x8xf32>
    %c0_39 = arith.constant 0 : index
    %c0_40 = arith.constant 0 : index
    %55 = vector.load %arg3[%c0_39, %c0_40] : memref<1x8xf32, #tpu.memory_space<vmem>>, vector<1x8xf32>
    %56 = vector.broadcast %55 : vector<1x8xf32> to vector<648x8xf32>
    %57 = arith.mulf %54, %56 : vector<648x8xf32>
    %c0_41 = arith.constant 0 : index
    %c0_42 = arith.constant 0 : index
    %58 = vector.load %arg4[%c0_41, %c0_42] : memref<1x8xf32, #tpu.memory_space<vmem>>, vector<1x8xf32>
    %59 = vector.broadcast %58 : vector<1x8xf32> to vector<648x8xf32>
    %60 = arith.addf %57, %59 : vector<648x8xf32>
    %cst_43 = arith.constant 0.000000e+00 : f32
    %61 = vector.broadcast %cst_43 : f32 to vector<648x8xf32>
    %62 = arith.maximumf %60, %61 : vector<648x8xf32>
    %c0_44 = arith.constant 0 : index
    %c0_45 = arith.constant 0 : index
    %63 = vector.load %arg5[%c0_44, %c0_45] : memref<244x648xbf16, #tpu.memory_space<vmem>>, vector<244x648xbf16>
    %64 = arith.truncf %62 : vector<648x8xf32> to vector<648x8xbf16>
    %cst_46 = arith.constant dense<0.000000e+00> : vector<244x8xf32>
    %65 = tpu.matmul %63, %64, %cst_46 {dimension_numbers = #tpu.dot_dimension_numbers<[1], [0], [0], [1], [0, 0, 1, 1], [], []>} : vector<244x648xbf16>, vector<648x8xbf16>, vector<244x8xf32> -> vector<244x8xf32>
    %c0_47 = arith.constant 0 : index
    %c0_48 = arith.constant 0 : index
    %66 = vector.load %arg13[%c0_47, %c0_48] : memref<244x8xf32, #tpu.memory_space<vmem>>, vector<244x8xf32>
    tpu.vector_store %arg13[%c0_47, %c0_48], %65 {strides = array<i32>} : memref<244x8xf32, #tpu.memory_space<vmem>>, vector<244x8xf32>,
    %cst_49 = arith.constant 0.000000e+00 : f32
    %67 = vector.broadcast %cst_49 : f32 to vector<200x16xf32>
    %c0_50 = arith.constant 0 : index
    %c0_51 = arith.constant 0 : index
    %68 = vector.load %arg13[%c0_50, %c0_51] : memref<244x8xf32, #tpu.memory_space<vmem>>, vector<200x8xf32>
    %69 = arith.truncf %68 : vector<200x8xf32> to vector<200x8xbf16>
    %c0_52 = arith.constant 0 : index
    %c0_53 = arith.constant 0 : index
    %c0_54 = arith.constant 0 : index
    %70 = vector.load %arg6[%c0_52, %c0_53, %c0_54] : memref<9x8x16xbf16, #tpu.memory_space<vmem>>, vector<1x8x16xbf16>
    %71 = vector.shape_cast %70 : vector<1x8x16xbf16> to vector<8x16xbf16>
    %cst_55 = arith.constant dense<0.000000e+00> : vector<200x16xf32>
    %72 = tpu.matmul %69, %71, %cst_55 {dimension_numbers = #tpu.dot_dimension_numbers<[1], [0], [0], [1], [0, 0, 1, 1], [], []>} : vector<200x8xbf16>, vector<8x16xbf16>, vector<200x16xf32> -> vector<200x16xf32>
    %73 = arith.addf %67, %72 : vector<200x16xf32>
    %c2_56 = arith.constant 2 : index
    %c0_57 = arith.constant 0 : index
    %74 = vector.load %arg13[%c2_56, %c0_57] : memref<244x8xf32, #tpu.memory_space<vmem>>, vector<200x8xf32>
    %75 = arith.truncf %74 : vector<200x8xf32> to vector<200x8xbf16>
    %c1_58 = arith.constant 1 : index
    %c0_59 = arith.constant 0 : index
    %c0_60 = arith.constant 0 : index
    %76 = vector.load %arg6[%c1_58, %c0_59, %c0_60] : memref<9x8x16xbf16, #tpu.memory_space<vmem>>, vector<1x8x16xbf16>
    %77 = vector.shape_cast %76 : vector<1x8x16xbf16> to vector<8x16xbf16>
    %cst_61 = arith.constant dense<0.000000e+00> : vector<200x16xf32>
    %78 = tpu.matmul %75, %77, %cst_61 {dimension_numbers = #tpu.dot_dimension_numbers<[1], [0], [0], [1], [0, 0, 1, 1], [], []>} : vector<200x8xbf16>, vector<8x16xbf16>, vector<200x16xf32> -> vector<200x16xf32>
    %79 = arith.addf %73, %78 : vector<200x16xf32>
    %c4_62 = arith.constant 4 : index
    %c0_63 = arith.constant 0 : index
    %80 = vector.load %arg13[%c4_62, %c0_63] : memref<244x8xf32, #tpu.memory_space<vmem>>, vector<200x8xf32>
    %81 = arith.truncf %80 : vector<200x8xf32> to vector<200x8xbf16>
    %c2_64 = arith.constant 2 : index
    %c0_65 = arith.constant 0 : index
    %c0_66 = arith.constant 0 : index
    %82 = vector.load %arg6[%c2_64, %c0_65, %c0_66] : memref<9x8x16xbf16, #tpu.memory_space<vmem>>, vector<1x8x16xbf16>
    %83 = vector.shape_cast %82 : vector<1x8x16xbf16> to vector<8x16xbf16>
    %cst_67 = arith.constant dense<0.000000e+00> : vector<200x16xf32>
    %84 = tpu.matmul %81, %83, %cst_67 {dimension_numbers = #tpu.dot_dimension_numbers<[1], [0], [0], [1], [0, 0, 1, 1], [], []>} : vector<200x8xbf16>, vector<8x16xbf16>, vector<200x16xf32> -> vector<200x16xf32>
    %85 = arith.addf %79, %84 : vector<200x16xf32>
    %c20 = arith.constant 20 : index
    %c0_68 = arith.constant 0 : index
    %86 = vector.load %arg13[%c20, %c0_68] : memref<244x8xf32, #tpu.memory_space<vmem>>, vector<200x8xf32>
    %87 = arith.truncf %86 : vector<200x8xf32> to vector<200x8xbf16>
    %c3_69 = arith.constant 3 : index
    %c0_70 = arith.constant 0 : index
    %c0_71 = arith.constant 0 : index
    %88 = vector.load %arg6[%c3_69, %c0_70, %c0_71] : memref<9x8x16xbf16, #tpu.memory_space<vmem>>, vector<1x8x16xbf16>
    %89 = vector.shape_cast %88 : vector<1x8x16xbf16> to vector<8x16xbf16>
    %cst_72 = arith.constant dense<0.000000e+00> : vector<200x16xf32>
    %90 = tpu.matmul %87, %89, %cst_72 {dimension_numbers = #tpu.dot_dimension_numbers<[1], [0], [0], [1], [0, 0, 1, 1], [], []>} : vector<200x8xbf16>, vector<8x16xbf16>, vector<200x16xf32> -> vector<200x16xf32>
    %91 = arith.addf %85, %90 : vector<200x16xf32>
    %c22 = arith.constant 22 : index
    %c0_73 = arith.constant 0 : index
    %92 = vector.load %arg13[%c22, %c0_73] : memref<244x8xf32, #tpu.memory_space<vmem>>, vector<200x8xf32>
    %93 = arith.truncf %92 : vector<200x8xf32> to vector<200x8xbf16>
    %c4_74 = arith.constant 4 : index
    %c0_75 = arith.constant 0 : index
    %c0_76 = arith.constant 0 : index
    %94 = vector.load %arg6[%c4_74, %c0_75, %c0_76] : memref<9x8x16xbf16, #tpu.memory_space<vmem>>, vector<1x8x16xbf16>
    %95 = vector.shape_cast %94 : vector<1x8x16xbf16> to vector<8x16xbf16>
    %cst_77 = arith.constant dense<0.000000e+00> : vector<200x16xf32>
    %96 = tpu.matmul %93, %95, %cst_77 {dimension_numbers = #tpu.dot_dimension_numbers<[1], [0], [0], [1], [0, 0, 1, 1], [], []>} : vector<200x8xbf16>, vector<8x16xbf16>, vector<200x16xf32> -> vector<200x16xf32>
    %97 = arith.addf %91, %96 : vector<200x16xf32>
    %c24 = arith.constant 24 : index
    %c0_78 = arith.constant 0 : index
    %98 = vector.load %arg13[%c24, %c0_78] : memref<244x8xf32, #tpu.memory_space<vmem>>, vector<200x8xf32>
    %99 = arith.truncf %98 : vector<200x8xf32> to vector<200x8xbf16>
    %c5_79 = arith.constant 5 : index
    %c0_80 = arith.constant 0 : index
    %c0_81 = arith.constant 0 : index
    %100 = vector.load %arg6[%c5_79, %c0_80, %c0_81] : memref<9x8x16xbf16, #tpu.memory_space<vmem>>, vector<1x8x16xbf16>
    %101 = vector.shape_cast %100 : vector<1x8x16xbf16> to vector<8x16xbf16>
    %cst_82 = arith.constant dense<0.000000e+00> : vector<200x16xf32>
    %102 = tpu.matmul %99, %101, %cst_82 {dimension_numbers = #tpu.dot_dimension_numbers<[1], [0], [0], [1], [0, 0, 1, 1], [], []>} : vector<200x8xbf16>, vector<8x16xbf16>, vector<200x16xf32> -> vector<200x16xf32>
    %103 = arith.addf %97, %102 : vector<200x16xf32>
    %c40_83 = arith.constant 40 : index
    %c0_84 = arith.constant 0 : index
    %104 = vector.load %arg13[%c40_83, %c0_84] : memref<244x8xf32, #tpu.memory_space<vmem>>, vector<200x8xf32>
    %105 = arith.truncf %104 : vector<200x8xf32> to vector<200x8xbf16>
    %c6_85 = arith.constant 6 : index
    %c0_86 = arith.constant 0 : index
    %c0_87 = arith.constant 0 : index
    %106 = vector.load %arg6[%c6_85, %c0_86, %c0_87] : memref<9x8x16xbf16, #tpu.memory_space<vmem>>, vector<1x8x16xbf16>
    %107 = vector.shape_cast %106 : vector<1x8x16xbf16> to vector<8x16xbf16>
    %cst_88 = arith.constant dense<0.000000e+00> : vector<200x16xf32>
    %108 = tpu.matmul %105, %107, %cst_88 {dimension_numbers = #tpu.dot_dimension_numbers<[1], [0], [0], [1], [0, 0, 1, 1], [], []>} : vector<200x8xbf16>, vector<8x16xbf16>, vector<200x16xf32> -> vector<200x16xf32>
    %109 = arith.addf %103, %108 : vector<200x16xf32>
    %c42 = arith.constant 42 : index
    %c0_89 = arith.constant 0 : index
    %110 = vector.load %arg13[%c42, %c0_89] : memref<244x8xf32, #tpu.memory_space<vmem>>, vector<200x8xf32>
    %111 = arith.truncf %110 : vector<200x8xf32> to vector<200x8xbf16>
    %c7_90 = arith.constant 7 : index
    %c0_91 = arith.constant 0 : index
    %c0_92 = arith.constant 0 : index
    %112 = vector.load %arg6[%c7_90, %c0_91, %c0_92] : memref<9x8x16xbf16, #tpu.memory_space<vmem>>, vector<1x8x16xbf16>
    %113 = vector.shape_cast %112 : vector<1x8x16xbf16> to vector<8x16xbf16>
    %cst_93 = arith.constant dense<0.000000e+00> : vector<200x16xf32>
    %114 = tpu.matmul %111, %113, %cst_93 {dimension_numbers = #tpu.dot_dimension_numbers<[1], [0], [0], [1], [0, 0, 1, 1], [], []>} : vector<200x8xbf16>, vector<8x16xbf16>, vector<200x16xf32> -> vector<200x16xf32>
    %115 = arith.addf %109, %114 : vector<200x16xf32>
    %c44 = arith.constant 44 : index
    %c0_94 = arith.constant 0 : index
    %116 = vector.load %arg13[%c44, %c0_94] : memref<244x8xf32, #tpu.memory_space<vmem>>, vector<200x8xf32>
    %117 = arith.truncf %116 : vector<200x8xf32> to vector<200x8xbf16>
    %c8_95 = arith.constant 8 : index
    %c0_96 = arith.constant 0 : index
    %c0_97 = arith.constant 0 : index
    %118 = vector.load %arg6[%c8_95, %c0_96, %c0_97] : memref<9x8x16xbf16, #tpu.memory_space<vmem>>, vector<1x8x16xbf16>
    %119 = vector.shape_cast %118 : vector<1x8x16xbf16> to vector<8x16xbf16>
    %cst_98 = arith.constant dense<0.000000e+00> : vector<200x16xf32>
    %120 = tpu.matmul %117, %119, %cst_98 {dimension_numbers = #tpu.dot_dimension_numbers<[1], [0], [0], [1], [0, 0, 1, 1], [], []>} : vector<200x8xbf16>, vector<8x16xbf16>, vector<200x16xf32> -> vector<200x16xf32>
    %121 = arith.addf %115, %120 : vector<200x16xf32>
    %c0_99 = arith.constant 0 : index
    %c0_100 = arith.constant 0 : index
    %122 = vector.load %arg7[%c0_99, %c0_100] : memref<1x16xf32, #tpu.memory_space<vmem>>, vector<1x16xf32>
    %123 = vector.broadcast %122 : vector<1x16xf32> to vector<200x16xf32>
    %124 = arith.mulf %121, %123 : vector<200x16xf32>
    %c0_101 = arith.constant 0 : index
    %c0_102 = arith.constant 0 : index
    %125 = vector.load %arg8[%c0_101, %c0_102] : memref<1x16xf32, #tpu.memory_space<vmem>>, vector<1x16xf32>
    %126 = vector.broadcast %125 : vector<1x16xf32> to vector<200x16xf32>
    %127 = arith.addf %124, %126 : vector<200x16xf32>
    %cst_103 = arith.constant 0.000000e+00 : f32
    %128 = vector.broadcast %cst_103 : f32 to vector<200x16xf32>
    %129 = arith.maximumf %127, %128 : vector<200x16xf32>
    %c0_104 = arith.constant 0 : index
    %c0_105 = arith.constant 0 : index
    %130 = vector.load %arg9[%c0_104, %c0_105] : memref<64x200xbf16, #tpu.memory_space<vmem>>, vector<64x200xbf16>
    %131 = arith.truncf %129 : vector<200x16xf32> to vector<200x16xbf16>
    %cst_106 = arith.constant dense<0.000000e+00> : vector<64x16xf32>
    %132 = tpu.matmul %130, %131, %cst_106 {dimension_numbers = #tpu.dot_dimension_numbers<[1], [0], [0], [1], [0, 0, 1, 1], [], []>} : vector<64x200xbf16>, vector<200x16xbf16>, vector<64x16xf32> -> vector<64x16xf32>
    %133 = arith.truncf %132 : vector<64x16xf32> to vector<64x16xbf16>
    %c0_107 = arith.constant 0 : index
    %c0_108 = arith.constant 0 : index
    %134 = vector.load %arg10[%c0_107, %c0_108] : memref<16x32xbf16, #tpu.memory_space<vmem>>, vector<16x32xbf16>
    %cst_109 = arith.constant dense<0.000000e+00> : vector<64x32xf32>
    %135 = tpu.matmul %133, %134, %cst_109 {dimension_numbers = #tpu.dot_dimension_numbers<[1], [0], [0], [1], [0, 0, 1, 1], [], []>} : vector<64x16xbf16>, vector<16x32xbf16>, vector<64x32xf32> -> vector<64x32xf32>
    %c0_110 = arith.constant 0 : index
    %c0_111 = arith.constant 0 : index
    %136 = vector.load %arg11[%c0_110, %c0_111] : memref<1x32xf32, #tpu.memory_space<vmem>>, vector<1x32xf32>
    %137 = vector.broadcast %136 : vector<1x32xf32> to vector<64x32xf32>
    %138 = arith.addf %135, %137 : vector<64x32xf32>
    %c0_112 = arith.constant 0 : index
    %c0_113 = arith.constant 0 : index
    %139 = vector.load %arg12[%c0_112, %c0_113] : memref<64x32xf32, #tpu.memory_space<vmem>>, vector<64x32xf32>
    tpu.vector_store %arg12[%c0_112, %c0_113], %138 {strides = array<i32>} : memref<64x32xf32, #tpu.memory_space<vmem>>, vector<64x32xf32>,
    return
  }
  func.func @transform_0(%arg0: i32) -> (i32, i32) {
    %c0_i32 = arith.constant 0 : i32
    %c0_i32_0 = arith.constant 0 : i32
    %c0_i32_1 = arith.constant 0 : i32
    return %c0_i32, %c0_i32_0 : i32, i32
  }
  func.func @transform_1(%arg0: i32) -> (i32, i32, i32) {
    %c0_i32 = arith.constant 0 : i32
    %c0_i32_0 = arith.constant 0 : i32
    %c0_i32_1 = arith.constant 0 : i32
    %c0_i32_2 = arith.constant 0 : i32
    return %c0_i32, %c0_i32_0, %c0_i32_1 : i32, i32, i32
  }
  func.func @transform_2(%arg0: i32) -> (i32, i32) {
    %c0_i32 = arith.constant 0 : i32
    %c0_i32_0 = arith.constant 0 : i32
    %c0_i32_1 = arith.constant 0 : i32
    return %c0_i32, %c0_i32_0 : i32, i32
  }
  func.func @transform_3(%arg0: i32) -> (i32, i32) {
    %c0_i32 = arith.constant 0 : i32
    %c0_i32_0 = arith.constant 0 : i32
    %c0_i32_1 = arith.constant 0 : i32
    return %c0_i32, %c0_i32_0 : i32, i32
  }
  func.func @transform_4(%arg0: i32) -> (i32, i32) {
    %c0_i32 = arith.constant 0 : i32
    %c0_i32_0 = arith.constant 0 : i32
    %c0_i32_1 = arith.constant 0 : i32
    return %c0_i32, %c0_i32_0 : i32, i32
  }
  func.func @transform_5(%arg0: i32) -> (i32, i32, i32) {
    %c0_i32 = arith.constant 0 : i32
    %c0_i32_0 = arith.constant 0 : i32
    %c0_i32_1 = arith.constant 0 : i32
    %c0_i32_2 = arith.constant 0 : i32
    return %c0_i32, %c0_i32_0, %c0_i32_1 : i32, i32, i32
  }
  func.func @transform_6(%arg0: i32) -> (i32, i32) {
    %c0_i32 = arith.constant 0 : i32
    %c0_i32_0 = arith.constant 0 : i32
    %c0_i32_1 = arith.constant 0 : i32
    return %c0_i32, %c0_i32_0 : i32, i32
  }
  func.func @transform_7(%arg0: i32) -> (i32, i32) {
    %c0_i32 = arith.constant 0 : i32
    %c0_i32_0 = arith.constant 0 : i32
    %c0_i32_1 = arith.constant 0 : i32
    return %c0_i32, %c0_i32_0 : i32, i32
  }
  func.func @transform_8(%arg0: i32) -> (i32, i32) {
    %c0_i32 = arith.constant 0 : i32
    %c0_i32_0 = arith.constant 0 : i32
    %c0_i32_1 = arith.constant 0 : i32
    return %c0_i32, %c0_i32_0 : i32, i32
  }
  func.func @transform_9(%arg0: i32) -> (i32, i32) {
    %c0_i32 = arith.constant 0 : i32
    %c0_i32_0 = arith.constant 0 : i32
    %c0_i32_1 = arith.constant 0 : i32
    return %c0_i32, %c0_i32_0 : i32, i32
  }
  func.func @transform_10(%arg0: i32) -> (i32, i32) {
    %c0_i32 = arith.constant 0 : i32
    %c0_i32_0 = arith.constant 0 : i32
    %c0_i32_1 = arith.constant 0 : i32
    return %c0_i32, %c0_i32_0 : i32, i32
  }
  func.func @transform_11(%arg0: i32) -> (i32, i32) {
    %c0_i32 = arith.constant 0 : i32
    %c0_i32_0 = arith.constant 0 : i32
    %c0_i32_1 = arith.constant 0 : i32
    return %c0_i32, %c0_i32_0 : i32, i32
  }
}

</mosaic_0001>

<llo_original>
// kernel: cnn_forward.1
$region0: #{cnn_forward.1}
  #allocation0 [shape = 'u32[]', space=smem, size = 0x4, offset = 0x4, fixed_abs, tag = 'smem constant byte address 0x4 - core index']
  #allocation1 [shape = 'u32[72,128]{1,0:T(1,128)}', space=vmem, size = 0x9000, scoped, tag = 'internal scratch']
  #allocation2 [shape = 'f32[244,8]{1,0:T(8,128)}', space=vmem, size = 0x1f000, scoped, tag = 'scratch operand']
  %s0 = inlined_call_operand.vmem [shape: f32[724,4], index: 0, kind: input, shape index: {}]
  %s1 = inlined_call_operand.vmem [shape: bf16[9,4,8], index: 1, kind: input, shape index: {}]
  %s2 = inlined_call_operand.vmem [shape: f32[1,8], index: 2, kind: input, shape index: {}]
  %s3 = inlined_call_operand.vmem [shape: f32[1,8], index: 3, kind: input, shape index: {}]
  %s4 = inlined_call_operand.vmem [shape: bf16[244,648], index: 4, kind: input, shape index: {}]
  %s5 = inlined_call_operand.vmem [shape: bf16[9,8,16], index: 5, kind: input, shape index: {}]
  %s6 = inlined_call_operand.vmem [shape: f32[1,16], index: 6, kind: input, shape index: {}]
  %s7 = inlined_call_operand.vmem [shape: f32[1,16], index: 7, kind: input, shape index: {}]
  %s8 = inlined_call_operand.vmem [shape: bf16[64,200], index: 8, kind: input, shape index: {}]
  %s9 = inlined_call_operand.vmem [shape: bf16[16,32], index: 9, kind: input, shape index: {}]
  %s10 = inlined_call_operand.vmem [shape: f32[1,32], index: 10, kind: input, shape index: {}]
  %s11 = inlined_call_operand.hbm [shape: f32[64,32], index: 11, kind: output, shape index: {}]
  %s12 = sld [smem:[#allocation0]]
  $region54: #{cnn_forward.1} parent=0
    _
  %s14 = ssub.s32 1, %s12
  %s15 = scalar_select 0, %s14, %s12
  $region1: #{cnn_forward.1} parent=0
    #allocation3 [shape = 'u8[32768]{0}', space=vmem, size = 0x8000, scoped, tag = 'output window, operand 0, single buffered']
    #allocation4 [shape = 's32[1]{0}', space=sflag, size = 0x4, scoped, tag = 'scoped memory for cnn_forward.1']
    %16 = vsyncpa [#allocation4], 0
    // Predicated region
    $region2: #{cnn_forward.1} parent=1 // pred_check
      _
    $region3: #{cnn_forward.1} parent=1 // pred_check_branch
      %18 = sbr.rel (0) target = $region5
    $region4: #{cnn_forward.1} parent=1 // pred_region
      _
    $region5: #{cnn_forward.1} parent=1 // pred_fallthru
      _
    // Predicated region
    $region6: #{cnn_forward.1} parent=1 // pred_check
      _
    $region7: #{cnn_forward.1} parent=1 // pred_check_branch
      %20 = sbr.rel (0) target = $region9
    $region8: #{cnn_forward.1} parent=1 // pred_region
      _
    $region9: #{cnn_forward.1} parent=1 // pred_fallthru
      _
    // Predicated region
    $region10: #{cnn_forward.1} parent=1 // pred_check
      _
    $region11: #{cnn_forward.1} parent=1 // pred_check_branch
      %22 = sbr.rel (0) target = $region13
    $region12: #{cnn_forward.1} parent=1 // pred_region
      _
    $region13: #{cnn_forward.1} parent=1 // pred_fallthru
      _
    // Predicated region
    $region14: #{cnn_forward.1} parent=1 // pred_check
      _
    $region15: #{cnn_forward.1} parent=1 // pred_check_branch
      %24 = sbr.rel (0) target = $region17
    $region16: #{cnn_forward.1} parent=1 // pred_region
      _
    $region17: #{cnn_forward.1} parent=1 // pred_fallthru
      _
    // Predicated region
    $region18: #{cnn_forward.1} parent=1 // pred_check
      _
    $region19: #{cnn_forward.1} parent=1 // pred_check_branch
      %26 = sbr.rel (0) target = $region21
    $region20: #{cnn_forward.1} parent=1 // pred_region
      _
    $region21: #{cnn_forward.1} parent=1 // pred_fallthru
      _
    // Predicated region
    $region22: #{cnn_forward.1} parent=1 // pred_check
      _
    $region23: #{cnn_forward.1} parent=1 // pred_check_branch
      %28 = sbr.rel (0) target = $region25
    $region24: #{cnn_forward.1} parent=1 // pred_region
      _
    $region25: #{cnn_forward.1} parent=1 // pred_fallthru
      _
    // Predicated region
    $region26: #{cnn_forward.1} parent=1 // pred_check
      _
    $region27: #{cnn_forward.1} parent=1 // pred_check_branch
      %30 = sbr.rel (0) target = $region29
    $region28: #{cnn_forward.1} parent=1 // pred_region
      _
    $region29: #{cnn_forward.1} parent=1 // pred_fallthru
      _
    // Predicated region
    $region30: #{cnn_forward.1} parent=1 // pred_check
      _
    $region31: #{cnn_forward.1} parent=1 // pred_check_branch
      %32 = sbr.rel (0) target = $region33
    $region32: #{cnn_forward.1} parent=1 // pred_region
      _
    $region33: #{cnn_forward.1} parent=1 // pred_fallthru
      _
    // Predicated region
    $region34: #{cnn_forward.1} parent=1 // pred_check
      _
    $region35: #{cnn_forward.1} parent=1 // pred_check_branch
      %34 = sbr.rel (0) target = $region37
    $region36: #{cnn_forward.1} parent=1 // pred_region
      _
    $region37: #{cnn_forward.1} parent=1 // pred_fallthru
      _
    // Predicated region
    $region38: #{cnn_forward.1} parent=1 // pred_check
      _
    $region39: #{cnn_forward.1} parent=1 // pred_check_branch
      %36 = sbr.rel (0) target = $region41
    $region40: #{cnn_forward.1} parent=1 // pred_region
      _
    $region41: #{cnn_forward.1} parent=1 // pred_fallthru
      _
    // Predicated region
    $region42: #{cnn_forward.1} parent=1 // pred_check
      _
    $region43: #{cnn_forward.1} parent=1 // pred_check_branch
      %38 = sbr.rel (0) target = $region45
    $region44: #{cnn_forward.1} parent=1 // pred_region
      _
    $region45: #{cnn_forward.1} parent=1 // pred_fallthru
      _
    %v40 = vld [vmem:[%s0] sm:$0xff]
    %v41 = vld [vmem:[%s0 + $0x8] sm:$0xff]
    %v42 = vld [vmem:[%s0 + $0x10] sm:$0xff]
    %v43 = vld [vmem:[%s0 + $0x18] sm:$0xff]
    %v44 = vld [vmem:[%s0 + $0x20] sm:$0xff]
    %v45 = vld [vmem:[%s0 + $0x28] sm:$0xff]
    %v46 = vld [vmem:[%s0 + $0x30] sm:$0xff]
    %v47 = vld [vmem:[%s0 + $0x38] sm:$0xff]
    %v48 = vld [vmem:[%s0 + $0x40] sm:$0xff]
    %v49 = vld [vmem:[%s0 + $0x48] sm:$0xff]
    %v50 = vld [vmem:[%s0 + $0x50] sm:$0xff]
    %v51 = vld [vmem:[%s0 + $0x58] sm:$0xff]
    %v52 = vld [vmem:[%s0 + $0x60] sm:$0xff]
    %v53 = vld [vmem:[%s0 + $0x68] sm:$0xff]
    %v54 = vld [vmem:[%s0 + $0x70] sm:$0xff]
    %v55 = vld [vmem:[%s0 + $0x78] sm:$0xff]
    %v56 = vld [vmem:[%s0 + $0x80] sm:$0xff]
    %v57 = vld [vmem:[%s0 + $0x88] sm:$0xff]
    %v58 = vld [vmem:[%s0 + $0x90] sm:$0xff]
    %v59 = vld [vmem:[%s0 + $0x98] sm:$0xff]
    %v60 = vld [vmem:[%s0 + $0xa0] sm:$0xff]
    %v61 = vld [vmem:[%s0 + $0xa8] sm:$0xff]
    %v62 = vld [vmem:[%s0 + $0xb0] sm:$0xff]
    %v63 = vld [vmem:[%s0 + $0xb8] sm:$0xff]
    %v64 = vld [vmem:[%s0 + $0xc0] sm:$0xff]
    %v65 = vld [vmem:[%s0 + $0xc8] sm:$0xff]
    %v66 = vld [vmem:[%s0 + $0xd0] sm:$0xff]
    %v67 = vld [vmem:[%s0 + $0xd8] sm:$0xff]
    %v68 = vld [vmem:[%s0 + $0xe0] sm:$0xff]
    %v69 = vld [vmem:[%s0 + $0xe8] sm:$0xff]
    %v70 = vld [vmem:[%s0 + $0xf0] sm:$0xff]
    %v71 = vld [vmem:[%s0 + $0xf8] sm:$0xff]
    %v72 = vld [vmem:[%s0 + $0x100] sm:$0xff]
    %v73 = vld [vmem:[%s0 + $0x108] sm:$0xff]
    %v74 = vld [vmem:[%s0 + $0x110] sm:$0xff]
    %v75 = vld [vmem:[%s0 + $0x118] sm:$0xff]
    %v76 = vld [vmem:[%s0 + $0x120] sm:$0xff]
    %v77 = vld [vmem:[%s0 + $0x128] sm:$0xff]
    %v78 = vld [vmem:[%s0 + $0x130] sm:$0xff]
    %v79 = vld [vmem:[%s0 + $0x138] sm:$0xff]
    %v80 = vld [vmem:[%s0 + $0x140] sm:$0xff]
    %v81 = vld [vmem:[%s0 + $0x148] sm:$0xff]
    %v82 = vld [vmem:[%s0 + $0x150] sm:$0xff]
    %v83 = vld [vmem:[%s0 + $0x158] sm:$0xff]
    %v84 = vld [vmem:[%s0 + $0x160] sm:$0xff]
    %v85 = vld [vmem:[%s0 + $0x168] sm:$0xff]
    %v86 = vld [vmem:[%s0 + $0x170] sm:$0xff]
    %v87 = vld [vmem:[%s0 + $0x178] sm:$0xff]
    %v88 = vld [vmem:[%s0 + $0x180] sm:$0xff]
    %v89 = vld [vmem:[%s0 + $0x188] sm:$0xff]
    %v90 = vld [vmem:[%s0 + $0x190] sm:$0xff]
    %v91 = vld [vmem:[%s0 + $0x198] sm:$0xff]
    %v92 = vld [vmem:[%s0 + $0x1a0] sm:$0xff]
    %v93 = vld [vmem:[%s0 + $0x1a8] sm:$0xff]
    %v94 = vld [vmem:[%s0 + $0x1b0] sm:$0xff]
    %v95 = vld [vmem:[%s0 + $0x1b8] sm:$0xff]
    %v96 = vld [vmem:[%s0 + $0x1c0] sm:$0xff]
    %v97 = vld [vmem:[%s0 + $0x1c8] sm:$0xff]
    %v98 = vld [vmem:[%s0 + $0x1d0] sm:$0xff]
    %v99 = vld [vmem:[%s0 + $0x1d8] sm:$0xff]
    %v100 = vld [vmem:[%s0 + $0x1e0] sm:$0xff]
    %v101 = vld [vmem:[%s0 + $0x1e8] sm:$0xff]
    %v102 = vld [vmem:[%s0 + $0x1f0] sm:$0xff]
    %v103 = vld [vmem:[%s0 + $0x1f8] sm:$0xff]
    %v104 = vld [vmem:[%s0 + $0x200] sm:$0xff]
    %v105 = vld [vmem:[%s0 + $0x208] sm:$0xff]
    %v106 = vld [vmem:[%s0 + $0x210] sm:$0xff]
    %v107 = vld [vmem:[%s0 + $0x218] sm:$0xff]
    %v108 = vld [vmem:[%s0 + $0x220] sm:$0xff]
    %v109 = vld [vmem:[%s0 + $0x228] sm:$0xff]
    %v110 = vld [vmem:[%s0 + $0x230] sm:$0xff]
    %v111 = vld [vmem:[%s0 + $0x238] sm:$0xff]
    %v112 = vld [vmem:[%s0 + $0x240] sm:$0xff]
    %v113 = vld [vmem:[%s0 + $0x248] sm:$0xff]
    %v114 = vld [vmem:[%s0 + $0x250] sm:$0xff]
    %v115 = vld [vmem:[%s0 + $0x258] sm:$0xff]
    %v116 = vld [vmem:[%s0 + $0x260] sm:$0xff]
    %v117 = vld [vmem:[%s0 + $0x268] sm:$0xff]
    %v118 = vld [vmem:[%s0 + $0x270] sm:$0xff]
    %v119 = vld [vmem:[%s0 + $0x278] sm:$0xff]
    %v120 = vld [vmem:[%s0 + $0x280] sm:$0xff]
    %v121 = vpack.c.bf16 %v41, %v40
    %v122 = vpack.c.bf16 %v43, %v42
    %v123 = vpack.c.bf16 %v45, %v44
    %v124 = vpack.c.bf16 %v47, %v46
    %v125 = vpack.c.bf16 %v49, %v48
    %v126 = vpack.c.bf16 %v51, %v50
    %v127 = vpack.c.bf16 %v53, %v52
    %v128 = vpack.c.bf16 %v55, %v54
    %v129 = vpack.c.bf16 %v57, %v56
    %v130 = vpack.c.bf16 %v59, %v58
    %v131 = vpack.c.bf16 %v61, %v60
    %v132 = vpack.c.bf16 %v63, %v62
    %v133 = vpack.c.bf16 %v65, %v64
    %v134 = vpack.c.bf16 %v67, %v66
    %v135 = vpack.c.bf16 %v69, %v68
    %v136 = vpack.c.bf16 %v71, %v70
    %v137 = vpack.c.bf16 %v73, %v72
    %v138 = vpack.c.bf16 %v75, %v74
    %v139 = vpack.c.bf16 %v77, %v76
    %v140 = vpack.c.bf16 %v79, %v78
    %v141 = vpack.c.bf16 %v81, %v80
    %v142 = vpack.c.bf16 %v83, %v82
    %v143 = vpack.c.bf16 %v85, %v84
    %v144 = vpack.c.bf16 %v87, %v86
    %v145 = vpack.c.bf16 %v89, %v88
    %v146 = vpack.c.bf16 %v91, %v90
    %v147 = vpack.c.bf16 %v93, %v92
    %v148 = vpack.c.bf16 %v95, %v94
    %v149 = vpack.c.bf16 %v97, %v96
    %v150 = vpack.c.bf16 %v99, %v98
    %v151 = vpack.c.bf16 %v101, %v100
    %v152 = vpack.c.bf16 %v103, %v102
    %v153 = vpack.c.bf16 %v105, %v104
    %v154 = vpack.c.bf16 %v107, %v106
    %v155 = vpack.c.bf16 %v109, %v108
    %v156 = vpack.c.bf16 %v111, %v110
    %v157 = vpack.c.bf16 %v113, %v112
    %v158 = vpack.c.bf16 %v115, %v114
    %v159 = vpack.c.bf16 %v117, %v116
    %v160 = vpack.c.bf16 %v119, %v118
    %v161 = vpack.c.bf16 %v120, %v120
    %v162 = vld [vmem:[%s1] sm:$0x3]
    %v163 = vld [vmem:[%s0 + $0x2] sm:$0xff]
    %v164 = vld [vmem:[%s0 + $0xa] sm:$0xff]
    %v165 = vld [vmem:[%s0 + $0x12] sm:$0xff]
    %v166 = vld [vmem:[%s0 + $0x1a] sm:$0xff]
    %v167 = vld [vmem:[%s0 + $0x22] sm:$0xff]
    %v168 = vld [vmem:[%s0 + $0x2a] sm:$0xff]
    %v169 = vld [vmem:[%s0 + $0x32] sm:$0xff]
    %v170 = vld [vmem:[%s0 + $0x3a] sm:$0xff]
    %v171 = vld [vmem:[%s0 + $0x42] sm:$0xff]
    %v172 = vld [vmem:[%s0 + $0x4a] sm:$0xff]
    %v173 = vld [vmem:[%s0 + $0x52] sm:$0xff]
    %v174 = vld [vmem:[%s0 + $0x5a] sm:$0xff]
    %v175 = vld [vmem:[%s0 + $0x62] sm:$0xff]
    %v176 = vld [vmem:[%s0 + $0x6a] sm:$0xff]
    %v177 = vld [vmem:[%s0 + $0x72] sm:$0xff]
    %v178 = vld [vmem:[%s0 + $0x7a] sm:$0xff]
    %v179 = vld [vmem:[%s0 + $0x82] sm:$0xff]
    %v180 = vld [vmem:[%s0 + $0x8a] sm:$0xff]
    %v181 = vld [vmem:[%s0 + $0x92] sm:$0xff]
    %v182 = vld [vmem:[%s0 + $0x9a] sm:$0xff]
    %v183 = vld [vmem:[%s0 + $0xa2] sm:$0xff]
    %v184 = vld [vmem:[%s0 + $0xaa] sm:$0xff]
    %v185 = vld [vmem:[%s0 + $0xb2] sm:$0xff]
    %v186 = vld [vmem:[%s0 + $0xba] sm:$0xff]
    %v187 = vld [vmem:[%s0 + $0xc2] sm:$0xff]
    %v188 = vld [vmem:[%s0 + $0xca] sm:$0xff]
    %v189 = vld [vmem:[%s0 + $0xd2] sm:$0xff]
    %v190 = vld [vmem:[%s0 + $0xda] sm:$0xff]
    %v191 = vld [vmem:[%s0 + $0xe2] sm:$0xff]
    %v192 = vld [vmem:[%s0 + $0xea] sm:$0xff]
    %v193 = vld [vmem:[%s0 + $0xf2] sm:$0xff]
    %v194 = vld [vmem:[%s0 + $0xfa] sm:$0xff]
    %v195 = vld [vmem:[%s0 + $0x102] sm:$0xff]
    %v196 = vld [vmem:[%s0 + $0x10a] sm:$0xff]
    %v197 = vld [vmem:[%s0 + $0x112] sm:$0xff]
    %v198 = vld [vmem:[%s0 + $0x11a] sm:$0xff]
    %v199 = vld [vmem:[%s0 + $0x122] sm:$0xff]
    %v200 = vld [vmem:[%s0 + $0x12a] sm:$0xff]
    %v201 = vld [vmem:[%s0 + $0x132] sm:$0xff]
    %v202 = vld [vmem:[%s0 + $0x13a] sm:$0xff]
    %v203 = vld [vmem:[%s0 + $0x142] sm:$0xff]
    %v204 = vld [vmem:[%s0 + $0x14a] sm:$0xff]
    %v205 = vld [vmem:[%s0 + $0x152] sm:$0xff]
    %v206 = vld [vmem:[%s0 + $0x15a] sm:$0xff]
    %v207 = vld [vmem:[%s0 + $0x162] sm:$0xff]
    %v208 = vld [vmem:[%s0 + $0x16a] sm:$0xff]
    %v209 = vld [vmem:[%s0 + $0x172] sm:$0xff]
    %v210 = vld [vmem:[%s0 + $0x17a] sm:$0xff]
    %v211 = vld [vmem:[%s0 + $0x182] sm:$0xff]
    %v212 = vld [vmem:[%s0 + $0x18a] sm:$0xff]
    %v213 = vld [vmem:[%s0 + $0x192] sm:$0xff]
    %v214 = vld [vmem:[%s0 + $0x19a] sm:$0xff]
    %v215 = vld [vmem:[%s0 + $0x1a2] sm:$0xff]
    %v216 = vld [vmem:[%s0 + $0x1aa] sm:$0xff]
    %v217 = vld [vmem:[%s0 + $0x1b2] sm:$0xff]
    %v218 = vld [vmem:[%s0 + $0x1ba] sm:$0xff]
    %v219 = vld [vmem:[%s0 + $0x1c2] sm:$0xff]
    %v220 = vld [vmem:[%s0 + $0x1ca] sm:$0xff]
    %v221 = vld [vmem:[%s0 + $0x1d2] sm:$0xff]
    %v222 = vld [vmem:[%s0 + $0x1da] sm:$0xff]
    %v223 = vld [vmem:[%s0 + $0x1e2] sm:$0xff]
    %v224 = vld [vmem:[%s0 + $0x1ea] sm:$0xff]
    %v225 = vld [vmem:[%s0 + $0x1f2] sm:$0xff]
    %v226 = vld [vmem:[%s0 + $0x1fa] sm:$0xff]
    %v227 = vld [vmem:[%s0 + $0x202] sm:$0xff]
    %v228 = vld [vmem:[%s0 + $0x20a] sm:$0xff]
    %v229 = vld [vmem:[%s0 + $0x212] sm:$0xff]
    %v230 = vld [vmem:[%s0 + $0x21a] sm:$0xff]
    %v231 = vld [vmem:[%s0 + $0x222] sm:$0xff]
    %v232 = vld [vmem:[%s0 + $0x22a] sm:$0xff]
    %v233 = vld [vmem:[%s0 + $0x232] sm:$0xff]
    %v234 = vld [vmem:[%s0 + $0x23a] sm:$0xff]
    %v235 = vld [vmem:[%s0 + $0x242] sm:$0xff]
    %v236 = vld [vmem:[%s0 + $0x24a] sm:$0xff]
    %v237 = vld [vmem:[%s0 + $0x252] sm:$0xff]
    %v238 = vld [vmem:[%s0 + $0x25a] sm:$0xff]
    %v239 = vld [vmem:[%s0 + $0x262] sm:$0xff]
    %v240 = vld [vmem:[%s0 + $0x26a] sm:$0xff]
    %v241 = vld [vmem:[%s0 + $0x272] sm:$0xff]
    %v242 = vld [vmem:[%s0 + $0x27a] sm:$0xff]
    %v243 = vld [vmem:[%s0 + $0x282] sm:$0xff]
    %v244 = vpack.c.bf16 %v164, %v163
    %v245 = vpack.c.bf16 %v166, %v165
    %v246 = vpack.c.bf16 %v168, %v167
    %v247 = vpack.c.bf16 %v170, %v169
    %v248 = vpack.c.bf16 %v172, %v171
    %v249 = vpack.c.bf16 %v174, %v173
    %v250 = vpack.c.bf16 %v176, %v175
    %v251 = vpack.c.bf16 %v178, %v177
    %v252 = vpack.c.bf16 %v180, %v179
    %v253 = vpack.c.bf16 %v182, %v181
    %v254 = vpack.c.bf16 %v184, %v183
    %v255 = vpack.c.bf16 %v186, %v185
    %v256 = vpack.c.bf16 %v188, %v187
    %v257 = vpack.c.bf16 %v190, %v189
    %v258 = vpack.c.bf16 %v192, %v191
    %v259 = vpack.c.bf16 %v194, %v193
    %v260 = vpack.c.bf16 %v196, %v195
    %v261 = vpack.c.bf16 %v198, %v197
    %v262 = vpack.c.bf16 %v200, %v199
    %v263 = vpack.c.bf16 %v202, %v201
    %v264 = vpack.c.bf16 %v204, %v203
    %v265 = vpack.c.bf16 %v206, %v205
    %v266 = vpack.c.bf16 %v208, %v207
    %v267 = vpack.c.bf16 %v210, %v209
    %v268 = vpack.c.bf16 %v212, %v211
    %v269 = vpack.c.bf16 %v214, %v213
    %v270 = vpack.c.bf16 %v216, %v215
    %v271 = vpack.c.bf16 %v218, %v217
    %v272 = vpack.c.bf16 %v220, %v219
    %v273 = vpack.c.bf16 %v222, %v221
    %v274 = vpack.c.bf16 %v224, %v223
    %v275 = vpack.c.bf16 %v226, %v225
    %v276 = vpack.c.bf16 %v228, %v227
    %v277 = vpack.c.bf16 %v230, %v229
    %v278 = vpack.c.bf16 %v232, %v231
    %v279 = vpack.c.bf16 %v234, %v233
    %v280 = vpack.c.bf16 %v236, %v235
    %v281 = vpack.c.bf16 %v238, %v237
    %v282 = vpack.c.bf16 %v240, %v239
    %v283 = vpack.c.bf16 %v242, %v241
    %v284 = vpack.c.bf16 %v243, %v243
    %s285 = scalar_lea.vmem %s1, 2
    %v286 = vld [vmem:[%s285] sm:$0x3]
    %vm287 = vcmask 31744
    %v289 = vsel %vm287, %v244, 0
    %v292 = vsel %vm287, %v245, 0
    %v295 = vsel %vm287, %v246, 0
    %v298 = vsel %vm287, %v247, 0
    %v301 = vsel %vm287, %v248, 0
    %v304 = vsel %vm287, %v249, 0
    %v307 = vsel %vm287, %v250, 0
    %v310 = vsel %vm287, %v251, 0
    %v313 = vsel %vm287, %v252, 0
    %v316 = vsel %vm287, %v253, 0
    %v319 = vsel %vm287, %v254, 0
    %v322 = vsel %vm287, %v255, 0
    %v325 = vsel %vm287, %v256, 0
    %v328 = vsel %vm287, %v257, 0
    %v331 = vsel %vm287, %v258, 0
    %v334 = vsel %vm287, %v259, 0
    %v337 = vsel %vm287, %v260, 0
    %v340 = vsel %vm287, %v261, 0
    %v343 = vsel %vm287, %v262, 0
    %v346 = vsel %vm287, %v263, 0
    %v349 = vsel %vm287, %v264, 0
    %v352 = vsel %vm287, %v265, 0
    %v355 = vsel %vm287, %v266, 0
    %v358 = vsel %vm287, %v267, 0
    %v361 = vsel %vm287, %v268, 0
    %v364 = vsel %vm287, %v269, 0
    %v367 = vsel %vm287, %v270, 0
    %v370 = vsel %vm287, %v271, 0
    %v373 = vsel %vm287, %v272, 0
    %v376 = vsel %vm287, %v273, 0
    %v379 = vsel %vm287, %v274, 0
    %v382 = vsel %vm287, %v275, 0
    %v385 = vsel %vm287, %v276, 0
    %v388 = vsel %vm287, %v277, 0
    %v391 = vsel %vm287, %v278, 0
    %v394 = vsel %vm287, %v279, 0
    %v397 = vsel %vm287, %v280, 0
    %v400 = vsel %vm287, %v281, 0
    %v403 = vsel %vm287, %v282, 0
    %v406 = vsel %vm287, %v283, 0
    %v409 = vsel %vm287, %v284, 0
    %vm411 = vcmask 1041408
    %v413 = vsel %vm411, %v286, 0
    %415 = vmatpush.bf16.msra.mxu0 0
    %416 = vmatpush.bf16.msra.mxu0 0
    %417 = vmatpush.bf16.msra.mxu0 0
    %418 = vmatpush.bf16.msra.mxu0 0
    %419 = vmatpush.bf16.msra.mxu0 0
    %420 = vmatpush.bf16.msra.mxu0 0
    %421 = vmatpush.bf16.msra.mxu0 0
    %422 = vmatpush.bf16.msra.mxu0 %v413
    %423 = vmatmul.bf16.gmra.mxu0 %v289
    %v424 = vpop.f32.mrf.mxu0
    %v425 = vadd.f32 0.0, %v424
    %v426 = vpop.f32.mrf.mxu0
    %v427 = vadd.f32 0.0, %v426
    %428 = vmatmul.bf16.gmra.mxu0 %v292
    %v429 = vpop.f32.mrf.mxu0
    %v430 = vadd.f32 0.0, %v429
    %v431 = vpop.f32.mrf.mxu0
    %v432 = vadd.f32 0.0, %v431
    %433 = vmatmul.bf16.gmra.mxu0 %v295
    %v434 = vpop.f32.mrf.mxu0
    %v435 = vadd.f32 0.0, %v434
    %v436 = vpop.f32.mrf.mxu0
    %v437 = vadd.f32 0.0, %v436
    %438 = vmatmul.bf16.gmra.mxu0 %v298
    %v439 = vpop.f32.mrf.mxu0
    %v440 = vadd.f32 0.0, %v439
    %v441 = vpop.f32.mrf.mxu0
    %v442 = vadd.f32 0.0, %v441
    %443 = vmatmul.bf16.gmra.mxu0 %v301
    %v444 = vpop.f32.mrf.mxu0
    %v445 = vadd.f32 0.0, %v444
    %v446 = vpop.f32.mrf.mxu0
    %v447 = vadd.f32 0.0, %v446
    %448 = vmatmul.bf16.gmra.mxu0 %v304
    %v449 = vpop.f32.mrf.mxu0
    %v450 = vadd.f32 0.0, %v449
    %v451 = vpop.f32.mrf.mxu0
    %v452 = vadd.f32 0.0, %v451
    %453 = vmatmul.bf16.gmra.mxu0 %v307
    %v454 = vpop.f32.mrf.mxu0
    %v455 = vadd.f32 0.0, %v454
    %v456 = vpop.f32.mrf.mxu0
    %v457 = vadd.f32 0.0, %v456
    %458 = vmatmul.bf16.gmra.mxu0 %v310
    %v459 = vpop.f32.mrf.mxu0
    %v460 = vadd.f32 0.0, %v459
    %v461 = vpop.f32.mrf.mxu0
    %v462 = vadd.f32 0.0, %v461
    %463 = vmatmul.bf16.gmra.mxu0 %v313
    %v464 = vpop.f32.mrf.mxu0
    %v465 = vadd.f32 0.0, %v464
    %v466 = vpop.f32.mrf.mxu0
    %v467 = vadd.f32 0.0, %v466
    %468 = vmatmul.bf16.gmra.mxu0 %v316
    %v469 = vpop.f32.mrf.mxu0
    %v470 = vadd.f32 0.0, %v469
    %v471 = vpop.f32.mrf.mxu0
    %v472 = vadd.f32 0.0, %v471
    %473 = vmatmul.bf16.gmra.mxu0 %v319
    %v474 = vpop.f32.mrf.mxu0
    %v475 = vadd.f32 0.0, %v474
    %v476 = vpop.f32.mrf.mxu0
    %v477 = vadd.f32 0.0, %v476
    %478 = vmatmul.bf16.gmra.mxu0 %v322
    %v479 = vpop.f32.mrf.mxu0
    %v480 = vadd.f32 0.0, %v479
    %v481 = vpop.f32.mrf.mxu0
    %v482 = vadd.f32 0.0, %v481
    %483 = vmatmul.bf16.gmra.mxu0 %v325
    %v484 = vpop.f32.mrf.mxu0
    %v485 = vadd.f32 0.0, %v484
    %v486 = vpop.f32.mrf.mxu0
    %v487 = vadd.f32 0.0, %v486
    %488 = vmatmul.bf16.gmra.mxu0 %v328
    %v489 = vpop.f32.mrf.mxu0
    %v490 = vadd.f32 0.0, %v489
    %v491 = vpop.f32.mrf.mxu0
    %v492 = vadd.f32 0.0, %v491
    %493 = vmatmul.bf16.gmra.mxu0 %v331
    %v494 = vpop.f32.mrf.mxu0
    %v495 = vadd.f32 0.0, %v494
    %v496 = vpop.f32.mrf.mxu0
    %v497 = vadd.f32 0.0, %v496
    %498 = vmatmul.bf16.gmra.mxu0 %v334
    %v499 = vpop.f32.mrf.mxu0
    %v500 = vadd.f32 0.0, %v499
    %v501 = vpop.f32.mrf.mxu0
    %v502 = vadd.f32 0.0, %v501
    %503 = vmatmul.bf16.gmra.mxu0 %v337
    %v504 = vpop.f32.mrf.mxu0
    %v505 = vadd.f32 0.0, %v504
    %v506 = vpop.f32.mrf.mxu0
    %v507 = vadd.f32 0.0, %v506
    %508 = vmatmul.bf16.gmra.mxu0 %v340
    %v509 = vpop.f32.mrf.mxu0
    %v510 = vadd.f32 0.0, %v509
    %v511 = vpop.f32.mrf.mxu0
    %v512 = vadd.f32 0.0, %v511
    %513 = vmatmul.bf16.gmra.mxu0 %v343
    %v514 = vpop.f32.mrf.mxu0
    %v515 = vadd.f32 0.0, %v514
    %v516 = vpop.f32.mrf.mxu0
    %v517 = vadd.f32 0.0, %v516
    %518 = vmatmul.bf16.gmra.mxu0 %v346
    %v519 = vpop.f32.mrf.mxu0
    %v520 = vadd.f32 0.0, %v519
    %v521 = vpop.f32.mrf.mxu0
    %v522 = vadd.f32 0.0, %v521
    %523 = vmatmul.bf16.gmra.mxu0 %v349
    %v524 = vpop.f32.mrf.mxu0
    %v525 = vadd.f32 0.0, %v524
    %v526 = vpop.f32.mrf.mxu0
    %v527 = vadd.f32 0.0, %v526
    %528 = vmatmul.bf16.gmra.mxu0 %v352
    %v529 = vpop.f32.mrf.mxu0
    %v530 = vadd.f32 0.0, %v529
    %v531 = vpop.f32.mrf.mxu0
    %v532 = vadd.f32 0.0, %v531
    %533 = vmatmul.bf16.gmra.mxu0 %v355
    %v534 = vpop.f32.mrf.mxu0
    %v535 = vadd.f32 0.0, %v534
    %v536 = vpop.f32.mrf.mxu0
    %v537 = vadd.f32 0.0, %v536
    %538 = vmatmul.bf16.gmra.mxu0 %v358
    %v539 = vpop.f32.mrf.mxu0
    %v540 = vadd.f32 0.0, %v539
    %v541 = vpop.f32.mrf.mxu0
    %v542 = vadd.f32 0.0, %v541
    %543 = vmatmul.bf16.gmra.mxu0 %v361
    %v544 = vpop.f32.mrf.mxu0
    %v545 = vadd.f32 0.0, %v544
    %v546 = vpop.f32.mrf.mxu0
    %v547 = vadd.f32 0.0, %v546
    %548 = vmatmul.bf16.gmra.mxu0 %v364
    %v549 = vpop.f32.mrf.mxu0
    %v550 = vadd.f32 0.0, %v549
    %v551 = vpop.f32.mrf.mxu0
    %v552 = vadd.f32 0.0, %v551
    %553 = vmatmul.bf16.gmra.mxu0 %v367
    %v554 = vpop.f32.mrf.mxu0
    %v555 = vadd.f32 0.0, %v554
    %v556 = vpop.f32.mrf.mxu0
    %v557 = vadd.f32 0.0, %v556
    %558 = vmatmul.bf16.gmra.mxu0 %v370
    %v559 = vpop.f32.mrf.mxu0
    %v560 = vadd.f32 0.0, %v559
    %v561 = vpop.f32.mrf.mxu0
    %v562 = vadd.f32 0.0, %v561
    %563 = vmatmul.bf16.gmra.mxu0 %v373
    %v564 = vpop.f32.mrf.mxu0
    %v565 = vadd.f32 0.0, %v564
    %v566 = vpop.f32.mrf.mxu0
    %v567 = vadd.f32 0.0, %v566
    %568 = vmatmul.bf16.gmra.mxu0 %v376
    %v569 = vpop.f32.mrf.mxu0
    %v570 = vadd.f32 0.0, %v569
    %v571 = vpop.f32.mrf.mxu0
    %v572 = vadd.f32 0.0, %v571
    %573 = vmatmul.bf16.gmra.mxu0 %v379
    %v574 = vpop.f32.mrf.mxu0
    %v575 = vadd.f32 0.0, %v574
    %v576 = vpop.f32.mrf.mxu0
    %v577 = vadd.f32 0.0, %v576
    %578 = vmatmul.bf16.gmra.mxu0 %v382
    %v579 = vpop.f32.mrf.mxu0
    %v580 = vadd.f32 0.0, %v579
    %v581 = vpop.f32.mrf.mxu0
    %v582 = vadd.f32 0.0, %v581
    %583 = vmatmul.bf16.gmra.mxu0 %v385
    %v584 = vpop.f32.mrf.mxu0
    %v585 = vadd.f32 0.0, %v584
    %v586 = vpop.f32.mrf.mxu0
    %v587 = vadd.f32 0.0, %v586
    %588 = vmatmul.bf16.gmra.mxu0 %v388
    %v589 = vpop.f32.mrf.mxu0
    %v590 = vadd.f32 0.0, %v589
    %v591 = vpop.f32.mrf.mxu0
    %v592 = vadd.f32 0.0, %v591
    %593 = vmatmul.bf16.gmra.mxu0 %v391
    %v594 = vpop.f32.mrf.mxu0
    %v595 = vadd.f32 0.0, %v594
    %v596 = vpop.f32.mrf.mxu0
    %v597 = vadd.f32 0.0, %v596
    %598 = vmatmul.bf16.gmra.mxu0 %v394
    %v599 = vpop.f32.mrf.mxu0
    %v600 = vadd.f32 0.0, %v599
    %v601 = vpop.f32.mrf.mxu0
    %v602 = vadd.f32 0.0, %v601
    %603 = vmatmul.bf16.gmra.mxu0 %v397
    %v604 = vpop.f32.mrf.mxu0
    %v605 = vadd.f32 0.0, %v604
    %v606 = vpop.f32.mrf.mxu0
    %v607 = vadd.f32 0.0, %v606
    %608 = vmatmul.bf16.gmra.mxu0 %v400
    %v609 = vpop.f32.mrf.mxu0
    %v610 = vadd.f32 0.0, %v609
    %v611 = vpop.f32.mrf.mxu0
    %v612 = vadd.f32 0.0, %v611
    %613 = vmatmul.bf16.gmra.mxu0 %v403
    %v614 = vpop.f32.mrf.mxu0
    %v615 = vadd.f32 0.0, %v614
    %v616 = vpop.f32.mrf.mxu0
    %v617 = vadd.f32 0.0, %v616
    %618 = vmatmul.bf16.gmra.mxu0 %v406
    %v619 = vpop.f32.mrf.mxu0
    %v620 = vadd.f32 0.0, %v619
    %v621 = vpop.f32.mrf.mxu0
    %v622 = vadd.f32 0.0, %v621
    %623 = vmatmul.bf16.gmra.mxu0 %v409
    %v624 = vpop.f32.mrf.mxu0
    %v625 = vadd.f32 0.0, %v624
    %v626 = vpop.f32.mrf.mxu0
    %627 = vdwg.mxu0
    %v629 = vsel %vm287, %v121, 0
    %v632 = vsel %vm287, %v122, 0
    %v635 = vsel %vm287, %v123, 0
    %v638 = vsel %vm287, %v124, 0
    %v641 = vsel %vm287, %v125, 0
    %v644 = vsel %vm287, %v126, 0
    %v647 = vsel %vm287, %v127, 0
    %v650 = vsel %vm287, %v128, 0
    %v653 = vsel %vm287, %v129, 0
    %v656 = vsel %vm287, %v130, 0
    %v659 = vsel %vm287, %v131, 0
    %v662 = vsel %vm287, %v132, 0
    %v665 = vsel %vm287, %v133, 0
    %v668 = vsel %vm287, %v134, 0
    %v671 = vsel %vm287, %v135, 0
    %v674 = vsel %vm287, %v136, 0
    %v677 = vsel %vm287, %v137, 0
    %v680 = vsel %vm287, %v138, 0
    %v683 = vsel %vm287, %v139, 0
    %v686 = vsel %vm287, %v140, 0
    %v689 = vsel %vm287, %v141, 0
    %v692 = vsel %vm287, %v142, 0
    %v695 = vsel %vm287, %v143, 0
    %v698 = vsel %vm287, %v144, 0
    %v701 = vsel %vm287, %v145, 0
    %v704 = vsel %vm287, %v146, 0
    %v707 = vsel %vm287, %v147, 0
    %v710 = vsel %vm287, %v148, 0
    %v713 = vsel %vm287, %v149, 0
    %v716 = vsel %vm287, %v150, 0
    %v719 = vsel %vm287, %v151, 0
    %v722 = vsel %vm287, %v152, 0
    %v725 = vsel %vm287, %v153, 0
    %v728 = vsel %vm287, %v154, 0
    %v731 = vsel %vm287, %v155, 0
    %v734 = vsel %vm287, %v156, 0
    %v737 = vsel %vm287, %v157, 0
    %v740 = vsel %vm287, %v158, 0
    %v743 = vsel %vm287, %v159, 0
    %v746 = vsel %vm287, %v160, 0
    %v749 = vsel %vm287, %v161, 0
    %v752 = vsel %vm411, %v162, 0
    %754 = vmatpush.bf16.msra.mxu0 0
    %755 = vmatpush.bf16.msra.mxu0 0
    %756 = vmatpush.bf16.msra.mxu0 0
    %757 = vmatpush.bf16.msra.mxu0 0
    %758 = vmatpush.bf16.msra.mxu0 0
    %759 = vmatpush.bf16.msra.mxu0 0
    %760 = vmatpush.bf16.msra.mxu0 0
    %761 = vmatpush.bf16.msra.mxu0 %v752
    %762 = vmatmul.bf16.gmra.mxu0 %v629
    %v763 = vpop.f32.mrf.mxu0
    %v764 = vadd.f32 %v425, %v763
    %v765 = vpop.f32.mrf.mxu0
    %v766 = vadd.f32 %v427, %v765
    %767 = vmatmul.bf16.gmra.mxu0 %v632
    %v768 = vpop.f32.mrf.mxu0
    %v769 = vadd.f32 %v430, %v768
    %v770 = vpop.f32.mrf.mxu0
    %v771 = vadd.f32 %v432, %v770
    %772 = vmatmul.bf16.gmra.mxu0 %v635
    %v773 = vpop.f32.mrf.mxu0
    %v774 = vadd.f32 %v435, %v773
    %v775 = vpop.f32.mrf.mxu0
    %v776 = vadd.f32 %v437, %v775
    %777 = vmatmul.bf16.gmra.mxu0 %v638
    %v778 = vpop.f32.mrf.mxu0
    %v779 = vadd.f32 %v440, %v778
    %v780 = vpop.f32.mrf.mxu0
    %v781 = vadd.f32 %v442, %v780
    %782 = vmatmul.bf16.gmra.mxu0 %v641
    %v783 = vpop.f32.mrf.mxu0
    %v784 = vadd.f32 %v445, %v783
    %v785 = vpop.f32.mrf.mxu0
    %v786 = vadd.f32 %v447, %v785
    %787 = vmatmul.bf16.gmra.mxu0 %v644
    %v788 = vpop.f32.mrf.mxu0
    %v789 = vadd.f32 %v450, %v788
    %v790 = vpop.f32.mrf.mxu0
    %v791 = vadd.f32 %v452, %v790
    %792 = vmatmul.bf16.gmra.mxu0 %v647
    %v793 = vpop.f32.mrf.mxu0
    %v794 = vadd.f32 %v455, %v793
    %v795 = vpop.f32.mrf.mxu0
    %v796 = vadd.f32 %v457, %v795
    %797 = vmatmul.bf16.gmra.mxu0 %v650
    %v798 = vpop.f32.mrf.mxu0
    %v799 = vadd.f32 %v460, %v798
    %v800 = vpop.f32.mrf.mxu0
    %v801 = vadd.f32 %v462, %v800
    %802 = vmatmul.bf16.gmra.mxu0 %v653
    %v803 = vpop.f32.mrf.mxu0
    %v804 = vadd.f32 %v465, %v803
    %v805 = vpop.f32.mrf.mxu0
    %v806 = vadd.f32 %v467, %v805
    %807 = vmatmul.bf16.gmra.mxu0 %v656
    %v808 = vpop.f32.mrf.mxu0
    %v809 = vadd.f32 %v470, %v808
    %v810 = vpop.f32.mrf.mxu0
    %v811 = vadd.f32 %v472, %v810
    %812 = vmatmul.bf16.gmra.mxu0 %v659
    %v813 = vpop.f32.mrf.mxu0
    %v814 = vadd.f32 %v475, %v813
    %v815 = vpop.f32.mrf.mxu0
    %v816 = vadd.f32 %v477, %v815
    %817 = vmatmul.bf16.gmra.mxu0 %v662
    %v818 = vpop.f32.mrf.mxu0
    %v819 = vadd.f32 %v480, %v818
    %v820 = vpop.f32.mrf.mxu0
    %v821 = vadd.f32 %v482, %v820
    %822 = vmatmul.bf16.gmra.mxu0 %v665
    %v823 = vpop.f32.mrf.mxu0
    %v824 = vadd.f32 %v485, %v823
    %v825 = vpop.f32.mrf.mxu0
    %v826 = vadd.f32 %v487, %v825
    %827 = vmatmul.bf16.gmra.mxu0 %v668
    %v828 = vpop.f32.mrf.mxu0
    %v829 = vadd.f32 %v490, %v828
    %v830 = vpop.f32.mrf.mxu0
    %v831 = vadd.f32 %v492, %v830
    %832 = vmatmul.bf16.gmra.mxu0 %v671
    %v833 = vpop.f32.mrf.mxu0
    %v834 = vadd.f32 %v495, %v833
    %v835 = vpop.f32.mrf.mxu0
    %v836 = vadd.f32 %v497, %v835
    %837 = vmatmul.bf16.gmra.mxu0 %v674
    %v838 = vpop.f32.mrf.mxu0
    %v839 = vadd.f32 %v500, %v838
    %v840 = vpop.f32.mrf.mxu0
    %v841 = vadd.f32 %v502, %v840
    %842 = vmatmul.bf16.gmra.mxu0 %v677
    %v843 = vpop.f32.mrf.mxu0
    %v844 = vadd.f32 %v505, %v843
    %v845 = vpop.f32.mrf.mxu0
    %v846 = vadd.f32 %v507, %v845
    %847 = vmatmul.bf16.gmra.mxu0 %v680
    %v848 = vpop.f32.mrf.mxu0
    %v849 = vadd.f32 %v510, %v848
    %v850 = vpop.f32.mrf.mxu0
    %v851 = vadd.f32 %v512, %v850
    %852 = vmatmul.bf16.gmra.mxu0 %v683
    %v853 = vpop.f32.mrf.mxu0
    %v854 = vadd.f32 %v515, %v853
    %v855 = vpop.f32.mrf.mxu0
    %v856 = vadd.f32 %v517, %v855
    %857 = vmatmul.bf16.gmra.mxu0 %v686
    %v858 = vpop.f32.mrf.mxu0
    %v859 = vadd.f32 %v520, %v858
    %v860 = vpop.f32.mrf.mxu0
    %v861 = vadd.f32 %v522, %v860
    %862 = vmatmul.bf16.gmra.mxu0 %v689
    %v863 = vpop.f32.mrf.mxu0
    %v864 = vadd.f32 %v525, %v863
    %v865 = vpop.f32.mrf.mxu0
    %v866 = vadd.f32 %v527, %v865
    %867 = vmatmul.bf16.gmra.mxu0 %v692
    %v868 = vpop.f32.mrf.mxu0
    %v869 = vadd.f32 %v530, %v868
    %v870 = vpop.f32.mrf.mxu0
    %v871 = vadd.f32 %v532, %v870
    %872 = vmatmul.bf16.gmra.mxu0 %v695
    %v873 = vpop.f32.mrf.mxu0
    %v874 = vadd.f32 %v535, %v873
    %v875 = vpop.f32.mrf.mxu0
    %v876 = vadd.f32 %v537, %v875
    %877 = vmatmul.bf16.gmra.mxu0 %v698
    %v878 = vpop.f32.mrf.mxu0
    %v879 = vadd.f32 %v540, %v878
    %v880 = vpop.f32.mrf.mxu0
    %v881 = vadd.f32 %v542, %v880
    %882 = vmatmul.bf16.gmra.mxu0 %v701
    %v883 = vpop.f32.mrf.mxu0
    %v884 = vadd.f32 %v545, %v883
    %v885 = vpop.f32.mrf.mxu0
    %v886 = vadd.f32 %v547, %v885
    %887 = vmatmul.bf16.gmra.mxu0 %v704
    %v888 = vpop.f32.mrf.mxu0
    %v889 = vadd.f32 %v550, %v888
    %v890 = vpop.f32.mrf.mxu0
    %v891 = vadd.f32 %v552, %v890
    %892 = vmatmul.bf16.gmra.mxu0 %v707
    %v893 = vpop.f32.mrf.mxu0
    %v894 = vadd.f32 %v555, %v893
    %v895 = vpop.f32.mrf.mxu0
    %v896 = vadd.f32 %v557, %v895
    %897 = vmatmul.bf16.gmra.mxu0 %v710
    %v898 = vpop.f32.mrf.mxu0
    %v899 = vadd.f32 %v560, %v898
    %v900 = vpop.f32.mrf.mxu0
    %v901 = vadd.f32 %v562, %v900
    %902 = vmatmul.bf16.gmra.mxu0 %v713
    %v903 = vpop.f32.mrf.mxu0
    %v904 = vadd.f32 %v565, %v903
    %v905 = vpop.f32.mrf.mxu0
    %v906 = vadd.f32 %v567, %v905
    %907 = vmatmul.bf16.gmra.mxu0 %v716
    %v908 = vpop.f32.mrf.mxu0
    %v909 = vadd.f32 %v570, %v908
    %v910 = vpop.f32.mrf.mxu0
    %v911 = vadd.f32 %v572, %v910
    %912 = vmatmul.bf16.gmra.mxu0 %v719
    %v913 = vpop.f32.mrf.mxu0
    %v914 = vadd.f32 %v575, %v913
    %v915 = vpop.f32.mrf.mxu0
    %v916 = vadd.f32 %v577, %v915
    %917 = vmatmul.bf16.gmra.mxu0 %v722
    %v918 = vpop.f32.mrf.mxu0
    %v919 = vadd.f32 %v580, %v918
    %v920 = vpop.f32.mrf.mxu0
    %v921 = vadd.f32 %v582, %v920
    %922 = vmatmul.bf16.gmra.mxu0 %v725
    %v923 = vpop.f32.mrf.mxu0
    %v924 = vadd.f32 %v585, %v923
    %v925 = vpop.f32.mrf.mxu0
    %v926 = vadd.f32 %v587, %v925
    %927 = vmatmul.bf16.gmra.mxu0 %v728
    %v928 = vpop.f32.mrf.mxu0
    %v929 = vadd.f32 %v590, %v928
    %v930 = vpop.f32.mrf.mxu0
    %v931 = vadd.f32 %v592, %v930
    %932 = vmatmul.bf16.gmra.mxu0 %v731
    %v933 = vpop.f32.mrf.mxu0
    %v934 = vadd.f32 %v595, %v933
    %v935 = vpop.f32.mrf.mxu0
    %v936 = vadd.f32 %v597, %v935
    %937 = vmatmul.bf16.gmra.mxu0 %v734
    %v938 = vpop.f32.mrf.mxu0
    %v939 = vadd.f32 %v600, %v938
    %v940 = vpop.f32.mrf.mxu0
    %v941 = vadd.f32 %v602, %v940
    %942 = vmatmul.bf16.gmra.mxu0 %v737
    %v943 = vpop.f32.mrf.mxu0
    %v944 = vadd.f32 %v605, %v943
    %v945 = vpop.f32.mrf.mxu0
    %v946 = vadd.f32 %v607, %v945
    %947 = vmatmul.bf16.gmra.mxu0 %v740
    %v948 = vpop.f32.mrf.mxu0
    %v949 = vadd.f32 %v610, %v948
    %v950 = vpop.f32.mrf.mxu0
    %v951 = vadd.f32 %v612, %v950
    %952 = vmatmul.bf16.gmra.mxu0 %v743
    %v953 = vpop.f32.mrf.mxu0
    %v954 = vadd.f32 %v615, %v953
    %v955 = vpop.f32.mrf.mxu0
    %v956 = vadd.f32 %v617, %v955
    %957 = vmatmul.bf16.gmra.mxu0 %v746
    %v958 = vpop.f32.mrf.mxu0
    %v959 = vadd.f32 %v620, %v958
    %v960 = vpop.f32.mrf.mxu0
    %v961 = vadd.f32 %v622, %v960
    %962 = vmatmul.bf16.gmra.mxu0 %v749
    %v963 = vpop.f32.mrf.mxu0
    %v964 = vadd.f32 %v625, %v963
    %v965 = vpop.f32.mrf.mxu0
    %966 = vdwg.mxu0
    %v967 = vld [vmem:[%s0 + $0x4] sm:$0xff]
    %v968 = vld [vmem:[%s0 + $0xc] sm:$0xff]
    %v969 = vld [vmem:[%s0 + $0x14] sm:$0xff]
    %v970 = vld [vmem:[%s0 + $0x1c] sm:$0xff]
    %v971 = vld [vmem:[%s0 + $0x24] sm:$0xff]
    %v972 = vld [vmem:[%s0 + $0x2c] sm:$0xff]
    %v973 = vld [vmem:[%s0 + $0x34] sm:$0xff]
    %v974 = vld [vmem:[%s0 + $0x3c] sm:$0xff]
    %v975 = vld [vmem:[%s0 + $0x44] sm:$0xff]
    %v976 = vld [vmem:[%s0 + $0x4c] sm:$0xff]
    %v977 = vld [vmem:[%s0 + $0x54] sm:$0xff]
    %v978 = vld [vmem:[%s0 + $0x5c] sm:$0xff]
    %v979 = vld [vmem:[%s0 + $0x64] sm:$0xff]
    %v980 = vld [vmem:[%s0 + $0x6c] sm:$0xff]
    %v981 = vld [vmem:[%s0 + $0x74] sm:$0xff]
    %v982 = vld [vmem:[%s0 + $0x7c] sm:$0xff]
    %v983 = vld [vmem:[%s0 + $0x84] sm:$0xff]
    %v984 = vld [vmem:[%s0 + $0x8c] sm:$0xff]
    %v985 = vld [vmem:[%s0 + $0x94] sm:$0xff]
    %v986 = vld [vmem:[%s0 + $0x9c] sm:$0xff]
    %v987 = vld [vmem:[%s0 + $0xa4] sm:$0xff]
    %v988 = vld [vmem:[%s0 + $0xac] sm:$0xff]
    %v989 = vld [vmem:[%s0 + $0xb4] sm:$0xff]
    %v990 = vld [vmem:[%s0 + $0xbc] sm:$0xff]
    %v991 = vld [vmem:[%s0 + $0xc4] sm:$0xff]
    %v992 = vld [vmem:[%s0 + $0xcc] sm:$0xff]
    %v993 = vld [vmem:[%s0 + $0xd4] sm:$0xff]
    %v994 = vld [vmem:[%s0 + $0xdc] sm:$0xff]
    %v995 = vld [vmem:[%s0 + $0xe4] sm:$0xff]
    %v996 = vld [vmem:[%s0 + $0xec] sm:$0xff]
    %v997 = vld [vmem:[%s0 + $0xf4] sm:$0xff]
    %v998 = vld [vmem:[%s0 + $0xfc] sm:$0xff]
    %v999 = vld [vmem:[%s0 + $0x104] sm:$0xff]
    %v1000 = vld [vmem:[%s0 + $0x10c] sm:$0xff]
    %v1001 = vld [vmem:[%s0 + $0x114] sm:$0xff]
    %v1002 = vld [vmem:[%s0 + $0x11c] sm:$0xff]
    %v1003 = vld [vmem:[%s0 + $0x124] sm:$0xff]
    %v1004 = vld [vmem:[%s0 + $0x12c] sm:$0xff]
    %v1005 = vld [vmem:[%s0 + $0x134] sm:$0xff]
    %v1006 = vld [vmem:[%s0 + $0x13c] sm:$0xff]
    %v1007 = vld [vmem:[%s0 + $0x144] sm:$0xff]
    %v1008 = vld [vmem:[%s0 + $0x14c] sm:$0xff]
    %v1009 = vld [vmem:[%s0 + $0x154] sm:$0xff]
    %v1010 = vld [vmem:[%s0 + $0x15c] sm:$0xff]
    %v1011 = vld [vmem:[%s0 + $0x164] sm:$0xff]
    %v1012 = vld [vmem:[%s0 + $0x16c] sm:$0xff]
    %v1013 = vld [vmem:[%s0 + $0x174] sm:$0xff]
    %v1014 = vld [vmem:[%s0 + $0x17c] sm:$0xff]
    %v1015 = vld [vmem:[%s0 + $0x184] sm:$0xff]
    %v1016 = vld [vmem:[%s0 + $0x18c] sm:$0xff]
    %v1017 = vld [vmem:[%s0 + $0x194] sm:$0xff]
    %v1018 = vld [vmem:[%s0 + $0x19c] sm:$0xff]
    %v1019 = vld [vmem:[%s0 + $0x1a4] sm:$0xff]
    %v1020 = vld [vmem:[%s0 + $0x1ac] sm:$0xff]
    %v1021 = vld [vmem:[%s0 + $0x1b4] sm:$0xff]
    %v1022 = vld [vmem:[%s0 + $0x1bc] sm:$0xff]
    %v1023 = vld [vmem:[%s0 + $0x1c4] sm:$0xff]
    %v1024 = vld [vmem:[%s0 + $0x1cc] sm:$0xff]
    %v1025 = vld [vmem:[%s0 + $0x1d4] sm:$0xff]
    %v1026 = vld [vmem:[%s0 + $0x1dc] sm:$0xff]
    %v1027 = vld [vmem:[%s0 + $0x1e4] sm:$0xff]
    %v1028 = vld [vmem:[%s0 + $0x1ec] sm:$0xff]
    %v1029 = vld [vmem:[%s0 + $0x1f4] sm:$0xff]
    %v1030 = vld [vmem:[%s0 + $0x1fc] sm:$0xff]
    %v1031 = vld [vmem:[%s0 + $0x204] sm:$0xff]
    %v1032 = vld [vmem:[%s0 + $0x20c] sm:$0xff]
    %v1033 = vld [vmem:[%s0 + $0x214] sm:$0xff]
    %v1034 = vld [vmem:[%s0 + $0x21c] sm:$0xff]
    %v1035 = vld [vmem:[%s0 + $0x224] sm:$0xff]
    %v1036 = vld [vmem:[%s0 + $0x22c] sm:$0xff]
    %v1037 = vld [vmem:[%s0 + $0x234] sm:$0xff]
    %v1038 = vld [vmem:[%s0 + $0x23c] sm:$0xff]
    %v1039 = vld [vmem:[%s0 + $0x244] sm:$0xff]
    %v1040 = vld [vmem:[%s0 + $0x24c] sm:$0xff]
    %v1041 = vld [vmem:[%s0 + $0x254] sm:$0xff]
    %v1042 = vld [vmem:[%s0 + $0x25c] sm:$0xff]
    %v1043 = vld [vmem:[%s0 + $0x264] sm:$0xff]
    %v1044 = vld [vmem:[%s0 + $0x26c] sm:$0xff]
    %v1045 = vld [vmem:[%s0 + $0x274] sm:$0xff]
    %v1046 = vld [vmem:[%s0 + $0x27c] sm:$0xff]
    %v1047 = vld [vmem:[%s0 + $0x284] sm:$0xff]
    %v1048 = vpack.c.bf16 %v968, %v967
    %v1049 = vpack.c.bf16 %v970, %v969
    %v1050 = vpack.c.bf16 %v972, %v971
    %v1051 = vpack.c.bf16 %v974, %v973
    %v1052 = vpack.c.bf16 %v976, %v975
    %v1053 = vpack.c.bf16 %v978, %v977
    %v1054 = vpack.c.bf16 %v980, %v979
    %v1055 = vpack.c.bf16 %v982, %v981
    %v1056 = vpack.c.bf16 %v984, %v983
    %v1057 = vpack.c.bf16 %v986, %v985
    %v1058 = vpack.c.bf16 %v988, %v987
    %v1059 = vpack.c.bf16 %v990, %v989
    %v1060 = vpack.c.bf16 %v992, %v991
    %v1061 = vpack.c.bf16 %v994, %v993
    %v1062 = vpack.c.bf16 %v996, %v995
    %v1063 = vpack.c.bf16 %v998, %v997
    %v1064 = vpack.c.bf16 %v1000, %v999
    %v1065 = vpack.c.bf16 %v1002, %v1001
    %v1066 = vpack.c.bf16 %v1004, %v1003
    %v1067 = vpack.c.bf16 %v1006, %v1005
    %v1068 = vpack.c.bf16 %v1008, %v1007
    %v1069 = vpack.c.bf16 %v1010, %v1009
    %v1070 = vpack.c.bf16 %v1012, %v1011
    %v1071 = vpack.c.bf16 %v1014, %v1013
    %v1072 = vpack.c.bf16 %v1016, %v1015
    %v1073 = vpack.c.bf16 %v1018, %v1017
    %v1074 = vpack.c.bf16 %v1020, %v1019
    %v1075 = vpack.c.bf16 %v1022, %v1021
    %v1076 = vpack.c.bf16 %v1024, %v1023
    %v1077 = vpack.c.bf16 %v1026, %v1025
    %v1078 = vpack.c.bf16 %v1028, %v1027
    %v1079 = vpack.c.bf16 %v1030, %v1029
    %v1080 = vpack.c.bf16 %v1032, %v1031
    %v1081 = vpack.c.bf16 %v1034, %v1033
    %v1082 = vpack.c.bf16 %v1036, %v1035
    %v1083 = vpack.c.bf16 %v1038, %v1037
    %v1084 = vpack.c.bf16 %v1040, %v1039
    %v1085 = vpack.c.bf16 %v1042, %v1041
    %v1086 = vpack.c.bf16 %v1044, %v1043
    %v1087 = vpack.c.bf16 %v1046, %v1045
    %v1088 = vpack.c.bf16 %v1047, %v1047
    %s1089 = scalar_lea.vmem %s1, 4
    %v1090 = vld [vmem:[%s1089] sm:$0x3]
    %v1092 = vsel %vm287, %v1048, 0
    %v1095 = vsel %vm287, %v1049, 0
    %v1098 = vsel %vm287, %v1050, 0
    %v1101 = vsel %vm287, %v1051, 0
    %v1104 = vsel %vm287, %v1052, 0
    %v1107 = vsel %vm287, %v1053, 0
    %v1110 = vsel %vm287, %v1054, 0
    %v1113 = vsel %vm287, %v1055, 0
    %v1116 = vsel %vm287, %v1056, 0
    %v1119 = vsel %vm287, %v1057, 0
    %v1122 = vsel %vm287, %v1058, 0
    %v1125 = vsel %vm287, %v1059, 0
    %v1128 = vsel %vm287, %v1060, 0
    %v1131 = vsel %vm287, %v1061, 0
    %v1134 = vsel %vm287, %v1062, 0
    %v1137 = vsel %vm287, %v1063, 0
    %v1140 = vsel %vm287, %v1064, 0
    %v1143 = vsel %vm287, %v1065, 0
    %v1146 = vsel %vm287, %v1066, 0
    %v1149 = vsel %vm287, %v1067, 0
    %v1152 = vsel %vm287, %v1068, 0
    %v1155 = vsel %vm287, %v1069, 0
    %v1158 = vsel %vm287, %v1070, 0
    %v1161 = vsel %vm287, %v1071, 0
    %v1164 = vsel %vm287, %v1072, 0
    %v1167 = vsel %vm287, %v1073, 0
    %v1170 = vsel %vm287, %v1074, 0
    %v1173 = vsel %vm287, %v1075, 0
    %v1176 = vsel %vm287, %v1076, 0
    %v1179 = vsel %vm287, %v1077, 0
    %v1182 = vsel %vm287, %v1078, 0
    %v1185 = vsel %vm287, %v1079, 0
    %v1188 = vsel %vm287, %v1080, 0
    %v1191 = vsel %vm287, %v1081, 0
    %v1194 = vsel %vm287, %v1082, 0
    %v1197 = vsel %vm287, %v1083, 0
    %v1200 = vsel %vm287, %v1084, 0
    %v1203 = vsel %vm287, %v1085, 0
    %v1206 = vsel %vm287, %v1086, 0
    %v1209 = vsel %vm287, %v1087, 0
    %v1212 = vsel %vm287, %v1088, 0
    %v1215 = vsel %vm411, %v1090, 0
    %1217 = vmatpush.bf16.msra.mxu0 0
    %1218 = vmatpush.bf16.msra.mxu0 0
    %1219 = vmatpush.bf16.msra.mxu0 0
    %1220 = vmatpush.bf16.msra.mxu0 0
    %1221 = vmatpush.bf16.msra.mxu0 0
    %1222 = vmatpush.bf16.msra.mxu0 0
    %1223 = vmatpush.bf16.msra.mxu0 0
    %1224 = vmatpush.bf16.msra.mxu0 %v1215
    %1225 = vmatmul.bf16.gmra.mxu0 %v1092
    %v1226 = vpop.f32.mrf.mxu0
    %v1227 = vadd.f32 0.0, %v1226
    %v1228 = vpop.f32.mrf.mxu0
    %v1229 = vadd.f32 0.0, %v1228
    %1230 = vmatmul.bf16.gmra.mxu0 %v1095
    %v1231 = vpop.f32.mrf.mxu0
    %v1232 = vadd.f32 0.0, %v1231
    %v1233 = vpop.f32.mrf.mxu0
    %v1234 = vadd.f32 0.0, %v1233
    %1235 = vmatmul.bf16.gmra.mxu0 %v1098
    %v1236 = vpop.f32.mrf.mxu0
    %v1237 = vadd.f32 0.0, %v1236
    %v1238 = vpop.f32.mrf.mxu0
    %v1239 = vadd.f32 0.0, %v1238
    %1240 = vmatmul.bf16.gmra.mxu0 %v1101
    %v1241 = vpop.f32.mrf.mxu0
    %v1242 = vadd.f32 0.0, %v1241
    %v1243 = vpop.f32.mrf.mxu0
    %v1244 = vadd.f32 0.0, %v1243
    %1245 = vmatmul.bf16.gmra.mxu0 %v1104
    %v1246 = vpop.f32.mrf.mxu0
    %v1247 = vadd.f32 0.0, %v1246
    %v1248 = vpop.f32.mrf.mxu0
    %v1249 = vadd.f32 0.0, %v1248
    %1250 = vmatmul.bf16.gmra.mxu0 %v1107
    %v1251 = vpop.f32.mrf.mxu0
    %v1252 = vadd.f32 0.0, %v1251
    %v1253 = vpop.f32.mrf.mxu0
    %v1254 = vadd.f32 0.0, %v1253
    %1255 = vmatmul.bf16.gmra.mxu0 %v1110
    %v1256 = vpop.f32.mrf.mxu0
    %v1257 = vadd.f32 0.0, %v1256
    %v1258 = vpop.f32.mrf.mxu0
    %v1259 = vadd.f32 0.0, %v1258
    %1260 = vmatmul.bf16.gmra.mxu0 %v1113
    %v1261 = vpop.f32.mrf.mxu0
    %v1262 = vadd.f32 0.0, %v1261
    %v1263 = vpop.f32.mrf.mxu0
    %v1264 = vadd.f32 0.0, %v1263
    %1265 = vmatmul.bf16.gmra.mxu0 %v1116
    %v1266 = vpop.f32.mrf.mxu0
    %v1267 = vadd.f32 0.0, %v1266
    %v1268 = vpop.f32.mrf.mxu0
    %v1269 = vadd.f32 0.0, %v1268
    %1270 = vmatmul.bf16.gmra.mxu0 %v1119
    %v1271 = vpop.f32.mrf.mxu0
    %v1272 = vadd.f32 0.0, %v1271
    %v1273 = vpop.f32.mrf.mxu0
    %v1274 = vadd.f32 0.0, %v1273
    %1275 = vmatmul.bf16.gmra.mxu0 %v1122
    %v1276 = vpop.f32.mrf.mxu0
    %v1277 = vadd.f32 0.0, %v1276
    %v1278 = vpop.f32.mrf.mxu0
    %v1279 = vadd.f32 0.0, %v1278
    %1280 = vmatmul.bf16.gmra.mxu0 %v1125
    %v1281 = vpop.f32.mrf.mxu0
    %v1282 = vadd.f32 0.0, %v1281
    %v1283 = vpop.f32.mrf.mxu0
    %v1284 = vadd.f32 0.0, %v1283
    %1285 = vmatmul.bf16.gmra.mxu0 %v1128
    %v1286 = vpop.f32.mrf.mxu0
    %v1287 = vadd.f32 0.0, %v1286
    %v1288 = vpop.f32.mrf.mxu0
    %v1289 = vadd.f32 0.0, %v1288
    %1290 = vmatmul.bf16.gmra.mxu0 %v1131
    %v1291 = vpop.f32.mrf.mxu0
    %v1292 = vadd.f32 0.0, %v1291
    %v1293 = vpop.f32.mrf.mxu0
    %v1294 = vadd.f32 0.0, %v1293
    %1295 = vmatmul.bf16.gmra.mxu0 %v1134
    %v1296 = vpop.f32.mrf.mxu0
    %v1297 = vadd.f32 0.0, %v1296
    %v1298 = vpop.f32.mrf.mxu0
    %v1299 = vadd.f32 0.0, %v1298
    %1300 = vmatmul.bf16.gmra.mxu0 %v1137
    %v1301 = vpop.f32.mrf.mxu0
    %v1302 = vadd.f32 0.0, %v1301
    %v1303 = vpop.f32.mrf.mxu0
    %v1304 = vadd.f32 0.0, %v1303
    %1305 = vmatmul.bf16.gmra.mxu0 %v1140
    %v1306 = vpop.f32.mrf.mxu0
    %v1307 = vadd.f32 0.0, %v1306
    %v1308 = vpop.f32.mrf.mxu0
    %v1309 = vadd.f32 0.0, %v1308
    %1310 = vmatmul.bf16.gmra.mxu0 %v1143
    %v1311 = vpop.f32.mrf.mxu0
    %v1312 = vadd.f32 0.0, %v1311
    %v1313 = vpop.f32.mrf.mxu0
    %v1314 = vadd.f32 0.0, %v1313
    %1315 = vmatmul.bf16.gmra.mxu0 %v1146
    %v1316 = vpop.f32.mrf.mxu0
    %v1317 = vadd.f32 0.0, %v1316
    %v1318 = vpop.f32.mrf.mxu0
    %v1319 = vadd.f32 0.0, %v1318
    %1320 = vmatmul.bf16.gmra.mxu0 %v1149
    %v1321 = vpop.f32.mrf.mxu0
    %v1322 = vadd.f32 0.0, %v1321
    %v1323 = vpop.f32.mrf.mxu0
    %v1324 = vadd.f32 0.0, %v1323
    %1325 = vmatmul.bf16.gmra.mxu0 %v1152
    %v1326 = vpop.f32.mrf.mxu0
    %v1327 = vadd.f32 0.0, %v1326
    %v1328 = vpop.f32.mrf.mxu0
    %v1329 = vadd.f32 0.0, %v1328
    %1330 = vmatmul.bf16.gmra.mxu0 %v1155
    %v1331 = vpop.f32.mrf.mxu0
    %v1332 = vadd.f32 0.0, %v1331
    %v1333 = vpop.f32.mrf.mxu0
    %v1334 = vadd.f32 0.0, %v1333
    %1335 = vmatmul.bf16.gmra.mxu0 %v1158
    %v1336 = vpop.f32.mrf.mxu0
    %v1337 = vadd.f32 0.0, %v1336
    %v1338 = vpop.f32.mrf.mxu0
    %v1339 = vadd.f32 0.0, %v1338
    %1340 = vmatmul.bf16.gmra.mxu0 %v1161
    %v1341 = vpop.f32.mrf.mxu0
    %v1342 = vadd.f32 0.0, %v1341
    %v1343 = vpop.f32.mrf.mxu0
    %v1344 = vadd.f32 0.0, %v1343
    %1345 = vmatmul.bf16.gmra.mxu0 %v1164
    %v1346 = vpop.f32.mrf.mxu0
    %v1347 = vadd.f32 0.0, %v1346
    %v1348 = vpop.f32.mrf.mxu0
    %v1349 = vadd.f32 0.0, %v1348
    %1350 = vmatmul.bf16.gmra.mxu0 %v1167
    %v1351 = vpop.f32.mrf.mxu0
    %v1352 = vadd.f32 0.0, %v1351
    %v1353 = vpop.f32.mrf.mxu0
    %v1354 = vadd.f32 0.0, %v1353
    %1355 = vmatmul.bf16.gmra.mxu0 %v1170
    %v1356 = vpop.f32.mrf.mxu0
    %v1357 = vadd.f32 0.0, %v1356
    %v1358 = vpop.f32.mrf.mxu0
    %v1359 = vadd.f32 0.0, %v1358
    %1360 = vmatmul.bf16.gmra.mxu0 %v1173
    %v1361 = vpop.f32.mrf.mxu0
    %v1362 = vadd.f32 0.0, %v1361
    %v1363 = vpop.f32.mrf.mxu0
    %v1364 = vadd.f32 0.0, %v1363
    %1365 = vmatmul.bf16.gmra.mxu0 %v1176
    %v1366 = vpop.f32.mrf.mxu0
    %v1367 = vadd.f32 0.0, %v1366
    %v1368 = vpop.f32.mrf.mxu0
    %v1369 = vadd.f32 0.0, %v1368
    %1370 = vmatmul.bf16.gmra.mxu0 %v1179
    %v1371 = vpop.f32.mrf.mxu0
    %v1372 = vadd.f32 0.0, %v1371
    %v1373 = vpop.f32.mrf.mxu0
    %v1374 = vadd.f32 0.0, %v1373
    %1375 = vmatmul.bf16.gmra.mxu0 %v1182
    %v1376 = vpop.f32.mrf.mxu0
    %v1377 = vadd.f32 0.0, %v1376
    %v1378 = vpop.f32.mrf.mxu0
    %v1379 = vadd.f32 0.0, %v1378
    %1380 = vmatmul.bf16.gmra.mxu0 %v1185
    %v1381 = vpop.f32.mrf.mxu0
    %v1382 = vadd.f32 0.0, %v1381
    %v1383 = vpop.f32.mrf.mxu0
    %v1384 = vadd.f32 0.0, %v1383
    %1385 = vmatmul.bf16.gmra.mxu0 %v1188
    %v1386 = vpop.f32.mrf.mxu0
    %v1387 = vadd.f32 0.0, %v1386
    %v1388 = vpop.f32.mrf.mxu0
    %v1389 = vadd.f32 0.0, %v1388
    %1390 = vmatmul.bf16.gmra.mxu0 %v1191
    %v1391 = vpop.f32.mrf.mxu0
    %v1392 = vadd.f32 0.0, %v1391
    %v1393 = vpop.f32.mrf.mxu0
    %v1394 = vadd.f32 0.0, %v1393
    %1395 = vmatmul.bf16.gmra.mxu0 %v1194
    %v1396 = vpop.f32.mrf.mxu0
    %v1397 = vadd.f32 0.0, %v1396
    %v1398 = vpop.f32.mrf.mxu0
    %v1399 = vadd.f32 0.0, %v1398
    %1400 = vmatmul.bf16.gmra.mxu0 %v1197
    %v1401 = vpop.f32.mrf.mxu0
    %v1402 = vadd.f32 0.0, %v1401
    %v1403 = vpop.f32.mrf.mxu0
    %v1404 = vadd.f32 0.0, %v1403
    %1405 = vmatmul.bf16.gmra.mxu0 %v1200
    %v1406 = vpop.f32.mrf.mxu0
    %v1407 = vadd.f32 0.0, %v1406
    %v1408 = vpop.f32.mrf.mxu0
    %v1409 = vadd.f32 0.0, %v1408
    %1410 = vmatmul.bf16.gmra.mxu0 %v1203
    %v1411 = vpop.f32.mrf.mxu0
    %v1412 = vadd.f32 0.0, %v1411
    %v1413 = vpop.f32.mrf.mxu0
    %v1414 = vadd.f32 0.0, %v1413
    %1415 = vmatmul.bf16.gmra.mxu0 %v1206
    %v1416 = vpop.f32.mrf.mxu0
    %v1417 = vadd.f32 0.0, %v1416
    %v1418 = vpop.f32.mrf.mxu0
    %v1419 = vadd.f32 0.0, %v1418
    %1420 = vmatmul.bf16.gmra.mxu0 %v1209
    %v1421 = vpop.f32.mrf.mxu0
    %v1422 = vadd.f32 0.0, %v1421
    %v1423 = vpop.f32.mrf.mxu0
    %v1424 = vadd.f32 0.0, %v1423
    %1425 = vmatmul.bf16.gmra.mxu0 %v1212
    %v1426 = vpop.f32.mrf.mxu0
    %v1427 = vadd.f32 0.0, %v1426
    %v1428 = vpop.f32.mrf.mxu0
    %1429 = vdwg.mxu0
    %v1430 = vadd.f32 %v764, %v1227
    %v1431 = vadd.f32 %v766, %v1229
    %v1432 = vadd.f32 %v769, %v1232
    %v1433 = vadd.f32 %v771, %v1234
    %v1434 = vadd.f32 %v774, %v1237
    %v1435 = vadd.f32 %v776, %v1239
    %v1436 = vadd.f32 %v779, %v1242
    %v1437 = vadd.f32 %v781, %v1244
    %v1438 = vadd.f32 %v784, %v1247
    %v1439 = vadd.f32 %v786, %v1249
    %v1440 = vadd.f32 %v789, %v1252
    %v1441 = vadd.f32 %v791, %v1254
    %v1442 = vadd.f32 %v794, %v1257
    %v1443 = vadd.f32 %v796, %v1259
    %v1444 = vadd.f32 %v799, %v1262
    %v1445 = vadd.f32 %v801, %v1264
    %v1446 = vadd.f32 %v804, %v1267
    %v1447 = vadd.f32 %v806, %v1269
    %v1448 = vadd.f32 %v809, %v1272
    %v1449 = vadd.f32 %v811, %v1274
    %v1450 = vadd.f32 %v814, %v1277
    %v1451 = vadd.f32 %v816, %v1279
    %v1452 = vadd.f32 %v819, %v1282
    %v1453 = vadd.f32 %v821, %v1284
    %v1454 = vadd.f32 %v824, %v1287
    %v1455 = vadd.f32 %v826, %v1289
    %v1456 = vadd.f32 %v829, %v1292
    %v1457 = vadd.f32 %v831, %v1294
    %v1458 = vadd.f32 %v834, %v1297
    %v1459 = vadd.f32 %v836, %v1299
    %v1460 = vadd.f32 %v839, %v1302
    %v1461 = vadd.f32 %v841, %v1304
    %v1462 = vadd.f32 %v844, %v1307
    %v1463 = vadd.f32 %v846, %v1309
    %v1464 = vadd.f32 %v849, %v1312
    %v1465 = vadd.f32 %v851, %v1314
    %v1466 = vadd.f32 %v854, %v1317
    %v1467 = vadd.f32 %v856, %v1319
    %v1468 = vadd.f32 %v859, %v1322
    %v1469 = vadd.f32 %v861, %v1324
    %v1470 = vadd.f32 %v864, %v1327
    %v1471 = vadd.f32 %v866, %v1329
    %v1472 = vadd.f32 %v869, %v1332
    %v1473 = vadd.f32 %v871, %v1334
    %v1474 = vadd.f32 %v874, %v1337
    %v1475 = vadd.f32 %v876, %v1339
    %v1476 = vadd.f32 %v879, %v1342
    %v1477 = vadd.f32 %v881, %v1344
    %v1478 = vadd.f32 %v884, %v1347
    %v1479 = vadd.f32 %v886, %v1349
    %v1480 = vadd.f32 %v889, %v1352
    %v1481 = vadd.f32 %v891, %v1354
    %v1482 = vadd.f32 %v894, %v1357
    %v1483 = vadd.f32 %v896, %v1359
    %v1484 = vadd.f32 %v899, %v1362
    %v1485 = vadd.f32 %v901, %v1364
    %v1486 = vadd.f32 %v904, %v1367
    %v1487 = vadd.f32 %v906, %v1369
    %v1488 = vadd.f32 %v909, %v1372
    %v1489 = vadd.f32 %v911, %v1374
    %v1490 = vadd.f32 %v914, %v1377
    %v1491 = vadd.f32 %v916, %v1379
    %v1492 = vadd.f32 %v919, %v1382
    %v1493 = vadd.f32 %v921, %v1384
    %v1494 = vadd.f32 %v924, %v1387
    %v1495 = vadd.f32 %v926, %v1389
    %v1496 = vadd.f32 %v929, %v1392
    %v1497 = vadd.f32 %v931, %v1394
    %v1498 = vadd.f32 %v934, %v1397
    %v1499 = vadd.f32 %v936, %v1399
    %v1500 = vadd.f32 %v939, %v1402
    %v1501 = vadd.f32 %v941, %v1404
    %v1502 = vadd.f32 %v944, %v1407
    %v1503 = vadd.f32 %v946, %v1409
    %v1504 = vadd.f32 %v949, %v1412
    %v1505 = vadd.f32 %v951, %v1414
    %v1506 = vadd.f32 %v954, %v1417
    %v1507 = vadd.f32 %v956, %v1419
    %v1508 = vadd.f32 %v959, %v1422
    %v1509 = vadd.f32 %v961, %v1424
    %v1510 = vadd.f32 %v964, %v1427
    %v1511 = vld [vmem:[%s0 + $0x24] sm:$0xff]
    %v1512 = vld [vmem:[%s0 + $0x2c] sm:$0xff]
    %v1513 = vld [vmem:[%s0 + $0x34] sm:$0xff]
    %v1514 = vld [vmem:[%s0 + $0x3c] sm:$0xff]
    %v1515 = vld [vmem:[%s0 + $0x44] sm:$0xff]
    %v1516 = vld [vmem:[%s0 + $0x4c] sm:$0xff]
    %v1517 = vld [vmem:[%s0 + $0x54] sm:$0xff]
    %v1518 = vld [vmem:[%s0 + $0x5c] sm:$0xff]
    %v1519 = vld [vmem:[%s0 + $0x64] sm:$0xff]
    %v1520 = vld [vmem:[%s0 + $0x6c] sm:$0xff]
    %v1521 = vld [vmem:[%s0 + $0x74] sm:$0xff]
    %v1522 = vld [vmem:[%s0 + $0x7c] sm:$0xff]
    %v1523 = vld [vmem:[%s0 + $0x84] sm:$0xff]
    %v1524 = vld [vmem:[%s0 + $0x8c] sm:$0xff]
    %v1525 = vld [vmem:[%s0 + $0x94] sm:$0xff]
    %v1526 = vld [vmem:[%s0 + $0x9c] sm:$0xff]
    %v1527 = vld [vmem:[%s0 + $0xa4] sm:$0xff]
    %v1528 = vld [vmem:[%s0 + $0xac] sm:$0xff]
    %v1529 = vld [vmem:[%s0 + $0xb4] sm:$0xff]
    %v1530 = vld [vmem:[%s0 + $0xbc] sm:$0xff]
    %v1531 = vld [vmem:[%s0 + $0xc4] sm:$0xff]
    %v1532 = vld [vmem:[%s0 + $0xcc] sm:$0xff]
    %v1533 = vld [vmem:[%s0 + $0xd4] sm:$0xff]
    %v1534 = vld [vmem:[%s0 + $0xdc] sm:$0xff]
    %v1535 = vld [vmem:[%s0 + $0xe4] sm:$0xff]
    %v1536 = vld [vmem:[%s0 + $0xec] sm:$0xff]
    %v1537 = vld [vmem:[%s0 + $0xf4] sm:$0xff]
    %v1538 = vld [vmem:[%s0 + $0xfc] sm:$0xff]
    %v1539 = vld [vmem:[%s0 + $0x104] sm:$0xff]
    %v1540 = vld [vmem:[%s0 + $0x10c] sm:$0xff]
    %v1541 = vld [vmem:[%s0 + $0x114] sm:$0xff]
    %v1542 = vld [vmem:[%s0 + $0x11c] sm:$0xff]
    %v1543 = vld [vmem:[%s0 + $0x124] sm:$0xff]
    %v1544 = vld [vmem:[%s0 + $0x12c] sm:$0xff]
    %v1545 = vld [vmem:[%s0 + $0x134] sm:$0xff]
    %v1546 = vld [vmem:[%s0 + $0x13c] sm:$0xff]
    %v1547 = vld [vmem:[%s0 + $0x144] sm:$0xff]
    %v1548 = vld [vmem:[%s0 + $0x14c] sm:$0xff]
    %v1549 = vld [vmem:[%s0 + $0x154] sm:$0xff]
    %v1550 = vld [vmem:[%s0 + $0x15c] sm:$0xff]
    %v1551 = vld [vmem:[%s0 + $0x164] sm:$0xff]
    %v1552 = vld [vmem:[%s0 + $0x16c] sm:$0xff]
    %v1553 = vld [vmem:[%s0 + $0x174] sm:$0xff]
    %v1554 = vld [vmem:[%s0 + $0x17c] sm:$0xff]
    %v1555 = vld [vmem:[%s0 + $0x184] sm:$0xff]
    %v1556 = vld [vmem:[%s0 + $0x18c] sm:$0xff]
    %v1557 = vld [vmem:[%s0 + $0x194] sm:$0xff]
    %v1558 = vld [vmem:[%s0 + $0x19c] sm:$0xff]
    %v1559 = vld [vmem:[%s0 + $0x1a4] sm:$0xff]
    %v1560 = vld [vmem:[%s0 + $0x1ac] sm:$0xff]
    %v1561 = vld [vmem:[%s0 + $0x1b4] sm:$0xff]
    %v1562 = vld [vmem:[%s0 + $0x1bc] sm:$0xff]
    %v1563 = vld [vmem:[%s0 + $0x1c4] sm:$0xff]
    %v1564 = vld [vmem:[%s0 + $0x1cc] sm:$0xff]
    %v1565 = vld [vmem:[%s0 + $0x1d4] sm:$0xff]
    %v1566 = vld [vmem:[%s0 + $0x1dc] sm:$0xff]
    %v1567 = vld [vmem:[%s0 + $0x1e4] sm:$0xff]
    %v1568 = vld [vmem:[%s0 + $0x1ec] sm:$0xff]
    %v1569 = vld [vmem:[%s0 + $0x1f4] sm:$0xff]
    %v1570 = vld [vmem:[%s0 + $0x1fc] sm:$0xff]
    %v1571 = vld [vmem:[%s0 + $0x204] sm:$0xff]
    %v1572 = vld [vmem:[%s0 + $0x20c] sm:$0xff]
    %v1573 = vld [vmem:[%s0 + $0x214] sm:$0xff]
    %v1574 = vld [vmem:[%s0 + $0x21c] sm:$0xff]
    %v1575 = vld [vmem:[%s0 + $0x224] sm:$0xff]
    %v1576 = vld [vmem:[%s0 + $0x22c] sm:$0xff]
    %v1577 = vld [vmem:[%s0 + $0x234] sm:$0xff]
    %v1578 = vld [vmem:[%s0 + $0x23c] sm:$0xff]
    %v1579 = vld [vmem:[%s0 + $0x244] sm:$0xff]
    %v1580 = vld [vmem:[%s0 + $0x24c] sm:$0xff]
    %v1581 = vld [vmem:[%s0 + $0x254] sm:$0xff]
    %v1582 = vld [vmem:[%s0 + $0x25c] sm:$0xff]
    %v1583 = vld [vmem:[%s0 + $0x264] sm:$0xff]
    %v1584 = vld [vmem:[%s0 + $0x26c] sm:$0xff]
    %v1585 = vld [vmem:[%s0 + $0x274] sm:$0xff]
    %v1586 = vld [vmem:[%s0 + $0x27c] sm:$0xff]
    %v1587 = vld [vmem:[%s0 + $0x284] sm:$0xff]
    %v1588 = vld [vmem:[%s0 + $0x28c] sm:$0xff]
    %v1589 = vld [vmem:[%s0 + $0x294] sm:$0xff]
    %v1590 = vld [vmem:[%s0 + $0x29c] sm:$0xff]
    %v1591 = vld [vmem:[%s0 + $0x2a4] sm:$0xff]
    %v1592 = vpack.c.bf16 %v1512, %v1511
    %v1593 = vpack.c.bf16 %v1514, %v1513
    %v1594 = vpack.c.bf16 %v1516, %v1515
    %v1595 = vpack.c.bf16 %v1518, %v1517
    %v1596 = vpack.c.bf16 %v1520, %v1519
    %v1597 = vpack.c.bf16 %v1522, %v1521
    %v1598 = vpack.c.bf16 %v1524, %v1523
    %v1599 = vpack.c.bf16 %v1526, %v1525
    %v1600 = vpack.c.bf16 %v1528, %v1527
    %v1601 = vpack.c.bf16 %v1530, %v1529
    %v1602 = vpack.c.bf16 %v1532, %v1531
    %v1603 = vpack.c.bf16 %v1534, %v1533
    %v1604 = vpack.c.bf16 %v1536, %v1535
    %v1605 = vpack.c.bf16 %v1538, %v1537
    %v1606 = vpack.c.bf16 %v1540, %v1539
    %v1607 = vpack.c.bf16 %v1542, %v1541
    %v1608 = vpack.c.bf16 %v1544, %v1543
    %v1609 = vpack.c.bf16 %v1546, %v1545
    %v1610 = vpack.c.bf16 %v1548, %v1547
    %v1611 = vpack.c.bf16 %v1550, %v1549
    %v1612 = vpack.c.bf16 %v1552, %v1551
    %v1613 = vpack.c.bf16 %v1554, %v1553
    %v1614 = vpack.c.bf16 %v1556, %v1555
    %v1615 = vpack.c.bf16 %v1558, %v1557
    %v1616 = vpack.c.bf16 %v1560, %v1559
    %v1617 = vpack.c.bf16 %v1562, %v1561
    %v1618 = vpack.c.bf16 %v1564, %v1563
    %v1619 = vpack.c.bf16 %v1566, %v1565
    %v1620 = vpack.c.bf16 %v1568, %v1567
    %v1621 = vpack.c.bf16 %v1570, %v1569
    %v1622 = vpack.c.bf16 %v1572, %v1571
    %v1623 = vpack.c.bf16 %v1574, %v1573
    %v1624 = vpack.c.bf16 %v1576, %v1575
    %v1625 = vpack.c.bf16 %v1578, %v1577
    %v1626 = vpack.c.bf16 %v1580, %v1579
    %v1627 = vpack.c.bf16 %v1582, %v1581
    %v1628 = vpack.c.bf16 %v1584, %v1583
    %v1629 = vpack.c.bf16 %v1586, %v1585
    %v1630 = vpack.c.bf16 %v1588, %v1587
    %v1631 = vpack.c.bf16 %v1590, %v1589
    %v1632 = vpack.c.bf16 %v1591, %v1591
    %s1633 = scalar_lea.vmem %s1, 6
    %v1634 = vld [vmem:[%s1633] sm:$0x3]
    %v1636 = vsel %vm287, %v1592, 0
    %v1639 = vsel %vm287, %v1593, 0
    %v1642 = vsel %vm287, %v1594, 0
    %v1645 = vsel %vm287, %v1595, 0
    %v1648 = vsel %vm287, %v1596, 0
    %v1651 = vsel %vm287, %v1597, 0
    %v1654 = vsel %vm287, %v1598, 0
    %v1657 = vsel %vm287, %v1599, 0
    %v1660 = vsel %vm287, %v1600, 0
    %v1663 = vsel %vm287, %v1601, 0
    %v1666 = vsel %vm287, %v1602, 0
    %v1669 = vsel %vm287, %v1603, 0
    %v1672 = vsel %vm287, %v1604, 0
    %v1675 = vsel %vm287, %v1605, 0
    %v1678 = vsel %vm287, %v1606, 0
    %v1681 = vsel %vm287, %v1607, 0
    %v1684 = vsel %vm287, %v1608, 0
    %v1687 = vsel %vm287, %v1609, 0
    %v1690 = vsel %vm287, %v1610, 0
    %v1693 = vsel %vm287, %v1611, 0
    %v1696 = vsel %vm287, %v1612, 0
    %v1699 = vsel %vm287, %v1613, 0
    %v1702 = vsel %vm287, %v1614, 0
    %v1705 = vsel %vm287, %v1615, 0
    %v1708 = vsel %vm287, %v1616, 0
    %v1711 = vsel %vm287, %v1617, 0
    %v1714 = vsel %vm287, %v1618, 0
    %v1717 = vsel %vm287, %v1619, 0
    %v1720 = vsel %vm287, %v1620, 0
    %v1723 = vsel %vm287, %v1621, 0
    %v1726 = vsel %vm287, %v1622, 0
    %v1729 = vsel %vm287, %v1623, 0
    %v1732 = vsel %vm287, %v1624, 0
    %v1735 = vsel %vm287, %v1625, 0
    %v1738 = vsel %vm287, %v1626, 0
    %v1741 = vsel %vm287, %v1627, 0
    %v1744 = vsel %vm287, %v1628, 0
    %v1747 = vsel %vm287, %v1629, 0
    %v1750 = vsel %vm287, %v1630, 0
    %v1753 = vsel %vm287, %v1631, 0
    %v1756 = vsel %vm287, %v1632, 0
    %v1759 = vsel %vm411, %v1634, 0
    %1761 = vmatpush.bf16.msra.mxu0 0
    %1762 = vmatpush.bf16.msra.mxu0 0
    %1763 = vmatpush.bf16.msra.mxu0 0
    %1764 = vmatpush.bf16.msra.mxu0 0
    %1765 = vmatpush.bf16.msra.mxu0 0
    %1766 = vmatpush.bf16.msra.mxu0 0
    %1767 = vmatpush.bf16.msra.mxu0 0
    %1768 = vmatpush.bf16.msra.mxu0 %v1759
    %1769 = vmatmul.bf16.gmra.mxu0 %v1636
    %v1770 = vpop.f32.mrf.mxu0
    %v1771 = vadd.f32 0.0, %v1770
    %v1772 = vpop.f32.mrf.mxu0
    %v1773 = vadd.f32 0.0, %v1772
    %1774 = vmatmul.bf16.gmra.mxu0 %v1639
    %v1775 = vpop.f32.mrf.mxu0
    %v1776 = vadd.f32 0.0, %v1775
    %v1777 = vpop.f32.mrf.mxu0
    %v1778 = vadd.f32 0.0, %v1777
    %1779 = vmatmul.bf16.gmra.mxu0 %v1642
    %v1780 = vpop.f32.mrf.mxu0
    %v1781 = vadd.f32 0.0, %v1780
    %v1782 = vpop.f32.mrf.mxu0
    %v1783 = vadd.f32 0.0, %v1782
    %1784 = vmatmul.bf16.gmra.mxu0 %v1645
    %v1785 = vpop.f32.mrf.mxu0
    %v1786 = vadd.f32 0.0, %v1785
    %v1787 = vpop.f32.mrf.mxu0
    %v1788 = vadd.f32 0.0, %v1787
    %1789 = vmatmul.bf16.gmra.mxu0 %v1648
    %v1790 = vpop.f32.mrf.mxu0
    %v1791 = vadd.f32 0.0, %v1790
    %v1792 = vpop.f32.mrf.mxu0
    %v1793 = vadd.f32 0.0, %v1792
    %1794 = vmatmul.bf16.gmra.mxu0 %v1651
    %v1795 = vpop.f32.mrf.mxu0
    %v1796 = vadd.f32 0.0, %v1795
    %v1797 = vpop.f32.mrf.mxu0
    %v1798 = vadd.f32 0.0, %v1797
    %1799 = vmatmul.bf16.gmra.mxu0 %v1654
    %v1800 = vpop.f32.mrf.mxu0
    %v1801 = vadd.f32 0.0, %v1800
    %v1802 = vpop.f32.mrf.mxu0
    %v1803 = vadd.f32 0.0, %v1802
    %1804 = vmatmul.bf16.gmra.mxu0 %v1657
    %v1805 = vpop.f32.mrf.mxu0
    %v1806 = vadd.f32 0.0, %v1805
    %v1807 = vpop.f32.mrf.mxu0
    %v1808 = vadd.f32 0.0, %v1807
    %1809 = vmatmul.bf16.gmra.mxu0 %v1660
    %v1810 = vpop.f32.mrf.mxu0
    %v1811 = vadd.f32 0.0, %v1810
    %v1812 = vpop.f32.mrf.mxu0
    %v1813 = vadd.f32 0.0, %v1812
    %1814 = vmatmul.bf16.gmra.mxu0 %v1663
    %v1815 = vpop.f32.mrf.mxu0
    %v1816 = vadd.f32 0.0, %v1815
    %v1817 = vpop.f32.mrf.mxu0
    %v1818 = vadd.f32 0.0, %v1817
    %1819 = vmatmul.bf16.gmra.mxu0 %v1666
    %v1820 = vpop.f32.mrf.mxu0
    %v1821 = vadd.f32 0.0, %v1820
    %v1822 = vpop.f32.mrf.mxu0
    %v1823 = vadd.f32 0.0, %v1822
    %1824 = vmatmul.bf16.gmra.mxu0 %v1669
    %v1825 = vpop.f32.mrf.mxu0
    %v1826 = vadd.f32 0.0, %v1825
    %v1827 = vpop.f32.mrf.mxu0
    %v1828 = vadd.f32 0.0, %v1827
    %1829 = vmatmul.bf16.gmra.mxu0 %v1672
    %v1830 = vpop.f32.mrf.mxu0
    %v1831 = vadd.f32 0.0, %v1830
    %v1832 = vpop.f32.mrf.mxu0
    %v1833 = vadd.f32 0.0, %v1832
    %1834 = vmatmul.bf16.gmra.mxu0 %v1675
    %v1835 = vpop.f32.mrf.mxu0
    %v1836 = vadd.f32 0.0, %v1835
    %v1837 = vpop.f32.mrf.mxu0
    %v1838 = vadd.f32 0.0, %v1837
    %1839 = vmatmul.bf16.gmra.mxu0 %v1678
    %v1840 = vpop.f32.mrf.mxu0
    %v1841 = vadd.f32 0.0, %v1840
    %v1842 = vpop.f32.mrf.mxu0
    %v1843 = vadd.f32 0.0, %v1842
    %1844 = vmatmul.bf16.gmra.mxu0 %v1681
    %v1845 = vpop.f32.mrf.mxu0
    %v1846 = vadd.f32 0.0, %v1845
    %v1847 = vpop.f32.mrf.mxu0
    %v1848 = vadd.f32 0.0, %v1847
    %1849 = vmatmul.bf16.gmra.mxu0 %v1684
    %v1850 = vpop.f32.mrf.mxu0
    %v1851 = vadd.f32 0.0, %v1850
    %v1852 = vpop.f32.mrf.mxu0
    %v1853 = vadd.f32 0.0, %v1852
    %1854 = vmatmul.bf16.gmra.mxu0 %v1687
    %v1855 = vpop.f32.mrf.mxu0
    %v1856 = vadd.f32 0.0, %v1855
    %v1857 = vpop.f32.mrf.mxu0
    %v1858 = vadd.f32 0.0, %v1857
    %1859 = vmatmul.bf16.gmra.mxu0 %v1690
    %v1860 = vpop.f32.mrf.mxu0
    %v1861 = vadd.f32 0.0, %v1860
    %v1862 = vpop.f32.mrf.mxu0
    %v1863 = vadd.f32 0.0, %v1862
    %1864 = vmatmul.bf16.gmra.mxu0 %v1693
    %v1865 = vpop.f32.mrf.mxu0
    %v1866 = vadd.f32 0.0, %v1865
    %v1867 = vpop.f32.mrf.mxu0
    %v1868 = vadd.f32 0.0, %v1867
    %1869 = vmatmul.bf16.gmra.mxu0 %v1696
    %v1870 = vpop.f32.mrf.mxu0
    %v1871 = vadd.f32 0.0, %v1870
    %v1872 = vpop.f32.mrf.mxu0
    %v1873 = vadd.f32 0.0, %v1872
    %1874 = vmatmul.bf16.gmra.mxu0 %v1699
    %v1875 = vpop.f32.mrf.mxu0
    %v1876 = vadd.f32 0.0, %v1875
    %v1877 = vpop.f32.mrf.mxu0
    %v1878 = vadd.f32 0.0, %v1877
    %1879 = vmatmul.bf16.gmra.mxu0 %v1702
    %v1880 = vpop.f32.mrf.mxu0
    %v1881 = vadd.f32 0.0, %v1880
    %v1882 = vpop.f32.mrf.mxu0
    %v1883 = vadd.f32 0.0, %v1882
    %1884 = vmatmul.bf16.gmra.mxu0 %v1705
    %v1885 = vpop.f32.mrf.mxu0
    %v1886 = vadd.f32 0.0, %v1885
    %v1887 = vpop.f32.mrf.mxu0
    %v1888 = vadd.f32 0.0, %v1887
    %1889 = vmatmul.bf16.gmra.mxu0 %v1708
    %v1890 = vpop.f32.mrf.mxu0
    %v1891 = vadd.f32 0.0, %v1890
    %v1892 = vpop.f32.mrf.mxu0
    %v1893 = vadd.f32 0.0, %v1892
    %1894 = vmatmul.bf16.gmra.mxu0 %v1711
    %v1895 = vpop.f32.mrf.mxu0
    %v1896 = vadd.f32 0.0, %v1895
    %v1897 = vpop.f32.mrf.mxu0
    %v1898 = vadd.f32 0.0, %v1897
    %1899 = vmatmul.bf16.gmra.mxu0 %v1714
    %v1900 = vpop.f32.mrf.mxu0
    %v1901 = vadd.f32 0.0, %v1900
    %v1902 = vpop.f32.mrf.mxu0
    %v1903 = vadd.f32 0.0, %v1902
    %1904 = vmatmul.bf16.gmra.mxu0 %v1717
    %v1905 = vpop.f32.mrf.mxu0
    %v1906 = vadd.f32 0.0, %v1905
    %v1907 = vpop.f32.mrf.mxu0
    %v1908 = vadd.f32 0.0, %v1907
    %1909 = vmatmul.bf16.gmra.mxu0 %v1720
    %v1910 = vpop.f32.mrf.mxu0
    %v1911 = vadd.f32 0.0, %v1910
    %v1912 = vpop.f32.mrf.mxu0
    %v1913 = vadd.f32 0.0, %v1912
    %1914 = vmatmul.bf16.gmra.mxu0 %v1723
    %v1915 = vpop.f32.mrf.mxu0
    %v1916 = vadd.f32 0.0, %v1915
    %v1917 = vpop.f32.mrf.mxu0
    %v1918 = vadd.f32 0.0, %v1917
    %1919 = vmatmul.bf16.gmra.mxu0 %v1726
    %v1920 = vpop.f32.mrf.mxu0
    %v1921 = vadd.f32 0.0, %v1920
    %v1922 = vpop.f32.mrf.mxu0
    %v1923 = vadd.f32 0.0, %v1922
    %1924 = vmatmul.bf16.gmra.mxu0 %v1729
    %v1925 = vpop.f32.mrf.mxu0
    %v1926 = vadd.f32 0.0, %v1925
    %v1927 = vpop.f32.mrf.mxu0
    %v1928 = vadd.f32 0.0, %v1927
    %1929 = vmatmul.bf16.gmra.mxu0 %v1732
    %v1930 = vpop.f32.mrf.mxu0
    %v1931 = vadd.f32 0.0, %v1930
    %v1932 = vpop.f32.mrf.mxu0
    %v1933 = vadd.f32 0.0, %v1932
    %1934 = vmatmul.bf16.gmra.mxu0 %v1735
    %v1935 = vpop.f32.mrf.mxu0
    %v1936 = vadd.f32 0.0, %v1935
    %v1937 = vpop.f32.mrf.mxu0
    %v1938 = vadd.f32 0.0, %v1937
    %1939 = vmatmul.bf16.gmra.mxu0 %v1738
    %v1940 = vpop.f32.mrf.mxu0
    %v1941 = vadd.f32 0.0, %v1940
    %v1942 = vpop.f32.mrf.mxu0
    %v1943 = vadd.f32 0.0, %v1942
    %1944 = vmatmul.bf16.gmra.mxu0 %v1741
    %v1945 = vpop.f32.mrf.mxu0
    %v1946 = vadd.f32 0.0, %v1945
    %v1947 = vpop.f32.mrf.mxu0
    %v1948 = vadd.f32 0.0, %v1947
    %1949 = vmatmul.bf16.gmra.mxu0 %v1744
    %v1950 = vpop.f32.mrf.mxu0
    %v1951 = vadd.f32 0.0, %v1950
    %v1952 = vpop.f32.mrf.mxu0
    %v1953 = vadd.f32 0.0, %v1952
    %1954 = vmatmul.bf16.gmra.mxu0 %v1747
    %v1955 = vpop.f32.mrf.mxu0
    %v1956 = vadd.f32 0.0, %v1955
    %v1957 = vpop.f32.mrf.mxu0
    %v1958 = vadd.f32 0.0, %v1957
    %1959 = vmatmul.bf16.gmra.mxu0 %v1750
    %v1960 = vpop.f32.mrf.mxu0
    %v1961 = vadd.f32 0.0, %v1960
    %v1962 = vpop.f32.mrf.mxu0
    %v1963 = vadd.f32 0.0, %v1962
    %1964 = vmatmul.bf16.gmra.mxu0 %v1753
    %v1965 = vpop.f32.mrf.mxu0
    %v1966 = vadd.f32 0.0, %v1965
    %v1967 = vpop.f32.mrf.mxu0
    %v1968 = vadd.f32 0.0, %v1967
    %1969 = vmatmul.bf16.gmra.mxu0 %v1756
    %v1970 = vpop.f32.mrf.mxu0
    %v1971 = vadd.f32 0.0, %v1970
    %v1972 = vpop.f32.mrf.mxu0
    %1973 = vdwg.mxu0
    %v1974 = vadd.f32 %v1430, %v1771
    %v1975 = vadd.f32 %v1431, %v1773
    %v1976 = vadd.f32 %v1432, %v1776
    %v1977 = vadd.f32 %v1433, %v1778
    %v1978 = vadd.f32 %v1434, %v1781
    %v1979 = vadd.f32 %v1435, %v1783
    %v1980 = vadd.f32 %v1436, %v1786
    %v1981 = vadd.f32 %v1437, %v1788
    %v1982 = vadd.f32 %v1438, %v1791
    %v1983 = vadd.f32 %v1439, %v1793
    %v1984 = vadd.f32 %v1440, %v1796
    %v1985 = vadd.f32 %v1441, %v1798
    %v1986 = vadd.f32 %v1442, %v1801
    %v1987 = vadd.f32 %v1443, %v1803
    %v1988 = vadd.f32 %v1444, %v1806
    %v1989 = vadd.f32 %v1445, %v1808
    %v1990 = vadd.f32 %v1446, %v1811
    %v1991 = vadd.f32 %v1447, %v1813
    %v1992 = vadd.f32 %v1448, %v1816
    %v1993 = vadd.f32 %v1449, %v1818
    %v1994 = vadd.f32 %v1450, %v1821
    %v1995 = vadd.f32 %v1451, %v1823
    %v1996 = vadd.f32 %v1452, %v1826
    %v1997 = vadd.f32 %v1453, %v1828
    %v1998 = vadd.f32 %v1454, %v1831
    %v1999 = vadd.f32 %v1455, %v1833
    %v2000 = vadd.f32 %v1456, %v1836
    %v2001 = vadd.f32 %v1457, %v1838
    %v2002 = vadd.f32 %v1458, %v1841
    %v2003 = vadd.f32 %v1459, %v1843
    %v2004 = vadd.f32 %v1460, %v1846
    %v2005 = vadd.f32 %v1461, %v1848
    %v2006 = vadd.f32 %v1462, %v1851
    %v2007 = vadd.f32 %v1463, %v1853
    %v2008 = vadd.f32 %v1464, %v1856
    %v2009 = vadd.f32 %v1465, %v1858
    %v2010 = vadd.f32 %v1466, %v1861
    %v2011 = vadd.f32 %v1467, %v1863
    %v2012 = vadd.f32 %v1468, %v1866
    %v2013 = vadd.f32 %v1469, %v1868
    %v2014 = vadd.f32 %v1470, %v1871
    %v2015 = vadd.f32 %v1471, %v1873
    %v2016 = vadd.f32 %v1472, %v1876
    %v2017 = vadd.f32 %v1473, %v1878
    %v2018 = vadd.f32 %v1474, %v1881
    %v2019 = vadd.f32 %v1475, %v1883
    %v2020 = vadd.f32 %v1476, %v1886
    %v2021 = vadd.f32 %v1477, %v1888
    %v2022 = vadd.f32 %v1478, %v1891
    %v2023 = vadd.f32 %v1479, %v1893
    %v2024 = vadd.f32 %v1480, %v1896
    %v2025 = vadd.f32 %v1481, %v1898
    %v2026 = vadd.f32 %v1482, %v1901
    %v2027 = vadd.f32 %v1483, %v1903
    %v2028 = vadd.f32 %v1484, %v1906
    %v2029 = vadd.f32 %v1485, %v1908
    %v2030 = vadd.f32 %v1486, %v1911
    %v2031 = vadd.f32 %v1487, %v1913
    %v2032 = vadd.f32 %v1488, %v1916
    %v2033 = vadd.f32 %v1489, %v1918
    %v2034 = vadd.f32 %v1490, %v1921
    %v2035 = vadd.f32 %v1491, %v1923
    %v2036 = vadd.f32 %v1492, %v1926
    %v2037 = vadd.f32 %v1493, %v1928
    %v2038 = vadd.f32 %v1494, %v1931
    %v2039 = vadd.f32 %v1495, %v1933
    %v2040 = vadd.f32 %v1496, %v1936
    %v2041 = vadd.f32 %v1497, %v1938
    %v2042 = vadd.f32 %v1498, %v1941
    %v2043 = vadd.f32 %v1499, %v1943
    %v2044 = vadd.f32 %v1500, %v1946
    %v2045 = vadd.f32 %v1501, %v1948
    %v2046 = vadd.f32 %v1502, %v1951
    %v2047 = vadd.f32 %v1503, %v1953
    %v2048 = vadd.f32 %v1504, %v1956
    %v2049 = vadd.f32 %v1505, %v1958
    %v2050 = vadd.f32 %v1506, %v1961
    %v2051 = vadd.f32 %v1507, %v1963
    %v2052 = vadd.f32 %v1508, %v1966
    %v2053 = vadd.f32 %v1509, %v1968
    %v2054 = vadd.f32 %v1510, %v1971
    %v2055 = vld [vmem:[%s0 + $0x26] sm:$0xff]
    %v2056 = vld [vmem:[%s0 + $0x2e] sm:$0xff]
    %v2057 = vld [vmem:[%s0 + $0x36] sm:$0xff]
    %v2058 = vld [vmem:[%s0 + $0x3e] sm:$0xff]
    %v2059 = vld [vmem:[%s0 + $0x46] sm:$0xff]
    %v2060 = vld [vmem:[%s0 + $0x4e] sm:$0xff]
    %v2061 = vld [vmem:[%s0 + $0x56] sm:$0xff]
    %v2062 = vld [vmem:[%s0 + $0x5e] sm:$0xff]
    %v2063 = vld [vmem:[%s0 + $0x66] sm:$0xff]
    %v2064 = vld [vmem:[%s0 + $0x6e] sm:$0xff]
    %v2065 = vld [vmem:[%s0 + $0x76] sm:$0xff]
    %v2066 = vld [vmem:[%s0 + $0x7e] sm:$0xff]
    %v2067 = vld [vmem:[%s0 + $0x86] sm:$0xff]
    %v2068 = vld [vmem:[%s0 + $0x8e] sm:$0xff]
    %v2069 = vld [vmem:[%s0 + $0x96] sm:$0xff]
    %v2070 = vld [vmem:[%s0 + $0x9e] sm:$0xff]
    %v2071 = vld [vmem:[%s0 + $0xa6] sm:$0xff]
    %v2072 = vld [vmem:[%s0 + $0xae] sm:$0xff]
    %v2073 = vld [vmem:[%s0 + $0xb6] sm:$0xff]
    %v2074 = vld [vmem:[%s0 + $0xbe] sm:$0xff]
    %v2075 = vld [vmem:[%s0 + $0xc6] sm:$0xff]
    %v2076 = vld [vmem:[%s0 + $0xce] sm:$0xff]
    %v2077 = vld [vmem:[%s0 + $0xd6] sm:$0xff]
    %v2078 = vld [vmem:[%s0 + $0xde] sm:$0xff]
    %v2079 = vld [vmem:[%s0 + $0xe6] sm:$0xff]
    %v2080 = vld [vmem:[%s0 + $0xee] sm:$0xff]
    %v2081 = vld [vmem:[%s0 + $0xf6] sm:$0xff]
    %v2082 = vld [vmem:[%s0 + $0xfe] sm:$0xff]
    %v2083 = vld [vmem:[%s0 + $0x106] sm:$0xff]
    %v2084 = vld [vmem:[%s0 + $0x10e] sm:$0xff]
    %v2085 = vld [vmem:[%s0 + $0x116] sm:$0xff]
    %v2086 = vld [vmem:[%s0 + $0x11e] sm:$0xff]
    %v2087 = vld [vmem:[%s0 + $0x126] sm:$0xff]
    %v2088 = vld [vmem:[%s0 + $0x12e] sm:$0xff]
    %v2089 = vld [vmem:[%s0 + $0x136] sm:$0xff]
    %v2090 = vld [vmem:[%s0 + $0x13e] sm:$0xff]
    %v2091 = vld [vmem:[%s0 + $0x146] sm:$0xff]
    %v2092 = vld [vmem:[%s0 + $0x14e] sm:$0xff]
    %v2093 = vld [vmem:[%s0 + $0x156] sm:$0xff]
    %v2094 = vld [vmem:[%s0 + $0x15e] sm:$0xff]
    %v2095 = vld [vmem:[%s0 + $0x166] sm:$0xff]
    %v2096 = vld [vmem:[%s0 + $0x16e] sm:$0xff]
    %v2097 = vld [vmem:[%s0 + $0x176] sm:$0xff]
    %v2098 = vld [vmem:[%s0 + $0x17e] sm:$0xff]
    %v2099 = vld [vmem:[%s0 + $0x186] sm:$0xff]
    %v2100 = vld [vmem:[%s0 + $0x18e] sm:$0xff]
    %v2101 = vld [vmem:[%s0 + $0x196] sm:$0xff]
    %v2102 = vld [vmem:[%s0 + $0x19e] sm:$0xff]
    %v2103 = vld [vmem:[%s0 + $0x1a6] sm:$0xff]
    %v2104 = vld [vmem:[%s0 + $0x1ae] sm:$0xff]
    %v2105 = vld [vmem:[%s0 + $0x1b6] sm:$0xff]
    %v2106 = vld [vmem:[%s0 + $0x1be] sm:$0xff]
    %v2107 = vld [vmem:[%s0 + $0x1c6] sm:$0xff]
    %v2108 = vld [vmem:[%s0 + $0x1ce] sm:$0xff]
    %v2109 = vld [vmem:[%s0 + $0x1d6] sm:$0xff]
    %v2110 = vld [vmem:[%s0 + $0x1de] sm:$0xff]
    %v2111 = vld [vmem:[%s0 + $0x1e6] sm:$0xff]
    %v2112 = vld [vmem:[%s0 + $0x1ee] sm:$0xff]
    %v2113 = vld [vmem:[%s0 + $0x1f6] sm:$0xff]
    %v2114 = vld [vmem:[%s0 + $0x1fe] sm:$0xff]
    %v2115 = vld [vmem:[%s0 + $0x206] sm:$0xff]
    %v2116 = vld [vmem:[%s0 + $0x20e] sm:$0xff]
    %v2117 = vld [vmem:[%s0 + $0x216] sm:$0xff]
    %v2118 = vld [vmem:[%s0 + $0x21e] sm:$0xff]
    %v2119 = vld [vmem:[%s0 + $0x226] sm:$0xff]
    %v2120 = vld [vmem:[%s0 + $0x22e] sm:$0xff]
    %v2121 = vld [vmem:[%s0 + $0x236] sm:$0xff]
    %v2122 = vld [vmem:[%s0 + $0x23e] sm:$0xff]
    %v2123 = vld [vmem:[%s0 + $0x246] sm:$0xff]
    %v2124 = vld [vmem:[%s0 + $0x24e] sm:$0xff]
    %v2125 = vld [vmem:[%s0 + $0x256] sm:$0xff]
    %v2126 = vld [vmem:[%s0 + $0x25e] sm:$0xff]
    %v2127 = vld [vmem:[%s0 + $0x266] sm:$0xff]
    %v2128 = vld [vmem:[%s0 + $0x26e] sm:$0xff]
    %v2129 = vld [vmem:[%s0 + $0x276] sm:$0xff]
    %v2130 = vld [vmem:[%s0 + $0x27e] sm:$0xff]
    %v2131 = vld [vmem:[%s0 + $0x286] sm:$0xff]
    %v2132 = vld [vmem:[%s0 + $0x28e] sm:$0xff]
    %v2133 = vld [vmem:[%s0 + $0x296] sm:$0xff]
    %v2134 = vld [vmem:[%s0 + $0x29e] sm:$0xff]
    %v2135 = vld [vmem:[%s0 + $0x2a6] sm:$0xff]
    %v2136 = vpack.c.bf16 %v2056, %v2055
    %v2137 = vpack.c.bf16 %v2058, %v2057
    %v2138 = vpack.c.bf16 %v2060, %v2059
    %v2139 = vpack.c.bf16 %v2062, %v2061
    %v2140 = vpack.c.bf16 %v2064, %v2063
    %v2141 = vpack.c.bf16 %v2066, %v2065
    %v2142 = vpack.c.bf16 %v2068, %v2067
    %v2143 = vpack.c.bf16 %v2070, %v2069
    %v2144 = vpack.c.bf16 %v2072, %v2071
    %v2145 = vpack.c.bf16 %v2074, %v2073
    %v2146 = vpack.c.bf16 %v2076, %v2075
    %v2147 = vpack.c.bf16 %v2078, %v2077
    %v2148 = vpack.c.bf16 %v2080, %v2079
    %v2149 = vpack.c.bf16 %v2082, %v2081
    %v2150 = vpack.c.bf16 %v2084, %v2083
    %v2151 = vpack.c.bf16 %v2086, %v2085
    %v2152 = vpack.c.bf16 %v2088, %v2087
    %v2153 = vpack.c.bf16 %v2090, %v2089
    %v2154 = vpack.c.bf16 %v2092, %v2091
    %v2155 = vpack.c.bf16 %v2094, %v2093
    %v2156 = vpack.c.bf16 %v2096, %v2095
    %v2157 = vpack.c.bf16 %v2098, %v2097
    %v2158 = vpack.c.bf16 %v2100, %v2099
    %v2159 = vpack.c.bf16 %v2102, %v2101
    %v2160 = vpack.c.bf16 %v2104, %v2103
    %v2161 = vpack.c.bf16 %v2106, %v2105
    %v2162 = vpack.c.bf16 %v2108, %v2107
    %v2163 = vpack.c.bf16 %v2110, %v2109
    %v2164 = vpack.c.bf16 %v2112, %v2111
    %v2165 = vpack.c.bf16 %v2114, %v2113
    %v2166 = vpack.c.bf16 %v2116, %v2115
    %v2167 = vpack.c.bf16 %v2118, %v2117
    %v2168 = vpack.c.bf16 %v2120, %v2119
    %v2169 = vpack.c.bf16 %v2122, %v2121
    %v2170 = vpack.c.bf16 %v2124, %v2123
    %v2171 = vpack.c.bf16 %v2126, %v2125
    %v2172 = vpack.c.bf16 %v2128, %v2127
    %v2173 = vpack.c.bf16 %v2130, %v2129
    %v2174 = vpack.c.bf16 %v2132, %v2131
    %v2175 = vpack.c.bf16 %v2134, %v2133
    %v2176 = vpack.c.bf16 %v2135, %v2135
    %s2177 = scalar_lea.vmem %s1, 8
    %v2178 = vld [vmem:[%s2177] sm:$0x3]
    %v2180 = vsel %vm287, %v2136, 0
    %v2183 = vsel %vm287, %v2137, 0
    %v2186 = vsel %vm287, %v2138, 0
    %v2189 = vsel %vm287, %v2139, 0
    %v2192 = vsel %vm287, %v2140, 0
    %v2195 = vsel %vm287, %v2141, 0
    %v2198 = vsel %vm287, %v2142, 0
    %v2201 = vsel %vm287, %v2143, 0
    %v2204 = vsel %vm287, %v2144, 0
    %v2207 = vsel %vm287, %v2145, 0
    %v2210 = vsel %vm287, %v2146, 0
    %v2213 = vsel %vm287, %v2147, 0
    %v2216 = vsel %vm287, %v2148, 0
    %v2219 = vsel %vm287, %v2149, 0
    %v2222 = vsel %vm287, %v2150, 0
    %v2225 = vsel %vm287, %v2151, 0
    %v2228 = vsel %vm287, %v2152, 0
    %v2231 = vsel %vm287, %v2153, 0
    %v2234 = vsel %vm287, %v2154, 0
    %v2237 = vsel %vm287, %v2155, 0
    %v2240 = vsel %vm287, %v2156, 0
    %v2243 = vsel %vm287, %v2157, 0
    %v2246 = vsel %vm287, %v2158, 0
    %v2249 = vsel %vm287, %v2159, 0
    %v2252 = vsel %vm287, %v2160, 0
    %v2255 = vsel %vm287, %v2161, 0
    %v2258 = vsel %vm287, %v2162, 0
    %v2261 = vsel %vm287, %v2163, 0
    %v2264 = vsel %vm287, %v2164, 0
    %v2267 = vsel %vm287, %v2165, 0
    %v2270 = vsel %vm287, %v2166, 0
    %v2273 = vsel %vm287, %v2167, 0
    %v2276 = vsel %vm287, %v2168, 0
    %v2279 = vsel %vm287, %v2169, 0
    %v2282 = vsel %vm287, %v2170, 0
    %v2285 = vsel %vm287, %v2171, 0
    %v2288 = vsel %vm287, %v2172, 0
    %v2291 = vsel %vm287, %v2173, 0
    %v2294 = vsel %vm287, %v2174, 0
    %v2297 = vsel %vm287, %v2175, 0
    %v2300 = vsel %vm287, %v2176, 0
    %v2303 = vsel %vm411, %v2178, 0
    %2305 = vmatpush.bf16.msra.mxu0 0
    %2306 = vmatpush.bf16.msra.mxu0 0
    %2307 = vmatpush.bf16.msra.mxu0 0
    %2308 = vmatpush.bf16.msra.mxu0 0
    %2309 = vmatpush.bf16.msra.mxu0 0
    %2310 = vmatpush.bf16.msra.mxu0 0
    %2311 = vmatpush.bf16.msra.mxu0 0
    %2312 = vmatpush.bf16.msra.mxu0 %v2303
    %2313 = vmatmul.bf16.gmra.mxu0 %v2180
    %v2314 = vpop.f32.mrf.mxu0
    %v2315 = vadd.f32 0.0, %v2314
    %v2316 = vpop.f32.mrf.mxu0
    %v2317 = vadd.f32 0.0, %v2316
    %2318 = vmatmul.bf16.gmra.mxu0 %v2183
    %v2319 = vpop.f32.mrf.mxu0
    %v2320 = vadd.f32 0.0, %v2319
    %v2321 = vpop.f32.mrf.mxu0
    %v2322 = vadd.f32 0.0, %v2321
    %2323 = vmatmul.bf16.gmra.mxu0 %v2186
    %v2324 = vpop.f32.mrf.mxu0
    %v2325 = vadd.f32 0.0, %v2324
    %v2326 = vpop.f32.mrf.mxu0
    %v2327 = vadd.f32 0.0, %v2326
    %2328 = vmatmul.bf16.gmra.mxu0 %v2189
    %v2329 = vpop.f32.mrf.mxu0
    %v2330 = vadd.f32 0.0, %v2329
    %v2331 = vpop.f32.mrf.mxu0
    %v2332 = vadd.f32 0.0, %v2331
    %2333 = vmatmul.bf16.gmra.mxu0 %v2192
    %v2334 = vpop.f32.mrf.mxu0
    %v2335 = vadd.f32 0.0, %v2334
    %v2336 = vpop.f32.mrf.mxu0
    %v2337 = vadd.f32 0.0, %v2336
    %2338 = vmatmul.bf16.gmra.mxu0 %v2195
    %v2339 = vpop.f32.mrf.mxu0
    %v2340 = vadd.f32 0.0, %v2339
    %v2341 = vpop.f32.mrf.mxu0
    %v2342 = vadd.f32 0.0, %v2341
    %2343 = vmatmul.bf16.gmra.mxu0 %v2198
    %v2344 = vpop.f32.mrf.mxu0
    %v2345 = vadd.f32 0.0, %v2344
    %v2346 = vpop.f32.mrf.mxu0
    %v2347 = vadd.f32 0.0, %v2346
    %2348 = vmatmul.bf16.gmra.mxu0 %v2201
    %v2349 = vpop.f32.mrf.mxu0
    %v2350 = vadd.f32 0.0, %v2349
    %v2351 = vpop.f32.mrf.mxu0
    %v2352 = vadd.f32 0.0, %v2351
    %2353 = vmatmul.bf16.gmra.mxu0 %v2204
    %v2354 = vpop.f32.mrf.mxu0
    %v2355 = vadd.f32 0.0, %v2354
    %v2356 = vpop.f32.mrf.mxu0
    %v2357 = vadd.f32 0.0, %v2356
    %2358 = vmatmul.bf16.gmra.mxu0 %v2207
    %v2359 = vpop.f32.mrf.mxu0
    %v2360 = vadd.f32 0.0, %v2359
    %v2361 = vpop.f32.mrf.mxu0
    %v2362 = vadd.f32 0.0, %v2361
    %2363 = vmatmul.bf16.gmra.mxu0 %v2210
    %v2364 = vpop.f32.mrf.mxu0
    %v2365 = vadd.f32 0.0, %v2364
    %v2366 = vpop.f32.mrf.mxu0
    %v2367 = vadd.f32 0.0, %v2366
    %2368 = vmatmul.bf16.gmra.mxu0 %v2213
    %v2369 = vpop.f32.mrf.mxu0
    %v2370 = vadd.f32 0.0, %v2369
    %v2371 = vpop.f32.mrf.mxu0
    %v2372 = vadd.f32 0.0, %v2371
    %2373 = vmatmul.bf16.gmra.mxu0 %v2216
    %v2374 = vpop.f32.mrf.mxu0
    %v2375 = vadd.f32 0.0, %v2374
    %v2376 = vpop.f32.mrf.mxu0
    %v2377 = vadd.f32 0.0, %v2376
    %2378 = vmatmul.bf16.gmra.mxu0 %v2219
    %v2379 = vpop.f32.mrf.mxu0
    %v2380 = vadd.f32 0.0, %v2379
    %v2381 = vpop.f32.mrf.mxu0
    %v2382 = vadd.f32 0.0, %v2381
    %2383 = vmatmul.bf16.gmra.mxu0 %v2222
    %v2384 = vpop.f32.mrf.mxu0
    %v2385 = vadd.f32 0.0, %v2384
    %v2386 = vpop.f32.mrf.mxu0
    %v2387 = vadd.f32 0.0, %v2386
    %2388 = vmatmul.bf16.gmra.mxu0 %v2225
    %v2389 = vpop.f32.mrf.mxu0
    %v2390 = vadd.f32 0.0, %v2389
    %v2391 = vpop.f32.mrf.mxu0
    %v2392 = vadd.f32 0.0, %v2391
    %2393 = vmatmul.bf16.gmra.mxu0 %v2228
    %v2394 = vpop.f32.mrf.mxu0
    %v2395 = vadd.f32 0.0, %v2394
    %v2396 = vpop.f32.mrf.mxu0
    %v2397 = vadd.f32 0.0, %v2396
    %2398 = vmatmul.bf16.gmra.mxu0 %v2231
    %v2399 = vpop.f32.mrf.mxu0
    %v2400 = vadd.f32 0.0, %v2399
    %v2401 = vpop.f32.mrf.mxu0
    %v2402 = vadd.f32 0.0, %v2401
    %2403 = vmatmul.bf16.gmra.mxu0 %v2234
    %v2404 = vpop.f32.mrf.mxu0
    %v2405 = vadd.f32 0.0, %v2404
    %v2406 = vpop.f32.mrf.mxu0
    %v2407 = vadd.f32 0.0, %v2406
    %2408 = vmatmul.bf16.gmra.mxu0 %v2237
    %v2409 = vpop.f32.mrf.mxu0
    %v2410 = vadd.f32 0.0, %v2409
    %v2411 = vpop.f32.mrf.mxu0
    %v2412 = vadd.f32 0.0, %v2411
    %2413 = vmatmul.bf16.gmra.mxu0 %v2240
    %v2414 = vpop.f32.mrf.mxu0
    %v2415 = vadd.f32 0.0, %v2414
    %v2416 = vpop.f32.mrf.mxu0
    %v2417 = vadd.f32 0.0, %v2416
    %2418 = vmatmul.bf16.gmra.mxu0 %v2243
    %v2419 = vpop.f32.mrf.mxu0
    %v2420 = vadd.f32 0.0, %v2419
    %v2421 = vpop.f32.mrf.mxu0
    %v2422 = vadd.f32 0.0, %v2421
    %2423 = vmatmul.bf16.gmra.mxu0 %v2246
    %v2424 = vpop.f32.mrf.mxu0
    %v2425 = vadd.f32 0.0, %v2424
    %v2426 = vpop.f32.mrf.mxu0
    %v2427 = vadd.f32 0.0, %v2426
    %2428 = vmatmul.bf16.gmra.mxu0 %v2249
    %v2429 = vpop.f32.mrf.mxu0
    %v2430 = vadd.f32 0.0, %v2429
    %v2431 = vpop.f32.mrf.mxu0
    %v2432 = vadd.f32 0.0, %v2431
    %2433 = vmatmul.bf16.gmra.mxu0 %v2252
    %v2434 = vpop.f32.mrf.mxu0
    %v2435 = vadd.f32 0.0, %v2434
    %v2436 = vpop.f32.mrf.mxu0
    %v2437 = vadd.f32 0.0, %v2436
    %2438 = vmatmul.bf16.gmra.mxu0 %v2255
    %v2439 = vpop.f32.mrf.mxu0
    %v2440 = vadd.f32 0.0, %v2439
    %v2441 = vpop.f32.mrf.mxu0
    %v2442 = vadd.f32 0.0, %v2441
    %2443 = vmatmul.bf16.gmra.mxu0 %v2258
    %v2444 = vpop.f32.mrf.mxu0
    %v2445 = vadd.f32 0.0, %v2444
    %v2446 = vpop.f32.mrf.mxu0
    %v2447 = vadd.f32 0.0, %v2446
    %2448 = vmatmul.bf16.gmra.mxu0 %v2261
    %v2449 = vpop.f32.mrf.mxu0
    %v2450 = vadd.f32 0.0, %v2449
    %v2451 = vpop.f32.mrf.mxu0
    %v2452 = vadd.f32 0.0, %v2451
    %2453 = vmatmul.bf16.gmra.mxu0 %v2264
    %v2454 = vpop.f32.mrf.mxu0
    %v2455 = vadd.f32 0.0, %v2454
    %v2456 = vpop.f32.mrf.mxu0
    %v2457 = vadd.f32 0.0, %v2456
    %2458 = vmatmul.bf16.gmra.mxu0 %v2267
    %v2459 = vpop.f32.mrf.mxu0
    %v2460 = vadd.f32 0.0, %v2459
    %v2461 = vpop.f32.mrf.mxu0
    %v2462 = vadd.f32 0.0, %v2461
    %2463 = vmatmul.bf16.gmra.mxu0 %v2270
    %v2464 = vpop.f32.mrf.mxu0
    %v2465 = vadd.f32 0.0, %v2464
    %v2466 = vpop.f32.mrf.mxu0
    %v2467 = vadd.f32 0.0, %v2466
    %2468 = vmatmul.bf16.gmra.mxu0 %v2273
    %v2469 = vpop.f32.mrf.mxu0
    %v2470 = vadd.f32 0.0, %v2469
    %v2471 = vpop.f32.mrf.mxu0
    %v2472 = vadd.f32 0.0, %v2471
    %2473 = vmatmul.bf16.gmra.mxu0 %v2276
    %v2474 = vpop.f32.mrf.mxu0
    %v2475 = vadd.f32 0.0, %v2474
    %v2476 = vpop.f32.mrf.mxu0
    %v2477 = vadd.f32 0.0, %v2476
    %2478 = vmatmul.bf16.gmra.mxu0 %v2279
    %v2479 = vpop.f32.mrf.mxu0
    %v2480 = vadd.f32 0.0, %v2479
    %v2481 = vpop.f32.mrf.mxu0
    %v2482 = vadd.f32 0.0, %v2481
    %2483 = vmatmul.bf16.gmra.mxu0 %v2282
    %v2484 = vpop.f32.mrf.mxu0
    %v2485 = vadd.f32 0.0, %v2484
    %v2486 = vpop.f32.mrf.mxu0
    %v2487 = vadd.f32 0.0, %v2486
    %2488 = vmatmul.bf16.gmra.mxu0 %v2285
    %v2489 = vpop.f32.mrf.mxu0
    %v2490 = vadd.f32 0.0, %v2489
    %v2491 = vpop.f32.mrf.mxu0
    %v2492 = vadd.f32 0.0, %v2491
    %2493 = vmatmul.bf16.gmra.mxu0 %v2288
    %v2494 = vpop.f32.mrf.mxu0
    %v2495 = vadd.f32 0.0, %v2494
    %v2496 = vpop.f32.mrf.mxu0
    %v2497 = vadd.f32 0.0, %v2496
    %2498 = vmatmul.bf16.gmra.mxu0 %v2291
    %v2499 = vpop.f32.mrf.mxu0
    %v2500 = vadd.f32 0.0, %v2499
    %v2501 = vpop.f32.mrf.mxu0
    %v2502 = vadd.f32 0.0, %v2501
    %2503 = vmatmul.bf16.gmra.mxu0 %v2294
    %v2504 = vpop.f32.mrf.mxu0
    %v2505 = vadd.f32 0.0, %v2504
    %v2506 = vpop.f32.mrf.mxu0
    %v2507 = vadd.f32 0.0, %v2506
    %2508 = vmatmul.bf16.gmra.mxu0 %v2297
    %v2509 = vpop.f32.mrf.mxu0
    %v2510 = vadd.f32 0.0, %v2509
    %v2511 = vpop.f32.mrf.mxu0
    %v2512 = vadd.f32 0.0, %v2511
    %2513 = vmatmul.bf16.gmra.mxu0 %v2300
    %v2514 = vpop.f32.mrf.mxu0
    %v2515 = vadd.f32 0.0, %v2514
    %v2516 = vpop.f32.mrf.mxu0
    %2517 = vdwg.mxu0
    %v2518 = vadd.f32 %v1974, %v2315
    %v2519 = vadd.f32 %v1975, %v2317
    %v2520 = vadd.f32 %v1976, %v2320
    %v2521 = vadd.f32 %v1977, %v2322
    %v2522 = vadd.f32 %v1978, %v2325
    %v2523 = vadd.f32 %v1979, %v2327
    %v2524 = vadd.f32 %v1980, %v2330
    %v2525 = vadd.f32 %v1981, %v2332
    %v2526 = vadd.f32 %v1982, %v2335
    %v2527 = vadd.f32 %v1983, %v2337
    %v2528 = vadd.f32 %v1984, %v2340
    %v2529 = vadd.f32 %v1985, %v2342
    %v2530 = vadd.f32 %v1986, %v2345
    %v2531 = vadd.f32 %v1987, %v2347
    %v2532 = vadd.f32 %v1988, %v2350
    %v2533 = vadd.f32 %v1989, %v2352
    %v2534 = vadd.f32 %v1990, %v2355
    %v2535 = vadd.f32 %v1991, %v2357
    %v2536 = vadd.f32 %v1992, %v2360
    %v2537 = vadd.f32 %v1993, %v2362
    %v2538 = vadd.f32 %v1994, %v2365
    %v2539 = vadd.f32 %v1995, %v2367
    %v2540 = vadd.f32 %v1996, %v2370
    %v2541 = vadd.f32 %v1997, %v2372
    %v2542 = vadd.f32 %v1998, %v2375
    %v2543 = vadd.f32 %v1999, %v2377
    %v2544 = vadd.f32 %v2000, %v2380
    %v2545 = vadd.f32 %v2001, %v2382
    %v2546 = vadd.f32 %v2002, %v2385
    %v2547 = vadd.f32 %v2003, %v2387
    %v2548 = vadd.f32 %v2004, %v2390
    %v2549 = vadd.f32 %v2005, %v2392
    %v2550 = vadd.f32 %v2006, %v2395
    %v2551 = vadd.f32 %v2007, %v2397
    %v2552 = vadd.f32 %v2008, %v2400
    %v2553 = vadd.f32 %v2009, %v2402
    %v2554 = vadd.f32 %v2010, %v2405
    %v2555 = vadd.f32 %v2011, %v2407
    %v2556 = vadd.f32 %v2012, %v2410
    %v2557 = vadd.f32 %v2013, %v2412
    %v2558 = vadd.f32 %v2014, %v2415
    %v2559 = vadd.f32 %v2015, %v2417
    %v2560 = vadd.f32 %v2016, %v2420
    %v2561 = vadd.f32 %v2017, %v2422
    %v2562 = vadd.f32 %v2018, %v2425
    %v2563 = vadd.f32 %v2019, %v2427
    %v2564 = vadd.f32 %v2020, %v2430
    %v2565 = vadd.f32 %v2021, %v2432
    %v2566 = vadd.f32 %v2022, %v2435
    %v2567 = vadd.f32 %v2023, %v2437
    %v2568 = vadd.f32 %v2024, %v2440
    %v2569 = vadd.f32 %v2025, %v2442
    %v2570 = vadd.f32 %v2026, %v2445
    %v2571 = vadd.f32 %v2027, %v2447
    %v2572 = vadd.f32 %v2028, %v2450
    %v2573 = vadd.f32 %v2029, %v2452
    %v2574 = vadd.f32 %v2030, %v2455
    %v2575 = vadd.f32 %v2031, %v2457
    %v2576 = vadd.f32 %v2032, %v2460
    %v2577 = vadd.f32 %v2033, %v2462
    %v2578 = vadd.f32 %v2034, %v2465
    %v2579 = vadd.f32 %v2035, %v2467
    %v2580 = vadd.f32 %v2036, %v2470
    %v2581 = vadd.f32 %v2037, %v2472
    %v2582 = vadd.f32 %v2038, %v2475
    %v2583 = vadd.f32 %v2039, %v2477
    %v2584 = vadd.f32 %v2040, %v2480
    %v2585 = vadd.f32 %v2041, %v2482
    %v2586 = vadd.f32 %v2042, %v2485
    %v2587 = vadd.f32 %v2043, %v2487
    %v2588 = vadd.f32 %v2044, %v2490
    %v2589 = vadd.f32 %v2045, %v2492
    %v2590 = vadd.f32 %v2046, %v2495
    %v2591 = vadd.f32 %v2047, %v2497
    %v2592 = vadd.f32 %v2048, %v2500
    %v2593 = vadd.f32 %v2049, %v2502
    %v2594 = vadd.f32 %v2050, %v2505
    %v2595 = vadd.f32 %v2051, %v2507
    %v2596 = vadd.f32 %v2052, %v2510
    %v2597 = vadd.f32 %v2053, %v2512
    %v2598 = vadd.f32 %v2054, %v2515
    %v2599 = vld [vmem:[%s0 + $0x28] sm:$0xff]
    %v2600 = vld [vmem:[%s0 + $0x30] sm:$0xff]
    %v2601 = vld [vmem:[%s0 + $0x38] sm:$0xff]
    %v2602 = vld [vmem:[%s0 + $0x40] sm:$0xff]
    %v2603 = vld [vmem:[%s0 + $0x48] sm:$0xff]
    %v2604 = vld [vmem:[%s0 + $0x50] sm:$0xff]
    %v2605 = vld [vmem:[%s0 + $0x58] sm:$0xff]
    %v2606 = vld [vmem:[%s0 + $0x60] sm:$0xff]
    %v2607 = vld [vmem:[%s0 + $0x68] sm:$0xff]
    %v2608 = vld [vmem:[%s0 + $0x70] sm:$0xff]
    %v2609 = vld [vmem:[%s0 + $0x78] sm:$0xff]
    %v2610 = vld [vmem:[%s0 + $0x80] sm:$0xff]
    %v2611 = vld [vmem:[%s0 + $0x88] sm:$0xff]
    %v2612 = vld [vmem:[%s0 + $0x90] sm:$0xff]
    %v2613 = vld [vmem:[%s0 + $0x98] sm:$0xff]
    %v2614 = vld [vmem:[%s0 + $0xa0] sm:$0xff]
    %v2615 = vld [vmem:[%s0 + $0xa8] sm:$0xff]
    %v2616 = vld [vmem:[%s0 + $0xb0] sm:$0xff]
    %v2617 = vld [vmem:[%s0 + $0xb8] sm:$0xff]
    %v2618 = vld [vmem:[%s0 + $0xc0] sm:$0xff]
    %v2619 = vld [vmem:[%s0 + $0xc8] sm:$0xff]
    %v2620 = vld [vmem:[%s0 + $0xd0] sm:$0xff]
    %v2621 = vld [vmem:[%s0 + $0xd8] sm:$0xff]
    %v2622 = vld [vmem:[%s0 + $0xe0] sm:$0xff]
    %v2623 = vld [vmem:[%s0 + $0xe8] sm:$0xff]
    %v2624 = vld [vmem:[%s0 + $0xf0] sm:$0xff]
    %v2625 = vld [vmem:[%s0 + $0xf8] sm:$0xff]
    %v2626 = vld [vmem:[%s0 + $0x100] sm:$0xff]
    %v2627 = vld [vmem:[%s0 + $0x108] sm:$0xff]
    %v2628 = vld [vmem:[%s0 + $0x110] sm:$0xff]
    %v2629 = vld [vmem:[%s0 + $0x118] sm:$0xff]
    %v2630 = vld [vmem:[%s0 + $0x120] sm:$0xff]
    %v2631 = vld [vmem:[%s0 + $0x128] sm:$0xff]
    %v2632 = vld [vmem:[%s0 + $0x130] sm:$0xff]
    %v2633 = vld [vmem:[%s0 + $0x138] sm:$0xff]
    %v2634 = vld [vmem:[%s0 + $0x140] sm:$0xff]
    %v2635 = vld [vmem:[%s0 + $0x148] sm:$0xff]
    %v2636 = vld [vmem:[%s0 + $0x150] sm:$0xff]
    %v2637 = vld [vmem:[%s0 + $0x158] sm:$0xff]
    %v2638 = vld [vmem:[%s0 + $0x160] sm:$0xff]
    %v2639 = vld [vmem:[%s0 + $0x168] sm:$0xff]
    %v2640 = vld [vmem:[%s0 + $0x170] sm:$0xff]
    %v2641 = vld [vmem:[%s0 + $0x178] sm:$0xff]
    %v2642 = vld [vmem:[%s0 + $0x180] sm:$0xff]
    %v2643 = vld [vmem:[%s0 + $0x188] sm:$0xff]
    %v2644 = vld [vmem:[%s0 + $0x190] sm:$0xff]
    %v2645 = vld [vmem:[%s0 + $0x198] sm:$0xff]
    %v2646 = vld [vmem:[%s0 + $0x1a0] sm:$0xff]
    %v2647 = vld [vmem:[%s0 + $0x1a8] sm:$0xff]
    %v2648 = vld [vmem:[%s0 + $0x1b0] sm:$0xff]
    %v2649 = vld [vmem:[%s0 + $0x1b8] sm:$0xff]
    %v2650 = vld [vmem:[%s0 + $0x1c0] sm:$0xff]
    %v2651 = vld [vmem:[%s0 + $0x1c8] sm:$0xff]
    %v2652 = vld [vmem:[%s0 + $0x1d0] sm:$0xff]
    %v2653 = vld [vmem:[%s0 + $0x1d8] sm:$0xff]
    %v2654 = vld [vmem:[%s0 + $0x1e0] sm:$0xff]
    %v2655 = vld [vmem:[%s0 + $0x1e8] sm:$0xff]
    %v2656 = vld [vmem:[%s0 + $0x1f0] sm:$0xff]
    %v2657 = vld [vmem:[%s0 + $0x1f8] sm:$0xff]
    %v2658 = vld [vmem:[%s0 + $0x200] sm:$0xff]
    %v2659 = vld [vmem:[%s0 + $0x208] sm:$0xff]
    %v2660 = vld [vmem:[%s0 + $0x210] sm:$0xff]
    %v2661 = vld [vmem:[%s0 + $0x218] sm:$0xff]
    %v2662 = vld [vmem:[%s0 + $0x220] sm:$0xff]
    %v2663 = vld [vmem:[%s0 + $0x228] sm:$0xff]
    %v2664 = vld [vmem:[%s0 + $0x230] sm:$0xff]
    %v2665 = vld [vmem:[%s0 + $0x238] sm:$0xff]
    %v2666 = vld [vmem:[%s0 + $0x240] sm:$0xff]
    %v2667 = vld [vmem:[%s0 + $0x248] sm:$0xff]
    %v2668 = vld [vmem:[%s0 + $0x250] sm:$0xff]
    %v2669 = vld [vmem:[%s0 + $0x258] sm:$0xff]
    %v2670 = vld [vmem:[%s0 + $0x260] sm:$0xff]
    %v2671 = vld [vmem:[%s0 + $0x268] sm:$0xff]
    %v2672 = vld [vmem:[%s0 + $0x270] sm:$0xff]
    %v2673 = vld [vmem:[%s0 + $0x278] sm:$0xff]
    %v2674 = vld [vmem:[%s0 + $0x280] sm:$0xff]
    %v2675 = vld [vmem:[%s0 + $0x288] sm:$0xff]
    %v2676 = vld [vmem:[%s0 + $0x290] sm:$0xff]
    %v2677 = vld [vmem:[%s0 + $0x298] sm:$0xff]
    %v2678 = vld [vmem:[%s0 + $0x2a0] sm:$0xff]
    %v2679 = vld [vmem:[%s0 + $0x2a8] sm:$0xff]
    %v2680 = vpack.c.bf16 %v2600, %v2599
    %v2681 = vpack.c.bf16 %v2602, %v2601
    %v2682 = vpack.c.bf16 %v2604, %v2603
    %v2683 = vpack.c.bf16 %v2606, %v2605
    %v2684 = vpack.c.bf16 %v2608, %v2607
    %v2685 = vpack.c.bf16 %v2610, %v2609
    %v2686 = vpack.c.bf16 %v2612, %v2611
    %v2687 = vpack.c.bf16 %v2614, %v2613
    %v2688 = vpack.c.bf16 %v2616, %v2615
    %v2689 = vpack.c.bf16 %v2618, %v2617
    %v2690 = vpack.c.bf16 %v2620, %v2619
    %v2691 = vpack.c.bf16 %v2622, %v2621
    %v2692 = vpack.c.bf16 %v2624, %v2623
    %v2693 = vpack.c.bf16 %v2626, %v2625
    %v2694 = vpack.c.bf16 %v2628, %v2627
    %v2695 = vpack.c.bf16 %v2630, %v2629
    %v2696 = vpack.c.bf16 %v2632, %v2631
    %v2697 = vpack.c.bf16 %v2634, %v2633
    %v2698 = vpack.c.bf16 %v2636, %v2635
    %v2699 = vpack.c.bf16 %v2638, %v2637
    %v2700 = vpack.c.bf16 %v2640, %v2639
    %v2701 = vpack.c.bf16 %v2642, %v2641
    %v2702 = vpack.c.bf16 %v2644, %v2643
    %v2703 = vpack.c.bf16 %v2646, %v2645
    %v2704 = vpack.c.bf16 %v2648, %v2647
    %v2705 = vpack.c.bf16 %v2650, %v2649
    %v2706 = vpack.c.bf16 %v2652, %v2651
    %v2707 = vpack.c.bf16 %v2654, %v2653
    %v2708 = vpack.c.bf16 %v2656, %v2655
    %v2709 = vpack.c.bf16 %v2658, %v2657
    %v2710 = vpack.c.bf16 %v2660, %v2659
    %v2711 = vpack.c.bf16 %v2662, %v2661
    %v2712 = vpack.c.bf16 %v2664, %v2663
    %v2713 = vpack.c.bf16 %v2666, %v2665
    %v2714 = vpack.c.bf16 %v2668, %v2667
    %v2715 = vpack.c.bf16 %v2670, %v2669
    %v2716 = vpack.c.bf16 %v2672, %v2671
    %v2717 = vpack.c.bf16 %v2674, %v2673
    %v2718 = vpack.c.bf16 %v2676, %v2675
    %v2719 = vpack.c.bf16 %v2678, %v2677
    %v2720 = vpack.c.bf16 %v2679, %v2679
    %s2721 = scalar_lea.vmem %s1, 10
    %v2722 = vld [vmem:[%s2721] sm:$0x3]
    %v2724 = vsel %vm287, %v2680, 0
    %v2727 = vsel %vm287, %v2681, 0
    %v2730 = vsel %vm287, %v2682, 0
    %v2733 = vsel %vm287, %v2683, 0
    %v2736 = vsel %vm287, %v2684, 0
    %v2739 = vsel %vm287, %v2685, 0
    %v2742 = vsel %vm287, %v2686, 0
    %v2745 = vsel %vm287, %v2687, 0
    %v2748 = vsel %vm287, %v2688, 0
    %v2751 = vsel %vm287, %v2689, 0
    %v2754 = vsel %vm287, %v2690, 0
    %v2757 = vsel %vm287, %v2691, 0
    %v2760 = vsel %vm287, %v2692, 0
    %v2763 = vsel %vm287, %v2693, 0
    %v2766 = vsel %vm287, %v2694, 0
    %v2769 = vsel %vm287, %v2695, 0
    %v2772 = vsel %vm287, %v2696, 0
    %v2775 = vsel %vm287, %v2697, 0
    %v2778 = vsel %vm287, %v2698, 0
    %v2781 = vsel %vm287, %v2699, 0
    %v2784 = vsel %vm287, %v2700, 0
    %v2787 = vsel %vm287, %v2701, 0
    %v2790 = vsel %vm287, %v2702, 0
    %v2793 = vsel %vm287, %v2703, 0
    %v2796 = vsel %vm287, %v2704, 0
    %v2799 = vsel %vm287, %v2705, 0
    %v2802 = vsel %vm287, %v2706, 0
    %v2805 = vsel %vm287, %v2707, 0
    %v2808 = vsel %vm287, %v2708, 0
    %v2811 = vsel %vm287, %v2709, 0
    %v2814 = vsel %vm287, %v2710, 0
    %v2817 = vsel %vm287, %v2711, 0
    %v2820 = vsel %vm287, %v2712, 0
    %v2823 = vsel %vm287, %v2713, 0
    %v2826 = vsel %vm287, %v2714, 0
    %v2829 = vsel %vm287, %v2715, 0
    %v2832 = vsel %vm287, %v2716, 0
    %v2835 = vsel %vm287, %v2717, 0
    %v2838 = vsel %vm287, %v2718, 0
    %v2841 = vsel %vm287, %v2719, 0
    %v2844 = vsel %vm287, %v2720, 0
    %v2847 = vsel %vm411, %v2722, 0
    %2849 = vmatpush.bf16.msra.mxu0 0
    %2850 = vmatpush.bf16.msra.mxu0 0
    %2851 = vmatpush.bf16.msra.mxu0 0
    %2852 = vmatpush.bf16.msra.mxu0 0
    %2853 = vmatpush.bf16.msra.mxu0 0
    %2854 = vmatpush.bf16.msra.mxu0 0
    %2855 = vmatpush.bf16.msra.mxu0 0
    %2856 = vmatpush.bf16.msra.mxu0 %v2847
    %2857 = vmatmul.bf16.gmra.mxu0 %v2724
    %v2858 = vpop.f32.mrf.mxu0
    %v2859 = vadd.f32 0.0, %v2858
    %v2860 = vpop.f32.mrf.mxu0
    %v2861 = vadd.f32 0.0, %v2860
    %2862 = vmatmul.bf16.gmra.mxu0 %v2727
    %v2863 = vpop.f32.mrf.mxu0
    %v2864 = vadd.f32 0.0, %v2863
    %v2865 = vpop.f32.mrf.mxu0
    %v2866 = vadd.f32 0.0, %v2865
    %2867 = vmatmul.bf16.gmra.mxu0 %v2730
    %v2868 = vpop.f32.mrf.mxu0
    %v2869 = vadd.f32 0.0, %v2868
    %v2870 = vpop.f32.mrf.mxu0
    %v2871 = vadd.f32 0.0, %v2870
    %2872 = vmatmul.bf16.gmra.mxu0 %v2733
    %v2873 = vpop.f32.mrf.mxu0
    %v2874 = vadd.f32 0.0, %v2873
    %v2875 = vpop.f32.mrf.mxu0
    %v2876 = vadd.f32 0.0, %v2875
    %2877 = vmatmul.bf16.gmra.mxu0 %v2736
    %v2878 = vpop.f32.mrf.mxu0
    %v2879 = vadd.f32 0.0, %v2878
    %v2880 = vpop.f32.mrf.mxu0
    %v2881 = vadd.f32 0.0, %v2880
    %2882 = vmatmul.bf16.gmra.mxu0 %v2739
    %v2883 = vpop.f32.mrf.mxu0
    %v2884 = vadd.f32 0.0, %v2883
    %v2885 = vpop.f32.mrf.mxu0
    %v2886 = vadd.f32 0.0, %v2885
    %2887 = vmatmul.bf16.gmra.mxu0 %v2742
    %v2888 = vpop.f32.mrf.mxu0
    %v2889 = vadd.f32 0.0, %v2888
    %v2890 = vpop.f32.mrf.mxu0
    %v2891 = vadd.f32 0.0, %v2890
    %2892 = vmatmul.bf16.gmra.mxu0 %v2745
    %v2893 = vpop.f32.mrf.mxu0
    %v2894 = vadd.f32 0.0, %v2893
    %v2895 = vpop.f32.mrf.mxu0
    %v2896 = vadd.f32 0.0, %v2895
    %2897 = vmatmul.bf16.gmra.mxu0 %v2748
    %v2898 = vpop.f32.mrf.mxu0
    %v2899 = vadd.f32 0.0, %v2898
    %v2900 = vpop.f32.mrf.mxu0
    %v2901 = vadd.f32 0.0, %v2900
    %2902 = vmatmul.bf16.gmra.mxu0 %v2751
    %v2903 = vpop.f32.mrf.mxu0
    %v2904 = vadd.f32 0.0, %v2903
    %v2905 = vpop.f32.mrf.mxu0
    %v2906 = vadd.f32 0.0, %v2905
    %2907 = vmatmul.bf16.gmra.mxu0 %v2754
    %v2908 = vpop.f32.mrf.mxu0
    %v2909 = vadd.f32 0.0, %v2908
    %v2910 = vpop.f32.mrf.mxu0
    %v2911 = vadd.f32 0.0, %v2910
    %2912 = vmatmul.bf16.gmra.mxu0 %v2757
    %v2913 = vpop.f32.mrf.mxu0
    %v2914 = vadd.f32 0.0, %v2913
    %v2915 = vpop.f32.mrf.mxu0
    %v2916 = vadd.f32 0.0, %v2915
    %2917 = vmatmul.bf16.gmra.mxu0 %v2760
    %v2918 = vpop.f32.mrf.mxu0
    %v2919 = vadd.f32 0.0, %v2918
    %v2920 = vpop.f32.mrf.mxu0
    %v2921 = vadd.f32 0.0, %v2920
    %2922 = vmatmul.bf16.gmra.mxu0 %v2763
    %v2923 = vpop.f32.mrf.mxu0
    %v2924 = vadd.f32 0.0, %v2923
    %v2925 = vpop.f32.mrf.mxu0
    %v2926 = vadd.f32 0.0, %v2925
    %2927 = vmatmul.bf16.gmra.mxu0 %v2766
    %v2928 = vpop.f32.mrf.mxu0
    %v2929 = vadd.f32 0.0, %v2928
    %v2930 = vpop.f32.mrf.mxu0
    %v2931 = vadd.f32 0.0, %v2930
    %2932 = vmatmul.bf16.gmra.mxu0 %v2769
    %v2933 = vpop.f32.mrf.mxu0
    %v2934 = vadd.f32 0.0, %v2933
    %v2935 = vpop.f32.mrf.mxu0
    %v2936 = vadd.f32 0.0, %v2935
    %2937 = vmatmul.bf16.gmra.mxu0 %v2772
    %v2938 = vpop.f32.mrf.mxu0
    %v2939 = vadd.f32 0.0, %v2938
    %v2940 = vpop.f32.mrf.mxu0
    %v2941 = vadd.f32 0.0, %v2940
    %2942 = vmatmul.bf16.gmra.mxu0 %v2775
    %v2943 = vpop.f32.mrf.mxu0
    %v2944 = vadd.f32 0.0, %v2943
    %v2945 = vpop.f32.mrf.mxu0
    %v2946 = vadd.f32 0.0, %v2945
    %2947 = vmatmul.bf16.gmra.mxu0 %v2778
    %v2948 = vpop.f32.mrf.mxu0
    %v2949 = vadd.f32 0.0, %v2948
    %v2950 = vpop.f32.mrf.mxu0
    %v2951 = vadd.f32 0.0, %v2950
    %2952 = vmatmul.bf16.gmra.mxu0 %v2781
    %v2953 = vpop.f32.mrf.mxu0
    %v2954 = vadd.f32 0.0, %v2953
    %v2955 = vpop.f32.mrf.mxu0
    %v2956 = vadd.f32 0.0, %v2955
    %2957 = vmatmul.bf16.gmra.mxu0 %v2784
    %v2958 = vpop.f32.mrf.mxu0
    %v2959 = vadd.f32 0.0, %v2958
    %v2960 = vpop.f32.mrf.mxu0
    %v2961 = vadd.f32 0.0, %v2960
    %2962 = vmatmul.bf16.gmra.mxu0 %v2787
    %v2963 = vpop.f32.mrf.mxu0
    %v2964 = vadd.f32 0.0, %v2963
    %v2965 = vpop.f32.mrf.mxu0
    %v2966 = vadd.f32 0.0, %v2965
    %2967 = vmatmul.bf16.gmra.mxu0 %v2790
    %v2968 = vpop.f32.mrf.mxu0
    %v2969 = vadd.f32 0.0, %v2968
    %v2970 = vpop.f32.mrf.mxu0
    %v2971 = vadd.f32 0.0, %v2970
    %2972 = vmatmul.bf16.gmra.mxu0 %v2793
    %v2973 = vpop.f32.mrf.mxu0
    %v2974 = vadd.f32 0.0, %v2973
    %v2975 = vpop.f32.mrf.mxu0
    %v2976 = vadd.f32 0.0, %v2975
    %2977 = vmatmul.bf16.gmra.mxu0 %v2796
    %v2978 = vpop.f32.mrf.mxu0
    %v2979 = vadd.f32 0.0, %v2978
    %v2980 = vpop.f32.mrf.mxu0
    %v2981 = vadd.f32 0.0, %v2980
    %2982 = vmatmul.bf16.gmra.mxu0 %v2799
    %v2983 = vpop.f32.mrf.mxu0
    %v2984 = vadd.f32 0.0, %v2983
    %v2985 = vpop.f32.mrf.mxu0
    %v2986 = vadd.f32 0.0, %v2985
    %2987 = vmatmul.bf16.gmra.mxu0 %v2802
    %v2988 = vpop.f32.mrf.mxu0
    %v2989 = vadd.f32 0.0, %v2988
    %v2990 = vpop.f32.mrf.mxu0
    %v2991 = vadd.f32 0.0, %v2990
    %2992 = vmatmul.bf16.gmra.mxu0 %v2805
    %v2993 = vpop.f32.mrf.mxu0
    %v2994 = vadd.f32 0.0, %v2993
    %v2995 = vpop.f32.mrf.mxu0
    %v2996 = vadd.f32 0.0, %v2995
    %2997 = vmatmul.bf16.gmra.mxu0 %v2808
    %v2998 = vpop.f32.mrf.mxu0
    %v2999 = vadd.f32 0.0, %v2998
    %v3000 = vpop.f32.mrf.mxu0
    %v3001 = vadd.f32 0.0, %v3000
    %3002 = vmatmul.bf16.gmra.mxu0 %v2811
    %v3003 = vpop.f32.mrf.mxu0
    %v3004 = vadd.f32 0.0, %v3003
    %v3005 = vpop.f32.mrf.mxu0
    %v3006 = vadd.f32 0.0, %v3005
    %3007 = vmatmul.bf16.gmra.mxu0 %v2814
    %v3008 = vpop.f32.mrf.mxu0
    %v3009 = vadd.f32 0.0, %v3008
    %v3010 = vpop.f32.mrf.mxu0
    %v3011 = vadd.f32 0.0, %v3010
    %3012 = vmatmul.bf16.gmra.mxu0 %v2817
    %v3013 = vpop.f32.mrf.mxu0
    %v3014 = vadd.f32 0.0, %v3013
    %v3015 = vpop.f32.mrf.mxu0
    %v3016 = vadd.f32 0.0, %v3015
    %3017 = vmatmul.bf16.gmra.mxu0 %v2820
    %v3018 = vpop.f32.mrf.mxu0
    %v3019 = vadd.f32 0.0, %v3018
    %v3020 = vpop.f32.mrf.mxu0
    %v3021 = vadd.f32 0.0, %v3020
    %3022 = vmatmul.bf16.gmra.mxu0 %v2823
    %v3023 = vpop.f32.mrf.mxu0
    %v3024 = vadd.f32 0.0, %v3023
    %v3025 = vpop.f32.mrf.mxu0
    %v3026 = vadd.f32 0.0, %v3025
    %3027 = vmatmul.bf16.gmra.mxu0 %v2826
    %v3028 = vpop.f32.mrf.mxu0
    %v3029 = vadd.f32 0.0, %v3028
    %v3030 = vpop.f32.mrf.mxu0
    %v3031 = vadd.f32 0.0, %v3030
    %3032 = vmatmul.bf16.gmra.mxu0 %v2829
    %v3033 = vpop.f32.mrf.mxu0
    %v3034 = vadd.f32 0.0, %v3033
    %v3035 = vpop.f32.mrf.mxu0
    %v3036 = vadd.f32 0.0, %v3035
    %3037 = vmatmul.bf16.gmra.mxu0 %v2832
    %v3038 = vpop.f32.mrf.mxu0
    %v3039 = vadd.f32 0.0, %v3038
    %v3040 = vpop.f32.mrf.mxu0
    %v3041 = vadd.f32 0.0, %v3040
    %3042 = vmatmul.bf16.gmra.mxu0 %v2835
    %v3043 = vpop.f32.mrf.mxu0
    %v3044 = vadd.f32 0.0, %v3043
    %v3045 = vpop.f32.mrf.mxu0
    %v3046 = vadd.f32 0.0, %v3045
    %3047 = vmatmul.bf16.gmra.mxu0 %v2838
    %v3048 = vpop.f32.mrf.mxu0
    %v3049 = vadd.f32 0.0, %v3048
    %v3050 = vpop.f32.mrf.mxu0
    %v3051 = vadd.f32 0.0, %v3050
    %3052 = vmatmul.bf16.gmra.mxu0 %v2841
    %v3053 = vpop.f32.mrf.mxu0
    %v3054 = vadd.f32 0.0, %v3053
    %v3055 = vpop.f32.mrf.mxu0
    %v3056 = vadd.f32 0.0, %v3055
    %3057 = vmatmul.bf16.gmra.mxu0 %v2844
    %v3058 = vpop.f32.mrf.mxu0
    %v3059 = vadd.f32 0.0, %v3058
    %v3060 = vpop.f32.mrf.mxu0
    %3061 = vdwg.mxu0
    %v3062 = vadd.f32 %v2518, %v2859
    %v3063 = vadd.f32 %v2519, %v2861
    %v3064 = vadd.f32 %v2520, %v2864
    %v3065 = vadd.f32 %v2521, %v2866
    %v3066 = vadd.f32 %v2522, %v2869
    %v3067 = vadd.f32 %v2523, %v2871
    %v3068 = vadd.f32 %v2524, %v2874
    %v3069 = vadd.f32 %v2525, %v2876
    %v3070 = vadd.f32 %v2526, %v2879
    %v3071 = vadd.f32 %v2527, %v2881
    %v3072 = vadd.f32 %v2528, %v2884
    %v3073 = vadd.f32 %v2529, %v2886
    %v3074 = vadd.f32 %v2530, %v2889
    %v3075 = vadd.f32 %v2531, %v2891
    %v3076 = vadd.f32 %v2532, %v2894
    %v3077 = vadd.f32 %v2533, %v2896
    %v3078 = vadd.f32 %v2534, %v2899
    %v3079 = vadd.f32 %v2535, %v2901
    %v3080 = vadd.f32 %v2536, %v2904
    %v3081 = vadd.f32 %v2537, %v2906
    %v3082 = vadd.f32 %v2538, %v2909
    %v3083 = vadd.f32 %v2539, %v2911
    %v3084 = vadd.f32 %v2540, %v2914
    %v3085 = vadd.f32 %v2541, %v2916
    %v3086 = vadd.f32 %v2542, %v2919
    %v3087 = vadd.f32 %v2543, %v2921
    %v3088 = vadd.f32 %v2544, %v2924
    %v3089 = vadd.f32 %v2545, %v2926
    %v3090 = vadd.f32 %v2546, %v2929
    %v3091 = vadd.f32 %v2547, %v2931
    %v3092 = vadd.f32 %v2548, %v2934
    %v3093 = vadd.f32 %v2549, %v2936
    %v3094 = vadd.f32 %v2550, %v2939
    %v3095 = vadd.f32 %v2551, %v2941
    %v3096 = vadd.f32 %v2552, %v2944
    %v3097 = vadd.f32 %v2553, %v2946
    %v3098 = vadd.f32 %v2554, %v2949
    %v3099 = vadd.f32 %v2555, %v2951
    %v3100 = vadd.f32 %v2556, %v2954
    %v3101 = vadd.f32 %v2557, %v2956
    %v3102 = vadd.f32 %v2558, %v2959
    %v3103 = vadd.f32 %v2559, %v2961
    %v3104 = vadd.f32 %v2560, %v2964
    %v3105 = vadd.f32 %v2561, %v2966
    %v3106 = vadd.f32 %v2562, %v2969
    %v3107 = vadd.f32 %v2563, %v2971
    %v3108 = vadd.f32 %v2564, %v2974
    %v3109 = vadd.f32 %v2565, %v2976
    %v3110 = vadd.f32 %v2566, %v2979
    %v3111 = vadd.f32 %v2567, %v2981
    %v3112 = vadd.f32 %v2568, %v2984
    %v3113 = vadd.f32 %v2569, %v2986
    %v3114 = vadd.f32 %v2570, %v2989
    %v3115 = vadd.f32 %v2571, %v2991
    %v3116 = vadd.f32 %v2572, %v2994
    %v3117 = vadd.f32 %v2573, %v2996
    %v3118 = vadd.f32 %v2574, %v2999
    %v3119 = vadd.f32 %v2575, %v3001
    %v3120 = vadd.f32 %v2576, %v3004
    %v3121 = vadd.f32 %v2577, %v3006
    %v3122 = vadd.f32 %v2578, %v3009
    %v3123 = vadd.f32 %v2579, %v3011
    %v3124 = vadd.f32 %v2580, %v3014
    %v3125 = vadd.f32 %v2581, %v3016
    %v3126 = vadd.f32 %v2582, %v3019
    %v3127 = vadd.f32 %v2583, %v3021
    %v3128 = vadd.f32 %v2584, %v3024
    %v3129 = vadd.f32 %v2585, %v3026
    %v3130 = vadd.f32 %v2586, %v3029
    %v3131 = vadd.f32 %v2587, %v3031
    %v3132 = vadd.f32 %v2588, %v3034
    %v3133 = vadd.f32 %v2589, %v3036
    %v3134 = vadd.f32 %v2590, %v3039
    %v3135 = vadd.f32 %v2591, %v3041
    %v3136 = vadd.f32 %v2592, %v3044
    %v3137 = vadd.f32 %v2593, %v3046
    %v3138 = vadd.f32 %v2594, %v3049
    %v3139 = vadd.f32 %v2595, %v3051
    %v3140 = vadd.f32 %v2596, %v3054
    %v3141 = vadd.f32 %v2597, %v3056
    %v3142 = vadd.f32 %v2598, %v3059
    %v3143 = vld [vmem:[%s0 + $0x48] sm:$0xff]
    %v3144 = vld [vmem:[%s0 + $0x50] sm:$0xff]
    %v3145 = vld [vmem:[%s0 + $0x58] sm:$0xff]
    %v3146 = vld [vmem:[%s0 + $0x60] sm:$0xff]
    %v3147 = vld [vmem:[%s0 + $0x68] sm:$0xff]
    %v3148 = vld [vmem:[%s0 + $0x70] sm:$0xff]
    %v3149 = vld [vmem:[%s0 + $0x78] sm:$0xff]
    %v3150 = vld [vmem:[%s0 + $0x80] sm:$0xff]
    %v3151 = vld [vmem:[%s0 + $0x88] sm:$0xff]
    %v3152 = vld [vmem:[%s0 + $0x90] sm:$0xff]
    %v3153 = vld [vmem:[%s0 + $0x98] sm:$0xff]
    %v3154 = vld [vmem:[%s0 + $0xa0] sm:$0xff]
    %v3155 = vld [vmem:[%s0 + $0xa8] sm:$0xff]
    %v3156 = vld [vmem:[%s0 + $0xb0] sm:$0xff]
    %v3157 = vld [vmem:[%s0 + $0xb8] sm:$0xff]
    %v3158 = vld [vmem:[%s0 + $0xc0] sm:$0xff]
    %v3159 = vld [vmem:[%s0 + $0xc8] sm:$0xff]
    %v3160 = vld [vmem:[%s0 + $0xd0] sm:$0xff]
    %v3161 = vld [vmem:[%s0 + $0xd8] sm:$0xff]
    %v3162 = vld [vmem:[%s0 + $0xe0] sm:$0xff]
    %v3163 = vld [vmem:[%s0 + $0xe8] sm:$0xff]
    %v3164 = vld [vmem:[%s0 + $0xf0] sm:$0xff]
    %v3165 = vld [vmem:[%s0 + $0xf8] sm:$0xff]
    %v3166 = vld [vmem:[%s0 + $0x100] sm:$0xff]
    %v3167 = vld [vmem:[%s0 + $0x108] sm:$0xff]
    %v3168 = vld [vmem:[%s0 + $0x110] sm:$0xff]
    %v3169 = vld [vmem:[%s0 + $0x118] sm:$0xff]
    %v3170 = vld [vmem:[%s0 + $0x120] sm:$0xff]
    %v3171 = vld [vmem:[%s0 + $0x128] sm:$0xff]
    %v3172 = vld [vmem:[%s0 + $0x130] sm:$0xff]
    %v3173 = vld [vmem:[%s0 + $0x138] sm:$0xff]
    %v3174 = vld [vmem:[%s0 + $0x140] sm:$0xff]
    %v3175 = vld [vmem:[%s0 + $0x148] sm:$0xff]
    %v3176 = vld [vmem:[%s0 + $0x150] sm:$0xff]
    %v3177 = vld [vmem:[%s0 + $0x158] sm:$0xff]
    %v3178 = vld [vmem:[%s0 + $0x160] sm:$0xff]
    %v3179 = vld [vmem:[%s0 + $0x168] sm:$0xff]
    %v3180 = vld [vmem:[%s0 + $0x170] sm:$0xff]
    %v3181 = vld [vmem:[%s0 + $0x178] sm:$0xff]
    %v3182 = vld [vmem:[%s0 + $0x180] sm:$0xff]
    %v3183 = vld [vmem:[%s0 + $0x188] sm:$0xff]
    %v3184 = vld [vmem:[%s0 + $0x190] sm:$0xff]
    %v3185 = vld [vmem:[%s0 + $0x198] sm:$0xff]
    %v3186 = vld [vmem:[%s0 + $0x1a0] sm:$0xff]
    %v3187 = vld [vmem:[%s0 + $0x1a8] sm:$0xff]
    %v3188 = vld [vmem:[%s0 + $0x1b0] sm:$0xff]
    %v3189 = vld [vmem:[%s0 + $0x1b8] sm:$0xff]
    %v3190 = vld [vmem:[%s0 + $0x1c0] sm:$0xff]
    %v3191 = vld [vmem:[%s0 + $0x1c8] sm:$0xff]
    %v3192 = vld [vmem:[%s0 + $0x1d0] sm:$0xff]
    %v3193 = vld [vmem:[%s0 + $0x1d8] sm:$0xff]
    %v3194 = vld [vmem:[%s0 + $0x1e0] sm:$0xff]
    %v3195 = vld [vmem:[%s0 + $0x1e8] sm:$0xff]
    %v3196 = vld [vmem:[%s0 + $0x1f0] sm:$0xff]
    %v3197 = vld [vmem:[%s0 + $0x1f8] sm:$0xff]
    %v3198 = vld [vmem:[%s0 + $0x200] sm:$0xff]
    %v3199 = vld [vmem:[%s0 + $0x208] sm:$0xff]
    %v3200 = vld [vmem:[%s0 + $0x210] sm:$0xff]
    %v3201 = vld [vmem:[%s0 + $0x218] sm:$0xff]
    %v3202 = vld [vmem:[%s0 + $0x220] sm:$0xff]
    %v3203 = vld [vmem:[%s0 + $0x228] sm:$0xff]
    %v3204 = vld [vmem:[%s0 + $0x230] sm:$0xff]
    %v3205 = vld [vmem:[%s0 + $0x238] sm:$0xff]
    %v3206 = vld [vmem:[%s0 + $0x240] sm:$0xff]
    %v3207 = vld [vmem:[%s0 + $0x248] sm:$0xff]
    %v3208 = vld [vmem:[%s0 + $0x250] sm:$0xff]
    %v3209 = vld [vmem:[%s0 + $0x258] sm:$0xff]
    %v3210 = vld [vmem:[%s0 + $0x260] sm:$0xff]
    %v3211 = vld [vmem:[%s0 + $0x268] sm:$0xff]
    %v3212 = vld [vmem:[%s0 + $0x270] sm:$0xff]
    %v3213 = vld [vmem:[%s0 + $0x278] sm:$0xff]
    %v3214 = vld [vmem:[%s0 + $0x280] sm:$0xff]
    %v3215 = vld [vmem:[%s0 + $0x288] sm:$0xff]
    %v3216 = vld [vmem:[%s0 + $0x290] sm:$0xff]
    %v3217 = vld [vmem:[%s0 + $0x298] sm:$0xff]
    %v3218 = vld [vmem:[%s0 + $0x2a0] sm:$0xff]
    %v3219 = vld [vmem:[%s0 + $0x2a8] sm:$0xff]
    %v3220 = vld [vmem:[%s0 + $0x2b0] sm:$0xff]
    %v3221 = vld [vmem:[%s0 + $0x2b8] sm:$0xff]
    %v3222 = vld [vmem:[%s0 + $0x2c0] sm:$0xff]
    %v3223 = vld [vmem:[%s0 + $0x2c8] sm:$0xff]
    %v3224 = vpack.c.bf16 %v3144, %v3143
    %v3225 = vpack.c.bf16 %v3146, %v3145
    %v3226 = vpack.c.bf16 %v3148, %v3147
    %v3227 = vpack.c.bf16 %v3150, %v3149
    %v3228 = vpack.c.bf16 %v3152, %v3151
    %v3229 = vpack.c.bf16 %v3154, %v3153
    %v3230 = vpack.c.bf16 %v3156, %v3155
    %v3231 = vpack.c.bf16 %v3158, %v3157
    %v3232 = vpack.c.bf16 %v3160, %v3159
    %v3233 = vpack.c.bf16 %v3162, %v3161
    %v3234 = vpack.c.bf16 %v3164, %v3163
    %v3235 = vpack.c.bf16 %v3166, %v3165
    %v3236 = vpack.c.bf16 %v3168, %v3167
    %v3237 = vpack.c.bf16 %v3170, %v3169
    %v3238 = vpack.c.bf16 %v3172, %v3171
    %v3239 = vpack.c.bf16 %v3174, %v3173
    %v3240 = vpack.c.bf16 %v3176, %v3175
    %v3241 = vpack.c.bf16 %v3178, %v3177
    %v3242 = vpack.c.bf16 %v3180, %v3179
    %v3243 = vpack.c.bf16 %v3182, %v3181
    %v3244 = vpack.c.bf16 %v3184, %v3183
    %v3245 = vpack.c.bf16 %v3186, %v3185
    %v3246 = vpack.c.bf16 %v3188, %v3187
    %v3247 = vpack.c.bf16 %v3190, %v3189
    %v3248 = vpack.c.bf16 %v3192, %v3191
    %v3249 = vpack.c.bf16 %v3194, %v3193
    %v3250 = vpack.c.bf16 %v3196, %v3195
    %v3251 = vpack.c.bf16 %v3198, %v3197
    %v3252 = vpack.c.bf16 %v3200, %v3199
    %v3253 = vpack.c.bf16 %v3202, %v3201
    %v3254 = vpack.c.bf16 %v3204, %v3203
    %v3255 = vpack.c.bf16 %v3206, %v3205
    %v3256 = vpack.c.bf16 %v3208, %v3207
    %v3257 = vpack.c.bf16 %v3210, %v3209
    %v3258 = vpack.c.bf16 %v3212, %v3211
    %v3259 = vpack.c.bf16 %v3214, %v3213
    %v3260 = vpack.c.bf16 %v3216, %v3215
    %v3261 = vpack.c.bf16 %v3218, %v3217
    %v3262 = vpack.c.bf16 %v3220, %v3219
    %v3263 = vpack.c.bf16 %v3222, %v3221
    %v3264 = vpack.c.bf16 %v3223, %v3223
    %s3265 = scalar_lea.vmem %s1, 12
    %v3266 = vld [vmem:[%s3265] sm:$0x3]
    %v3268 = vsel %vm287, %v3224, 0
    %v3271 = vsel %vm287, %v3225, 0
    %v3274 = vsel %vm287, %v3226, 0
    %v3277 = vsel %vm287, %v3227, 0
    %v3280 = vsel %vm287, %v3228, 0
    %v3283 = vsel %vm287, %v3229, 0
    %v3286 = vsel %vm287, %v3230, 0
    %v3289 = vsel %vm287, %v3231, 0
    %v3292 = vsel %vm287, %v3232, 0
    %v3295 = vsel %vm287, %v3233, 0
    %v3298 = vsel %vm287, %v3234, 0
    %v3301 = vsel %vm287, %v3235, 0
    %v3304 = vsel %vm287, %v3236, 0
    %v3307 = vsel %vm287, %v3237, 0
    %v3310 = vsel %vm287, %v3238, 0
    %v3313 = vsel %vm287, %v3239, 0
    %v3316 = vsel %vm287, %v3240, 0
    %v3319 = vsel %vm287, %v3241, 0
    %v3322 = vsel %vm287, %v3242, 0
    %v3325 = vsel %vm287, %v3243, 0
    %v3328 = vsel %vm287, %v3244, 0
    %v3331 = vsel %vm287, %v3245, 0
    %v3334 = vsel %vm287, %v3246, 0
    %v3337 = vsel %vm287, %v3247, 0
    %v3340 = vsel %vm287, %v3248, 0
    %v3343 = vsel %vm287, %v3249, 0
    %v3346 = vsel %vm287, %v3250, 0
    %v3349 = vsel %vm287, %v3251, 0
    %v3352 = vsel %vm287, %v3252, 0
    %v3355 = vsel %vm287, %v3253, 0
    %v3358 = vsel %vm287, %v3254, 0
    %v3361 = vsel %vm287, %v3255, 0
    %v3364 = vsel %vm287, %v3256, 0
    %v3367 = vsel %vm287, %v3257, 0
    %v3370 = vsel %vm287, %v3258, 0
    %v3373 = vsel %vm287, %v3259, 0
    %v3376 = vsel %vm287, %v3260, 0
    %v3379 = vsel %vm287, %v3261, 0
    %v3382 = vsel %vm287, %v3262, 0
    %v3385 = vsel %vm287, %v3263, 0
    %v3388 = vsel %vm287, %v3264, 0
    %v3391 = vsel %vm411, %v3266, 0
    %3393 = vmatpush.bf16.msra.mxu0 0
    %3394 = vmatpush.bf16.msra.mxu0 0
    %3395 = vmatpush.bf16.msra.mxu0 0
    %3396 = vmatpush.bf16.msra.mxu0 0
    %3397 = vmatpush.bf16.msra.mxu0 0
    %3398 = vmatpush.bf16.msra.mxu0 0
    %3399 = vmatpush.bf16.msra.mxu0 0
    %3400 = vmatpush.bf16.msra.mxu0 %v3391
    %3401 = vmatmul.bf16.gmra.mxu0 %v3268
    %v3402 = vpop.f32.mrf.mxu0
    %v3403 = vadd.f32 0.0, %v3402
    %v3404 = vpop.f32.mrf.mxu0
    %v3405 = vadd.f32 0.0, %v3404
    %3406 = vmatmul.bf16.gmra.mxu0 %v3271
    %v3407 = vpop.f32.mrf.mxu0
    %v3408 = vadd.f32 0.0, %v3407
    %v3409 = vpop.f32.mrf.mxu0
    %v3410 = vadd.f32 0.0, %v3409
    %3411 = vmatmul.bf16.gmra.mxu0 %v3274
    %v3412 = vpop.f32.mrf.mxu0
    %v3413 = vadd.f32 0.0, %v3412
    %v3414 = vpop.f32.mrf.mxu0
    %v3415 = vadd.f32 0.0, %v3414
    %3416 = vmatmul.bf16.gmra.mxu0 %v3277
    %v3417 = vpop.f32.mrf.mxu0
    %v3418 = vadd.f32 0.0, %v3417
    %v3419 = vpop.f32.mrf.mxu0
    %v3420 = vadd.f32 0.0, %v3419
    %3421 = vmatmul.bf16.gmra.mxu0 %v3280
    %v3422 = vpop.f32.mrf.mxu0
    %v3423 = vadd.f32 0.0, %v3422
    %v3424 = vpop.f32.mrf.mxu0
    %v3425 = vadd.f32 0.0, %v3424
    %3426 = vmatmul.bf16.gmra.mxu0 %v3283
    %v3427 = vpop.f32.mrf.mxu0
    %v3428 = vadd.f32 0.0, %v3427
    %v3429 = vpop.f32.mrf.mxu0
    %v3430 = vadd.f32 0.0, %v3429
    %3431 = vmatmul.bf16.gmra.mxu0 %v3286
    %v3432 = vpop.f32.mrf.mxu0
    %v3433 = vadd.f32 0.0, %v3432
    %v3434 = vpop.f32.mrf.mxu0
    %v3435 = vadd.f32 0.0, %v3434
    %3436 = vmatmul.bf16.gmra.mxu0 %v3289
    %v3437 = vpop.f32.mrf.mxu0
    %v3438 = vadd.f32 0.0, %v3437
    %v3439 = vpop.f32.mrf.mxu0
    %v3440 = vadd.f32 0.0, %v3439
    %3441 = vmatmul.bf16.gmra.mxu0 %v3292
    %v3442 = vpop.f32.mrf.mxu0
    %v3443 = vadd.f32 0.0, %v3442
    %v3444 = vpop.f32.mrf.mxu0
    %v3445 = vadd.f32 0.0, %v3444
    %3446 = vmatmul.bf16.gmra.mxu0 %v3295
    %v3447 = vpop.f32.mrf.mxu0
    %v3448 = vadd.f32 0.0, %v3447
    %v3449 = vpop.f32.mrf.mxu0
    %v3450 = vadd.f32 0.0, %v3449
    %3451 = vmatmul.bf16.gmra.mxu0 %v3298
    %v3452 = vpop.f32.mrf.mxu0
    %v3453 = vadd.f32 0.0, %v3452
    %v3454 = vpop.f32.mrf.mxu0
    %v3455 = vadd.f32 0.0, %v3454
    %3456 = vmatmul.bf16.gmra.mxu0 %v3301
    %v3457 = vpop.f32.mrf.mxu0
    %v3458 = vadd.f32 0.0, %v3457
    %v3459 = vpop.f32.mrf.mxu0
    %v3460 = vadd.f32 0.0, %v3459
    %3461 = vmatmul.bf16.gmra.mxu0 %v3304
    %v3462 = vpop.f32.mrf.mxu0
    %v3463 = vadd.f32 0.0, %v3462
    %v3464 = vpop.f32.mrf.mxu0
    %v3465 = vadd.f32 0.0, %v3464
    %3466 = vmatmul.bf16.gmra.mxu0 %v3307
    %v3467 = vpop.f32.mrf.mxu0
    %v3468 = vadd.f32 0.0, %v3467
    %v3469 = vpop.f32.mrf.mxu0
    %v3470 = vadd.f32 0.0, %v3469
    %3471 = vmatmul.bf16.gmra.mxu0 %v3310
    %v3472 = vpop.f32.mrf.mxu0
    %v3473 = vadd.f32 0.0, %v3472
    %v3474 = vpop.f32.mrf.mxu0
    %v3475 = vadd.f32 0.0, %v3474
    %3476 = vmatmul.bf16.gmra.mxu0 %v3313
    %v3477 = vpop.f32.mrf.mxu0
    %v3478 = vadd.f32 0.0, %v3477
    %v3479 = vpop.f32.mrf.mxu0
    %v3480 = vadd.f32 0.0, %v3479
    %3481 = vmatmul.bf16.gmra.mxu0 %v3316
    %v3482 = vpop.f32.mrf.mxu0
    %v3483 = vadd.f32 0.0, %v3482
    %v3484 = vpop.f32.mrf.mxu0
    %v3485 = vadd.f32 0.0, %v3484
    %3486 = vmatmul.bf16.gmra.mxu0 %v3319
    %v3487 = vpop.f32.mrf.mxu0
    %v3488 = vadd.f32 0.0, %v3487
    %v3489 = vpop.f32.mrf.mxu0
    %v3490 = vadd.f32 0.0, %v3489
    %3491 = vmatmul.bf16.gmra.mxu0 %v3322
    %v3492 = vpop.f32.mrf.mxu0
    %v3493 = vadd.f32 0.0, %v3492
    %v3494 = vpop.f32.mrf.mxu0
    %v3495 = vadd.f32 0.0, %v3494
    %3496 = vmatmul.bf16.gmra.mxu0 %v3325
    %v3497 = vpop.f32.mrf.mxu0
    %v3498 = vadd.f32 0.0, %v3497
    %v3499 = vpop.f32.mrf.mxu0
    %v3500 = vadd.f32 0.0, %v3499
    %3501 = vmatmul.bf16.gmra.mxu0 %v3328
    %v3502 = vpop.f32.mrf.mxu0
    %v3503 = vadd.f32 0.0, %v3502
    %v3504 = vpop.f32.mrf.mxu0
    %v3505 = vadd.f32 0.0, %v3504
    %3506 = vmatmul.bf16.gmra.mxu0 %v3331
    %v3507 = vpop.f32.mrf.mxu0
    %v3508 = vadd.f32 0.0, %v3507
    %v3509 = vpop.f32.mrf.mxu0
    %v3510 = vadd.f32 0.0, %v3509
    %3511 = vmatmul.bf16.gmra.mxu0 %v3334
    %v3512 = vpop.f32.mrf.mxu0
    %v3513 = vadd.f32 0.0, %v3512
    %v3514 = vpop.f32.mrf.mxu0
    %v3515 = vadd.f32 0.0, %v3514
    %3516 = vmatmul.bf16.gmra.mxu0 %v3337
    %v3517 = vpop.f32.mrf.mxu0
    %v3518 = vadd.f32 0.0, %v3517
    %v3519 = vpop.f32.mrf.mxu0
    %v3520 = vadd.f32 0.0, %v3519
    %3521 = vmatmul.bf16.gmra.mxu0 %v3340
    %v3522 = vpop.f32.mrf.mxu0
    %v3523 = vadd.f32 0.0, %v3522
    %v3524 = vpop.f32.mrf.mxu0
    %v3525 = vadd.f32 0.0, %v3524
    %3526 = vmatmul.bf16.gmra.mxu0 %v3343
    %v3527 = vpop.f32.mrf.mxu0
    %v3528 = vadd.f32 0.0, %v3527
    %v3529 = vpop.f32.mrf.mxu0
    %v3530 = vadd.f32 0.0, %v3529
    %3531 = vmatmul.bf16.gmra.mxu0 %v3346
    %v3532 = vpop.f32.mrf.mxu0
    %v3533 = vadd.f32 0.0, %v3532
    %v3534 = vpop.f32.mrf.mxu0
    %v3535 = vadd.f32 0.0, %v3534
    %3536 = vmatmul.bf16.gmra.mxu0 %v3349
    %v3537 = vpop.f32.mrf.mxu0
    %v3538 = vadd.f32 0.0, %v3537
    %v3539 = vpop.f32.mrf.mxu0
    %v3540 = vadd.f32 0.0, %v3539
    %3541 = vmatmul.bf16.gmra.mxu0 %v3352
    %v3542 = vpop.f32.mrf.mxu0
    %v3543 = vadd.f32 0.0, %v3542
    %v3544 = vpop.f32.mrf.mxu0
    %v3545 = vadd.f32 0.0, %v3544
    %3546 = vmatmul.bf16.gmra.mxu0 %v3355
    %v3547 = vpop.f32.mrf.mxu0
    %v3548 = vadd.f32 0.0, %v3547
    %v3549 = vpop.f32.mrf.mxu0
    %v3550 = vadd.f32 0.0, %v3549
    %3551 = vmatmul.bf16.gmra.mxu0 %v3358
    %v3552 = vpop.f32.mrf.mxu0
    %v3553 = vadd.f32 0.0, %v3552
    %v3554 = vpop.f32.mrf.mxu0
    %v3555 = vadd.f32 0.0, %v3554
    %3556 = vmatmul.bf16.gmra.mxu0 %v3361
    %v3557 = vpop.f32.mrf.mxu0
    %v3558 = vadd.f32 0.0, %v3557
    %v3559 = vpop.f32.mrf.mxu0
    %v3560 = vadd.f32 0.0, %v3559
    %3561 = vmatmul.bf16.gmra.mxu0 %v3364
    %v3562 = vpop.f32.mrf.mxu0
    %v3563 = vadd.f32 0.0, %v3562
    %v3564 = vpop.f32.mrf.mxu0
    %v3565 = vadd.f32 0.0, %v3564
    %3566 = vmatmul.bf16.gmra.mxu0 %v3367
    %v3567 = vpop.f32.mrf.mxu0
    %v3568 = vadd.f32 0.0, %v3567
    %v3569 = vpop.f32.mrf.mxu0
    %v3570 = vadd.f32 0.0, %v3569
    %3571 = vmatmul.bf16.gmra.mxu0 %v3370
    %v3572 = vpop.f32.mrf.mxu0
    %v3573 = vadd.f32 0.0, %v3572
    %v3574 = vpop.f32.mrf.mxu0
    %v3575 = vadd.f32 0.0, %v3574
    %3576 = vmatmul.bf16.gmra.mxu0 %v3373
    %v3577 = vpop.f32.mrf.mxu0
    %v3578 = vadd.f32 0.0, %v3577
    %v3579 = vpop.f32.mrf.mxu0
    %v3580 = vadd.f32 0.0, %v3579
    %3581 = vmatmul.bf16.gmra.mxu0 %v3376
    %v3582 = vpop.f32.mrf.mxu0
    %v3583 = vadd.f32 0.0, %v3582
    %v3584 = vpop.f32.mrf.mxu0
    %v3585 = vadd.f32 0.0, %v3584
    %3586 = vmatmul.bf16.gmra.mxu0 %v3379
    %v3587 = vpop.f32.mrf.mxu0
    %v3588 = vadd.f32 0.0, %v3587
    %v3589 = vpop.f32.mrf.mxu0
    %v3590 = vadd.f32 0.0, %v3589
    %3591 = vmatmul.bf16.gmra.mxu0 %v3382
    %v3592 = vpop.f32.mrf.mxu0
    %v3593 = vadd.f32 0.0, %v3592
    %v3594 = vpop.f32.mrf.mxu0
    %v3595 = vadd.f32 0.0, %v3594
    %3596 = vmatmul.bf16.gmra.mxu0 %v3385
    %v3597 = vpop.f32.mrf.mxu0
    %v3598 = vadd.f32 0.0, %v3597
    %v3599 = vpop.f32.mrf.mxu0
    %v3600 = vadd.f32 0.0, %v3599
    %3601 = vmatmul.bf16.gmra.mxu0 %v3388
    %v3602 = vpop.f32.mrf.mxu0
    %v3603 = vadd.f32 0.0, %v3602
    %v3604 = vpop.f32.mrf.mxu0
    %3605 = vdwg.mxu0
    %v3606 = vadd.f32 %v3062, %v3403
    %v3607 = vadd.f32 %v3063, %v3405
    %v3608 = vadd.f32 %v3064, %v3408
    %v3609 = vadd.f32 %v3065, %v3410
    %v3610 = vadd.f32 %v3066, %v3413
    %v3611 = vadd.f32 %v3067, %v3415
    %v3612 = vadd.f32 %v3068, %v3418
    %v3613 = vadd.f32 %v3069, %v3420
    %v3614 = vadd.f32 %v3070, %v3423
    %v3615 = vadd.f32 %v3071, %v3425
    %v3616 = vadd.f32 %v3072, %v3428
    %v3617 = vadd.f32 %v3073, %v3430
    %v3618 = vadd.f32 %v3074, %v3433
    %v3619 = vadd.f32 %v3075, %v3435
    %v3620 = vadd.f32 %v3076, %v3438
    %v3621 = vadd.f32 %v3077, %v3440
    %v3622 = vadd.f32 %v3078, %v3443
    %v3623 = vadd.f32 %v3079, %v3445
    %v3624 = vadd.f32 %v3080, %v3448
    %v3625 = vadd.f32 %v3081, %v3450
    %v3626 = vadd.f32 %v3082, %v3453
    %v3627 = vadd.f32 %v3083, %v3455
    %v3628 = vadd.f32 %v3084, %v3458
    %v3629 = vadd.f32 %v3085, %v3460
    %v3630 = vadd.f32 %v3086, %v3463
    %v3631 = vadd.f32 %v3087, %v3465
    %v3632 = vadd.f32 %v3088, %v3468
    %v3633 = vadd.f32 %v3089, %v3470
    %v3634 = vadd.f32 %v3090, %v3473
    %v3635 = vadd.f32 %v3091, %v3475
    %v3636 = vadd.f32 %v3092, %v3478
    %v3637 = vadd.f32 %v3093, %v3480
    %v3638 = vadd.f32 %v3094, %v3483
    %v3639 = vadd.f32 %v3095, %v3485
    %v3640 = vadd.f32 %v3096, %v3488
    %v3641 = vadd.f32 %v3097, %v3490
    %v3642 = vadd.f32 %v3098, %v3493
    %v3643 = vadd.f32 %v3099, %v3495
    %v3644 = vadd.f32 %v3100, %v3498
    %v3645 = vadd.f32 %v3101, %v3500
    %v3646 = vadd.f32 %v3102, %v3503
    %v3647 = vadd.f32 %v3103, %v3505
    %v3648 = vadd.f32 %v3104, %v3508
    %v3649 = vadd.f32 %v3105, %v3510
    %v3650 = vadd.f32 %v3106, %v3513
    %v3651 = vadd.f32 %v3107, %v3515
    %v3652 = vadd.f32 %v3108, %v3518
    %v3653 = vadd.f32 %v3109, %v3520
    %v3654 = vadd.f32 %v3110, %v3523
    %v3655 = vadd.f32 %v3111, %v3525
    %v3656 = vadd.f32 %v3112, %v3528
    %v3657 = vadd.f32 %v3113, %v3530
    %v3658 = vadd.f32 %v3114, %v3533
    %v3659 = vadd.f32 %v3115, %v3535
    %v3660 = vadd.f32 %v3116, %v3538
    %v3661 = vadd.f32 %v3117, %v3540
    %v3662 = vadd.f32 %v3118, %v3543
    %v3663 = vadd.f32 %v3119, %v3545
    %v3664 = vadd.f32 %v3120, %v3548
    %v3665 = vadd.f32 %v3121, %v3550
    %v3666 = vadd.f32 %v3122, %v3553
    %v3667 = vadd.f32 %v3123, %v3555
    %v3668 = vadd.f32 %v3124, %v3558
    %v3669 = vadd.f32 %v3125, %v3560
    %v3670 = vadd.f32 %v3126, %v3563
    %v3671 = vadd.f32 %v3127, %v3565
    %v3672 = vadd.f32 %v3128, %v3568
    %v3673 = vadd.f32 %v3129, %v3570
    %v3674 = vadd.f32 %v3130, %v3573
    %v3675 = vadd.f32 %v3131, %v3575
    %v3676 = vadd.f32 %v3132, %v3578
    %v3677 = vadd.f32 %v3133, %v3580
    %v3678 = vadd.f32 %v3134, %v3583
    %v3679 = vadd.f32 %v3135, %v3585
    %v3680 = vadd.f32 %v3136, %v3588
    %v3681 = vadd.f32 %v3137, %v3590
    %v3682 = vadd.f32 %v3138, %v3593
    %v3683 = vadd.f32 %v3139, %v3595
    %v3684 = vadd.f32 %v3140, %v3598
    %v3685 = vadd.f32 %v3141, %v3600
    %v3686 = vadd.f32 %v3142, %v3603
    %v3687 = vld [vmem:[%s0 + $0x4a] sm:$0xff]
    %v3688 = vld [vmem:[%s0 + $0x52] sm:$0xff]
    %v3689 = vld [vmem:[%s0 + $0x5a] sm:$0xff]
    %v3690 = vld [vmem:[%s0 + $0x62] sm:$0xff]
    %v3691 = vld [vmem:[%s0 + $0x6a] sm:$0xff]
    %v3692 = vld [vmem:[%s0 + $0x72] sm:$0xff]
    %v3693 = vld [vmem:[%s0 + $0x7a] sm:$0xff]
    %v3694 = vld [vmem:[%s0 + $0x82] sm:$0xff]
    %v3695 = vld [vmem:[%s0 + $0x8a] sm:$0xff]
    %v3696 = vld [vmem:[%s0 + $0x92] sm:$0xff]
    %v3697 = vld [vmem:[%s0 + $0x9a] sm:$0xff]
    %v3698 = vld [vmem:[%s0 + $0xa2] sm:$0xff]
    %v3699 = vld [vmem:[%s0 + $0xaa] sm:$0xff]
    %v3700 = vld [vmem:[%s0 + $0xb2] sm:$0xff]
    %v3701 = vld [vmem:[%s0 + $0xba] sm:$0xff]
    %v3702 = vld [vmem:[%s0 + $0xc2] sm:$0xff]
    %v3703 = vld [vmem:[%s0 + $0xca] sm:$0xff]
    %v3704 = vld [vmem:[%s0 + $0xd2] sm:$0xff]
    %v3705 = vld [vmem:[%s0 + $0xda] sm:$0xff]
    %v3706 = vld [vmem:[%s0 + $0xe2] sm:$0xff]
    %v3707 = vld [vmem:[%s0 + $0xea] sm:$0xff]
    %v3708 = vld [vmem:[%s0 + $0xf2] sm:$0xff]
    %v3709 = vld [vmem:[%s0 + $0xfa] sm:$0xff]
    %v3710 = vld [vmem:[%s0 + $0x102] sm:$0xff]
    %v3711 = vld [vmem:[%s0 + $0x10a] sm:$0xff]
    %v3712 = vld [vmem:[%s0 + $0x112] sm:$0xff]
    %v3713 = vld [vmem:[%s0 + $0x11a] sm:$0xff]
    %v3714 = vld [vmem:[%s0 + $0x122] sm:$0xff]
    %v3715 = vld [vmem:[%s0 + $0x12a] sm:$0xff]
    %v3716 = vld [vmem:[%s0 + $0x132] sm:$0xff]
    %v3717 = vld [vmem:[%s0 + $0x13a] sm:$0xff]
    %v3718 = vld [vmem:[%s0 + $0x142] sm:$0xff]
    %v3719 = vld [vmem:[%s0 + $0x14a] sm:$0xff]
    %v3720 = vld [vmem:[%s0 + $0x152] sm:$0xff]
    %v3721 = vld [vmem:[%s0 + $0x15a] sm:$0xff]
    %v3722 = vld [vmem:[%s0 + $0x162] sm:$0xff]
    %v3723 = vld [vmem:[%s0 + $0x16a] sm:$0xff]
    %v3724 = vld [vmem:[%s0 + $0x172] sm:$0xff]
    %v3725 = vld [vmem:[%s0 + $0x17a] sm:$0xff]
    %v3726 = vld [vmem:[%s0 + $0x182] sm:$0xff]
    %v3727 = vld [vmem:[%s0 + $0x18a] sm:$0xff]
    %v3728 = vld [vmem:[%s0 + $0x192] sm:$0xff]
    %v3729 = vld [vmem:[%s0 + $0x19a] sm:$0xff]
    %v3730 = vld [vmem:[%s0 + $0x1a2] sm:$0xff]
    %v3731 = vld [vmem:[%s0 + $0x1aa] sm:$0xff]
    %v3732 = vld [vmem:[%s0 + $0x1b2] sm:$0xff]
    %v3733 = vld [vmem:[%s0 + $0x1ba] sm:$0xff]
    %v3734 = vld [vmem:[%s0 + $0x1c2] sm:$0xff]
    %v3735 = vld [vmem:[%s0 + $0x1ca] sm:$0xff]
    %v3736 = vld [vmem:[%s0 + $0x1d2] sm:$0xff]
    %v3737 = vld [vmem:[%s0 + $0x1da] sm:$0xff]
    %v3738 = vld [vmem:[%s0 + $0x1e2] sm:$0xff]
    %v3739 = vld [vmem:[%s0 + $0x1ea] sm:$0xff]
    %v3740 = vld [vmem:[%s0 + $0x1f2] sm:$0xff]
    %v3741 = vld [vmem:[%s0 + $0x1fa] sm:$0xff]
    %v3742 = vld [vmem:[%s0 + $0x202] sm:$0xff]
    %v3743 = vld [vmem:[%s0 + $0x20a] sm:$0xff]
    %v3744 = vld [vmem:[%s0 + $0x212] sm:$0xff]
    %v3745 = vld [vmem:[%s0 + $0x21a] sm:$0xff]
    %v3746 = vld [vmem:[%s0 + $0x222] sm:$0xff]
    %v3747 = vld [vmem:[%s0 + $0x22a] sm:$0xff]
    %v3748 = vld [vmem:[%s0 + $0x232] sm:$0xff]
    %v3749 = vld [vmem:[%s0 + $0x23a] sm:$0xff]
    %v3750 = vld [vmem:[%s0 + $0x242] sm:$0xff]
    %v3751 = vld [vmem:[%s0 + $0x24a] sm:$0xff]
    %v3752 = vld [vmem:[%s0 + $0x252] sm:$0xff]
    %v3753 = vld [vmem:[%s0 + $0x25a] sm:$0xff]
    %v3754 = vld [vmem:[%s0 + $0x262] sm:$0xff]
    %v3755 = vld [vmem:[%s0 + $0x26a] sm:$0xff]
    %v3756 = vld [vmem:[%s0 + $0x272] sm:$0xff]
    %v3757 = vld [vmem:[%s0 + $0x27a] sm:$0xff]
    %v3758 = vld [vmem:[%s0 + $0x282] sm:$0xff]
    %v3759 = vld [vmem:[%s0 + $0x28a] sm:$0xff]
    %v3760 = vld [vmem:[%s0 + $0x292] sm:$0xff]
    %v3761 = vld [vmem:[%s0 + $0x29a] sm:$0xff]
    %v3762 = vld [vmem:[%s0 + $0x2a2] sm:$0xff]
    %v3763 = vld [vmem:[%s0 + $0x2aa] sm:$0xff]
    %v3764 = vld [vmem:[%s0 + $0x2b2] sm:$0xff]
    %v3765 = vld [vmem:[%s0 + $0x2ba] sm:$0xff]
    %v3766 = vld [vmem:[%s0 + $0x2c2] sm:$0xff]
    %v3767 = vld [vmem:[%s0 + $0x2ca] sm:$0xff]
    %v3768 = vpack.c.bf16 %v3688, %v3687
    %v3769 = vpack.c.bf16 %v3690, %v3689
    %v3770 = vpack.c.bf16 %v3692, %v3691
    %v3771 = vpack.c.bf16 %v3694, %v3693
    %v3772 = vpack.c.bf16 %v3696, %v3695
    %v3773 = vpack.c.bf16 %v3698, %v3697
    %v3774 = vpack.c.bf16 %v3700, %v3699
    %v3775 = vpack.c.bf16 %v3702, %v3701
    %v3776 = vpack.c.bf16 %v3704, %v3703
    %v3777 = vpack.c.bf16 %v3706, %v3705
    %v3778 = vpack.c.bf16 %v3708, %v3707
    %v3779 = vpack.c.bf16 %v3710, %v3709
    %v3780 = vpack.c.bf16 %v3712, %v3711
    %v3781 = vpack.c.bf16 %v3714, %v3713
    %v3782 = vpack.c.bf16 %v3716, %v3715
    %v3783 = vpack.c.bf16 %v3718, %v3717
    %v3784 = vpack.c.bf16 %v3720, %v3719
    %v3785 = vpack.c.bf16 %v3722, %v3721
    %v3786 = vpack.c.bf16 %v3724, %v3723
    %v3787 = vpack.c.bf16 %v3726, %v3725
    %v3788 = vpack.c.bf16 %v3728, %v3727
    %v3789 = vpack.c.bf16 %v3730, %v3729
    %v3790 = vpack.c.bf16 %v3732, %v3731
    %v3791 = vpack.c.bf16 %v3734, %v3733
    %v3792 = vpack.c.bf16 %v3736, %v3735
    %v3793 = vpack.c.bf16 %v3738, %v3737
    %v3794 = vpack.c.bf16 %v3740, %v3739
    %v3795 = vpack.c.bf16 %v3742, %v3741
    %v3796 = vpack.c.bf16 %v3744, %v3743
    %v3797 = vpack.c.bf16 %v3746, %v3745
    %v3798 = vpack.c.bf16 %v3748, %v3747
    %v3799 = vpack.c.bf16 %v3750, %v3749
    %v3800 = vpack.c.bf16 %v3752, %v3751
    %v3801 = vpack.c.bf16 %v3754, %v3753
    %v3802 = vpack.c.bf16 %v3756, %v3755
    %v3803 = vpack.c.bf16 %v3758, %v3757
    %v3804 = vpack.c.bf16 %v3760, %v3759
    %v3805 = vpack.c.bf16 %v3762, %v3761
    %v3806 = vpack.c.bf16 %v3764, %v3763
    %v3807 = vpack.c.bf16 %v3766, %v3765
    %v3808 = vpack.c.bf16 %v3767, %v3767
    %s3809 = scalar_lea.vmem %s1, 14
    %v3810 = vld [vmem:[%s3809] sm:$0x3]
    %v3812 = vsel %vm287, %v3768, 0
    %v3815 = vsel %vm287, %v3769, 0
    %v3818 = vsel %vm287, %v3770, 0
    %v3821 = vsel %vm287, %v3771, 0
    %v3824 = vsel %vm287, %v3772, 0
    %v3827 = vsel %vm287, %v3773, 0
    %v3830 = vsel %vm287, %v3774, 0
    %v3833 = vsel %vm287, %v3775, 0
    %v3836 = vsel %vm287, %v3776, 0
    %v3839 = vsel %vm287, %v3777, 0
    %v3842 = vsel %vm287, %v3778, 0
    %v3845 = vsel %vm287, %v3779, 0
    %v3848 = vsel %vm287, %v3780, 0
    %v3851 = vsel %vm287, %v3781, 0
    %v3854 = vsel %vm287, %v3782, 0
    %v3857 = vsel %vm287, %v3783, 0
    %v3860 = vsel %vm287, %v3784, 0
    %v3863 = vsel %vm287, %v3785, 0
    %v3866 = vsel %vm287, %v3786, 0
    %v3869 = vsel %vm287, %v3787, 0
    %v3872 = vsel %vm287, %v3788, 0
    %v3875 = vsel %vm287, %v3789, 0
    %v3878 = vsel %vm287, %v3790, 0
    %v3881 = vsel %vm287, %v3791, 0
    %v3884 = vsel %vm287, %v3792, 0
    %v3887 = vsel %vm287, %v3793, 0
    %v3890 = vsel %vm287, %v3794, 0
    %v3893 = vsel %vm287, %v3795, 0
    %v3896 = vsel %vm287, %v3796, 0
    %v3899 = vsel %vm287, %v3797, 0
    %v3902 = vsel %vm287, %v3798, 0
    %v3905 = vsel %vm287, %v3799, 0
    %v3908 = vsel %vm287, %v3800, 0
    %v3911 = vsel %vm287, %v3801, 0
    %v3914 = vsel %vm287, %v3802, 0
    %v3917 = vsel %vm287, %v3803, 0
    %v3920 = vsel %vm287, %v3804, 0
    %v3923 = vsel %vm287, %v3805, 0
    %v3926 = vsel %vm287, %v3806, 0
    %v3929 = vsel %vm287, %v3807, 0
    %v3932 = vsel %vm287, %v3808, 0
    %v3935 = vsel %vm411, %v3810, 0
    %3937 = vmatpush.bf16.msra.mxu0 0
    %3938 = vmatpush.bf16.msra.mxu0 0
    %3939 = vmatpush.bf16.msra.mxu0 0
    %3940 = vmatpush.bf16.msra.mxu0 0
    %3941 = vmatpush.bf16.msra.mxu0 0
    %3942 = vmatpush.bf16.msra.mxu0 0
    %3943 = vmatpush.bf16.msra.mxu0 0
    %3944 = vmatpush.bf16.msra.mxu0 %v3935
    %3945 = vmatmul.bf16.gmra.mxu0 %v3812
    %v3946 = vpop.f32.mrf.mxu0
    %v3947 = vadd.f32 0.0, %v3946
    %v3948 = vpop.f32.mrf.mxu0
    %v3949 = vadd.f32 0.0, %v3948
    %3950 = vmatmul.bf16.gmra.mxu0 %v3815
    %v3951 = vpop.f32.mrf.mxu0
    %v3952 = vadd.f32 0.0, %v3951
    %v3953 = vpop.f32.mrf.mxu0
    %v3954 = vadd.f32 0.0, %v3953
    %3955 = vmatmul.bf16.gmra.mxu0 %v3818
    %v3956 = vpop.f32.mrf.mxu0
    %v3957 = vadd.f32 0.0, %v3956
    %v3958 = vpop.f32.mrf.mxu0
    %v3959 = vadd.f32 0.0, %v3958
    %3960 = vmatmul.bf16.gmra.mxu0 %v3821
    %v3961 = vpop.f32.mrf.mxu0
    %v3962 = vadd.f32 0.0, %v3961
    %v3963 = vpop.f32.mrf.mxu0
    %v3964 = vadd.f32 0.0, %v3963
    %3965 = vmatmul.bf16.gmra.mxu0 %v3824
    %v3966 = vpop.f32.mrf.mxu0
    %v3967 = vadd.f32 0.0, %v3966
    %v3968 = vpop.f32.mrf.mxu0
    %v3969 = vadd.f32 0.0, %v3968
    %3970 = vmatmul.bf16.gmra.mxu0 %v3827
    %v3971 = vpop.f32.mrf.mxu0
    %v3972 = vadd.f32 0.0, %v3971
    %v3973 = vpop.f32.mrf.mxu0
    %v3974 = vadd.f32 0.0, %v3973
    %3975 = vmatmul.bf16.gmra.mxu0 %v3830
    %v3976 = vpop.f32.mrf.mxu0
    %v3977 = vadd.f32 0.0, %v3976
    %v3978 = vpop.f32.mrf.mxu0
    %v3979 = vadd.f32 0.0, %v3978
    %3980 = vmatmul.bf16.gmra.mxu0 %v3833
    %v3981 = vpop.f32.mrf.mxu0
    %v3982 = vadd.f32 0.0, %v3981
    %v3983 = vpop.f32.mrf.mxu0
    %v3984 = vadd.f32 0.0, %v3983
    %3985 = vmatmul.bf16.gmra.mxu0 %v3836
    %v3986 = vpop.f32.mrf.mxu0
    %v3987 = vadd.f32 0.0, %v3986
    %v3988 = vpop.f32.mrf.mxu0
    %v3989 = vadd.f32 0.0, %v3988
    %3990 = vmatmul.bf16.gmra.mxu0 %v3839
    %v3991 = vpop.f32.mrf.mxu0
    %v3992 = vadd.f32 0.0, %v3991
    %v3993 = vpop.f32.mrf.mxu0
    %v3994 = vadd.f32 0.0, %v3993
    %3995 = vmatmul.bf16.gmra.mxu0 %v3842
    %v3996 = vpop.f32.mrf.mxu0
    %v3997 = vadd.f32 0.0, %v3996
    %v3998 = vpop.f32.mrf.mxu0
    %v3999 = vadd.f32 0.0, %v3998
    %4000 = vmatmul.bf16.gmra.mxu0 %v3845
    %v4001 = vpop.f32.mrf.mxu0
    %v4002 = vadd.f32 0.0, %v4001
    %v4003 = vpop.f32.mrf.mxu0
    %v4004 = vadd.f32 0.0, %v4003
    %4005 = vmatmul.bf16.gmra.mxu0 %v3848
    %v4006 = vpop.f32.mrf.mxu0
    %v4007 = vadd.f32 0.0, %v4006
    %v4008 = vpop.f32.mrf.mxu0
    %v4009 = vadd.f32 0.0, %v4008
    %4010 = vmatmul.bf16.gmra.mxu0 %v3851
    %v4011 = vpop.f32.mrf.mxu0
    %v4012 = vadd.f32 0.0, %v4011
    %v4013 = vpop.f32.mrf.mxu0
    %v4014 = vadd.f32 0.0, %v4013
    %4015 = vmatmul.bf16.gmra.mxu0 %v3854
    %v4016 = vpop.f32.mrf.mxu0
    %v4017 = vadd.f32 0.0, %v4016
    %v4018 = vpop.f32.mrf.mxu0
    %v4019 = vadd.f32 0.0, %v4018
    %4020 = vmatmul.bf16.gmra.mxu0 %v3857
    %v4021 = vpop.f32.mrf.mxu0
    %v4022 = vadd.f32 0.0, %v4021
    %v4023 = vpop.f32.mrf.mxu0
    %v4024 = vadd.f32 0.0, %v4023
    %4025 = vmatmul.bf16.gmra.mxu0 %v3860
    %v4026 = vpop.f32.mrf.mxu0
    %v4027 = vadd.f32 0.0, %v4026
    %v4028 = vpop.f32.mrf.mxu0
    %v4029 = vadd.f32 0.0, %v4028
    %4030 = vmatmul.bf16.gmra.mxu0 %v3863
    %v4031 = vpop.f32.mrf.mxu0
    %v4032 = vadd.f32 0.0, %v4031
    %v4033 = vpop.f32.mrf.mxu0
    %v4034 = vadd.f32 0.0, %v4033
    %4035 = vmatmul.bf16.gmra.mxu0 %v3866
    %v4036 = vpop.f32.mrf.mxu0
    %v4037 = vadd.f32 0.0, %v4036
    %v4038 = vpop.f32.mrf.mxu0
    %v4039 = vadd.f32 0.0, %v4038
    %4040 = vmatmul.bf16.gmra.mxu0 %v3869
    %v4041 = vpop.f32.mrf.mxu0
    %v4042 = vadd.f32 0.0, %v4041
    %v4043 = vpop.f32.mrf.mxu0
    %v4044 = vadd.f32 0.0, %v4043
    %4045 = vmatmul.bf16.gmra.mxu0 %v3872
    %v4046 = vpop.f32.mrf.mxu0
    %v4047 = vadd.f32 0.0, %v4046
    %v4048 = vpop.f32.mrf.mxu0
    %v4049 = vadd.f32 0.0, %v4048
    %4050 = vmatmul.bf16.gmra.mxu0 %v3875
    %v4051 = vpop.f32.mrf.mxu0
    %v4052 = vadd.f32 0.0, %v4051
    %v4053 = vpop.f32.mrf.mxu0
    %v4054 = vadd.f32 0.0, %v4053
    %4055 = vmatmul.bf16.gmra.mxu0 %v3878
    %v4056 = vpop.f32.mrf.mxu0
    %v4057 = vadd.f32 0.0, %v4056
    %v4058 = vpop.f32.mrf.mxu0
    %v4059 = vadd.f32 0.0, %v4058
    %4060 = vmatmul.bf16.gmra.mxu0 %v3881
    %v4061 = vpop.f32.mrf.mxu0
    %v4062 = vadd.f32 0.0, %v4061
    %v4063 = vpop.f32.mrf.mxu0
    %v4064 = vadd.f32 0.0, %v4063
    %4065 = vmatmul.bf16.gmra.mxu0 %v3884
    %v4066 = vpop.f32.mrf.mxu0
    %v4067 = vadd.f32 0.0, %v4066
    %v4068 = vpop.f32.mrf.mxu0
    %v4069 = vadd.f32 0.0, %v4068
    %4070 = vmatmul.bf16.gmra.mxu0 %v3887
    %v4071 = vpop.f32.mrf.mxu0
    %v4072 = vadd.f32 0.0, %v4071
    %v4073 = vpop.f32.mrf.mxu0
    %v4074 = vadd.f32 0.0, %v4073
    %4075 = vmatmul.bf16.gmra.mxu0 %v3890
    %v4076 = vpop.f32.mrf.mxu0
    %v4077 = vadd.f32 0.0, %v4076
    %v4078 = vpop.f32.mrf.mxu0
    %v4079 = vadd.f32 0.0, %v4078
    %4080 = vmatmul.bf16.gmra.mxu0 %v3893
    %v4081 = vpop.f32.mrf.mxu0
    %v4082 = vadd.f32 0.0, %v4081
    %v4083 = vpop.f32.mrf.mxu0
    %v4084 = vadd.f32 0.0, %v4083
    %4085 = vmatmul.bf16.gmra.mxu0 %v3896
    %v4086 = vpop.f32.mrf.mxu0
    %v4087 = vadd.f32 0.0, %v4086
    %v4088 = vpop.f32.mrf.mxu0
    %v4089 = vadd.f32 0.0, %v4088
    %4090 = vmatmul.bf16.gmra.mxu0 %v3899
    %v4091 = vpop.f32.mrf.mxu0
    %v4092 = vadd.f32 0.0, %v4091
    %v4093 = vpop.f32.mrf.mxu0
    %v4094 = vadd.f32 0.0, %v4093
    %4095 = vmatmul.bf16.gmra.mxu0 %v3902
    %v4096 = vpop.f32.mrf.mxu0
    %v4097 = vadd.f32 0.0, %v4096
    %v4098 = vpop.f32.mrf.mxu0
    %v4099 = vadd.f32 0.0, %v4098
    %4100 = vmatmul.bf16.gmra.mxu0 %v3905
    %v4101 = vpop.f32.mrf.mxu0
    %v4102 = vadd.f32 0.0, %v4101
    %v4103 = vpop.f32.mrf.mxu0
    %v4104 = vadd.f32 0.0, %v4103
    %4105 = vmatmul.bf16.gmra.mxu0 %v3908
    %v4106 = vpop.f32.mrf.mxu0
    %v4107 = vadd.f32 0.0, %v4106
    %v4108 = vpop.f32.mrf.mxu0
    %v4109 = vadd.f32 0.0, %v4108
    %4110 = vmatmul.bf16.gmra.mxu0 %v3911
    %v4111 = vpop.f32.mrf.mxu0
    %v4112 = vadd.f32 0.0, %v4111
    %v4113 = vpop.f32.mrf.mxu0
    %v4114 = vadd.f32 0.0, %v4113
    %4115 = vmatmul.bf16.gmra.mxu0 %v3914
    %v4116 = vpop.f32.mrf.mxu0
    %v4117 = vadd.f32 0.0, %v4116
    %v4118 = vpop.f32.mrf.mxu0
    %v4119 = vadd.f32 0.0, %v4118
    %4120 = vmatmul.bf16.gmra.mxu0 %v3917
    %v4121 = vpop.f32.mrf.mxu0
    %v4122 = vadd.f32 0.0, %v4121
    %v4123 = vpop.f32.mrf.mxu0
    %v4124 = vadd.f32 0.0, %v4123
    %4125 = vmatmul.bf16.gmra.mxu0 %v3920
    %v4126 = vpop.f32.mrf.mxu0
    %v4127 = vadd.f32 0.0, %v4126
    %v4128 = vpop.f32.mrf.mxu0
    %v4129 = vadd.f32 0.0, %v4128
    %4130 = vmatmul.bf16.gmra.mxu0 %v3923
    %v4131 = vpop.f32.mrf.mxu0
    %v4132 = vadd.f32 0.0, %v4131
    %v4133 = vpop.f32.mrf.mxu0
    %v4134 = vadd.f32 0.0, %v4133
    %4135 = vmatmul.bf16.gmra.mxu0 %v3926
    %v4136 = vpop.f32.mrf.mxu0
    %v4137 = vadd.f32 0.0, %v4136
    %v4138 = vpop.f32.mrf.mxu0
    %v4139 = vadd.f32 0.0, %v4138
    %4140 = vmatmul.bf16.gmra.mxu0 %v3929
    %v4141 = vpop.f32.mrf.mxu0
    %v4142 = vadd.f32 0.0, %v4141
    %v4143 = vpop.f32.mrf.mxu0
    %v4144 = vadd.f32 0.0, %v4143
    %4145 = vmatmul.bf16.gmra.mxu0 %v3932
    %v4146 = vpop.f32.mrf.mxu0
    %v4147 = vadd.f32 0.0, %v4146
    %v4148 = vpop.f32.mrf.mxu0
    %4149 = vdwg.mxu0
    %v4150 = vadd.f32 %v3606, %v3947
    %v4151 = vadd.f32 %v3607, %v3949
    %v4152 = vadd.f32 %v3608, %v3952
    %v4153 = vadd.f32 %v3609, %v3954
    %v4154 = vadd.f32 %v3610, %v3957
    %v4155 = vadd.f32 %v3611, %v3959
    %v4156 = vadd.f32 %v3612, %v3962
    %v4157 = vadd.f32 %v3613, %v3964
    %v4158 = vadd.f32 %v3614, %v3967
    %v4159 = vadd.f32 %v3615, %v3969
    %v4160 = vadd.f32 %v3616, %v3972
    %v4161 = vadd.f32 %v3617, %v3974
    %v4162 = vadd.f32 %v3618, %v3977
    %v4163 = vadd.f32 %v3619, %v3979
    %v4164 = vadd.f32 %v3620, %v3982
    %v4165 = vadd.f32 %v3621, %v3984
    %v4166 = vadd.f32 %v3622, %v3987
    %v4167 = vadd.f32 %v3623, %v3989
    %v4168 = vadd.f32 %v3624, %v3992
    %v4169 = vadd.f32 %v3625, %v3994
    %v4170 = vadd.f32 %v3626, %v3997
    %v4171 = vadd.f32 %v3627, %v3999
    %v4172 = vadd.f32 %v3628, %v4002
    %v4173 = vadd.f32 %v3629, %v4004
    %v4174 = vadd.f32 %v3630, %v4007
    %v4175 = vadd.f32 %v3631, %v4009
    %v4176 = vadd.f32 %v3632, %v4012
    %v4177 = vadd.f32 %v3633, %v4014
    %v4178 = vadd.f32 %v3634, %v4017
    %v4179 = vadd.f32 %v3635, %v4019
    %v4180 = vadd.f32 %v3636, %v4022
    %v4181 = vadd.f32 %v3637, %v4024
    %v4182 = vadd.f32 %v3638, %v4027
    %v4183 = vadd.f32 %v3639, %v4029
    %v4184 = vadd.f32 %v3640, %v4032
    %v4185 = vadd.f32 %v3641, %v4034
    %v4186 = vadd.f32 %v3642, %v4037
    %v4187 = vadd.f32 %v3643, %v4039
    %v4188 = vadd.f32 %v3644, %v4042
    %v4189 = vadd.f32 %v3645, %v4044
    %v4190 = vadd.f32 %v3646, %v4047
    %v4191 = vadd.f32 %v3647, %v4049
    %v4192 = vadd.f32 %v3648, %v4052
    %v4193 = vadd.f32 %v3649, %v4054
    %v4194 = vadd.f32 %v3650, %v4057
    %v4195 = vadd.f32 %v3651, %v4059
    %v4196 = vadd.f32 %v3652, %v4062
    %v4197 = vadd.f32 %v3653, %v4064
    %v4198 = vadd.f32 %v3654, %v4067
    %v4199 = vadd.f32 %v3655, %v4069
    %v4200 = vadd.f32 %v3656, %v4072
    %v4201 = vadd.f32 %v3657, %v4074
    %v4202 = vadd.f32 %v3658, %v4077
    %v4203 = vadd.f32 %v3659, %v4079
    %v4204 = vadd.f32 %v3660, %v4082
    %v4205 = vadd.f32 %v3661, %v4084
    %v4206 = vadd.f32 %v3662, %v4087
    %v4207 = vadd.f32 %v3663, %v4089
    %v4208 = vadd.f32 %v3664, %v4092
    %v4209 = vadd.f32 %v3665, %v4094
    %v4210 = vadd.f32 %v3666, %v4097
    %v4211 = vadd.f32 %v3667, %v4099
    %v4212 = vadd.f32 %v3668, %v4102
    %v4213 = vadd.f32 %v3669, %v4104
    %v4214 = vadd.f32 %v3670, %v4107
    %v4215 = vadd.f32 %v3671, %v4109
    %v4216 = vadd.f32 %v3672, %v4112
    %v4217 = vadd.f32 %v3673, %v4114
    %v4218 = vadd.f32 %v3674, %v4117
    %v4219 = vadd.f32 %v3675, %v4119
    %v4220 = vadd.f32 %v3676, %v4122
    %v4221 = vadd.f32 %v3677, %v4124
    %v4222 = vadd.f32 %v3678, %v4127
    %v4223 = vadd.f32 %v3679, %v4129
    %v4224 = vadd.f32 %v3680, %v4132
    %v4225 = vadd.f32 %v3681, %v4134
    %v4226 = vadd.f32 %v3682, %v4137
    %v4227 = vadd.f32 %v3683, %v4139
    %v4228 = vadd.f32 %v3684, %v4142
    %v4229 = vadd.f32 %v3685, %v4144
    %v4230 = vadd.f32 %v3686, %v4147
    %v4231 = vld [vmem:[%s0 + $0x4c] sm:$0xff]
    %v4232 = vld [vmem:[%s0 + $0x54] sm:$0xff]
    %v4233 = vld [vmem:[%s0 + $0x5c] sm:$0xff]
    %v4234 = vld [vmem:[%s0 + $0x64] sm:$0xff]
    %v4235 = vld [vmem:[%s0 + $0x6c] sm:$0xff]
    %v4236 = vld [vmem:[%s0 + $0x74] sm:$0xff]
    %v4237 = vld [vmem:[%s0 + $0x7c] sm:$0xff]
    %v4238 = vld [vmem:[%s0 + $0x84] sm:$0xff]
    %v4239 = vld [vmem:[%s0 + $0x8c] sm:$0xff]
    %v4240 = vld [vmem:[%s0 + $0x94] sm:$0xff]
    %v4241 = vld [vmem:[%s0 + $0x9c] sm:$0xff]
    %v4242 = vld [vmem:[%s0 + $0xa4] sm:$0xff]
    %v4243 = vld [vmem:[%s0 + $0xac] sm:$0xff]
    %v4244 = vld [vmem:[%s0 + $0xb4] sm:$0xff]
    %v4245 = vld [vmem:[%s0 + $0xbc] sm:$0xff]
    %v4246 = vld [vmem:[%s0 + $0xc4] sm:$0xff]
    %v4247 = vld [vmem:[%s0 + $0xcc] sm:$0xff]
    %v4248 = vld [vmem:[%s0 + $0xd4] sm:$0xff]
    %v4249 = vld [vmem:[%s0 + $0xdc] sm:$0xff]
    %v4250 = vld [vmem:[%s0 + $0xe4] sm:$0xff]
    %v4251 = vld [vmem:[%s0 + $0xec] sm:$0xff]
    %v4252 = vld [vmem:[%s0 + $0xf4] sm:$0xff]
    %v4253 = vld [vmem:[%s0 + $0xfc] sm:$0xff]
    %v4254 = vld [vmem:[%s0 + $0x104] sm:$0xff]
    %v4255 = vld [vmem:[%s0 + $0x10c] sm:$0xff]
    %v4256 = vld [vmem:[%s0 + $0x114] sm:$0xff]
    %v4257 = vld [vmem:[%s0 + $0x11c] sm:$0xff]
    %v4258 = vld [vmem:[%s0 + $0x124] sm:$0xff]
    %v4259 = vld [vmem:[%s0 + $0x12c] sm:$0xff]
    %v4260 = vld [vmem:[%s0 + $0x134] sm:$0xff]
    %v4261 = vld [vmem:[%s0 + $0x13c] sm:$0xff]
    %v4262 = vld [vmem:[%s0 + $0x144] sm:$0xff]
    %v4263 = vld [vmem:[%s0 + $0x14c] sm:$0xff]
    %v4264 = vld [vmem:[%s0 + $0x154] sm:$0xff]
    %v4265 = vld [vmem:[%s0 + $0x15c] sm:$0xff]
    %v4266 = vld [vmem:[%s0 + $0x164] sm:$0xff]
    %v4267 = vld [vmem:[%s0 + $0x16c] sm:$0xff]
    %v4268 = vld [vmem:[%s0 + $0x174] sm:$0xff]
    %v4269 = vld [vmem:[%s0 + $0x17c] sm:$0xff]
    %v4270 = vld [vmem:[%s0 + $0x184] sm:$0xff]
    %v4271 = vld [vmem:[%s0 + $0x18c] sm:$0xff]
    %v4272 = vld [vmem:[%s0 + $0x194] sm:$0xff]
    %v4273 = vld [vmem:[%s0 + $0x19c] sm:$0xff]
    %v4274 = vld [vmem:[%s0 + $0x1a4] sm:$0xff]
    %v4275 = vld [vmem:[%s0 + $0x1ac] sm:$0xff]
    %v4276 = vld [vmem:[%s0 + $0x1b4] sm:$0xff]
    %v4277 = vld [vmem:[%s0 + $0x1bc] sm:$0xff]
    %v4278 = vld [vmem:[%s0 + $0x1c4] sm:$0xff]
    %v4279 = vld [vmem:[%s0 + $0x1cc] sm:$0xff]
    %v4280 = vld [vmem:[%s0 + $0x1d4] sm:$0xff]
    %v4281 = vld [vmem:[%s0 + $0x1dc] sm:$0xff]
    %v4282 = vld [vmem:[%s0 + $0x1e4] sm:$0xff]
    %v4283 = vld [vmem:[%s0 + $0x1ec] sm:$0xff]
    %v4284 = vld [vmem:[%s0 + $0x1f4] sm:$0xff]
    %v4285 = vld [vmem:[%s0 + $0x1fc] sm:$0xff]
    %v4286 = vld [vmem:[%s0 + $0x204] sm:$0xff]
    %v4287 = vld [vmem:[%s0 + $0x20c] sm:$0xff]
    %v4288 = vld [vmem:[%s0 + $0x214] sm:$0xff]
    %v4289 = vld [vmem:[%s0 + $0x21c] sm:$0xff]
    %v4290 = vld [vmem:[%s0 + $0x224] sm:$0xff]
    %v4291 = vld [vmem:[%s0 + $0x22c] sm:$0xff]
    %v4292 = vld [vmem:[%s0 + $0x234] sm:$0xff]
    %v4293 = vld [vmem:[%s0 + $0x23c] sm:$0xff]
    %v4294 = vld [vmem:[%s0 + $0x244] sm:$0xff]
    %v4295 = vld [vmem:[%s0 + $0x24c] sm:$0xff]
    %v4296 = vld [vmem:[%s0 + $0x254] sm:$0xff]
    %v4297 = vld [vmem:[%s0 + $0x25c] sm:$0xff]
    %v4298 = vld [vmem:[%s0 + $0x264] sm:$0xff]
    %v4299 = vld [vmem:[%s0 + $0x26c] sm:$0xff]
    %v4300 = vld [vmem:[%s0 + $0x274] sm:$0xff]
    %v4301 = vld [vmem:[%s0 + $0x27c] sm:$0xff]
    %v4302 = vld [vmem:[%s0 + $0x284] sm:$0xff]
    %v4303 = vld [vmem:[%s0 + $0x28c] sm:$0xff]
    %v4304 = vld [vmem:[%s0 + $0x294] sm:$0xff]
    %v4305 = vld [vmem:[%s0 + $0x29c] sm:$0xff]
    %v4306 = vld [vmem:[%s0 + $0x2a4] sm:$0xff]
    %v4307 = vld [vmem:[%s0 + $0x2ac] sm:$0xff]
    %v4308 = vld [vmem:[%s0 + $0x2b4] sm:$0xff]
    %v4309 = vld [vmem:[%s0 + $0x2bc] sm:$0xff]
    %v4310 = vld [vmem:[%s0 + $0x2c4] sm:$0xff]
    %v4311 = vld [vmem:[%s0 + $0x2cc] sm:$0xff]
    %v4312 = vpack.c.bf16 %v4232, %v4231
    %v4313 = vpack.c.bf16 %v4234, %v4233
    %v4314 = vpack.c.bf16 %v4236, %v4235
    %v4315 = vpack.c.bf16 %v4238, %v4237
    %v4316 = vpack.c.bf16 %v4240, %v4239
    %v4317 = vpack.c.bf16 %v4242, %v4241
    %v4318 = vpack.c.bf16 %v4244, %v4243
    %v4319 = vpack.c.bf16 %v4246, %v4245
    %v4320 = vpack.c.bf16 %v4248, %v4247
    %v4321 = vpack.c.bf16 %v4250, %v4249
    %v4322 = vpack.c.bf16 %v4252, %v4251
    %v4323 = vpack.c.bf16 %v4254, %v4253
    %v4324 = vpack.c.bf16 %v4256, %v4255
    %v4325 = vpack.c.bf16 %v4258, %v4257
    %v4326 = vpack.c.bf16 %v4260, %v4259
    %v4327 = vpack.c.bf16 %v4262, %v4261
    %v4328 = vpack.c.bf16 %v4264, %v4263
    %v4329 = vpack.c.bf16 %v4266, %v4265
    %v4330 = vpack.c.bf16 %v4268, %v4267
    %v4331 = vpack.c.bf16 %v4270, %v4269
    %v4332 = vpack.c.bf16 %v4272, %v4271
    %v4333 = vpack.c.bf16 %v4274, %v4273
    %v4334 = vpack.c.bf16 %v4276, %v4275
    %v4335 = vpack.c.bf16 %v4278, %v4277
    %v4336 = vpack.c.bf16 %v4280, %v4279
    %v4337 = vpack.c.bf16 %v4282, %v4281
    %v4338 = vpack.c.bf16 %v4284, %v4283
    %v4339 = vpack.c.bf16 %v4286, %v4285
    %v4340 = vpack.c.bf16 %v4288, %v4287
    %v4341 = vpack.c.bf16 %v4290, %v4289
    %v4342 = vpack.c.bf16 %v4292, %v4291
    %v4343 = vpack.c.bf16 %v4294, %v4293
    %v4344 = vpack.c.bf16 %v4296, %v4295
    %v4345 = vpack.c.bf16 %v4298, %v4297
    %v4346 = vpack.c.bf16 %v4300, %v4299
    %v4347 = vpack.c.bf16 %v4302, %v4301
    %v4348 = vpack.c.bf16 %v4304, %v4303
    %v4349 = vpack.c.bf16 %v4306, %v4305
    %v4350 = vpack.c.bf16 %v4308, %v4307
    %v4351 = vpack.c.bf16 %v4310, %v4309
    %v4352 = vpack.c.bf16 %v4311, %v4311
    %s4353 = scalar_lea.vmem %s1, 16
    %v4354 = vld [vmem:[%s4353] sm:$0x3]
    %v4356 = vsel %vm287, %v4312, 0
    %v4359 = vsel %vm287, %v4313, 0
    %v4362 = vsel %vm287, %v4314, 0
    %v4365 = vsel %vm287, %v4315, 0
    %v4368 = vsel %vm287, %v4316, 0
    %v4371 = vsel %vm287, %v4317, 0
    %v4374 = vsel %vm287, %v4318, 0
    %v4377 = vsel %vm287, %v4319, 0
    %v4380 = vsel %vm287, %v4320, 0
    %v4383 = vsel %vm287, %v4321, 0
    %v4386 = vsel %vm287, %v4322, 0
    %v4389 = vsel %vm287, %v4323, 0
    %v4392 = vsel %vm287, %v4324, 0
    %v4395 = vsel %vm287, %v4325, 0
    %v4398 = vsel %vm287, %v4326, 0
    %v4401 = vsel %vm287, %v4327, 0
    %v4404 = vsel %vm287, %v4328, 0
    %v4407 = vsel %vm287, %v4329, 0
    %v4410 = vsel %vm287, %v4330, 0
    %v4413 = vsel %vm287, %v4331, 0
    %v4416 = vsel %vm287, %v4332, 0
    %v4419 = vsel %vm287, %v4333, 0
    %v4422 = vsel %vm287, %v4334, 0
    %v4425 = vsel %vm287, %v4335, 0
    %v4428 = vsel %vm287, %v4336, 0
    %v4431 = vsel %vm287, %v4337, 0
    %v4434 = vsel %vm287, %v4338, 0
    %v4437 = vsel %vm287, %v4339, 0
    %v4440 = vsel %vm287, %v4340, 0
    %v4443 = vsel %vm287, %v4341, 0
    %v4446 = vsel %vm287, %v4342, 0
    %v4449 = vsel %vm287, %v4343, 0
    %v4452 = vsel %vm287, %v4344, 0
    %v4455 = vsel %vm287, %v4345, 0
    %v4458 = vsel %vm287, %v4346, 0
    %v4461 = vsel %vm287, %v4347, 0
    %v4464 = vsel %vm287, %v4348, 0
    %v4467 = vsel %vm287, %v4349, 0
    %v4470 = vsel %vm287, %v4350, 0
    %v4473 = vsel %vm287, %v4351, 0
    %v4476 = vsel %vm287, %v4352, 0
    %v4479 = vsel %vm411, %v4354, 0
    %4481 = vmatpush.bf16.msra.mxu0 0
    %4482 = vmatpush.bf16.msra.mxu0 0
    %4483 = vmatpush.bf16.msra.mxu0 0
    %4484 = vmatpush.bf16.msra.mxu0 0
    %4485 = vmatpush.bf16.msra.mxu0 0
    %4486 = vmatpush.bf16.msra.mxu0 0
    %4487 = vmatpush.bf16.msra.mxu0 0
    %4488 = vmatpush.bf16.msra.mxu0 %v4479
    %4489 = vmatmul.bf16.gmra.mxu0 %v4356
    %v4490 = vpop.f32.mrf.mxu0
    %v4491 = vadd.f32 0.0, %v4490
    %v4492 = vpop.f32.mrf.mxu0
    %v4493 = vadd.f32 0.0, %v4492
    %4494 = vmatmul.bf16.gmra.mxu0 %v4359
    %v4495 = vpop.f32.mrf.mxu0
    %v4496 = vadd.f32 0.0, %v4495
    %v4497 = vpop.f32.mrf.mxu0
    %v4498 = vadd.f32 0.0, %v4497
    %4499 = vmatmul.bf16.gmra.mxu0 %v4362
    %v4500 = vpop.f32.mrf.mxu0
    %v4501 = vadd.f32 0.0, %v4500
    %v4502 = vpop.f32.mrf.mxu0
    %v4503 = vadd.f32 0.0, %v4502
    %4504 = vmatmul.bf16.gmra.mxu0 %v4365
    %v4505 = vpop.f32.mrf.mxu0
    %v4506 = vadd.f32 0.0, %v4505
    %v4507 = vpop.f32.mrf.mxu0
    %v4508 = vadd.f32 0.0, %v4507
    %4509 = vmatmul.bf16.gmra.mxu0 %v4368
    %v4510 = vpop.f32.mrf.mxu0
    %v4511 = vadd.f32 0.0, %v4510
    %v4512 = vpop.f32.mrf.mxu0
    %v4513 = vadd.f32 0.0, %v4512
    %4514 = vmatmul.bf16.gmra.mxu0 %v4371
    %v4515 = vpop.f32.mrf.mxu0
    %v4516 = vadd.f32 0.0, %v4515
    %v4517 = vpop.f32.mrf.mxu0
    %v4518 = vadd.f32 0.0, %v4517
    %4519 = vmatmul.bf16.gmra.mxu0 %v4374
    %v4520 = vpop.f32.mrf.mxu0
    %v4521 = vadd.f32 0.0, %v4520
    %v4522 = vpop.f32.mrf.mxu0
    %v4523 = vadd.f32 0.0, %v4522
    %4524 = vmatmul.bf16.gmra.mxu0 %v4377
    %v4525 = vpop.f32.mrf.mxu0
    %v4526 = vadd.f32 0.0, %v4525
    %v4527 = vpop.f32.mrf.mxu0
    %v4528 = vadd.f32 0.0, %v4527
    %4529 = vmatmul.bf16.gmra.mxu0 %v4380
    %v4530 = vpop.f32.mrf.mxu0
    %v4531 = vadd.f32 0.0, %v4530
    %v4532 = vpop.f32.mrf.mxu0
    %v4533 = vadd.f32 0.0, %v4532
    %4534 = vmatmul.bf16.gmra.mxu0 %v4383
    %v4535 = vpop.f32.mrf.mxu0
    %v4536 = vadd.f32 0.0, %v4535
    %v4537 = vpop.f32.mrf.mxu0
    %v4538 = vadd.f32 0.0, %v4537
    %4539 = vmatmul.bf16.gmra.mxu0 %v4386
    %v4540 = vpop.f32.mrf.mxu0
    %v4541 = vadd.f32 0.0, %v4540
    %v4542 = vpop.f32.mrf.mxu0
    %v4543 = vadd.f32 0.0, %v4542
    %4544 = vmatmul.bf16.gmra.mxu0 %v4389
    %v4545 = vpop.f32.mrf.mxu0
    %v4546 = vadd.f32 0.0, %v4545
    %v4547 = vpop.f32.mrf.mxu0
    %v4548 = vadd.f32 0.0, %v4547
    %4549 = vmatmul.bf16.gmra.mxu0 %v4392
    %v4550 = vpop.f32.mrf.mxu0
    %v4551 = vadd.f32 0.0, %v4550
    %v4552 = vpop.f32.mrf.mxu0
    %v4553 = vadd.f32 0.0, %v4552
    %4554 = vmatmul.bf16.gmra.mxu0 %v4395
    %v4555 = vpop.f32.mrf.mxu0
    %v4556 = vadd.f32 0.0, %v4555
    %v4557 = vpop.f32.mrf.mxu0
    %v4558 = vadd.f32 0.0, %v4557
    %4559 = vmatmul.bf16.gmra.mxu0 %v4398
    %v4560 = vpop.f32.mrf.mxu0
    %v4561 = vadd.f32 0.0, %v4560
    %v4562 = vpop.f32.mrf.mxu0
    %v4563 = vadd.f32 0.0, %v4562
    %4564 = vmatmul.bf16.gmra.mxu0 %v4401
    %v4565 = vpop.f32.mrf.mxu0
    %v4566 = vadd.f32 0.0, %v4565
    %v4567 = vpop.f32.mrf.mxu0
    %v4568 = vadd.f32 0.0, %v4567
    %4569 = vmatmul.bf16.gmra.mxu0 %v4404
    %v4570 = vpop.f32.mrf.mxu0
    %v4571 = vadd.f32 0.0, %v4570
    %v4572 = vpop.f32.mrf.mxu0
    %v4573 = vadd.f32 0.0, %v4572
    %4574 = vmatmul.bf16.gmra.mxu0 %v4407
    %v4575 = vpop.f32.mrf.mxu0
    %v4576 = vadd.f32 0.0, %v4575
    %v4577 = vpop.f32.mrf.mxu0
    %v4578 = vadd.f32 0.0, %v4577
    %4579 = vmatmul.bf16.gmra.mxu0 %v4410
    %v4580 = vpop.f32.mrf.mxu0
    %v4581 = vadd.f32 0.0, %v4580
    %v4582 = vpop.f32.mrf.mxu0
    %v4583 = vadd.f32 0.0, %v4582
    %4584 = vmatmul.bf16.gmra.mxu0 %v4413
    %v4585 = vpop.f32.mrf.mxu0
    %v4586 = vadd.f32 0.0, %v4585
    %v4587 = vpop.f32.mrf.mxu0
    %v4588 = vadd.f32 0.0, %v4587
    %4589 = vmatmul.bf16.gmra.mxu0 %v4416
    %v4590 = vpop.f32.mrf.mxu0
    %v4591 = vadd.f32 0.0, %v4590
    %v4592 = vpop.f32.mrf.mxu0
    %v4593 = vadd.f32 0.0, %v4592
    %4594 = vmatmul.bf16.gmra.mxu0 %v4419
    %v4595 = vpop.f32.mrf.mxu0
    %v4596 = vadd.f32 0.0, %v4595
    %v4597 = vpop.f32.mrf.mxu0
    %v4598 = vadd.f32 0.0, %v4597
    %4599 = vmatmul.bf16.gmra.mxu0 %v4422
    %v4600 = vpop.f32.mrf.mxu0
    %v4601 = vadd.f32 0.0, %v4600
    %v4602 = vpop.f32.mrf.mxu0
    %v4603 = vadd.f32 0.0, %v4602
    %4604 = vmatmul.bf16.gmra.mxu0 %v4425
    %v4605 = vpop.f32.mrf.mxu0
    %v4606 = vadd.f32 0.0, %v4605
    %v4607 = vpop.f32.mrf.mxu0
    %v4608 = vadd.f32 0.0, %v4607
    %4609 = vmatmul.bf16.gmra.mxu0 %v4428
    %v4610 = vpop.f32.mrf.mxu0
    %v4611 = vadd.f32 0.0, %v4610
    %v4612 = vpop.f32.mrf.mxu0
    %v4613 = vadd.f32 0.0, %v4612
    %4614 = vmatmul.bf16.gmra.mxu0 %v4431
    %v4615 = vpop.f32.mrf.mxu0
    %v4616 = vadd.f32 0.0, %v4615
    %v4617 = vpop.f32.mrf.mxu0
    %v4618 = vadd.f32 0.0, %v4617
    %4619 = vmatmul.bf16.gmra.mxu0 %v4434
    %v4620 = vpop.f32.mrf.mxu0
    %v4621 = vadd.f32 0.0, %v4620
    %v4622 = vpop.f32.mrf.mxu0
    %v4623 = vadd.f32 0.0, %v4622
    %4624 = vmatmul.bf16.gmra.mxu0 %v4437
    %v4625 = vpop.f32.mrf.mxu0
    %v4626 = vadd.f32 0.0, %v4625
    %v4627 = vpop.f32.mrf.mxu0
    %v4628 = vadd.f32 0.0, %v4627
    %4629 = vmatmul.bf16.gmra.mxu0 %v4440
    %v4630 = vpop.f32.mrf.mxu0
    %v4631 = vadd.f32 0.0, %v4630
    %v4632 = vpop.f32.mrf.mxu0
    %v4633 = vadd.f32 0.0, %v4632
    %4634 = vmatmul.bf16.gmra.mxu0 %v4443
    %v4635 = vpop.f32.mrf.mxu0
    %v4636 = vadd.f32 0.0, %v4635
    %v4637 = vpop.f32.mrf.mxu0
    %v4638 = vadd.f32 0.0, %v4637
    %4639 = vmatmul.bf16.gmra.mxu0 %v4446
    %v4640 = vpop.f32.mrf.mxu0
    %v4641 = vadd.f32 0.0, %v4640
    %v4642 = vpop.f32.mrf.mxu0
    %v4643 = vadd.f32 0.0, %v4642
    %4644 = vmatmul.bf16.gmra.mxu0 %v4449
    %v4645 = vpop.f32.mrf.mxu0
    %v4646 = vadd.f32 0.0, %v4645
    %v4647 = vpop.f32.mrf.mxu0
    %v4648 = vadd.f32 0.0, %v4647
    %4649 = vmatmul.bf16.gmra.mxu0 %v4452
    %v4650 = vpop.f32.mrf.mxu0
    %v4651 = vadd.f32 0.0, %v4650
    %v4652 = vpop.f32.mrf.mxu0
    %v4653 = vadd.f32 0.0, %v4652
    %4654 = vmatmul.bf16.gmra.mxu0 %v4455
    %v4655 = vpop.f32.mrf.mxu0
    %v4656 = vadd.f32 0.0, %v4655
    %v4657 = vpop.f32.mrf.mxu0
    %v4658 = vadd.f32 0.0, %v4657
    %4659 = vmatmul.bf16.gmra.mxu0 %v4458
    %v4660 = vpop.f32.mrf.mxu0
    %v4661 = vadd.f32 0.0, %v4660
    %v4662 = vpop.f32.mrf.mxu0
    %v4663 = vadd.f32 0.0, %v4662
    %4664 = vmatmul.bf16.gmra.mxu0 %v4461
    %v4665 = vpop.f32.mrf.mxu0
    %v4666 = vadd.f32 0.0, %v4665
    %v4667 = vpop.f32.mrf.mxu0
    %v4668 = vadd.f32 0.0, %v4667
    %4669 = vmatmul.bf16.gmra.mxu0 %v4464
    %v4670 = vpop.f32.mrf.mxu0
    %v4671 = vadd.f32 0.0, %v4670
    %v4672 = vpop.f32.mrf.mxu0
    %v4673 = vadd.f32 0.0, %v4672
    %4674 = vmatmul.bf16.gmra.mxu0 %v4467
    %v4675 = vpop.f32.mrf.mxu0
    %v4676 = vadd.f32 0.0, %v4675
    %v4677 = vpop.f32.mrf.mxu0
    %v4678 = vadd.f32 0.0, %v4677
    %4679 = vmatmul.bf16.gmra.mxu0 %v4470
    %v4680 = vpop.f32.mrf.mxu0
    %v4681 = vadd.f32 0.0, %v4680
    %v4682 = vpop.f32.mrf.mxu0
    %v4683 = vadd.f32 0.0, %v4682
    %4684 = vmatmul.bf16.gmra.mxu0 %v4473
    %v4685 = vpop.f32.mrf.mxu0
    %v4686 = vadd.f32 0.0, %v4685
    %v4687 = vpop.f32.mrf.mxu0
    %v4688 = vadd.f32 0.0, %v4687
    %4689 = vmatmul.bf16.gmra.mxu0 %v4476
    %v4690 = vpop.f32.mrf.mxu0
    %v4691 = vadd.f32 0.0, %v4690
    %v4692 = vpop.f32.mrf.mxu0
    %4693 = vdwg.mxu0
    %v4694 = vadd.f32 %v4150, %v4491
    %v4695 = vadd.f32 %v4151, %v4493
    %v4696 = vadd.f32 %v4152, %v4496
    %v4697 = vadd.f32 %v4153, %v4498
    %v4698 = vadd.f32 %v4154, %v4501
    %v4699 = vadd.f32 %v4155, %v4503
    %v4700 = vadd.f32 %v4156, %v4506
    %v4701 = vadd.f32 %v4157, %v4508
    %v4702 = vadd.f32 %v4158, %v4511
    %v4703 = vadd.f32 %v4159, %v4513
    %v4704 = vadd.f32 %v4160, %v4516
    %v4705 = vadd.f32 %v4161, %v4518
    %v4706 = vadd.f32 %v4162, %v4521
    %v4707 = vadd.f32 %v4163, %v4523
    %v4708 = vadd.f32 %v4164, %v4526
    %v4709 = vadd.f32 %v4165, %v4528
    %v4710 = vadd.f32 %v4166, %v4531
    %v4711 = vadd.f32 %v4167, %v4533
    %v4712 = vadd.f32 %v4168, %v4536
    %v4713 = vadd.f32 %v4169, %v4538
    %v4714 = vadd.f32 %v4170, %v4541
    %v4715 = vadd.f32 %v4171, %v4543
    %v4716 = vadd.f32 %v4172, %v4546
    %v4717 = vadd.f32 %v4173, %v4548
    %v4718 = vadd.f32 %v4174, %v4551
    %v4719 = vadd.f32 %v4175, %v4553
    %v4720 = vadd.f32 %v4176, %v4556
    %v4721 = vadd.f32 %v4177, %v4558
    %v4722 = vadd.f32 %v4178, %v4561
    %v4723 = vadd.f32 %v4179, %v4563
    %v4724 = vadd.f32 %v4180, %v4566
    %v4725 = vadd.f32 %v4181, %v4568
    %v4726 = vadd.f32 %v4182, %v4571
    %v4727 = vadd.f32 %v4183, %v4573
    %v4728 = vadd.f32 %v4184, %v4576
    %v4729 = vadd.f32 %v4185, %v4578
    %v4730 = vadd.f32 %v4186, %v4581
    %v4731 = vadd.f32 %v4187, %v4583
    %v4732 = vadd.f32 %v4188, %v4586
    %v4733 = vadd.f32 %v4189, %v4588
    %v4734 = vadd.f32 %v4190, %v4591
    %v4735 = vadd.f32 %v4191, %v4593
    %v4736 = vadd.f32 %v4192, %v4596
    %v4737 = vadd.f32 %v4193, %v4598
    %v4738 = vadd.f32 %v4194, %v4601
    %v4739 = vadd.f32 %v4195, %v4603
    %v4740 = vadd.f32 %v4196, %v4606
    %v4741 = vadd.f32 %v4197, %v4608
    %v4742 = vadd.f32 %v4198, %v4611
    %v4743 = vadd.f32 %v4199, %v4613
    %v4744 = vadd.f32 %v4200, %v4616
    %v4745 = vadd.f32 %v4201, %v4618
    %v4746 = vadd.f32 %v4202, %v4621
    %v4747 = vadd.f32 %v4203, %v4623
    %v4748 = vadd.f32 %v4204, %v4626
    %v4749 = vadd.f32 %v4205, %v4628
    %v4750 = vadd.f32 %v4206, %v4631
    %v4751 = vadd.f32 %v4207, %v4633
    %v4752 = vadd.f32 %v4208, %v4636
    %v4753 = vadd.f32 %v4209, %v4638
    %v4754 = vadd.f32 %v4210, %v4641
    %v4755 = vadd.f32 %v4211, %v4643
    %v4756 = vadd.f32 %v4212, %v4646
    %v4757 = vadd.f32 %v4213, %v4648
    %v4758 = vadd.f32 %v4214, %v4651
    %v4759 = vadd.f32 %v4215, %v4653
    %v4760 = vadd.f32 %v4216, %v4656
    %v4761 = vadd.f32 %v4217, %v4658
    %v4762 = vadd.f32 %v4218, %v4661
    %v4763 = vadd.f32 %v4219, %v4663
    %v4764 = vadd.f32 %v4220, %v4666
    %v4765 = vadd.f32 %v4221, %v4668
    %v4766 = vadd.f32 %v4222, %v4671
    %v4767 = vadd.f32 %v4223, %v4673
    %v4768 = vadd.f32 %v4224, %v4676
    %v4769 = vadd.f32 %v4225, %v4678
    %v4770 = vadd.f32 %v4226, %v4681
    %v4771 = vadd.f32 %v4227, %v4683
    %v4772 = vadd.f32 %v4228, %v4686
    %v4773 = vadd.f32 %v4229, %v4688
    %v4774 = vadd.f32 %v4230, %v4691
    %v4775 = vld [vmem:[%s2] sm:$0x1]
    %v4777 = vperm.slane %v4775, 0
    %v4779 = vmul.f32 %v4694, %v4777
    %v4780 = vmul.f32 %v4695, %v4777
    %v4781 = vmul.f32 %v4696, %v4777
    %v4782 = vmul.f32 %v4697, %v4777
    %v4783 = vmul.f32 %v4698, %v4777
    %v4784 = vmul.f32 %v4699, %v4777
    %v4785 = vmul.f32 %v4700, %v4777
    %v4786 = vmul.f32 %v4701, %v4777
    %v4787 = vmul.f32 %v4702, %v4777
    %v4788 = vmul.f32 %v4703, %v4777
    %v4789 = vmul.f32 %v4704, %v4777
    %v4790 = vmul.f32 %v4705, %v4777
    %v4791 = vmul.f32 %v4706, %v4777
    %v4792 = vmul.f32 %v4707, %v4777
    %v4793 = vmul.f32 %v4708, %v4777
    %v4794 = vmul.f32 %v4709, %v4777
    %v4795 = vmul.f32 %v4710, %v4777
    %v4796 = vmul.f32 %v4711, %v4777
    %v4797 = vmul.f32 %v4712, %v4777
    %v4798 = vmul.f32 %v4713, %v4777
    %v4799 = vmul.f32 %v4714, %v4777
    %v4800 = vmul.f32 %v4715, %v4777
    %v4801 = vmul.f32 %v4716, %v4777
    %v4802 = vmul.f32 %v4717, %v4777
    %v4803 = vmul.f32 %v4718, %v4777
    %v4804 = vmul.f32 %v4719, %v4777
    %v4805 = vmul.f32 %v4720, %v4777
    %v4806 = vmul.f32 %v4721, %v4777
    %v4807 = vmul.f32 %v4722, %v4777
    %v4808 = vmul.f32 %v4723, %v4777
    %v4809 = vmul.f32 %v4724, %v4777
    %v4810 = vmul.f32 %v4725, %v4777
    %v4811 = vmul.f32 %v4726, %v4777
    %v4812 = vmul.f32 %v4727, %v4777
    %v4813 = vmul.f32 %v4728, %v4777
    %v4814 = vmul.f32 %v4729, %v4777
    %v4815 = vmul.f32 %v4730, %v4777
    %v4816 = vmul.f32 %v4731, %v4777
    %v4817 = vmul.f32 %v4732, %v4777
    %v4818 = vmul.f32 %v4733, %v4777
    %v4819 = vmul.f32 %v4734, %v4777
    %v4820 = vmul.f32 %v4735, %v4777
    %v4821 = vmul.f32 %v4736, %v4777
    %v4822 = vmul.f32 %v4737, %v4777
    %v4823 = vmul.f32 %v4738, %v4777
    %v4824 = vmul.f32 %v4739, %v4777
    %v4825 = vmul.f32 %v4740, %v4777
    %v4826 = vmul.f32 %v4741, %v4777
    %v4827 = vmul.f32 %v4742, %v4777
    %v4828 = vmul.f32 %v4743, %v4777
    %v4829 = vmul.f32 %v4744, %v4777
    %v4830 = vmul.f32 %v4745, %v4777
    %v4831 = vmul.f32 %v4746, %v4777
    %v4832 = vmul.f32 %v4747, %v4777
    %v4833 = vmul.f32 %v4748, %v4777
    %v4834 = vmul.f32 %v4749, %v4777
    %v4835 = vmul.f32 %v4750, %v4777
    %v4836 = vmul.f32 %v4751, %v4777
    %v4837 = vmul.f32 %v4752, %v4777
    %v4838 = vmul.f32 %v4753, %v4777
    %v4839 = vmul.f32 %v4754, %v4777
    %v4840 = vmul.f32 %v4755, %v4777
    %v4841 = vmul.f32 %v4756, %v4777
    %v4842 = vmul.f32 %v4757, %v4777
    %v4843 = vmul.f32 %v4758, %v4777
    %v4844 = vmul.f32 %v4759, %v4777
    %v4845 = vmul.f32 %v4760, %v4777
    %v4846 = vmul.f32 %v4761, %v4777
    %v4847 = vmul.f32 %v4762, %v4777
    %v4848 = vmul.f32 %v4763, %v4777
    %v4849 = vmul.f32 %v4764, %v4777
    %v4850 = vmul.f32 %v4765, %v4777
    %v4851 = vmul.f32 %v4766, %v4777
    %v4852 = vmul.f32 %v4767, %v4777
    %v4853 = vmul.f32 %v4768, %v4777
    %v4854 = vmul.f32 %v4769, %v4777
    %v4855 = vmul.f32 %v4770, %v4777
    %v4856 = vmul.f32 %v4771, %v4777
    %v4857 = vmul.f32 %v4772, %v4777
    %v4858 = vmul.f32 %v4773, %v4777
    %v4859 = vmul.f32 %v4774, %v4777
    %v4860 = vld [vmem:[%s3] sm:$0x1]
    %v4862 = vperm.slane %v4860, 0
    %v4864 = vadd.f32 %v4779, %v4862
    %v4865 = vadd.f32 %v4780, %v4862
    %v4866 = vadd.f32 %v4781, %v4862
    %v4867 = vadd.f32 %v4782, %v4862
    %v4868 = vadd.f32 %v4783, %v4862
    %v4869 = vadd.f32 %v4784, %v4862
    %v4870 = vadd.f32 %v4785, %v4862
    %v4871 = vadd.f32 %v4786, %v4862
    %v4872 = vadd.f32 %v4787, %v4862
    %v4873 = vadd.f32 %v4788, %v4862
    %v4874 = vadd.f32 %v4789, %v4862
    %v4875 = vadd.f32 %v4790, %v4862
    %v4876 = vadd.f32 %v4791, %v4862
    %v4877 = vadd.f32 %v4792, %v4862
    %v4878 = vadd.f32 %v4793, %v4862
    %v4879 = vadd.f32 %v4794, %v4862
    %v4880 = vadd.f32 %v4795, %v4862
    %v4881 = vadd.f32 %v4796, %v4862
    %v4882 = vadd.f32 %v4797, %v4862
    %v4883 = vadd.f32 %v4798, %v4862
    %v4884 = vadd.f32 %v4799, %v4862
    %v4885 = vadd.f32 %v4800, %v4862
    %v4886 = vadd.f32 %v4801, %v4862
    %v4887 = vadd.f32 %v4802, %v4862
    %v4888 = vadd.f32 %v4803, %v4862
    %v4889 = vadd.f32 %v4804, %v4862
    %v4890 = vadd.f32 %v4805, %v4862
    %v4891 = vadd.f32 %v4806, %v4862
    %v4892 = vadd.f32 %v4807, %v4862
    %v4893 = vadd.f32 %v4808, %v4862
    %v4894 = vadd.f32 %v4809, %v4862
    %v4895 = vadd.f32 %v4810, %v4862
    %v4896 = vadd.f32 %v4811, %v4862
    %v4897 = vadd.f32 %v4812, %v4862
    %v4898 = vadd.f32 %v4813, %v4862
    %v4899 = vadd.f32 %v4814, %v4862
    %v4900 = vadd.f32 %v4815, %v4862
    %v4901 = vadd.f32 %v4816, %v4862
    %v4902 = vadd.f32 %v4817, %v4862
    %v4903 = vadd.f32 %v4818, %v4862
    %v4904 = vadd.f32 %v4819, %v4862
    %v4905 = vadd.f32 %v4820, %v4862
    %v4906 = vadd.f32 %v4821, %v4862
    %v4907 = vadd.f32 %v4822, %v4862
    %v4908 = vadd.f32 %v4823, %v4862
    %v4909 = vadd.f32 %v4824, %v4862
    %v4910 = vadd.f32 %v4825, %v4862
    %v4911 = vadd.f32 %v4826, %v4862
    %v4912 = vadd.f32 %v4827, %v4862
    %v4913 = vadd.f32 %v4828, %v4862
    %v4914 = vadd.f32 %v4829, %v4862
    %v4915 = vadd.f32 %v4830, %v4862
    %v4916 = vadd.f32 %v4831, %v4862
    %v4917 = vadd.f32 %v4832, %v4862
    %v4918 = vadd.f32 %v4833, %v4862
    %v4919 = vadd.f32 %v4834, %v4862
    %v4920 = vadd.f32 %v4835, %v4862
    %v4921 = vadd.f32 %v4836, %v4862
    %v4922 = vadd.f32 %v4837, %v4862
    %v4923 = vadd.f32 %v4838, %v4862
    %v4924 = vadd.f32 %v4839, %v4862
    %v4925 = vadd.f32 %v4840, %v4862
    %v4926 = vadd.f32 %v4841, %v4862
    %v4927 = vadd.f32 %v4842, %v4862
    %v4928 = vadd.f32 %v4843, %v4862
    %v4929 = vadd.f32 %v4844, %v4862
    %v4930 = vadd.f32 %v4845, %v4862
    %v4931 = vadd.f32 %v4846, %v4862
    %v4932 = vadd.f32 %v4847, %v4862
    %v4933 = vadd.f32 %v4848, %v4862
    %v4934 = vadd.f32 %v4849, %v4862
    %v4935 = vadd.f32 %v4850, %v4862
    %v4936 = vadd.f32 %v4851, %v4862
    %v4937 = vadd.f32 %v4852, %v4862
    %v4938 = vadd.f32 %v4853, %v4862
    %v4939 = vadd.f32 %v4854, %v4862
    %v4940 = vadd.f32 %v4855, %v4862
    %v4941 = vadd.f32 %v4856, %v4862
    %v4942 = vadd.f32 %v4857, %v4862
    %v4943 = vadd.f32 %v4858, %v4862
    %v4944 = vadd.f32 %v4859, %v4862
    %v4945 = vmax.f32 %v4864, 0.0
    %v4946 = vmax.f32 %v4865, 0.0
    %v4947 = vmax.f32 %v4866, 0.0
    %v4948 = vmax.f32 %v4867, 0.0
    %v4949 = vmax.f32 %v4868, 0.0
    %v4950 = vmax.f32 %v4869, 0.0
    %v4951 = vmax.f32 %v4870, 0.0
    %v4952 = vmax.f32 %v4871, 0.0
    %v4953 = vmax.f32 %v4872, 0.0
    %v4954 = vmax.f32 %v4873, 0.0
    %v4955 = vmax.f32 %v4874, 0.0
    %v4956 = vmax.f32 %v4875, 0.0
    %v4957 = vmax.f32 %v4876, 0.0
    %v4958 = vmax.f32 %v4877, 0.0
    %v4959 = vmax.f32 %v4878, 0.0
    %v4960 = vmax.f32 %v4879, 0.0
    %v4961 = vmax.f32 %v4880, 0.0
    %v4962 = vmax.f32 %v4881, 0.0
    %v4963 = vmax.f32 %v4882, 0.0
    %v4964 = vmax.f32 %v4883, 0.0
    %v4965 = vmax.f32 %v4884, 0.0
    %v4966 = vmax.f32 %v4885, 0.0
    %v4967 = vmax.f32 %v4886, 0.0
    %v4968 = vmax.f32 %v4887, 0.0
    %v4969 = vmax.f32 %v4888, 0.0
    %v4970 = vmax.f32 %v4889, 0.0
    %v4971 = vmax.f32 %v4890, 0.0
    %v4972 = vmax.f32 %v4891, 0.0
    %v4973 = vmax.f32 %v4892, 0.0
    %v4974 = vmax.f32 %v4893, 0.0
    %v4975 = vmax.f32 %v4894, 0.0
    %v4976 = vmax.f32 %v4895, 0.0
    %v4977 = vmax.f32 %v4896, 0.0
    %v4978 = vmax.f32 %v4897, 0.0
    %v4979 = vmax.f32 %v4898, 0.0
    %v4980 = vmax.f32 %v4899, 0.0
    %v4981 = vmax.f32 %v4900, 0.0
    %v4982 = vmax.f32 %v4901, 0.0
    %v4983 = vmax.f32 %v4902, 0.0
    %v4984 = vmax.f32 %v4903, 0.0
    %v4985 = vmax.f32 %v4904, 0.0
    %v4986 = vmax.f32 %v4905, 0.0
    %v4987 = vmax.f32 %v4906, 0.0
    %v4988 = vmax.f32 %v4907, 0.0
    %v4989 = vmax.f32 %v4908, 0.0
    %v4990 = vmax.f32 %v4909, 0.0
    %v4991 = vmax.f32 %v4910, 0.0
    %v4992 = vmax.f32 %v4911, 0.0
    %v4993 = vmax.f32 %v4912, 0.0
    %v4994 = vmax.f32 %v4913, 0.0
    %v4995 = vmax.f32 %v4914, 0.0
    %v4996 = vmax.f32 %v4915, 0.0
    %v4997 = vmax.f32 %v4916, 0.0
    %v4998 = vmax.f32 %v4917, 0.0
    %v4999 = vmax.f32 %v4918, 0.0
    %v5000 = vmax.f32 %v4919, 0.0
    %v5001 = vmax.f32 %v4920, 0.0
    %v5002 = vmax.f32 %v4921, 0.0
    %v5003 = vmax.f32 %v4922, 0.0
    %v5004 = vmax.f32 %v4923, 0.0
    %v5005 = vmax.f32 %v4924, 0.0
    %v5006 = vmax.f32 %v4925, 0.0
    %v5007 = vmax.f32 %v4926, 0.0
    %v5008 = vmax.f32 %v4927, 0.0
    %v5009 = vmax.f32 %v4928, 0.0
    %v5010 = vmax.f32 %v4929, 0.0
    %v5011 = vmax.f32 %v4930, 0.0
    %v5012 = vmax.f32 %v4931, 0.0
    %v5013 = vmax.f32 %v4932, 0.0
    %v5014 = vmax.f32 %v4933, 0.0
    %v5015 = vmax.f32 %v4934, 0.0
    %v5016 = vmax.f32 %v4935, 0.0
    %v5017 = vmax.f32 %v4936, 0.0
    %v5018 = vmax.f32 %v4937, 0.0
    %v5019 = vmax.f32 %v4938, 0.0
    %v5020 = vmax.f32 %v4939, 0.0
    %v5021 = vmax.f32 %v4940, 0.0
    %v5022 = vmax.f32 %v4941, 0.0
    %v5023 = vmax.f32 %v4942, 0.0
    %v5024 = vmax.f32 %v4943, 0.0
    %v5025 = vmax.f32 %v4944, 0.0
    %v5026 = vld [vmem:[%s4] sm:$0xff]
    %v5027 = vld [vmem:[%s4 + $0x8] sm:$0xff]
    %v5028 = vld [vmem:[%s4 + $0x10] sm:$0xff]
    %v5029 = vld [vmem:[%s4 + $0x18] sm:$0xff]
    %v5030 = vld [vmem:[%s4 + $0x20] sm:$0xff]
    %v5031 = vld [vmem:[%s4 + $0x28] sm:$0xff]
    %v5032 = vld [vmem:[%s4 + $0x30] sm:$0xff]
    %v5033 = vld [vmem:[%s4 + $0x38] sm:$0xff]
    %v5034 = vld [vmem:[%s4 + $0x40] sm:$0xff]
    %v5035 = vld [vmem:[%s4 + $0x48] sm:$0xff]
    %v5036 = vld [vmem:[%s4 + $0x50] sm:$0xff]
    %v5037 = vld [vmem:[%s4 + $0x58] sm:$0xff]
    %v5038 = vld [vmem:[%s4 + $0x60] sm:$0xff]
    %v5039 = vld [vmem:[%s4 + $0x68] sm:$0xff]
    %v5040 = vld [vmem:[%s4 + $0x70] sm:$0xff]
    %v5041 = vld [vmem:[%s4 + $0x78] sm:$0xff]
    %v5042 = vld [vmem:[%s4 + $0x80] sm:$0xff]
    %v5043 = vld [vmem:[%s4 + $0x88] sm:$0xff]
    %v5044 = vld [vmem:[%s4 + $0x90] sm:$0xff]
    %v5045 = vld [vmem:[%s4 + $0x98] sm:$0xff]
    %v5046 = vld [vmem:[%s4 + $0xa0] sm:$0xff]
    %v5047 = vld [vmem:[%s4 + $0xa8] sm:$0xff]
    %v5048 = vld [vmem:[%s4 + $0xb0] sm:$0xff]
    %v5049 = vld [vmem:[%s4 + $0xb8] sm:$0xff]
    %v5050 = vld [vmem:[%s4 + $0xc0] sm:$0xff]
    %v5051 = vld [vmem:[%s4 + $0xc8] sm:$0xff]
    %v5052 = vld [vmem:[%s4 + $0xd0] sm:$0xff]
    %v5053 = vld [vmem:[%s4 + $0xd8] sm:$0xff]
    %v5054 = vld [vmem:[%s4 + $0xe0] sm:$0xff]
    %v5055 = vld [vmem:[%s4 + $0xe8] sm:$0xff]
    %v5056 = vld [vmem:[%s4 + $0xf0] sm:$0xff]
    %v5057 = vld [vmem:[%s4 + $0xf8] sm:$0xff]
    %v5058 = vld [vmem:[%s4 + $0x100] sm:$0xff]
    %v5059 = vld [vmem:[%s4 + $0x108] sm:$0xff]
    %v5060 = vld [vmem:[%s4 + $0x110] sm:$0xff]
    %v5061 = vld [vmem:[%s4 + $0x118] sm:$0xff]
    %v5062 = vld [vmem:[%s4 + $0x120] sm:$0xff]
    %v5063 = vld [vmem:[%s4 + $0x128] sm:$0xff]
    %v5064 = vld [vmem:[%s4 + $0x130] sm:$0xff]
    %v5065 = vld [vmem:[%s4 + $0x138] sm:$0xff]
    %v5066 = vld [vmem:[%s4 + $0x140] sm:$0xff]
    %v5067 = vld [vmem:[%s4 + $0x148] sm:$0xff]
    %v5068 = vld [vmem:[%s4 + $0x150] sm:$0xff]
    %v5069 = vld [vmem:[%s4 + $0x158] sm:$0xff]
    %v5070 = vld [vmem:[%s4 + $0x160] sm:$0xff]
    %v5071 = vld [vmem:[%s4 + $0x168] sm:$0xff]
    %v5072 = vld [vmem:[%s4 + $0x170] sm:$0xff]
    %v5073 = vld [vmem:[%s4 + $0x178] sm:$0xff]
    %v5074 = vld [vmem:[%s4 + $0x180] sm:$0xff]
    %v5075 = vld [vmem:[%s4 + $0x188] sm:$0xff]
    %v5076 = vld [vmem:[%s4 + $0x190] sm:$0xff]
    %v5077 = vld [vmem:[%s4 + $0x198] sm:$0xff]
    %v5078 = vld [vmem:[%s4 + $0x1a0] sm:$0xff]
    %v5079 = vld [vmem:[%s4 + $0x1a8] sm:$0xff]
    %v5080 = vld [vmem:[%s4 + $0x1b0] sm:$0xff]
    %v5081 = vld [vmem:[%s4 + $0x1b8] sm:$0xff]
    %v5082 = vld [vmem:[%s4 + $0x1c0] sm:$0xff]
    %v5083 = vld [vmem:[%s4 + $0x1c8] sm:$0xff]
    %v5084 = vld [vmem:[%s4 + $0x1d0] sm:$0xff]
    %v5085 = vld [vmem:[%s4 + $0x1d8] sm:$0xff]
    %v5086 = vld [vmem:[%s4 + $0x1e0] sm:$0xff]
    %v5087 = vld [vmem:[%s4 + $0x1e8] sm:$0xff]
    %v5088 = vld [vmem:[%s4 + $0x1f0] sm:$0xff]
    %v5089 = vld [vmem:[%s4 + $0x1f8] sm:$0xff]
    %v5090 = vld [vmem:[%s4 + $0x200] sm:$0xff]
    %v5091 = vld [vmem:[%s4 + $0x208] sm:$0xff]
    %v5092 = vld [vmem:[%s4 + $0x210] sm:$0xff]
    %v5093 = vld [vmem:[%s4 + $0x218] sm:$0xff]
    %v5094 = vld [vmem:[%s4 + $0x220] sm:$0xff]
    %v5095 = vld [vmem:[%s4 + $0x228] sm:$0xff]
    %v5096 = vld [vmem:[%s4 + $0x230] sm:$0xff]
    %v5097 = vld [vmem:[%s4 + $0x238] sm:$0xff]
    %v5098 = vld [vmem:[%s4 + $0x240] sm:$0xff]
    %v5099 = vld [vmem:[%s4 + $0x248] sm:$0xff]
    %v5100 = vld [vmem:[%s4 + $0x250] sm:$0xff]
    %v5101 = vld [vmem:[%s4 + $0x258] sm:$0xff]
    %v5102 = vld [vmem:[%s4 + $0x260] sm:$0xff]
    %v5103 = vld [vmem:[%s4 + $0x268] sm:$0xff]
    %v5104 = vld [vmem:[%s4 + $0x270] sm:$0xff]
    %v5105 = vld [vmem:[%s4 + $0x278] sm:$0xff]
    %v5106 = vld [vmem:[%s4 + $0x280] sm:$0xff]
    %v5107 = vld [vmem:[%s4 + $0x288] sm:$0xff]
    %v5108 = vld [vmem:[%s4 + $0x290] sm:$0xff]
    %v5109 = vld [vmem:[%s4 + $0x298] sm:$0xff]
    %v5110 = vld [vmem:[%s4 + $0x2a0] sm:$0xff]
    %v5111 = vld [vmem:[%s4 + $0x2a8] sm:$0xff]
    %v5112 = vld [vmem:[%s4 + $0x2b0] sm:$0xff]
    %v5113 = vld [vmem:[%s4 + $0x2b8] sm:$0xff]
    %v5114 = vld [vmem:[%s4 + $0x2c0] sm:$0xff]
    %v5115 = vld [vmem:[%s4 + $0x2c8] sm:$0xff]
    %v5116 = vld [vmem:[%s4 + $0x2d0] sm:$0x33]
    %v5117 = vld [vmem:[%s4 + $0x2d8] sm:$0x33]
    %v5118 = vld [vmem:[%s4 + $0x2e0] sm:$0x33]
    %v5119 = vpack.c.bf16 %v4946, %v4945
    %v5120 = vpack.c.bf16 %v4948, %v4947
    %v5121 = vpack.c.bf16 %v4950, %v4949
    %v5122 = vpack.c.bf16 %v4952, %v4951
    %v5123 = vpack.c.bf16 %v4954, %v4953
    %v5124 = vpack.c.bf16 %v4956, %v4955
    %v5125 = vpack.c.bf16 %v4958, %v4957
    %v5126 = vpack.c.bf16 %v4960, %v4959
    %v5127 = vpack.c.bf16 %v4962, %v4961
    %v5128 = vpack.c.bf16 %v4964, %v4963
    %v5129 = vpack.c.bf16 %v4966, %v4965
    %v5130 = vpack.c.bf16 %v4968, %v4967
    %v5131 = vpack.c.bf16 %v4970, %v4969
    %v5132 = vpack.c.bf16 %v4972, %v4971
    %v5133 = vpack.c.bf16 %v4974, %v4973
    %v5134 = vpack.c.bf16 %v4976, %v4975
    %v5135 = vpack.c.bf16 %v4978, %v4977
    %v5136 = vpack.c.bf16 %v4980, %v4979
    %v5137 = vpack.c.bf16 %v4982, %v4981
    %v5138 = vpack.c.bf16 %v4984, %v4983
    %v5139 = vpack.c.bf16 %v4986, %v4985
    %v5140 = vpack.c.bf16 %v4988, %v4987
    %v5141 = vpack.c.bf16 %v4990, %v4989
    %v5142 = vpack.c.bf16 %v4992, %v4991
    %v5143 = vpack.c.bf16 %v4994, %v4993
    %v5144 = vpack.c.bf16 %v4996, %v4995
    %v5145 = vpack.c.bf16 %v4998, %v4997
    %v5146 = vpack.c.bf16 %v5000, %v4999
    %v5147 = vpack.c.bf16 %v5002, %v5001
    %v5148 = vpack.c.bf16 %v5004, %v5003
    %v5149 = vpack.c.bf16 %v5006, %v5005
    %v5150 = vpack.c.bf16 %v5008, %v5007
    %v5151 = vpack.c.bf16 %v5010, %v5009
    %v5152 = vpack.c.bf16 %v5012, %v5011
    %v5153 = vpack.c.bf16 %v5014, %v5013
    %v5154 = vpack.c.bf16 %v5016, %v5015
    %v5155 = vpack.c.bf16 %v5018, %v5017
    %v5156 = vpack.c.bf16 %v5020, %v5019
    %v5157 = vpack.c.bf16 %v5022, %v5021
    %v5158 = vpack.c.bf16 %v5024, %v5023
    %v5159 = vpack.c.bf16 %v5025, %v5025
    %v5253 = vunpack.c.l.b16 %v5026
    %v5254 = vunpack.c.h.b16 %v5026
    %v5255 = vunpack.c.l.b16 %v5027
    %v5256 = vunpack.c.h.b16 %v5027
    %v5257 = vunpack.c.l.b16 %v5028
    %v5258 = vunpack.c.h.b16 %v5028
    %v5259 = vunpack.c.l.b16 %v5029
    %v5260 = vunpack.c.h.b16 %v5029
    %v5261 = vunpack.c.l.b16 %v5030
    %v5262 = vunpack.c.h.b16 %v5030
    %v5263 = vunpack.c.l.b16 %v5031
    %v5264 = vunpack.c.h.b16 %v5031
    %v5265 = vunpack.c.l.b16 %v5032
    %v5266 = vunpack.c.h.b16 %v5032
    %v5267 = vunpack.c.l.b16 %v5033
    %v5268 = vunpack.c.h.b16 %v5033
    %v5269 = vunpack.c.l.b16 %v5034
    %v5270 = vunpack.c.h.b16 %v5034
    %v5271 = vunpack.c.l.b16 %v5035
    %v5272 = vunpack.c.h.b16 %v5035
    %v5273 = vunpack.c.l.b16 %v5036
    %v5274 = vunpack.c.h.b16 %v5036
    %v5275 = vunpack.c.l.b16 %v5037
    %v5276 = vunpack.c.h.b16 %v5037
    %v5277 = vunpack.c.l.b16 %v5038
    %v5278 = vunpack.c.h.b16 %v5038
    %v5279 = vunpack.c.l.b16 %v5039
    %v5280 = vunpack.c.h.b16 %v5039
    %v5281 = vunpack.c.l.b16 %v5040
    %v5282 = vunpack.c.h.b16 %v5040
    %v5283 = vunpack.c.l.b16 %v5041
    %v5284 = vunpack.c.h.b16 %v5041
    %v5285 = vunpack.c.l.b16 %v5042
    %v5286 = vunpack.c.h.b16 %v5042
    %v5287 = vunpack.c.l.b16 %v5043
    %v5288 = vunpack.c.h.b16 %v5043
    %v5289 = vunpack.c.l.b16 %v5044
    %v5290 = vunpack.c.h.b16 %v5044
    %v5291 = vunpack.c.l.b16 %v5045
    %v5292 = vunpack.c.h.b16 %v5045
    %v5293 = vunpack.c.l.b16 %v5046
    %v5294 = vunpack.c.h.b16 %v5046
    %v5295 = vunpack.c.l.b16 %v5047
    %v5296 = vunpack.c.h.b16 %v5047
    %v5297 = vunpack.c.l.b16 %v5048
    %v5298 = vunpack.c.h.b16 %v5048
    %v5299 = vunpack.c.l.b16 %v5049
    %v5300 = vunpack.c.h.b16 %v5049
    %v5301 = vunpack.c.l.b16 %v5050
    %v5302 = vunpack.c.h.b16 %v5050
    %v5303 = vunpack.c.l.b16 %v5051
    %v5304 = vunpack.c.h.b16 %v5051
    %v5305 = vunpack.c.l.b16 %v5052
    %v5306 = vunpack.c.h.b16 %v5052
    %v5307 = vunpack.c.l.b16 %v5053
    %v5308 = vunpack.c.h.b16 %v5053
    %v5309 = vunpack.c.l.b16 %v5054
    %v5310 = vunpack.c.h.b16 %v5054
    %v5311 = vunpack.c.l.b16 %v5055
    %v5312 = vunpack.c.h.b16 %v5055
    %v5313 = vunpack.c.l.b16 %v5056
    %v5314 = vunpack.c.h.b16 %v5056
    %v5315 = vunpack.c.l.b16 %v5057
    %v5316 = vunpack.c.h.b16 %v5057
    %v5317 = vunpack.c.l.b16 %v5058
    %v5318 = vunpack.c.h.b16 %v5058
    %v5319 = vunpack.c.l.b16 %v5059
    %v5320 = vunpack.c.h.b16 %v5059
    %v5321 = vunpack.c.l.b16 %v5060
    %v5322 = vunpack.c.h.b16 %v5060
    %v5323 = vunpack.c.l.b16 %v5061
    %v5324 = vunpack.c.h.b16 %v5061
    %v5325 = vunpack.c.l.b16 %v5062
    %v5326 = vunpack.c.h.b16 %v5062
    %v5327 = vunpack.c.l.b16 %v5063
    %v5328 = vunpack.c.h.b16 %v5063
    %v5329 = vunpack.c.l.b16 %v5064
    %v5330 = vunpack.c.h.b16 %v5064
    %v5331 = vunpack.c.l.b16 %v5065
    %v5332 = vunpack.c.h.b16 %v5065
    %v5333 = vunpack.c.l.b16 %v5066
    %v5334 = vunpack.c.h.b16 %v5066
    %v5335 = vunpack.c.l.b16 %v5067
    %v5336 = vunpack.c.h.b16 %v5067
    %v5337 = vunpack.c.l.b16 %v5068
    %v5338 = vunpack.c.h.b16 %v5068
    %v5339 = vunpack.c.l.b16 %v5069
    %v5340 = vunpack.c.h.b16 %v5069
    %v5341 = vunpack.c.l.b16 %v5070
    %v5342 = vunpack.c.h.b16 %v5070
    %v5343 = vunpack.c.l.b16 %v5071
    %v5344 = vunpack.c.h.b16 %v5071
    %v5345 = vunpack.c.l.b16 %v5072
    %v5346 = vunpack.c.h.b16 %v5072
    %v5347 = vunpack.c.l.b16 %v5073
    %v5348 = vunpack.c.h.b16 %v5073
    %v5349 = vunpack.c.l.b16 %v5074
    %v5350 = vunpack.c.h.b16 %v5074
    %v5351 = vunpack.c.l.b16 %v5075
    %v5352 = vunpack.c.h.b16 %v5075
    %v5353 = vunpack.c.l.b16 %v5076
    %v5354 = vunpack.c.h.b16 %v5076
    %v5355 = vunpack.c.l.b16 %v5077
    %v5356 = vunpack.c.h.b16 %v5077
    %v5357 = vunpack.c.l.b16 %v5078
    %v5358 = vunpack.c.h.b16 %v5078
    %v5359 = vunpack.c.l.b16 %v5079
    %v5360 = vunpack.c.h.b16 %v5079
    %v5361 = vunpack.c.l.b16 %v5080
    %v5362 = vunpack.c.h.b16 %v5080
    %v5363 = vunpack.c.l.b16 %v5081
    %v5364 = vunpack.c.h.b16 %v5081
    %v5365 = vunpack.c.l.b16 %v5082
    %v5366 = vunpack.c.h.b16 %v5082
    %v5367 = vunpack.c.l.b16 %v5083
    %v5368 = vunpack.c.h.b16 %v5083
    %v5369 = vunpack.c.l.b16 %v5084
    %v5370 = vunpack.c.h.b16 %v5084
    %v5371 = vunpack.c.l.b16 %v5085
    %v5372 = vunpack.c.h.b16 %v5085
    %v5373 = vunpack.c.l.b16 %v5086
    %v5374 = vunpack.c.h.b16 %v5086
    %v5375 = vunpack.c.l.b16 %v5087
    %v5376 = vunpack.c.h.b16 %v5087
    %v5377 = vunpack.c.l.b16 %v5088
    %v5378 = vunpack.c.h.b16 %v5088
    %v5379 = vunpack.c.l.b16 %v5089
    %v5380 = vunpack.c.h.b16 %v5089
    %v5381 = vunpack.c.l.b16 %v5090
    %v5382 = vunpack.c.h.b16 %v5090
    %v5383 = vunpack.c.l.b16 %v5091
    %v5384 = vunpack.c.h.b16 %v5091
    %v5385 = vunpack.c.l.b16 %v5092
    %v5386 = vunpack.c.h.b16 %v5092
    %v5387 = vunpack.c.l.b16 %v5093
    %v5388 = vunpack.c.h.b16 %v5093
    %v5389 = vunpack.c.l.b16 %v5094
    %v5390 = vunpack.c.h.b16 %v5094
    %v5391 = vunpack.c.l.b16 %v5095
    %v5392 = vunpack.c.h.b16 %v5095
    %v5393 = vunpack.c.l.b16 %v5096
    %v5394 = vunpack.c.h.b16 %v5096
    %v5395 = vunpack.c.l.b16 %v5097
    %v5396 = vunpack.c.h.b16 %v5097
    %v5397 = vunpack.c.l.b16 %v5098
    %v5398 = vunpack.c.h.b16 %v5098
    %v5399 = vunpack.c.l.b16 %v5099
    %v5400 = vunpack.c.h.b16 %v5099
    %v5401 = vunpack.c.l.b16 %v5100
    %v5402 = vunpack.c.h.b16 %v5100
    %v5403 = vunpack.c.l.b16 %v5101
    %v5404 = vunpack.c.h.b16 %v5101
    %v5405 = vunpack.c.l.b16 %v5102
    %v5406 = vunpack.c.h.b16 %v5102
    %v5407 = vunpack.c.l.b16 %v5103
    %v5408 = vunpack.c.h.b16 %v5103
    %v5409 = vunpack.c.l.b16 %v5104
    %v5410 = vunpack.c.h.b16 %v5104
    %v5411 = vunpack.c.l.b16 %v5105
    %v5412 = vunpack.c.h.b16 %v5105
    %v5413 = vunpack.c.l.b16 %v5106
    %v5414 = vunpack.c.h.b16 %v5106
    %v5415 = vunpack.c.l.b16 %v5107
    %v5416 = vunpack.c.h.b16 %v5107
    %v5417 = vunpack.c.l.b16 %v5108
    %v5418 = vunpack.c.h.b16 %v5108
    %v5419 = vunpack.c.l.b16 %v5109
    %v5420 = vunpack.c.h.b16 %v5109
    %v5421 = vunpack.c.l.b16 %v5110
    %v5422 = vunpack.c.h.b16 %v5110
    %v5423 = vunpack.c.l.b16 %v5111
    %v5424 = vunpack.c.h.b16 %v5111
    %v5425 = vunpack.c.l.b16 %v5112
    %v5426 = vunpack.c.h.b16 %v5112
    %v5427 = vunpack.c.l.b16 %v5113
    %v5428 = vunpack.c.h.b16 %v5113
    %v5429 = vunpack.c.l.b16 %v5114
    %v5430 = vunpack.c.h.b16 %v5114
    %v5431 = vunpack.c.l.b16 %v5115
    %v5432 = vunpack.c.h.b16 %v5115
    %v5433 = vunpack.c.l.b16 %v5116
    %v5434 = vunpack.c.h.b16 %v5116
    %v5435 = vunpack.c.l.b16 %v5117
    %v5436 = vunpack.c.h.b16 %v5117
    %v5437 = vunpack.c.l.b16 %v5118
    %v5438 = vunpack.c.h.b16 %v5118
    %v5439 = vpack.c.b16 %v5259, %v5253
    %v5440 = vpack.c.b16 %v5260, %v5254
    %v5441 = vpack.c.b16 %v5261, %v5255
    %v5442 = vpack.c.b16 %v5262, %v5256
    %v5443 = vpack.c.b16 %v5263, %v5257
    %v5444 = vpack.c.b16 %v5264, %v5258
    %v5445 = vpack.c.b16 %v5271, %v5265
    %v5446 = vpack.c.b16 %v5272, %v5266
    %v5447 = vpack.c.b16 %v5273, %v5267
    %v5448 = vpack.c.b16 %v5274, %v5268
    %v5449 = vpack.c.b16 %v5275, %v5269
    %v5450 = vpack.c.b16 %v5276, %v5270
    %v5451 = vpack.c.b16 %v5283, %v5277
    %v5452 = vpack.c.b16 %v5284, %v5278
    %v5453 = vpack.c.b16 %v5285, %v5279
    %v5454 = vpack.c.b16 %v5286, %v5280
    %v5455 = vpack.c.b16 %v5287, %v5281
    %v5456 = vpack.c.b16 %v5288, %v5282
    %v5457 = vpack.c.b16 %v5295, %v5289
    %v5458 = vpack.c.b16 %v5296, %v5290
    %v5459 = vpack.c.b16 %v5297, %v5291
    %v5460 = vpack.c.b16 %v5298, %v5292
    %v5461 = vpack.c.b16 %v5299, %v5293
    %v5462 = vpack.c.b16 %v5300, %v5294
    %v5463 = vpack.c.b16 %v5307, %v5301
    %v5464 = vpack.c.b16 %v5308, %v5302
    %v5465 = vpack.c.b16 %v5309, %v5303
    %v5466 = vpack.c.b16 %v5310, %v5304
    %v5467 = vpack.c.b16 %v5311, %v5305
    %v5468 = vpack.c.b16 %v5312, %v5306
    %v5469 = vpack.c.b16 %v5319, %v5313
    %v5470 = vpack.c.b16 %v5320, %v5314
    %v5471 = vpack.c.b16 %v5321, %v5315
    %v5472 = vpack.c.b16 %v5322, %v5316
    %v5473 = vpack.c.b16 %v5323, %v5317
    %v5474 = vpack.c.b16 %v5324, %v5318
    %v5475 = vpack.c.b16 %v5331, %v5325
    %v5476 = vpack.c.b16 %v5332, %v5326
    %v5477 = vpack.c.b16 %v5333, %v5327
    %v5478 = vpack.c.b16 %v5334, %v5328
    %v5479 = vpack.c.b16 %v5335, %v5329
    %v5480 = vpack.c.b16 %v5336, %v5330
    %v5481 = vpack.c.b16 %v5343, %v5337
    %v5482 = vpack.c.b16 %v5344, %v5338
    %v5483 = vpack.c.b16 %v5345, %v5339
    %v5484 = vpack.c.b16 %v5346, %v5340
    %v5485 = vpack.c.b16 %v5347, %v5341
    %v5486 = vpack.c.b16 %v5348, %v5342
    %v5487 = vpack.c.b16 %v5355, %v5349
    %v5488 = vpack.c.b16 %v5356, %v5350
    %v5489 = vpack.c.b16 %v5357, %v5351
    %v5490 = vpack.c.b16 %v5358, %v5352
    %v5491 = vpack.c.b16 %v5359, %v5353
    %v5492 = vpack.c.b16 %v5360, %v5354
    %v5493 = vpack.c.b16 %v5367, %v5361
    %v5494 = vpack.c.b16 %v5368, %v5362
    %v5495 = vpack.c.b16 %v5369, %v5363
    %v5496 = vpack.c.b16 %v5370, %v5364
    %v5497 = vpack.c.b16 %v5371, %v5365
    %v5498 = vpack.c.b16 %v5372, %v5366
    %v5499 = vpack.c.b16 %v5379, %v5373
    %v5500 = vpack.c.b16 %v5380, %v5374
    %v5501 = vpack.c.b16 %v5381, %v5375
    %v5502 = vpack.c.b16 %v5382, %v5376
    %v5503 = vpack.c.b16 %v5383, %v5377
    %v5504 = vpack.c.b16 %v5384, %v5378
    %v5505 = vpack.c.b16 %v5391, %v5385
    %v5506 = vpack.c.b16 %v5392, %v5386
    %v5507 = vpack.c.b16 %v5393, %v5387
    %v5508 = vpack.c.b16 %v5394, %v5388
    %v5509 = vpack.c.b16 %v5395, %v5389
    %v5510 = vpack.c.b16 %v5396, %v5390
    %v5511 = vpack.c.b16 %v5403, %v5397
    %v5512 = vpack.c.b16 %v5404, %v5398
    %v5513 = vpack.c.b16 %v5405, %v5399
    %v5514 = vpack.c.b16 %v5406, %v5400
    %v5515 = vpack.c.b16 %v5407, %v5401
    %v5516 = vpack.c.b16 %v5408, %v5402
    %v5517 = vpack.c.b16 %v5415, %v5409
    %v5518 = vpack.c.b16 %v5416, %v5410
    %v5519 = vpack.c.b16 %v5417, %v5411
    %v5520 = vpack.c.b16 %v5418, %v5412
    %v5521 = vpack.c.b16 %v5419, %v5413
    %v5522 = vpack.c.b16 %v5420, %v5414
    %v5523 = vpack.c.b16 %v5427, %v5421
    %v5524 = vpack.c.b16 %v5428, %v5422
    %v5525 = vpack.c.b16 %v5429, %v5423
    %v5526 = vpack.c.b16 %v5430, %v5424
    %v5527 = vpack.c.b16 %v5431, %v5425
    %v5528 = vpack.c.b16 %v5432, %v5426
    %v5529 = vpack.c.b16 %v5433, %v5433
    %v5530 = vpack.c.b16 %v5434, %v5434
    %v5531 = vpack.c.b16 %v5435, %v5435
    %v5532 = vpack.c.b16 %v5436, %v5436
    %v5533 = vpack.c.b16 %v5437, %v5437
    %v5534 = vpack.c.b16 %v5438, %v5438
    %vm5615 = vcmask 64512
    %v5617 = vsel %vm5615, %v5444, 0
    %v5620 = vsel %vm5615, %v5450, 0
    %v5623 = vsel %vm5615, %v5456, 0
    %v5626 = vsel %vm5615, %v5462, 0
    %v5629 = vsel %vm5615, %v5468, 0
    %v5632 = vsel %vm5615, %v5474, 0
    %v5635 = vsel %vm5615, %v5480, 0
    %v5638 = vsel %vm5615, %v5486, 0
    %v5641 = vsel %vm5615, %v5492, 0
    %v5644 = vsel %vm5615, %v5498, 0
    %v5647 = vsel %vm5615, %v5504, 0
    %v5650 = vsel %vm5615, %v5510, 0
    %v5653 = vsel %vm5615, %v5516, 0
    %v5656 = vsel %vm5615, %v5522, 0
    %v5659 = vsel %vm5615, %v5528, 0
    %v5662 = vsel %vm5615, %v5534, 0
    %vm5664 = vcmask 1043456
    %v5666 = vsel %vm5664, %v5159, 0
    %5668 = vmatpush.bf16.msra.mxu0 %v5126
    %5669 = vmatpush.bf16.msra.mxu0 %v5125
    %5670 = vmatpush.bf16.msra.mxu0 %v5124
    %5671 = vmatpush.bf16.msra.mxu0 %v5123
    %5672 = vmatpush.bf16.msra.mxu0 %v5122
    %5673 = vmatpush.bf16.msra.mxu0 %v5121
    %5674 = vmatpush.bf16.msra.mxu0 %v5120
    %5675 = vmatpush.bf16.msra.mxu0 %v5119
    %5676 = vmatmul.bf16.gmra.mxu0 %v5439
    %v5677 = vpop.f32.mrf.mxu0
    %v5678 = vadd.f32 0.0, %v5677
    %v5679 = vpop.f32.mrf.mxu0
    %v5680 = vadd.f32 0.0, %v5679
    %5681 = vmatmul.bf16.gmra.mxu0 %v5445
    %v5682 = vpop.f32.mrf.mxu0
    %v5683 = vadd.f32 0.0, %v5682
    %v5684 = vpop.f32.mrf.mxu0
    %v5685 = vadd.f32 0.0, %v5684
    %5686 = vmatmul.bf16.gmra.mxu0 %v5451
    %v5687 = vpop.f32.mrf.mxu0
    %v5688 = vadd.f32 0.0, %v5687
    %v5689 = vpop.f32.mrf.mxu0
    %v5690 = vadd.f32 0.0, %v5689
    %5691 = vmatmul.bf16.gmra.mxu0 %v5457
    %v5692 = vpop.f32.mrf.mxu0
    %v5693 = vadd.f32 0.0, %v5692
    %v5694 = vpop.f32.mrf.mxu0
    %v5695 = vadd.f32 0.0, %v5694
    %5696 = vmatmul.bf16.gmra.mxu0 %v5463
    %v5697 = vpop.f32.mrf.mxu0
    %v5698 = vadd.f32 0.0, %v5697
    %v5699 = vpop.f32.mrf.mxu0
    %v5700 = vadd.f32 0.0, %v5699
    %5701 = vmatmul.bf16.gmra.mxu0 %v5469
    %v5702 = vpop.f32.mrf.mxu0
    %v5703 = vadd.f32 0.0, %v5702
    %v5704 = vpop.f32.mrf.mxu0
    %v5705 = vadd.f32 0.0, %v5704
    %5706 = vmatmul.bf16.gmra.mxu0 %v5475
    %v5707 = vpop.f32.mrf.mxu0
    %v5708 = vadd.f32 0.0, %v5707
    %v5709 = vpop.f32.mrf.mxu0
    %v5710 = vadd.f32 0.0, %v5709
    %5711 = vmatmul.bf16.gmra.mxu0 %v5481
    %v5712 = vpop.f32.mrf.mxu0
    %v5713 = vadd.f32 0.0, %v5712
    %v5714 = vpop.f32.mrf.mxu0
    %v5715 = vadd.f32 0.0, %v5714
    %5716 = vmatmul.bf16.gmra.mxu0 %v5487
    %v5717 = vpop.f32.mrf.mxu0
    %v5718 = vadd.f32 0.0, %v5717
    %v5719 = vpop.f32.mrf.mxu0
    %v5720 = vadd.f32 0.0, %v5719
    %5721 = vmatmul.bf16.gmra.mxu0 %v5493
    %v5722 = vpop.f32.mrf.mxu0
    %v5723 = vadd.f32 0.0, %v5722
    %v5724 = vpop.f32.mrf.mxu0
    %v5725 = vadd.f32 0.0, %v5724
    %5726 = vmatmul.bf16.gmra.mxu0 %v5499
    %v5727 = vpop.f32.mrf.mxu0
    %v5728 = vadd.f32 0.0, %v5727
    %v5729 = vpop.f32.mrf.mxu0
    %v5730 = vadd.f32 0.0, %v5729
    %5731 = vmatmul.bf16.gmra.mxu0 %v5505
    %v5732 = vpop.f32.mrf.mxu0
    %v5733 = vadd.f32 0.0, %v5732
    %v5734 = vpop.f32.mrf.mxu0
    %v5735 = vadd.f32 0.0, %v5734
    %5736 = vmatmul.bf16.gmra.mxu0 %v5511
    %v5737 = vpop.f32.mrf.mxu0
    %v5738 = vadd.f32 0.0, %v5737
    %v5739 = vpop.f32.mrf.mxu0
    %v5740 = vadd.f32 0.0, %v5739
    %5741 = vmatmul.bf16.gmra.mxu0 %v5517
    %v5742 = vpop.f32.mrf.mxu0
    %v5743 = vadd.f32 0.0, %v5742
    %v5744 = vpop.f32.mrf.mxu0
    %v5745 = vadd.f32 0.0, %v5744
    %5746 = vmatmul.bf16.gmra.mxu0 %v5523
    %v5747 = vpop.f32.mrf.mxu0
    %v5748 = vadd.f32 0.0, %v5747
    %v5749 = vpop.f32.mrf.mxu0
    %v5750 = vadd.f32 0.0, %v5749
    %5751 = vmatmul.bf16.gmra.mxu0 %v5529
    %v5752 = vpop.f32.mrf.mxu0
    %v5753 = vadd.f32 0.0, %v5752
    %v5754 = vpop.f32.mrf.mxu0
    %5755 = vdwg.mxu0
    %5756 = vmatpush.bf16.msra.mxu0 %v5134
    %5757 = vmatpush.bf16.msra.mxu0 %v5133
    %5758 = vmatpush.bf16.msra.mxu0 %v5132
    %5759 = vmatpush.bf16.msra.mxu0 %v5131
    %5760 = vmatpush.bf16.msra.mxu0 %v5130
    %5761 = vmatpush.bf16.msra.mxu0 %v5129
    %5762 = vmatpush.bf16.msra.mxu0 %v5128
    %5763 = vmatpush.bf16.msra.mxu0 %v5127
    %5764 = vmatmul.bf16.gmra.mxu0 %v5440
    %v5765 = vpop.f32.mrf.mxu0
    %v5766 = vadd.f32 %v5678, %v5765
    %v5767 = vpop.f32.mrf.mxu0
    %v5768 = vadd.f32 %v5680, %v5767
    %5769 = vmatmul.bf16.gmra.mxu0 %v5446
    %v5770 = vpop.f32.mrf.mxu0
    %v5771 = vadd.f32 %v5683, %v5770
    %v5772 = vpop.f32.mrf.mxu0
    %v5773 = vadd.f32 %v5685, %v5772
    %5774 = vmatmul.bf16.gmra.mxu0 %v5452
    %v5775 = vpop.f32.mrf.mxu0
    %v5776 = vadd.f32 %v5688, %v5775
    %v5777 = vpop.f32.mrf.mxu0
    %v5778 = vadd.f32 %v5690, %v5777
    %5779 = vmatmul.bf16.gmra.mxu0 %v5458
    %v5780 = vpop.f32.mrf.mxu0
    %v5781 = vadd.f32 %v5693, %v5780
    %v5782 = vpop.f32.mrf.mxu0
    %v5783 = vadd.f32 %v5695, %v5782
    %5784 = vmatmul.bf16.gmra.mxu0 %v5464
    %v5785 = vpop.f32.mrf.mxu0
    %v5786 = vadd.f32 %v5698, %v5785
    %v5787 = vpop.f32.mrf.mxu0
    %v5788 = vadd.f32 %v5700, %v5787
    %5789 = vmatmul.bf16.gmra.mxu0 %v5470
    %v5790 = vpop.f32.mrf.mxu0
    %v5791 = vadd.f32 %v5703, %v5790
    %v5792 = vpop.f32.mrf.mxu0
    %v5793 = vadd.f32 %v5705, %v5792
    %5794 = vmatmul.bf16.gmra.mxu0 %v5476
    %v5795 = vpop.f32.mrf.mxu0
    %v5796 = vadd.f32 %v5708, %v5795
    %v5797 = vpop.f32.mrf.mxu0
    %v5798 = vadd.f32 %v5710, %v5797
    %5799 = vmatmul.bf16.gmra.mxu0 %v5482
    %v5800 = vpop.f32.mrf.mxu0
    %v5801 = vadd.f32 %v5713, %v5800
    %v5802 = vpop.f32.mrf.mxu0
    %v5803 = vadd.f32 %v5715, %v5802
    %5804 = vmatmul.bf16.gmra.mxu0 %v5488
    %v5805 = vpop.f32.mrf.mxu0
    %v5806 = vadd.f32 %v5718, %v5805
    %v5807 = vpop.f32.mrf.mxu0
    %v5808 = vadd.f32 %v5720, %v5807
    %5809 = vmatmul.bf16.gmra.mxu0 %v5494
    %v5810 = vpop.f32.mrf.mxu0
    %v5811 = vadd.f32 %v5723, %v5810
    %v5812 = vpop.f32.mrf.mxu0
    %v5813 = vadd.f32 %v5725, %v5812
    %5814 = vmatmul.bf16.gmra.mxu0 %v5500
    %v5815 = vpop.f32.mrf.mxu0
    %v5816 = vadd.f32 %v5728, %v5815
    %v5817 = vpop.f32.mrf.mxu0
    %v5818 = vadd.f32 %v5730, %v5817
    %5819 = vmatmul.bf16.gmra.mxu0 %v5506
    %v5820 = vpop.f32.mrf.mxu0
    %v5821 = vadd.f32 %v5733, %v5820
    %v5822 = vpop.f32.mrf.mxu0
    %v5823 = vadd.f32 %v5735, %v5822
    %5824 = vmatmul.bf16.gmra.mxu0 %v5512
    %v5825 = vpop.f32.mrf.mxu0
    %v5826 = vadd.f32 %v5738, %v5825
    %v5827 = vpop.f32.mrf.mxu0
    %v5828 = vadd.f32 %v5740, %v5827
    %5829 = vmatmul.bf16.gmra.mxu0 %v5518
    %v5830 = vpop.f32.mrf.mxu0
    %v5831 = vadd.f32 %v5743, %v5830
    %v5832 = vpop.f32.mrf.mxu0
    %v5833 = vadd.f32 %v5745, %v5832
    %5834 = vmatmul.bf16.gmra.mxu0 %v5524
    %v5835 = vpop.f32.mrf.mxu0
    %v5836 = vadd.f32 %v5748, %v5835
    %v5837 = vpop.f32.mrf.mxu0
    %v5838 = vadd.f32 %v5750, %v5837
    %5839 = vmatmul.bf16.gmra.mxu0 %v5530
    %v5840 = vpop.f32.mrf.mxu0
    %v5841 = vadd.f32 %v5753, %v5840
    %v5842 = vpop.f32.mrf.mxu0
    %5843 = vdwg.mxu0
    %5844 = vmatpush.bf16.msra.mxu0 %v5142
    %5845 = vmatpush.bf16.msra.mxu0 %v5141
    %5846 = vmatpush.bf16.msra.mxu0 %v5140
    %5847 = vmatpush.bf16.msra.mxu0 %v5139
    %5848 = vmatpush.bf16.msra.mxu0 %v5138
    %5849 = vmatpush.bf16.msra.mxu0 %v5137
    %5850 = vmatpush.bf16.msra.mxu0 %v5136
    %5851 = vmatpush.bf16.msra.mxu0 %v5135
    %5852 = vmatmul.bf16.gmra.mxu0 %v5441
    %v5853 = vpop.f32.mrf.mxu0
    %v5854 = vadd.f32 %v5766, %v5853
    %v5855 = vpop.f32.mrf.mxu0
    %v5856 = vadd.f32 %v5768, %v5855
    %5857 = vmatmul.bf16.gmra.mxu0 %v5447
    %v5858 = vpop.f32.mrf.mxu0
    %v5859 = vadd.f32 %v5771, %v5858
    %v5860 = vpop.f32.mrf.mxu0
    %v5861 = vadd.f32 %v5773, %v5860
    %5862 = vmatmul.bf16.gmra.mxu0 %v5453
    %v5863 = vpop.f32.mrf.mxu0
    %v5864 = vadd.f32 %v5776, %v5863
    %v5865 = vpop.f32.mrf.mxu0
    %v5866 = vadd.f32 %v5778, %v5865
    %5867 = vmatmul.bf16.gmra.mxu0 %v5459
    %v5868 = vpop.f32.mrf.mxu0
    %v5869 = vadd.f32 %v5781, %v5868
    %v5870 = vpop.f32.mrf.mxu0
    %v5871 = vadd.f32 %v5783, %v5870
    %5872 = vmatmul.bf16.gmra.mxu0 %v5465
    %v5873 = vpop.f32.mrf.mxu0
    %v5874 = vadd.f32 %v5786, %v5873
    %v5875 = vpop.f32.mrf.mxu0
    %v5876 = vadd.f32 %v5788, %v5875
    %5877 = vmatmul.bf16.gmra.mxu0 %v5471
    %v5878 = vpop.f32.mrf.mxu0
    %v5879 = vadd.f32 %v5791, %v5878
    %v5880 = vpop.f32.mrf.mxu0
    %v5881 = vadd.f32 %v5793, %v5880
    %5882 = vmatmul.bf16.gmra.mxu0 %v5477
    %v5883 = vpop.f32.mrf.mxu0
    %v5884 = vadd.f32 %v5796, %v5883
    %v5885 = vpop.f32.mrf.mxu0
    %v5886 = vadd.f32 %v5798, %v5885
    %5887 = vmatmul.bf16.gmra.mxu0 %v5483
    %v5888 = vpop.f32.mrf.mxu0
    %v5889 = vadd.f32 %v5801, %v5888
    %v5890 = vpop.f32.mrf.mxu0
    %v5891 = vadd.f32 %v5803, %v5890
    %5892 = vmatmul.bf16.gmra.mxu0 %v5489
    %v5893 = vpop.f32.mrf.mxu0
    %v5894 = vadd.f32 %v5806, %v5893
    %v5895 = vpop.f32.mrf.mxu0
    %v5896 = vadd.f32 %v5808, %v5895
    %5897 = vmatmul.bf16.gmra.mxu0 %v5495
    %v5898 = vpop.f32.mrf.mxu0
    %v5899 = vadd.f32 %v5811, %v5898
    %v5900 = vpop.f32.mrf.mxu0
    %v5901 = vadd.f32 %v5813, %v5900
    %5902 = vmatmul.bf16.gmra.mxu0 %v5501
    %v5903 = vpop.f32.mrf.mxu0
    %v5904 = vadd.f32 %v5816, %v5903
    %v5905 = vpop.f32.mrf.mxu0
    %v5906 = vadd.f32 %v5818, %v5905
    %5907 = vmatmul.bf16.gmra.mxu0 %v5507
    %v5908 = vpop.f32.mrf.mxu0
    %v5909 = vadd.f32 %v5821, %v5908
    %v5910 = vpop.f32.mrf.mxu0
    %v5911 = vadd.f32 %v5823, %v5910
    %5912 = vmatmul.bf16.gmra.mxu0 %v5513
    %v5913 = vpop.f32.mrf.mxu0
    %v5914 = vadd.f32 %v5826, %v5913
    %v5915 = vpop.f32.mrf.mxu0
    %v5916 = vadd.f32 %v5828, %v5915
    %5917 = vmatmul.bf16.gmra.mxu0 %v5519
    %v5918 = vpop.f32.mrf.mxu0
    %v5919 = vadd.f32 %v5831, %v5918
    %v5920 = vpop.f32.mrf.mxu0
    %v5921 = vadd.f32 %v5833, %v5920
    %5922 = vmatmul.bf16.gmra.mxu0 %v5525
    %v5923 = vpop.f32.mrf.mxu0
    %v5924 = vadd.f32 %v5836, %v5923
    %v5925 = vpop.f32.mrf.mxu0
    %v5926 = vadd.f32 %v5838, %v5925
    %5927 = vmatmul.bf16.gmra.mxu0 %v5531
    %v5928 = vpop.f32.mrf.mxu0
    %v5929 = vadd.f32 %v5841, %v5928
    %v5930 = vpop.f32.mrf.mxu0
    %5931 = vdwg.mxu0
    %5932 = vmatpush.bf16.msra.mxu0 %v5150
    %5933 = vmatpush.bf16.msra.mxu0 %v5149
    %5934 = vmatpush.bf16.msra.mxu0 %v5148
    %5935 = vmatpush.bf16.msra.mxu0 %v5147
    %5936 = vmatpush.bf16.msra.mxu0 %v5146
    %5937 = vmatpush.bf16.msra.mxu0 %v5145
    %5938 = vmatpush.bf16.msra.mxu0 %v5144
    %5939 = vmatpush.bf16.msra.mxu0 %v5143
    %5940 = vmatmul.bf16.gmra.mxu0 %v5442
    %v5941 = vpop.f32.mrf.mxu0
    %v5942 = vadd.f32 %v5854, %v5941
    %v5943 = vpop.f32.mrf.mxu0
    %v5944 = vadd.f32 %v5856, %v5943
    %5945 = vmatmul.bf16.gmra.mxu0 %v5448
    %v5946 = vpop.f32.mrf.mxu0
    %v5947 = vadd.f32 %v5859, %v5946
    %v5948 = vpop.f32.mrf.mxu0
    %v5949 = vadd.f32 %v5861, %v5948
    %5950 = vmatmul.bf16.gmra.mxu0 %v5454
    %v5951 = vpop.f32.mrf.mxu0
    %v5952 = vadd.f32 %v5864, %v5951
    %v5953 = vpop.f32.mrf.mxu0
    %v5954 = vadd.f32 %v5866, %v5953
    %5955 = vmatmul.bf16.gmra.mxu0 %v5460
    %v5956 = vpop.f32.mrf.mxu0
    %v5957 = vadd.f32 %v5869, %v5956
    %v5958 = vpop.f32.mrf.mxu0
    %v5959 = vadd.f32 %v5871, %v5958
    %5960 = vmatmul.bf16.gmra.mxu0 %v5466
    %v5961 = vpop.f32.mrf.mxu0
    %v5962 = vadd.f32 %v5874, %v5961
    %v5963 = vpop.f32.mrf.mxu0
    %v5964 = vadd.f32 %v5876, %v5963
    %5965 = vmatmul.bf16.gmra.mxu0 %v5472
    %v5966 = vpop.f32.mrf.mxu0
    %v5967 = vadd.f32 %v5879, %v5966
    %v5968 = vpop.f32.mrf.mxu0
    %v5969 = vadd.f32 %v5881, %v5968
    %5970 = vmatmul.bf16.gmra.mxu0 %v5478
    %v5971 = vpop.f32.mrf.mxu0
    %v5972 = vadd.f32 %v5884, %v5971
    %v5973 = vpop.f32.mrf.mxu0
    %v5974 = vadd.f32 %v5886, %v5973
    %5975 = vmatmul.bf16.gmra.mxu0 %v5484
    %v5976 = vpop.f32.mrf.mxu0
    %v5977 = vadd.f32 %v5889, %v5976
    %v5978 = vpop.f32.mrf.mxu0
    %v5979 = vadd.f32 %v5891, %v5978
    %5980 = vmatmul.bf16.gmra.mxu0 %v5490
    %v5981 = vpop.f32.mrf.mxu0
    %v5982 = vadd.f32 %v5894, %v5981
    %v5983 = vpop.f32.mrf.mxu0
    %v5984 = vadd.f32 %v5896, %v5983
    %5985 = vmatmul.bf16.gmra.mxu0 %v5496
    %v5986 = vpop.f32.mrf.mxu0
    %v5987 = vadd.f32 %v5899, %v5986
    %v5988 = vpop.f32.mrf.mxu0
    %v5989 = vadd.f32 %v5901, %v5988
    %5990 = vmatmul.bf16.gmra.mxu0 %v5502
    %v5991 = vpop.f32.mrf.mxu0
    %v5992 = vadd.f32 %v5904, %v5991
    %v5993 = vpop.f32.mrf.mxu0
    %v5994 = vadd.f32 %v5906, %v5993
    %5995 = vmatmul.bf16.gmra.mxu0 %v5508
    %v5996 = vpop.f32.mrf.mxu0
    %v5997 = vadd.f32 %v5909, %v5996
    %v5998 = vpop.f32.mrf.mxu0
    %v5999 = vadd.f32 %v5911, %v5998
    %6000 = vmatmul.bf16.gmra.mxu0 %v5514
    %v6001 = vpop.f32.mrf.mxu0
    %v6002 = vadd.f32 %v5914, %v6001
    %v6003 = vpop.f32.mrf.mxu0
    %v6004 = vadd.f32 %v5916, %v6003
    %6005 = vmatmul.bf16.gmra.mxu0 %v5520
    %v6006 = vpop.f32.mrf.mxu0
    %v6007 = vadd.f32 %v5919, %v6006
    %v6008 = vpop.f32.mrf.mxu0
    %v6009 = vadd.f32 %v5921, %v6008
    %6010 = vmatmul.bf16.gmra.mxu0 %v5526
    %v6011 = vpop.f32.mrf.mxu0
    %v6012 = vadd.f32 %v5924, %v6011
    %v6013 = vpop.f32.mrf.mxu0
    %v6014 = vadd.f32 %v5926, %v6013
    %6015 = vmatmul.bf16.gmra.mxu0 %v5532
    %v6016 = vpop.f32.mrf.mxu0
    %v6017 = vadd.f32 %v5929, %v6016
    %v6018 = vpop.f32.mrf.mxu0
    %6019 = vdwg.mxu0
    %6020 = vmatpush.bf16.msra.mxu0 %v5158
    %6021 = vmatpush.bf16.msra.mxu0 %v5157
    %6022 = vmatpush.bf16.msra.mxu0 %v5156
    %6023 = vmatpush.bf16.msra.mxu0 %v5155
    %6024 = vmatpush.bf16.msra.mxu0 %v5154
    %6025 = vmatpush.bf16.msra.mxu0 %v5153
    %6026 = vmatpush.bf16.msra.mxu0 %v5152
    %6027 = vmatpush.bf16.msra.mxu0 %v5151
    %6028 = vmatmul.bf16.gmra.mxu0 %v5443
    %v6029 = vpop.f32.mrf.mxu0
    %v6030 = vadd.f32 %v5942, %v6029
    %v6031 = vpop.f32.mrf.mxu0
    %v6032 = vadd.f32 %v5944, %v6031
    %6033 = vmatmul.bf16.gmra.mxu0 %v5449
    %v6034 = vpop.f32.mrf.mxu0
    %v6035 = vadd.f32 %v5947, %v6034
    %v6036 = vpop.f32.mrf.mxu0
    %v6037 = vadd.f32 %v5949, %v6036
    %6038 = vmatmul.bf16.gmra.mxu0 %v5455
    %v6039 = vpop.f32.mrf.mxu0
    %v6040 = vadd.f32 %v5952, %v6039
    %v6041 = vpop.f32.mrf.mxu0
    %v6042 = vadd.f32 %v5954, %v6041
    %6043 = vmatmul.bf16.gmra.mxu0 %v5461
    %v6044 = vpop.f32.mrf.mxu0
    %v6045 = vadd.f32 %v5957, %v6044
    %v6046 = vpop.f32.mrf.mxu0
    %v6047 = vadd.f32 %v5959, %v6046
    %6048 = vmatmul.bf16.gmra.mxu0 %v5467
    %v6049 = vpop.f32.mrf.mxu0
    %v6050 = vadd.f32 %v5962, %v6049
    %v6051 = vpop.f32.mrf.mxu0
    %v6052 = vadd.f32 %v5964, %v6051
    %6053 = vmatmul.bf16.gmra.mxu0 %v5473
    %v6054 = vpop.f32.mrf.mxu0
    %v6055 = vadd.f32 %v5967, %v6054
    %v6056 = vpop.f32.mrf.mxu0
    %v6057 = vadd.f32 %v5969, %v6056
    %6058 = vmatmul.bf16.gmra.mxu0 %v5479
    %v6059 = vpop.f32.mrf.mxu0
    %v6060 = vadd.f32 %v5972, %v6059
    %v6061 = vpop.f32.mrf.mxu0
    %v6062 = vadd.f32 %v5974, %v6061
    %6063 = vmatmul.bf16.gmra.mxu0 %v5485
    %v6064 = vpop.f32.mrf.mxu0
    %v6065 = vadd.f32 %v5977, %v6064
    %v6066 = vpop.f32.mrf.mxu0
    %v6067 = vadd.f32 %v5979, %v6066
    %6068 = vmatmul.bf16.gmra.mxu0 %v5491
    %v6069 = vpop.f32.mrf.mxu0
    %v6070 = vadd.f32 %v5982, %v6069
    %v6071 = vpop.f32.mrf.mxu0
    %v6072 = vadd.f32 %v5984, %v6071
    %6073 = vmatmul.bf16.gmra.mxu0 %v5497
    %v6074 = vpop.f32.mrf.mxu0
    %v6075 = vadd.f32 %v5987, %v6074
    %v6076 = vpop.f32.mrf.mxu0
    %v6077 = vadd.f32 %v5989, %v6076
    %6078 = vmatmul.bf16.gmra.mxu0 %v5503
    %v6079 = vpop.f32.mrf.mxu0
    %v6080 = vadd.f32 %v5992, %v6079
    %v6081 = vpop.f32.mrf.mxu0
    %v6082 = vadd.f32 %v5994, %v6081
    %6083 = vmatmul.bf16.gmra.mxu0 %v5509
    %v6084 = vpop.f32.mrf.mxu0
    %v6085 = vadd.f32 %v5997, %v6084
    %v6086 = vpop.f32.mrf.mxu0
    %v6087 = vadd.f32 %v5999, %v6086
    %6088 = vmatmul.bf16.gmra.mxu0 %v5515
    %v6089 = vpop.f32.mrf.mxu0
    %v6090 = vadd.f32 %v6002, %v6089
    %v6091 = vpop.f32.mrf.mxu0
    %v6092 = vadd.f32 %v6004, %v6091
    %6093 = vmatmul.bf16.gmra.mxu0 %v5521
    %v6094 = vpop.f32.mrf.mxu0
    %v6095 = vadd.f32 %v6007, %v6094
    %v6096 = vpop.f32.mrf.mxu0
    %v6097 = vadd.f32 %v6009, %v6096
    %6098 = vmatmul.bf16.gmra.mxu0 %v5527
    %v6099 = vpop.f32.mrf.mxu0
    %v6100 = vadd.f32 %v6012, %v6099
    %v6101 = vpop.f32.mrf.mxu0
    %v6102 = vadd.f32 %v6014, %v6101
    %6103 = vmatmul.bf16.gmra.mxu0 %v5533
    %v6104 = vpop.f32.mrf.mxu0
    %v6105 = vadd.f32 %v6017, %v6104
    %v6106 = vpop.f32.mrf.mxu0
    %6107 = vdwg.mxu0
    %6108 = vmatpush.bf16.msra.mxu0 0
    %6109 = vmatpush.bf16.msra.mxu0 0
    %6110 = vmatpush.bf16.msra.mxu0 0
    %6111 = vmatpush.bf16.msra.mxu0 0
    %6112 = vmatpush.bf16.msra.mxu0 0
    %6113 = vmatpush.bf16.msra.mxu0 0
    %6114 = vmatpush.bf16.msra.mxu0 0
    %6115 = vmatpush.bf16.msra.mxu0 %v5666
    %6116 = vmatmul.bf16.gmra.mxu0 %v5617
    %v6117 = vpop.f32.mrf.mxu0
    %v6118 = vadd.f32 %v6030, %v6117
    %v6119 = vpop.f32.mrf.mxu0
    %v6120 = vadd.f32 %v6032, %v6119
    %6121 = vmatmul.bf16.gmra.mxu0 %v5620
    %v6122 = vpop.f32.mrf.mxu0
    %v6123 = vadd.f32 %v6035, %v6122
    %v6124 = vpop.f32.mrf.mxu0
    %v6125 = vadd.f32 %v6037, %v6124
    %6126 = vmatmul.bf16.gmra.mxu0 %v5623
    %v6127 = vpop.f32.mrf.mxu0
    %v6128 = vadd.f32 %v6040, %v6127
    %v6129 = vpop.f32.mrf.mxu0
    %v6130 = vadd.f32 %v6042, %v6129
    %6131 = vmatmul.bf16.gmra.mxu0 %v5626
    %v6132 = vpop.f32.mrf.mxu0
    %v6133 = vadd.f32 %v6045, %v6132
    %v6134 = vpop.f32.mrf.mxu0
    %v6135 = vadd.f32 %v6047, %v6134
    %6136 = vmatmul.bf16.gmra.mxu0 %v5629
    %v6137 = vpop.f32.mrf.mxu0
    %v6138 = vadd.f32 %v6050, %v6137
    %v6139 = vpop.f32.mrf.mxu0
    %v6140 = vadd.f32 %v6052, %v6139
    %6141 = vmatmul.bf16.gmra.mxu0 %v5632
    %v6142 = vpop.f32.mrf.mxu0
    %v6143 = vadd.f32 %v6055, %v6142
    %v6144 = vpop.f32.mrf.mxu0
    %v6145 = vadd.f32 %v6057, %v6144
    %6146 = vmatmul.bf16.gmra.mxu0 %v5635
    %v6147 = vpop.f32.mrf.mxu0
    %v6148 = vadd.f32 %v6060, %v6147
    %v6149 = vpop.f32.mrf.mxu0
    %v6150 = vadd.f32 %v6062, %v6149
    %6151 = vmatmul.bf16.gmra.mxu0 %v5638
    %v6152 = vpop.f32.mrf.mxu0
    %v6153 = vadd.f32 %v6065, %v6152
    %v6154 = vpop.f32.mrf.mxu0
    %v6155 = vadd.f32 %v6067, %v6154
    %6156 = vmatmul.bf16.gmra.mxu0 %v5641
    %v6157 = vpop.f32.mrf.mxu0
    %v6158 = vadd.f32 %v6070, %v6157
    %v6159 = vpop.f32.mrf.mxu0
    %v6160 = vadd.f32 %v6072, %v6159
    %6161 = vmatmul.bf16.gmra.mxu0 %v5644
    %v6162 = vpop.f32.mrf.mxu0
    %v6163 = vadd.f32 %v6075, %v6162
    %v6164 = vpop.f32.mrf.mxu0
    %v6165 = vadd.f32 %v6077, %v6164
    %6166 = vmatmul.bf16.gmra.mxu0 %v5647
    %v6167 = vpop.f32.mrf.mxu0
    %v6168 = vadd.f32 %v6080, %v6167
    %v6169 = vpop.f32.mrf.mxu0
    %v6170 = vadd.f32 %v6082, %v6169
    %6171 = vmatmul.bf16.gmra.mxu0 %v5650
    %v6172 = vpop.f32.mrf.mxu0
    %v6173 = vadd.f32 %v6085, %v6172
    %v6174 = vpop.f32.mrf.mxu0
    %v6175 = vadd.f32 %v6087, %v6174
    %6176 = vmatmul.bf16.gmra.mxu0 %v5653
    %v6177 = vpop.f32.mrf.mxu0
    %v6178 = vadd.f32 %v6090, %v6177
    %v6179 = vpop.f32.mrf.mxu0
    %v6180 = vadd.f32 %v6092, %v6179
    %6181 = vmatmul.bf16.gmra.mxu0 %v5656
    %v6182 = vpop.f32.mrf.mxu0
    %v6183 = vadd.f32 %v6095, %v6182
    %v6184 = vpop.f32.mrf.mxu0
    %v6185 = vadd.f32 %v6097, %v6184
    %6186 = vmatmul.bf16.gmra.mxu0 %v5659
    %v6187 = vpop.f32.mrf.mxu0
    %v6188 = vadd.f32 %v6100, %v6187
    %v6189 = vpop.f32.mrf.mxu0
    %v6190 = vadd.f32 %v6102, %v6189
    %6191 = vmatmul.bf16.gmra.mxu0 %v5662
    %v6192 = vpop.f32.mrf.mxu0
    %v6193 = vadd.f32 %v6105, %v6192
    %v6194 = vpop.f32.mrf.mxu0
    %6195 = vdwg.mxu0
    %6196 = vst.msk [vmem:[#allocation2] sm:$0xff] %vm5615, %v6118
    %6197 = vst.msk [vmem:[#allocation2 + $0x8] sm:$0xff] %vm5615, %v6120
    %6198 = vst.msk [vmem:[#allocation2 + $0x10] sm:$0xff] %vm5615, %v6123
    %6199 = vst.msk [vmem:[#allocation2 + $0x18] sm:$0xff] %vm5615, %v6125
    %6200 = vst.msk [vmem:[#allocation2 + $0x20] sm:$0xff] %vm5615, %v6128
    %6201 = vst.msk [vmem:[#allocation2 + $0x28] sm:$0xff] %vm5615, %v6130
    %6202 = vst.msk [vmem:[#allocation2 + $0x30] sm:$0xff] %vm5615, %v6133
    %6203 = vst.msk [vmem:[#allocation2 + $0x38] sm:$0xff] %vm5615, %v6135
    %6204 = vst.msk [vmem:[#allocation2 + $0x40] sm:$0xff] %vm5615, %v6138
    %6205 = vst.msk [vmem:[#allocation2 + $0x48] sm:$0xff] %vm5615, %v6140
    %6206 = vst.msk [vmem:[#allocation2 + $0x50] sm:$0xff] %vm5615, %v6143
    %6207 = vst.msk [vmem:[#allocation2 + $0x58] sm:$0xff] %vm5615, %v6145
    %6208 = vst.msk [vmem:[#allocation2 + $0x60] sm:$0xff] %vm5615, %v6148
    %6209 = vst.msk [vmem:[#allocation2 + $0x68] sm:$0xff] %vm5615, %v6150
    %6210 = vst.msk [vmem:[#allocation2 + $0x70] sm:$0xff] %vm5615, %v6153
    %6211 = vst.msk [vmem:[#allocation2 + $0x78] sm:$0xff] %vm5615, %v6155
    %6212 = vst.msk [vmem:[#allocation2 + $0x80] sm:$0xff] %vm5615, %v6158
    %6213 = vst.msk [vmem:[#allocation2 + $0x88] sm:$0xff] %vm5615, %v6160
    %6214 = vst.msk [vmem:[#allocation2 + $0x90] sm:$0xff] %vm5615, %v6163
    %6215 = vst.msk [vmem:[#allocation2 + $0x98] sm:$0xff] %vm5615, %v6165
    %6216 = vst.msk [vmem:[#allocation2 + $0xa0] sm:$0xff] %vm5615, %v6168
    %6217 = vst.msk [vmem:[#allocation2 + $0xa8] sm:$0xff] %vm5615, %v6170
    %6218 = vst.msk [vmem:[#allocation2 + $0xb0] sm:$0xff] %vm5615, %v6173
    %6219 = vst.msk [vmem:[#allocation2 + $0xb8] sm:$0xff] %vm5615, %v6175
    %6220 = vst.msk [vmem:[#allocation2 + $0xc0] sm:$0xff] %vm5615, %v6178
    %6221 = vst.msk [vmem:[#allocation2 + $0xc8] sm:$0xff] %vm5615, %v6180
    %6222 = vst.msk [vmem:[#allocation2 + $0xd0] sm:$0xff] %vm5615, %v6183
    %6223 = vst.msk [vmem:[#allocation2 + $0xd8] sm:$0xff] %vm5615, %v6185
    %6224 = vst.msk [vmem:[#allocation2 + $0xe0] sm:$0xff] %vm5615, %v6188
    %6225 = vst.msk [vmem:[#allocation2 + $0xe8] sm:$0xff] %vm5615, %v6190
    %vm6226 = vcmask 60416
    %6227 = vst.msk [vmem:[#allocation2 + $0xf0] sm:$0xf] %vm6226, %v6193
    %v6228 = vld [vmem:[#allocation2] sm:$0xff]
    %v6229 = vld [vmem:[#allocation2 + $0x8] sm:$0xff]
    %v6230 = vld [vmem:[#allocation2 + $0x10] sm:$0xff]
    %v6231 = vld [vmem:[#allocation2 + $0x18] sm:$0xff]
    %v6232 = vld [vmem:[#allocation2 + $0x20] sm:$0xff]
    %v6233 = vld [vmem:[#allocation2 + $0x28] sm:$0xff]
    %v6234 = vld [vmem:[#allocation2 + $0x30] sm:$0xff]
    %v6235 = vld [vmem:[#allocation2 + $0x38] sm:$0xff]
    %v6236 = vld [vmem:[#allocation2 + $0x40] sm:$0xff]
    %v6237 = vld [vmem:[#allocation2 + $0x48] sm:$0xff]
    %v6238 = vld [vmem:[#allocation2 + $0x50] sm:$0xff]
    %v6239 = vld [vmem:[#allocation2 + $0x58] sm:$0xff]
    %v6240 = vld [vmem:[#allocation2 + $0x60] sm:$0xff]
    %v6241 = vld [vmem:[#allocation2 + $0x68] sm:$0xff]
    %v6242 = vld [vmem:[#allocation2 + $0x70] sm:$0xff]
    %v6243 = vld [vmem:[#allocation2 + $0x78] sm:$0xff]
    %v6244 = vld [vmem:[#allocation2 + $0x80] sm:$0xff]
    %v6245 = vld [vmem:[#allocation2 + $0x88] sm:$0xff]
    %v6246 = vld [vmem:[#allocation2 + $0x90] sm:$0xff]
    %v6247 = vld [vmem:[#allocation2 + $0x98] sm:$0xff]
    %v6248 = vld [vmem:[#allocation2 + $0xa0] sm:$0xff]
    %v6249 = vld [vmem:[#allocation2 + $0xa8] sm:$0xff]
    %v6250 = vld [vmem:[#allocation2 + $0xb0] sm:$0xff]
    %v6251 = vld [vmem:[#allocation2 + $0xb8] sm:$0xff]
    %v6252 = vld [vmem:[#allocation2 + $0xc0] sm:$0xff]
    %v6253 = vpack.c.bf16 %v6229, %v6228
    %v6254 = vpack.c.bf16 %v6231, %v6230
    %v6255 = vpack.c.bf16 %v6233, %v6232
    %v6256 = vpack.c.bf16 %v6235, %v6234
    %v6257 = vpack.c.bf16 %v6237, %v6236
    %v6258 = vpack.c.bf16 %v6239, %v6238
    %v6259 = vpack.c.bf16 %v6241, %v6240
    %v6260 = vpack.c.bf16 %v6243, %v6242
    %v6261 = vpack.c.bf16 %v6245, %v6244
    %v6262 = vpack.c.bf16 %v6247, %v6246
    %v6263 = vpack.c.bf16 %v6249, %v6248
    %v6264 = vpack.c.bf16 %v6251, %v6250
    %v6265 = vpack.c.bf16 %v6252, %v6252
    %v6266 = vld [vmem:[%s5] sm:$0xf]
    %v6267 = vld [vmem:[#allocation2 + $0x2] sm:$0xff]
    %v6268 = vld [vmem:[#allocation2 + $0xa] sm:$0xff]
    %v6269 = vld [vmem:[#allocation2 + $0x12] sm:$0xff]
    %v6270 = vld [vmem:[#allocation2 + $0x1a] sm:$0xff]
    %v6271 = vld [vmem:[#allocation2 + $0x22] sm:$0xff]
    %v6272 = vld [vmem:[#allocation2 + $0x2a] sm:$0xff]
    %v6273 = vld [vmem:[#allocation2 + $0x32] sm:$0xff]
    %v6274 = vld [vmem:[#allocation2 + $0x3a] sm:$0xff]
    %v6275 = vld [vmem:[#allocation2 + $0x42] sm:$0xff]
    %v6276 = vld [vmem:[#allocation2 + $0x4a] sm:$0xff]
    %v6277 = vld [vmem:[#allocation2 + $0x52] sm:$0xff]
    %v6278 = vld [vmem:[#allocation2 + $0x5a] sm:$0xff]
    %v6279 = vld [vmem:[#allocation2 + $0x62] sm:$0xff]
    %v6280 = vld [vmem:[#allocation2 + $0x6a] sm:$0xff]
    %v6281 = vld [vmem:[#allocation2 + $0x72] sm:$0xff]
    %v6282 = vld [vmem:[#allocation2 + $0x7a] sm:$0xff]
    %v6283 = vld [vmem:[#allocation2 + $0x82] sm:$0xff]
    %v6284 = vld [vmem:[#allocation2 + $0x8a] sm:$0xff]
    %v6285 = vld [vmem:[#allocation2 + $0x92] sm:$0xff]
    %v6286 = vld [vmem:[#allocation2 + $0x9a] sm:$0xff]
    %v6287 = vld [vmem:[#allocation2 + $0xa2] sm:$0xff]
    %v6288 = vld [vmem:[#allocation2 + $0xaa] sm:$0xff]
    %v6289 = vld [vmem:[#allocation2 + $0xb2] sm:$0xff]
    %v6290 = vld [vmem:[#allocation2 + $0xba] sm:$0xff]
    %v6291 = vld [vmem:[#allocation2 + $0xc2] sm:$0xff]
    %v6292 = vpack.c.bf16 %v6268, %v6267
    %v6293 = vpack.c.bf16 %v6270, %v6269
    %v6294 = vpack.c.bf16 %v6272, %v6271
    %v6295 = vpack.c.bf16 %v6274, %v6273
    %v6296 = vpack.c.bf16 %v6276, %v6275
    %v6297 = vpack.c.bf16 %v6278, %v6277
    %v6298 = vpack.c.bf16 %v6280, %v6279
    %v6299 = vpack.c.bf16 %v6282, %v6281
    %v6300 = vpack.c.bf16 %v6284, %v6283
    %v6301 = vpack.c.bf16 %v6286, %v6285
    %v6302 = vpack.c.bf16 %v6288, %v6287
    %v6303 = vpack.c.bf16 %v6290, %v6289
    %v6304 = vpack.c.bf16 %v6291, %v6291
    %s6305 = scalar_lea.vmem %s5, 4
    %v6306 = vld [vmem:[%s6305] sm:$0xf]
    %v6308 = vsel %vm5615, %v6292, 0
    %v6311 = vsel %vm5615, %v6293, 0
    %v6314 = vsel %vm5615, %v6294, 0
    %v6317 = vsel %vm5615, %v6295, 0
    %v6320 = vsel %vm5615, %v6296, 0
    %v6323 = vsel %vm5615, %v6297, 0
    %v6326 = vsel %vm5615, %v6298, 0
    %v6329 = vsel %vm5615, %v6299, 0
    %v6332 = vsel %vm5615, %v6300, 0
    %v6335 = vsel %vm5615, %v6301, 0
    %v6338 = vsel %vm5615, %v6302, 0
    %v6341 = vsel %vm5615, %v6303, 0
    %v6344 = vsel %vm5615, %v6304, 0
    %v6347 = vsel %vm5664, %v6306, 0
    %6349 = vmatpush.bf16.msra.mxu0 0
    %6350 = vmatpush.bf16.msra.mxu0 0
    %6351 = vmatpush.bf16.msra.mxu0 0
    %6352 = vmatpush.bf16.msra.mxu0 0
    %6353 = vmatpush.bf16.msra.mxu0 0
    %6354 = vmatpush.bf16.msra.mxu0 0
    %6355 = vmatpush.bf16.msra.mxu0 0
    %6356 = vmatpush.bf16.msra.mxu0 %v6347
    %6357 = vmatmul.bf16.gmra.mxu0 %v6308
    %v6358 = vpop.f32.mrf.mxu0
    %v6359 = vadd.f32 0.0, %v6358
    %v6360 = vpop.f32.mrf.mxu0
    %v6361 = vadd.f32 0.0, %v6360
    %6362 = vmatmul.bf16.gmra.mxu0 %v6311
    %v6363 = vpop.f32.mrf.mxu0
    %v6364 = vadd.f32 0.0, %v6363
    %v6365 = vpop.f32.mrf.mxu0
    %v6366 = vadd.f32 0.0, %v6365
    %6367 = vmatmul.bf16.gmra.mxu0 %v6314
    %v6368 = vpop.f32.mrf.mxu0
    %v6369 = vadd.f32 0.0, %v6368
    %v6370 = vpop.f32.mrf.mxu0
    %v6371 = vadd.f32 0.0, %v6370
    %6372 = vmatmul.bf16.gmra.mxu0 %v6317
    %v6373 = vpop.f32.mrf.mxu0
    %v6374 = vadd.f32 0.0, %v6373
    %v6375 = vpop.f32.mrf.mxu0
    %v6376 = vadd.f32 0.0, %v6375
    %6377 = vmatmul.bf16.gmra.mxu0 %v6320
    %v6378 = vpop.f32.mrf.mxu0
    %v6379 = vadd.f32 0.0, %v6378
    %v6380 = vpop.f32.mrf.mxu0
    %v6381 = vadd.f32 0.0, %v6380
    %6382 = vmatmul.bf16.gmra.mxu0 %v6323
    %v6383 = vpop.f32.mrf.mxu0
    %v6384 = vadd.f32 0.0, %v6383
    %v6385 = vpop.f32.mrf.mxu0
    %v6386 = vadd.f32 0.0, %v6385
    %6387 = vmatmul.bf16.gmra.mxu0 %v6326
    %v6388 = vpop.f32.mrf.mxu0
    %v6389 = vadd.f32 0.0, %v6388
    %v6390 = vpop.f32.mrf.mxu0
    %v6391 = vadd.f32 0.0, %v6390
    %6392 = vmatmul.bf16.gmra.mxu0 %v6329
    %v6393 = vpop.f32.mrf.mxu0
    %v6394 = vadd.f32 0.0, %v6393
    %v6395 = vpop.f32.mrf.mxu0
    %v6396 = vadd.f32 0.0, %v6395
    %6397 = vmatmul.bf16.gmra.mxu0 %v6332
    %v6398 = vpop.f32.mrf.mxu0
    %v6399 = vadd.f32 0.0, %v6398
    %v6400 = vpop.f32.mrf.mxu0
    %v6401 = vadd.f32 0.0, %v6400
    %6402 = vmatmul.bf16.gmra.mxu0 %v6335
    %v6403 = vpop.f32.mrf.mxu0
    %v6404 = vadd.f32 0.0, %v6403
    %v6405 = vpop.f32.mrf.mxu0
    %v6406 = vadd.f32 0.0, %v6405
    %6407 = vmatmul.bf16.gmra.mxu0 %v6338
    %v6408 = vpop.f32.mrf.mxu0
    %v6409 = vadd.f32 0.0, %v6408
    %v6410 = vpop.f32.mrf.mxu0
    %v6411 = vadd.f32 0.0, %v6410
    %6412 = vmatmul.bf16.gmra.mxu0 %v6341
    %v6413 = vpop.f32.mrf.mxu0
    %v6414 = vadd.f32 0.0, %v6413
    %v6415 = vpop.f32.mrf.mxu0
    %v6416 = vadd.f32 0.0, %v6415
    %6417 = vmatmul.bf16.gmra.mxu0 %v6344
    %v6418 = vpop.f32.mrf.mxu0
    %v6419 = vadd.f32 0.0, %v6418
    %v6420 = vpop.f32.mrf.mxu0
    %6421 = vdwg.mxu0
    %v6423 = vsel %vm5615, %v6253, 0
    %v6426 = vsel %vm5615, %v6254, 0
    %v6429 = vsel %vm5615, %v6255, 0
    %v6432 = vsel %vm5615, %v6256, 0
    %v6435 = vsel %vm5615, %v6257, 0
    %v6438 = vsel %vm5615, %v6258, 0
    %v6441 = vsel %vm5615, %v6259, 0
    %v6444 = vsel %vm5615, %v6260, 0
    %v6447 = vsel %vm5615, %v6261, 0
    %v6450 = vsel %vm5615, %v6262, 0
    %v6453 = vsel %vm5615, %v6263, 0
    %v6456 = vsel %vm5615, %v6264, 0
    %v6459 = vsel %vm5615, %v6265, 0
    %v6462 = vsel %vm5664, %v6266, 0
    %6464 = vmatpush.bf16.msra.mxu0 0
    %6465 = vmatpush.bf16.msra.mxu0 0
    %6466 = vmatpush.bf16.msra.mxu0 0
    %6467 = vmatpush.bf16.msra.mxu0 0
    %6468 = vmatpush.bf16.msra.mxu0 0
    %6469 = vmatpush.bf16.msra.mxu0 0
    %6470 = vmatpush.bf16.msra.mxu0 0
    %6471 = vmatpush.bf16.msra.mxu0 %v6462
    %6472 = vmatmul.bf16.gmra.mxu0 %v6423
    %v6473 = vpop.f32.mrf.mxu0
    %v6474 = vadd.f32 %v6359, %v6473
    %v6475 = vpop.f32.mrf.mxu0
    %v6476 = vadd.f32 %v6361, %v6475
    %6477 = vmatmul.bf16.gmra.mxu0 %v6426
    %v6478 = vpop.f32.mrf.mxu0
    %v6479 = vadd.f32 %v6364, %v6478
    %v6480 = vpop.f32.mrf.mxu0
    %v6481 = vadd.f32 %v6366, %v6480
    %6482 = vmatmul.bf16.gmra.mxu0 %v6429
    %v6483 = vpop.f32.mrf.mxu0
    %v6484 = vadd.f32 %v6369, %v6483
    %v6485 = vpop.f32.mrf.mxu0
    %v6486 = vadd.f32 %v6371, %v6485
    %6487 = vmatmul.bf16.gmra.mxu0 %v6432
    %v6488 = vpop.f32.mrf.mxu0
    %v6489 = vadd.f32 %v6374, %v6488
    %v6490 = vpop.f32.mrf.mxu0
    %v6491 = vadd.f32 %v6376, %v6490
    %6492 = vmatmul.bf16.gmra.mxu0 %v6435
    %v6493 = vpop.f32.mrf.mxu0
    %v6494 = vadd.f32 %v6379, %v6493
    %v6495 = vpop.f32.mrf.mxu0
    %v6496 = vadd.f32 %v6381, %v6495
    %6497 = vmatmul.bf16.gmra.mxu0 %v6438
    %v6498 = vpop.f32.mrf.mxu0
    %v6499 = vadd.f32 %v6384, %v6498
    %v6500 = vpop.f32.mrf.mxu0
    %v6501 = vadd.f32 %v6386, %v6500
    %6502 = vmatmul.bf16.gmra.mxu0 %v6441
    %v6503 = vpop.f32.mrf.mxu0
    %v6504 = vadd.f32 %v6389, %v6503
    %v6505 = vpop.f32.mrf.mxu0
    %v6506 = vadd.f32 %v6391, %v6505
    %6507 = vmatmul.bf16.gmra.mxu0 %v6444
    %v6508 = vpop.f32.mrf.mxu0
    %v6509 = vadd.f32 %v6394, %v6508
    %v6510 = vpop.f32.mrf.mxu0
    %v6511 = vadd.f32 %v6396, %v6510
    %6512 = vmatmul.bf16.gmra.mxu0 %v6447
    %v6513 = vpop.f32.mrf.mxu0
    %v6514 = vadd.f32 %v6399, %v6513
    %v6515 = vpop.f32.mrf.mxu0
    %v6516 = vadd.f32 %v6401, %v6515
    %6517 = vmatmul.bf16.gmra.mxu0 %v6450
    %v6518 = vpop.f32.mrf.mxu0
    %v6519 = vadd.f32 %v6404, %v6518
    %v6520 = vpop.f32.mrf.mxu0
    %v6521 = vadd.f32 %v6406, %v6520
    %6522 = vmatmul.bf16.gmra.mxu0 %v6453
    %v6523 = vpop.f32.mrf.mxu0
    %v6524 = vadd.f32 %v6409, %v6523
    %v6525 = vpop.f32.mrf.mxu0
    %v6526 = vadd.f32 %v6411, %v6525
    %6527 = vmatmul.bf16.gmra.mxu0 %v6456
    %v6528 = vpop.f32.mrf.mxu0
    %v6529 = vadd.f32 %v6414, %v6528
    %v6530 = vpop.f32.mrf.mxu0
    %v6531 = vadd.f32 %v6416, %v6530
    %6532 = vmatmul.bf16.gmra.mxu0 %v6459
    %v6533 = vpop.f32.mrf.mxu0
    %v6534 = vadd.f32 %v6419, %v6533
    %v6535 = vpop.f32.mrf.mxu0
    %6536 = vdwg.mxu0
    %v6537 = vld [vmem:[#allocation2 + $0x4] sm:$0xff]
    %v6538 = vld [vmem:[#allocation2 + $0xc] sm:$0xff]
    %v6539 = vld [vmem:[#allocation2 + $0x14] sm:$0xff]
    %v6540 = vld [vmem:[#allocation2 + $0x1c] sm:$0xff]
    %v6541 = vld [vmem:[#allocation2 + $0x24] sm:$0xff]
    %v6542 = vld [vmem:[#allocation2 + $0x2c] sm:$0xff]
    %v6543 = vld [vmem:[#allocation2 + $0x34] sm:$0xff]
    %v6544 = vld [vmem:[#allocation2 + $0x3c] sm:$0xff]
    %v6545 = vld [vmem:[#allocation2 + $0x44] sm:$0xff]
    %v6546 = vld [vmem:[#allocation2 + $0x4c] sm:$0xff]
    %v6547 = vld [vmem:[#allocation2 + $0x54] sm:$0xff]
    %v6548 = vld [vmem:[#allocation2 + $0x5c] sm:$0xff]
    %v6549 = vld [vmem:[#allocation2 + $0x64] sm:$0xff]
    %v6550 = vld [vmem:[#allocation2 + $0x6c] sm:$0xff]
    %v6551 = vld [vmem:[#allocation2 + $0x74] sm:$0xff]
    %v6552 = vld [vmem:[#allocation2 + $0x7c] sm:$0xff]
    %v6553 = vld [vmem:[#allocation2 + $0x84] sm:$0xff]
    %v6554 = vld [vmem:[#allocation2 + $0x8c] sm:$0xff]
    %v6555 = vld [vmem:[#allocation2 + $0x94] sm:$0xff]
    %v6556 = vld [vmem:[#allocation2 + $0x9c] sm:$0xff]
    %v6557 = vld [vmem:[#allocation2 + $0xa4] sm:$0xff]
    %v6558 = vld [vmem:[#allocation2 + $0xac] sm:$0xff]
    %v6559 = vld [vmem:[#allocation2 + $0xb4] sm:$0xff]
    %v6560 = vld [vmem:[#allocation2 + $0xbc] sm:$0xff]
    %v6561 = vld [vmem:[#allocation2 + $0xc4] sm:$0xff]
    %v6562 = vpack.c.bf16 %v6538, %v6537
    %v6563 = vpack.c.bf16 %v6540, %v6539
    %v6564 = vpack.c.bf16 %v6542, %v6541
    %v6565 = vpack.c.bf16 %v6544, %v6543
    %v6566 = vpack.c.bf16 %v6546, %v6545
    %v6567 = vpack.c.bf16 %v6548, %v6547
    %v6568 = vpack.c.bf16 %v6550, %v6549
    %v6569 = vpack.c.bf16 %v6552, %v6551
    %v6570 = vpack.c.bf16 %v6554, %v6553
    %v6571 = vpack.c.bf16 %v6556, %v6555
    %v6572 = vpack.c.bf16 %v6558, %v6557
    %v6573 = vpack.c.bf16 %v6560, %v6559
    %v6574 = vpack.c.bf16 %v6561, %v6561
    %s6575 = scalar_lea.vmem %s5, 8
    %v6576 = vld [vmem:[%s6575] sm:$0xf]
    %v6578 = vsel %vm5615, %v6562, 0
    %v6581 = vsel %vm5615, %v6563, 0
    %v6584 = vsel %vm5615, %v6564, 0
    %v6587 = vsel %vm5615, %v6565, 0
    %v6590 = vsel %vm5615, %v6566, 0
    %v6593 = vsel %vm5615, %v6567, 0
    %v6596 = vsel %vm5615, %v6568, 0
    %v6599 = vsel %vm5615, %v6569, 0
    %v6602 = vsel %vm5615, %v6570, 0
    %v6605 = vsel %vm5615, %v6571, 0
    %v6608 = vsel %vm5615, %v6572, 0
    %v6611 = vsel %vm5615, %v6573, 0
    %v6614 = vsel %vm5615, %v6574, 0
    %v6617 = vsel %vm5664, %v6576, 0
    %6619 = vmatpush.bf16.msra.mxu0 0
    %6620 = vmatpush.bf16.msra.mxu0 0
    %6621 = vmatpush.bf16.msra.mxu0 0
    %6622 = vmatpush.bf16.msra.mxu0 0
    %6623 = vmatpush.bf16.msra.mxu0 0
    %6624 = vmatpush.bf16.msra.mxu0 0
    %6625 = vmatpush.bf16.msra.mxu0 0
    %6626 = vmatpush.bf16.msra.mxu0 %v6617
    %6627 = vmatmul.bf16.gmra.mxu0 %v6578
    %v6628 = vpop.f32.mrf.mxu0
    %v6629 = vadd.f32 0.0, %v6628
    %v6630 = vpop.f32.mrf.mxu0
    %v6631 = vadd.f32 0.0, %v6630
    %6632 = vmatmul.bf16.gmra.mxu0 %v6581
    %v6633 = vpop.f32.mrf.mxu0
    %v6634 = vadd.f32 0.0, %v6633
    %v6635 = vpop.f32.mrf.mxu0
    %v6636 = vadd.f32 0.0, %v6635
    %6637 = vmatmul.bf16.gmra.mxu0 %v6584
    %v6638 = vpop.f32.mrf.mxu0
    %v6639 = vadd.f32 0.0, %v6638
    %v6640 = vpop.f32.mrf.mxu0
    %v6641 = vadd.f32 0.0, %v6640
    %6642 = vmatmul.bf16.gmra.mxu0 %v6587
    %v6643 = vpop.f32.mrf.mxu0
    %v6644 = vadd.f32 0.0, %v6643
    %v6645 = vpop.f32.mrf.mxu0
    %v6646 = vadd.f32 0.0, %v6645
    %6647 = vmatmul.bf16.gmra.mxu0 %v6590
    %v6648 = vpop.f32.mrf.mxu0
    %v6649 = vadd.f32 0.0, %v6648
    %v6650 = vpop.f32.mrf.mxu0
    %v6651 = vadd.f32 0.0, %v6650
    %6652 = vmatmul.bf16.gmra.mxu0 %v6593
    %v6653 = vpop.f32.mrf.mxu0
    %v6654 = vadd.f32 0.0, %v6653
    %v6655 = vpop.f32.mrf.mxu0
    %v6656 = vadd.f32 0.0, %v6655
    %6657 = vmatmul.bf16.gmra.mxu0 %v6596
    %v6658 = vpop.f32.mrf.mxu0
    %v6659 = vadd.f32 0.0, %v6658
    %v6660 = vpop.f32.mrf.mxu0
    %v6661 = vadd.f32 0.0, %v6660
    %6662 = vmatmul.bf16.gmra.mxu0 %v6599
    %v6663 = vpop.f32.mrf.mxu0
    %v6664 = vadd.f32 0.0, %v6663
    %v6665 = vpop.f32.mrf.mxu0
    %v6666 = vadd.f32 0.0, %v6665
    %6667 = vmatmul.bf16.gmra.mxu0 %v6602
    %v6668 = vpop.f32.mrf.mxu0
    %v6669 = vadd.f32 0.0, %v6668
    %v6670 = vpop.f32.mrf.mxu0
    %v6671 = vadd.f32 0.0, %v6670
    %6672 = vmatmul.bf16.gmra.mxu0 %v6605
    %v6673 = vpop.f32.mrf.mxu0
    %v6674 = vadd.f32 0.0, %v6673
    %v6675 = vpop.f32.mrf.mxu0
    %v6676 = vadd.f32 0.0, %v6675
    %6677 = vmatmul.bf16.gmra.mxu0 %v6608
    %v6678 = vpop.f32.mrf.mxu0
    %v6679 = vadd.f32 0.0, %v6678
    %v6680 = vpop.f32.mrf.mxu0
    %v6681 = vadd.f32 0.0, %v6680
    %6682 = vmatmul.bf16.gmra.mxu0 %v6611
    %v6683 = vpop.f32.mrf.mxu0
    %v6684 = vadd.f32 0.0, %v6683
    %v6685 = vpop.f32.mrf.mxu0
    %v6686 = vadd.f32 0.0, %v6685
    %6687 = vmatmul.bf16.gmra.mxu0 %v6614
    %v6688 = vpop.f32.mrf.mxu0
    %v6689 = vadd.f32 0.0, %v6688
    %v6690 = vpop.f32.mrf.mxu0
    %6691 = vdwg.mxu0
    %v6692 = vadd.f32 %v6474, %v6629
    %v6693 = vadd.f32 %v6476, %v6631
    %v6694 = vadd.f32 %v6479, %v6634
    %v6695 = vadd.f32 %v6481, %v6636
    %v6696 = vadd.f32 %v6484, %v6639
    %v6697 = vadd.f32 %v6486, %v6641
    %v6698 = vadd.f32 %v6489, %v6644
    %v6699 = vadd.f32 %v6491, %v6646
    %v6700 = vadd.f32 %v6494, %v6649
    %v6701 = vadd.f32 %v6496, %v6651
    %v6702 = vadd.f32 %v6499, %v6654
    %v6703 = vadd.f32 %v6501, %v6656
    %v6704 = vadd.f32 %v6504, %v6659
    %v6705 = vadd.f32 %v6506, %v6661
    %v6706 = vadd.f32 %v6509, %v6664
    %v6707 = vadd.f32 %v6511, %v6666
    %v6708 = vadd.f32 %v6514, %v6669
    %v6709 = vadd.f32 %v6516, %v6671
    %v6710 = vadd.f32 %v6519, %v6674
    %v6711 = vadd.f32 %v6521, %v6676
    %v6712 = vadd.f32 %v6524, %v6679
    %v6713 = vadd.f32 %v6526, %v6681
    %v6714 = vadd.f32 %v6529, %v6684
    %v6715 = vadd.f32 %v6531, %v6686
    %v6716 = vadd.f32 %v6534, %v6689
    %v6717 = vld [vmem:[#allocation2 + $0x14] sm:$0xff]
    %v6718 = vld [vmem:[#allocation2 + $0x1c] sm:$0xff]
    %v6719 = vld [vmem:[#allocation2 + $0x24] sm:$0xff]
    %v6720 = vld [vmem:[#allocation2 + $0x2c] sm:$0xff]
    %v6721 = vld [vmem:[#allocation2 + $0x34] sm:$0xff]
    %v6722 = vld [vmem:[#allocation2 + $0x3c] sm:$0xff]
    %v6723 = vld [vmem:[#allocation2 + $0x44] sm:$0xff]
    %v6724 = vld [vmem:[#allocation2 + $0x4c] sm:$0xff]
    %v6725 = vld [vmem:[#allocation2 + $0x54] sm:$0xff]
    %v6726 = vld [vmem:[#allocation2 + $0x5c] sm:$0xff]
    %v6727 = vld [vmem:[#allocation2 + $0x64] sm:$0xff]
    %v6728 = vld [vmem:[#allocation2 + $0x6c] sm:$0xff]
    %v6729 = vld [vmem:[#allocation2 + $0x74] sm:$0xff]
    %v6730 = vld [vmem:[#allocation2 + $0x7c] sm:$0xff]
    %v6731 = vld [vmem:[#allocation2 + $0x84] sm:$0xff]
    %v6732 = vld [vmem:[#allocation2 + $0x8c] sm:$0xff]
    %v6733 = vld [vmem:[#allocation2 + $0x94] sm:$0xff]
    %v6734 = vld [vmem:[#allocation2 + $0x9c] sm:$0xff]
    %v6735 = vld [vmem:[#allocation2 + $0xa4] sm:$0xff]
    %v6736 = vld [vmem:[#allocation2 + $0xac] sm:$0xff]
    %v6737 = vld [vmem:[#allocation2 + $0xb4] sm:$0xff]
    %v6738 = vld [vmem:[#allocation2 + $0xbc] sm:$0xff]
    %v6739 = vld [vmem:[#allocation2 + $0xc4] sm:$0xff]
    %v6740 = vld [vmem:[#allocation2 + $0xcc] sm:$0xff]
    %v6741 = vld [vmem:[#allocation2 + $0xd4] sm:$0xff]
    %v6742 = vpack.c.bf16 %v6718, %v6717
    %v6743 = vpack.c.bf16 %v6720, %v6719
    %v6744 = vpack.c.bf16 %v6722, %v6721
    %v6745 = vpack.c.bf16 %v6724, %v6723
    %v6746 = vpack.c.bf16 %v6726, %v6725
    %v6747 = vpack.c.bf16 %v6728, %v6727
    %v6748 = vpack.c.bf16 %v6730, %v6729
    %v6749 = vpack.c.bf16 %v6732, %v6731
    %v6750 = vpack.c.bf16 %v6734, %v6733
    %v6751 = vpack.c.bf16 %v6736, %v6735
    %v6752 = vpack.c.bf16 %v6738, %v6737
    %v6753 = vpack.c.bf16 %v6740, %v6739
    %v6754 = vpack.c.bf16 %v6741, %v6741
    %s6755 = scalar_lea.vmem %s5, 12
    %v6756 = vld [vmem:[%s6755] sm:$0xf]
    %v6758 = vsel %vm5615, %v6742, 0
    %v6761 = vsel %vm5615, %v6743, 0
    %v6764 = vsel %vm5615, %v6744, 0
    %v6767 = vsel %vm5615, %v6745, 0
    %v6770 = vsel %vm5615, %v6746, 0
    %v6773 = vsel %vm5615, %v6747, 0
    %v6776 = vsel %vm5615, %v6748, 0
    %v6779 = vsel %vm5615, %v6749, 0
    %v6782 = vsel %vm5615, %v6750, 0
    %v6785 = vsel %vm5615, %v6751, 0
    %v6788 = vsel %vm5615, %v6752, 0
    %v6791 = vsel %vm5615, %v6753, 0
    %v6794 = vsel %vm5615, %v6754, 0
    %v6797 = vsel %vm5664, %v6756, 0
    %6799 = vmatpush.bf16.msra.mxu0 0
    %6800 = vmatpush.bf16.msra.mxu0 0
    %6801 = vmatpush.bf16.msra.mxu0 0
    %6802 = vmatpush.bf16.msra.mxu0 0
    %6803 = vmatpush.bf16.msra.mxu0 0
    %6804 = vmatpush.bf16.msra.mxu0 0
    %6805 = vmatpush.bf16.msra.mxu0 0
    %6806 = vmatpush.bf16.msra.mxu0 %v6797
    %6807 = vmatmul.bf16.gmra.mxu0 %v6758
    %v6808 = vpop.f32.mrf.mxu0
    %v6809 = vadd.f32 0.0, %v6808
    %v6810 = vpop.f32.mrf.mxu0
    %v6811 = vadd.f32 0.0, %v6810
    %6812 = vmatmul.bf16.gmra.mxu0 %v6761
    %v6813 = vpop.f32.mrf.mxu0
    %v6814 = vadd.f32 0.0, %v6813
    %v6815 = vpop.f32.mrf.mxu0
    %v6816 = vadd.f32 0.0, %v6815
    %6817 = vmatmul.bf16.gmra.mxu0 %v6764
    %v6818 = vpop.f32.mrf.mxu0
    %v6819 = vadd.f32 0.0, %v6818
    %v6820 = vpop.f32.mrf.mxu0
    %v6821 = vadd.f32 0.0, %v6820
    %6822 = vmatmul.bf16.gmra.mxu0 %v6767
    %v6823 = vpop.f32.mrf.mxu0
    %v6824 = vadd.f32 0.0, %v6823
    %v6825 = vpop.f32.mrf.mxu0
    %v6826 = vadd.f32 0.0, %v6825
    %6827 = vmatmul.bf16.gmra.mxu0 %v6770
    %v6828 = vpop.f32.mrf.mxu0
    %v6829 = vadd.f32 0.0, %v6828
    %v6830 = vpop.f32.mrf.mxu0
    %v6831 = vadd.f32 0.0, %v6830
    %6832 = vmatmul.bf16.gmra.mxu0 %v6773
    %v6833 = vpop.f32.mrf.mxu0
    %v6834 = vadd.f32 0.0, %v6833
    %v6835 = vpop.f32.mrf.mxu0
    %v6836 = vadd.f32 0.0, %v6835
    %6837 = vmatmul.bf16.gmra.mxu0 %v6776
    %v6838 = vpop.f32.mrf.mxu0
    %v6839 = vadd.f32 0.0, %v6838
    %v6840 = vpop.f32.mrf.mxu0
    %v6841 = vadd.f32 0.0, %v6840
    %6842 = vmatmul.bf16.gmra.mxu0 %v6779
    %v6843 = vpop.f32.mrf.mxu0
    %v6844 = vadd.f32 0.0, %v6843
    %v6845 = vpop.f32.mrf.mxu0
    %v6846 = vadd.f32 0.0, %v6845
    %6847 = vmatmul.bf16.gmra.mxu0 %v6782
    %v6848 = vpop.f32.mrf.mxu0
    %v6849 = vadd.f32 0.0, %v6848
    %v6850 = vpop.f32.mrf.mxu0
    %v6851 = vadd.f32 0.0, %v6850
    %6852 = vmatmul.bf16.gmra.mxu0 %v6785
    %v6853 = vpop.f32.mrf.mxu0
    %v6854 = vadd.f32 0.0, %v6853
    %v6855 = vpop.f32.mrf.mxu0
    %v6856 = vadd.f32 0.0, %v6855
    %6857 = vmatmul.bf16.gmra.mxu0 %v6788
    %v6858 = vpop.f32.mrf.mxu0
    %v6859 = vadd.f32 0.0, %v6858
    %v6860 = vpop.f32.mrf.mxu0
    %v6861 = vadd.f32 0.0, %v6860
    %6862 = vmatmul.bf16.gmra.mxu0 %v6791
    %v6863 = vpop.f32.mrf.mxu0
    %v6864 = vadd.f32 0.0, %v6863
    %v6865 = vpop.f32.mrf.mxu0
    %v6866 = vadd.f32 0.0, %v6865
    %6867 = vmatmul.bf16.gmra.mxu0 %v6794
    %v6868 = vpop.f32.mrf.mxu0
    %v6869 = vadd.f32 0.0, %v6868
    %v6870 = vpop.f32.mrf.mxu0
    %6871 = vdwg.mxu0
    %v6872 = vadd.f32 %v6692, %v6809
    %v6873 = vadd.f32 %v6693, %v6811
    %v6874 = vadd.f32 %v6694, %v6814
    %v6875 = vadd.f32 %v6695, %v6816
    %v6876 = vadd.f32 %v6696, %v6819
    %v6877 = vadd.f32 %v6697, %v6821
    %v6878 = vadd.f32 %v6698, %v6824
    %v6879 = vadd.f32 %v6699, %v6826
    %v6880 = vadd.f32 %v6700, %v6829
    %v6881 = vadd.f32 %v6701, %v6831
    %v6882 = vadd.f32 %v6702, %v6834
    %v6883 = vadd.f32 %v6703, %v6836
    %v6884 = vadd.f32 %v6704, %v6839
    %v6885 = vadd.f32 %v6705, %v6841
    %v6886 = vadd.f32 %v6706, %v6844
    %v6887 = vadd.f32 %v6707, %v6846
    %v6888 = vadd.f32 %v6708, %v6849
    %v6889 = vadd.f32 %v6709, %v6851
    %v6890 = vadd.f32 %v6710, %v6854
    %v6891 = vadd.f32 %v6711, %v6856
    %v6892 = vadd.f32 %v6712, %v6859
    %v6893 = vadd.f32 %v6713, %v6861
    %v6894 = vadd.f32 %v6714, %v6864
    %v6895 = vadd.f32 %v6715, %v6866
    %v6896 = vadd.f32 %v6716, %v6869
    %v6897 = vld [vmem:[#allocation2 + $0x16] sm:$0xff]
    %v6898 = vld [vmem:[#allocation2 + $0x1e] sm:$0xff]
    %v6899 = vld [vmem:[#allocation2 + $0x26] sm:$0xff]
    %v6900 = vld [vmem:[#allocation2 + $0x2e] sm:$0xff]
    %v6901 = vld [vmem:[#allocation2 + $0x36] sm:$0xff]
    %v6902 = vld [vmem:[#allocation2 + $0x3e] sm:$0xff]
    %v6903 = vld [vmem:[#allocation2 + $0x46] sm:$0xff]
    %v6904 = vld [vmem:[#allocation2 + $0x4e] sm:$0xff]
    %v6905 = vld [vmem:[#allocation2 + $0x56] sm:$0xff]
    %v6906 = vld [vmem:[#allocation2 + $0x5e] sm:$0xff]
    %v6907 = vld [vmem:[#allocation2 + $0x66] sm:$0xff]
    %v6908 = vld [vmem:[#allocation2 + $0x6e] sm:$0xff]
    %v6909 = vld [vmem:[#allocation2 + $0x76] sm:$0xff]
    %v6910 = vld [vmem:[#allocation2 + $0x7e] sm:$0xff]
    %v6911 = vld [vmem:[#allocation2 + $0x86] sm:$0xff]
    %v6912 = vld [vmem:[#allocation2 + $0x8e] sm:$0xff]
    %v6913 = vld [vmem:[#allocation2 + $0x96] sm:$0xff]
    %v6914 = vld [vmem:[#allocation2 + $0x9e] sm:$0xff]
    %v6915 = vld [vmem:[#allocation2 + $0xa6] sm:$0xff]
    %v6916 = vld [vmem:[#allocation2 + $0xae] sm:$0xff]
    %v6917 = vld [vmem:[#allocation2 + $0xb6] sm:$0xff]
    %v6918 = vld [vmem:[#allocation2 + $0xbe] sm:$0xff]
    %v6919 = vld [vmem:[#allocation2 + $0xc6] sm:$0xff]
    %v6920 = vld [vmem:[#allocation2 + $0xce] sm:$0xff]
    %v6921 = vld [vmem:[#allocation2 + $0xd6] sm:$0xff]
    %v6922 = vpack.c.bf16 %v6898, %v6897
    %v6923 = vpack.c.bf16 %v6900, %v6899
    %v6924 = vpack.c.bf16 %v6902, %v6901
    %v6925 = vpack.c.bf16 %v6904, %v6903
    %v6926 = vpack.c.bf16 %v6906, %v6905
    %v6927 = vpack.c.bf16 %v6908, %v6907
    %v6928 = vpack.c.bf16 %v6910, %v6909
    %v6929 = vpack.c.bf16 %v6912, %v6911
    %v6930 = vpack.c.bf16 %v6914, %v6913
    %v6931 = vpack.c.bf16 %v6916, %v6915
    %v6932 = vpack.c.bf16 %v6918, %v6917
    %v6933 = vpack.c.bf16 %v6920, %v6919
    %v6934 = vpack.c.bf16 %v6921, %v6921
    %s6935 = scalar_lea.vmem %s5, 16
    %v6936 = vld [vmem:[%s6935] sm:$0xf]
    %v6938 = vsel %vm5615, %v6922, 0
    %v6941 = vsel %vm5615, %v6923, 0
    %v6944 = vsel %vm5615, %v6924, 0
    %v6947 = vsel %vm5615, %v6925, 0
    %v6950 = vsel %vm5615, %v6926, 0
    %v6953 = vsel %vm5615, %v6927, 0
    %v6956 = vsel %vm5615, %v6928, 0
    %v6959 = vsel %vm5615, %v6929, 0
    %v6962 = vsel %vm5615, %v6930, 0
    %v6965 = vsel %vm5615, %v6931, 0
    %v6968 = vsel %vm5615, %v6932, 0
    %v6971 = vsel %vm5615, %v6933, 0
    %v6974 = vsel %vm5615, %v6934, 0
    %v6977 = vsel %vm5664, %v6936, 0
    %6979 = vmatpush.bf16.msra.mxu0 0
    %6980 = vmatpush.bf16.msra.mxu0 0
    %6981 = vmatpush.bf16.msra.mxu0 0
    %6982 = vmatpush.bf16.msra.mxu0 0
    %6983 = vmatpush.bf16.msra.mxu0 0
    %6984 = vmatpush.bf16.msra.mxu0 0
    %6985 = vmatpush.bf16.msra.mxu0 0
    %6986 = vmatpush.bf16.msra.mxu0 %v6977
    %6987 = vmatmul.bf16.gmra.mxu0 %v6938
    %v6988 = vpop.f32.mrf.mxu0
    %v6989 = vadd.f32 0.0, %v6988
    %v6990 = vpop.f32.mrf.mxu0
    %v6991 = vadd.f32 0.0, %v6990
    %6992 = vmatmul.bf16.gmra.mxu0 %v6941
    %v6993 = vpop.f32.mrf.mxu0
    %v6994 = vadd.f32 0.0, %v6993
    %v6995 = vpop.f32.mrf.mxu0
    %v6996 = vadd.f32 0.0, %v6995
    %6997 = vmatmul.bf16.gmra.mxu0 %v6944
    %v6998 = vpop.f32.mrf.mxu0
    %v6999 = vadd.f32 0.0, %v6998
    %v7000 = vpop.f32.mrf.mxu0
    %v7001 = vadd.f32 0.0, %v7000
    %7002 = vmatmul.bf16.gmra.mxu0 %v6947
    %v7003 = vpop.f32.mrf.mxu0
    %v7004 = vadd.f32 0.0, %v7003
    %v7005 = vpop.f32.mrf.mxu0
    %v7006 = vadd.f32 0.0, %v7005
    %7007 = vmatmul.bf16.gmra.mxu0 %v6950
    %v7008 = vpop.f32.mrf.mxu0
    %v7009 = vadd.f32 0.0, %v7008
    %v7010 = vpop.f32.mrf.mxu0
    %v7011 = vadd.f32 0.0, %v7010
    %7012 = vmatmul.bf16.gmra.mxu0 %v6953
    %v7013 = vpop.f32.mrf.mxu0
    %v7014 = vadd.f32 0.0, %v7013
    %v7015 = vpop.f32.mrf.mxu0
    %v7016 = vadd.f32 0.0, %v7015
    %7017 = vmatmul.bf16.gmra.mxu0 %v6956
    %v7018 = vpop.f32.mrf.mxu0
    %v7019 = vadd.f32 0.0, %v7018
    %v7020 = vpop.f32.mrf.mxu0
    %v7021 = vadd.f32 0.0, %v7020
    %7022 = vmatmul.bf16.gmra.mxu0 %v6959
    %v7023 = vpop.f32.mrf.mxu0
    %v7024 = vadd.f32 0.0, %v7023
    %v7025 = vpop.f32.mrf.mxu0
    %v7026 = vadd.f32 0.0, %v7025
    %7027 = vmatmul.bf16.gmra.mxu0 %v6962
    %v7028 = vpop.f32.mrf.mxu0
    %v7029 = vadd.f32 0.0, %v7028
    %v7030 = vpop.f32.mrf.mxu0
    %v7031 = vadd.f32 0.0, %v7030
    %7032 = vmatmul.bf16.gmra.mxu0 %v6965
    %v7033 = vpop.f32.mrf.mxu0
    %v7034 = vadd.f32 0.0, %v7033
    %v7035 = vpop.f32.mrf.mxu0
    %v7036 = vadd.f32 0.0, %v7035
    %7037 = vmatmul.bf16.gmra.mxu0 %v6968
    %v7038 = vpop.f32.mrf.mxu0
    %v7039 = vadd.f32 0.0, %v7038
    %v7040 = vpop.f32.mrf.mxu0
    %v7041 = vadd.f32 0.0, %v7040
    %7042 = vmatmul.bf16.gmra.mxu0 %v6971
    %v7043 = vpop.f32.mrf.mxu0
    %v7044 = vadd.f32 0.0, %v7043
    %v7045 = vpop.f32.mrf.mxu0
    %v7046 = vadd.f32 0.0, %v7045
    %7047 = vmatmul.bf16.gmra.mxu0 %v6974
    %v7048 = vpop.f32.mrf.mxu0
    %v7049 = vadd.f32 0.0, %v7048
    %v7050 = vpop.f32.mrf.mxu0
    %7051 = vdwg.mxu0
    %v7052 = vadd.f32 %v6872, %v6989
    %v7053 = vadd.f32 %v6873, %v6991
    %v7054 = vadd.f32 %v6874, %v6994
    %v7055 = vadd.f32 %v6875, %v6996
    %v7056 = vadd.f32 %v6876, %v6999
    %v7057 = vadd.f32 %v6877, %v7001
    %v7058 = vadd.f32 %v6878, %v7004
    %v7059 = vadd.f32 %v6879, %v7006
    %v7060 = vadd.f32 %v6880, %v7009
    %v7061 = vadd.f32 %v6881, %v7011
    %v7062 = vadd.f32 %v6882, %v7014
    %v7063 = vadd.f32 %v6883, %v7016
    %v7064 = vadd.f32 %v6884, %v7019
    %v7065 = vadd.f32 %v6885, %v7021
    %v7066 = vadd.f32 %v6886, %v7024
    %v7067 = vadd.f32 %v6887, %v7026
    %v7068 = vadd.f32 %v6888, %v7029
    %v7069 = vadd.f32 %v6889, %v7031
    %v7070 = vadd.f32 %v6890, %v7034
    %v7071 = vadd.f32 %v6891, %v7036
    %v7072 = vadd.f32 %v6892, %v7039
    %v7073 = vadd.f32 %v6893, %v7041
    %v7074 = vadd.f32 %v6894, %v7044
    %v7075 = vadd.f32 %v6895, %v7046
    %v7076 = vadd.f32 %v6896, %v7049
    %v7077 = vld [vmem:[#allocation2 + $0x18] sm:$0xff]
    %v7078 = vld [vmem:[#allocation2 + $0x20] sm:$0xff]
    %v7079 = vld [vmem:[#allocation2 + $0x28] sm:$0xff]
    %v7080 = vld [vmem:[#allocation2 + $0x30] sm:$0xff]
    %v7081 = vld [vmem:[#allocation2 + $0x38] sm:$0xff]
    %v7082 = vld [vmem:[#allocation2 + $0x40] sm:$0xff]
    %v7083 = vld [vmem:[#allocation2 + $0x48] sm:$0xff]
    %v7084 = vld [vmem:[#allocation2 + $0x50] sm:$0xff]
    %v7085 = vld [vmem:[#allocation2 + $0x58] sm:$0xff]
    %v7086 = vld [vmem:[#allocation2 + $0x60] sm:$0xff]
    %v7087 = vld [vmem:[#allocation2 + $0x68] sm:$0xff]
    %v7088 = vld [vmem:[#allocation2 + $0x70] sm:$0xff]
    %v7089 = vld [vmem:[#allocation2 + $0x78] sm:$0xff]
    %v7090 = vld [vmem:[#allocation2 + $0x80] sm:$0xff]
    %v7091 = vld [vmem:[#allocation2 + $0x88] sm:$0xff]
    %v7092 = vld [vmem:[#allocation2 + $0x90] sm:$0xff]
    %v7093 = vld [vmem:[#allocation2 + $0x98] sm:$0xff]
    %v7094 = vld [vmem:[#allocation2 + $0xa0] sm:$0xff]
    %v7095 = vld [vmem:[#allocation2 + $0xa8] sm:$0xff]
    %v7096 = vld [vmem:[#allocation2 + $0xb0] sm:$0xff]
    %v7097 = vld [vmem:[#allocation2 + $0xb8] sm:$0xff]
    %v7098 = vld [vmem:[#allocation2 + $0xc0] sm:$0xff]
    %v7099 = vld [vmem:[#allocation2 + $0xc8] sm:$0xff]
    %v7100 = vld [vmem:[#allocation2 + $0xd0] sm:$0xff]
    %v7101 = vld [vmem:[#allocation2 + $0xd8] sm:$0xff]
    %v7102 = vpack.c.bf16 %v7078, %v7077
    %v7103 = vpack.c.bf16 %v7080, %v7079
    %v7104 = vpack.c.bf16 %v7082, %v7081
    %v7105 = vpack.c.bf16 %v7084, %v7083
    %v7106 = vpack.c.bf16 %v7086, %v7085
    %v7107 = vpack.c.bf16 %v7088, %v7087
    %v7108 = vpack.c.bf16 %v7090, %v7089
    %v7109 = vpack.c.bf16 %v7092, %v7091
    %v7110 = vpack.c.bf16 %v7094, %v7093
    %v7111 = vpack.c.bf16 %v7096, %v7095
    %v7112 = vpack.c.bf16 %v7098, %v7097
    %v7113 = vpack.c.bf16 %v7100, %v7099
    %v7114 = vpack.c.bf16 %v7101, %v7101
    %s7115 = scalar_lea.vmem %s5, 20
    %v7116 = vld [vmem:[%s7115] sm:$0xf]
    %v7118 = vsel %vm5615, %v7102, 0
    %v7121 = vsel %vm5615, %v7103, 0
    %v7124 = vsel %vm5615, %v7104, 0
    %v7127 = vsel %vm5615, %v7105, 0
    %v7130 = vsel %vm5615, %v7106, 0
    %v7133 = vsel %vm5615, %v7107, 0
    %v7136 = vsel %vm5615, %v7108, 0
    %v7139 = vsel %vm5615, %v7109, 0
    %v7142 = vsel %vm5615, %v7110, 0
    %v7145 = vsel %vm5615, %v7111, 0
    %v7148 = vsel %vm5615, %v7112, 0
    %v7151 = vsel %vm5615, %v7113, 0
    %v7154 = vsel %vm5615, %v7114, 0
    %v7157 = vsel %vm5664, %v7116, 0
    %7159 = vmatpush.bf16.msra.mxu0 0
    %7160 = vmatpush.bf16.msra.mxu0 0
    %7161 = vmatpush.bf16.msra.mxu0 0
    %7162 = vmatpush.bf16.msra.mxu0 0
    %7163 = vmatpush.bf16.msra.mxu0 0
    %7164 = vmatpush.bf16.msra.mxu0 0
    %7165 = vmatpush.bf16.msra.mxu0 0
    %7166 = vmatpush.bf16.msra.mxu0 %v7157
    %7167 = vmatmul.bf16.gmra.mxu0 %v7118
    %v7168 = vpop.f32.mrf.mxu0
    %v7169 = vadd.f32 0.0, %v7168
    %v7170 = vpop.f32.mrf.mxu0
    %v7171 = vadd.f32 0.0, %v7170
    %7172 = vmatmul.bf16.gmra.mxu0 %v7121
    %v7173 = vpop.f32.mrf.mxu0
    %v7174 = vadd.f32 0.0, %v7173
    %v7175 = vpop.f32.mrf.mxu0
    %v7176 = vadd.f32 0.0, %v7175
    %7177 = vmatmul.bf16.gmra.mxu0 %v7124
    %v7178 = vpop.f32.mrf.mxu0
    %v7179 = vadd.f32 0.0, %v7178
    %v7180 = vpop.f32.mrf.mxu0
    %v7181 = vadd.f32 0.0, %v7180
    %7182 = vmatmul.bf16.gmra.mxu0 %v7127
    %v7183 = vpop.f32.mrf.mxu0
    %v7184 = vadd.f32 0.0, %v7183
    %v7185 = vpop.f32.mrf.mxu0
    %v7186 = vadd.f32 0.0, %v7185
    %7187 = vmatmul.bf16.gmra.mxu0 %v7130
    %v7188 = vpop.f32.mrf.mxu0
    %v7189 = vadd.f32 0.0, %v7188
    %v7190 = vpop.f32.mrf.mxu0
    %v7191 = vadd.f32 0.0, %v7190
    %7192 = vmatmul.bf16.gmra.mxu0 %v7133
    %v7193 = vpop.f32.mrf.mxu0
    %v7194 = vadd.f32 0.0, %v7193
    %v7195 = vpop.f32.mrf.mxu0
    %v7196 = vadd.f32 0.0, %v7195
    %7197 = vmatmul.bf16.gmra.mxu0 %v7136
    %v7198 = vpop.f32.mrf.mxu0
    %v7199 = vadd.f32 0.0, %v7198
    %v7200 = vpop.f32.mrf.mxu0
    %v7201 = vadd.f32 0.0, %v7200
    %7202 = vmatmul.bf16.gmra.mxu0 %v7139
    %v7203 = vpop.f32.mrf.mxu0
    %v7204 = vadd.f32 0.0, %v7203
    %v7205 = vpop.f32.mrf.mxu0
    %v7206 = vadd.f32 0.0, %v7205
    %7207 = vmatmul.bf16.gmra.mxu0 %v7142
    %v7208 = vpop.f32.mrf.mxu0
    %v7209 = vadd.f32 0.0, %v7208
    %v7210 = vpop.f32.mrf.mxu0
    %v7211 = vadd.f32 0.0, %v7210
    %7212 = vmatmul.bf16.gmra.mxu0 %v7145
    %v7213 = vpop.f32.mrf.mxu0
    %v7214 = vadd.f32 0.0, %v7213
    %v7215 = vpop.f32.mrf.mxu0
    %v7216 = vadd.f32 0.0, %v7215
    %7217 = vmatmul.bf16.gmra.mxu0 %v7148
    %v7218 = vpop.f32.mrf.mxu0
    %v7219 = vadd.f32 0.0, %v7218
    %v7220 = vpop.f32.mrf.mxu0
    %v7221 = vadd.f32 0.0, %v7220
    %7222 = vmatmul.bf16.gmra.mxu0 %v7151
    %v7223 = vpop.f32.mrf.mxu0
    %v7224 = vadd.f32 0.0, %v7223
    %v7225 = vpop.f32.mrf.mxu0
    %v7226 = vadd.f32 0.0, %v7225
    %7227 = vmatmul.bf16.gmra.mxu0 %v7154
    %v7228 = vpop.f32.mrf.mxu0
    %v7229 = vadd.f32 0.0, %v7228
    %v7230 = vpop.f32.mrf.mxu0
    %7231 = vdwg.mxu0
    %v7232 = vadd.f32 %v7052, %v7169
    %v7233 = vadd.f32 %v7053, %v7171
    %v7234 = vadd.f32 %v7054, %v7174
    %v7235 = vadd.f32 %v7055, %v7176
    %v7236 = vadd.f32 %v7056, %v7179
    %v7237 = vadd.f32 %v7057, %v7181
    %v7238 = vadd.f32 %v7058, %v7184
    %v7239 = vadd.f32 %v7059, %v7186
    %v7240 = vadd.f32 %v7060, %v7189
    %v7241 = vadd.f32 %v7061, %v7191
    %v7242 = vadd.f32 %v7062, %v7194
    %v7243 = vadd.f32 %v7063, %v7196
    %v7244 = vadd.f32 %v7064, %v7199
    %v7245 = vadd.f32 %v7065, %v7201
    %v7246 = vadd.f32 %v7066, %v7204
    %v7247 = vadd.f32 %v7067, %v7206
    %v7248 = vadd.f32 %v7068, %v7209
    %v7249 = vadd.f32 %v7069, %v7211
    %v7250 = vadd.f32 %v7070, %v7214
    %v7251 = vadd.f32 %v7071, %v7216
    %v7252 = vadd.f32 %v7072, %v7219
    %v7253 = vadd.f32 %v7073, %v7221
    %v7254 = vadd.f32 %v7074, %v7224
    %v7255 = vadd.f32 %v7075, %v7226
    %v7256 = vadd.f32 %v7076, %v7229
    %v7257 = vld [vmem:[#allocation2 + $0x28] sm:$0xff]
    %v7258 = vld [vmem:[#allocation2 + $0x30] sm:$0xff]
    %v7259 = vld [vmem:[#allocation2 + $0x38] sm:$0xff]
    %v7260 = vld [vmem:[#allocation2 + $0x40] sm:$0xff]
    %v7261 = vld [vmem:[#allocation2 + $0x48] sm:$0xff]
    %v7262 = vld [vmem:[#allocation2 + $0x50] sm:$0xff]
    %v7263 = vld [vmem:[#allocation2 + $0x58] sm:$0xff]
    %v7264 = vld [vmem:[#allocation2 + $0x60] sm:$0xff]
    %v7265 = vld [vmem:[#allocation2 + $0x68] sm:$0xff]
    %v7266 = vld [vmem:[#allocation2 + $0x70] sm:$0xff]
    %v7267 = vld [vmem:[#allocation2 + $0x78] sm:$0xff]
    %v7268 = vld [vmem:[#allocation2 + $0x80] sm:$0xff]
    %v7269 = vld [vmem:[#allocation2 + $0x88] sm:$0xff]
    %v7270 = vld [vmem:[#allocation2 + $0x90] sm:$0xff]
    %v7271 = vld [vmem:[#allocation2 + $0x98] sm:$0xff]
    %v7272 = vld [vmem:[#allocation2 + $0xa0] sm:$0xff]
    %v7273 = vld [vmem:[#allocation2 + $0xa8] sm:$0xff]
    %v7274 = vld [vmem:[#allocation2 + $0xb0] sm:$0xff]
    %v7275 = vld [vmem:[#allocation2 + $0xb8] sm:$0xff]
    %v7276 = vld [vmem:[#allocation2 + $0xc0] sm:$0xff]
    %v7277 = vld [vmem:[#allocation2 + $0xc8] sm:$0xff]
    %v7278 = vld [vmem:[#allocation2 + $0xd0] sm:$0xff]
    %v7279 = vld [vmem:[#allocation2 + $0xd8] sm:$0xff]
    %v7280 = vld [vmem:[#allocation2 + $0xe0] sm:$0xff]
    %v7281 = vld [vmem:[#allocation2 + $0xe8] sm:$0xff]
    %v7282 = vpack.c.bf16 %v7258, %v7257
    %v7283 = vpack.c.bf16 %v7260, %v7259
    %v7284 = vpack.c.bf16 %v7262, %v7261
    %v7285 = vpack.c.bf16 %v7264, %v7263
    %v7286 = vpack.c.bf16 %v7266, %v7265
    %v7287 = vpack.c.bf16 %v7268, %v7267
    %v7288 = vpack.c.bf16 %v7270, %v7269
    %v7289 = vpack.c.bf16 %v7272, %v7271
    %v7290 = vpack.c.bf16 %v7274, %v7273
    %v7291 = vpack.c.bf16 %v7276, %v7275
    %v7292 = vpack.c.bf16 %v7278, %v7277
    %v7293 = vpack.c.bf16 %v7280, %v7279
    %v7294 = vpack.c.bf16 %v7281, %v7281
    %s7295 = scalar_lea.vmem %s5, 24
    %v7296 = vld [vmem:[%s7295] sm:$0xf]
    %v7298 = vsel %vm5615, %v7282, 0
    %v7301 = vsel %vm5615, %v7283, 0
    %v7304 = vsel %vm5615, %v7284, 0
    %v7307 = vsel %vm5615, %v7285, 0
    %v7310 = vsel %vm5615, %v7286, 0
    %v7313 = vsel %vm5615, %v7287, 0
    %v7316 = vsel %vm5615, %v7288, 0
    %v7319 = vsel %vm5615, %v7289, 0
    %v7322 = vsel %vm5615, %v7290, 0
    %v7325 = vsel %vm5615, %v7291, 0
    %v7328 = vsel %vm5615, %v7292, 0
    %v7331 = vsel %vm5615, %v7293, 0
    %v7334 = vsel %vm5615, %v7294, 0
    %v7337 = vsel %vm5664, %v7296, 0
    %7339 = vmatpush.bf16.msra.mxu0 0
    %7340 = vmatpush.bf16.msra.mxu0 0
    %7341 = vmatpush.bf16.msra.mxu0 0
    %7342 = vmatpush.bf16.msra.mxu0 0
    %7343 = vmatpush.bf16.msra.mxu0 0
    %7344 = vmatpush.bf16.msra.mxu0 0
    %7345 = vmatpush.bf16.msra.mxu0 0
    %7346 = vmatpush.bf16.msra.mxu0 %v7337
    %7347 = vmatmul.bf16.gmra.mxu0 %v7298
    %v7348 = vpop.f32.mrf.mxu0
    %v7349 = vadd.f32 0.0, %v7348
    %v7350 = vpop.f32.mrf.mxu0
    %v7351 = vadd.f32 0.0, %v7350
    %7352 = vmatmul.bf16.gmra.mxu0 %v7301
    %v7353 = vpop.f32.mrf.mxu0
    %v7354 = vadd.f32 0.0, %v7353
    %v7355 = vpop.f32.mrf.mxu0
    %v7356 = vadd.f32 0.0, %v7355
    %7357 = vmatmul.bf16.gmra.mxu0 %v7304
    %v7358 = vpop.f32.mrf.mxu0
    %v7359 = vadd.f32 0.0, %v7358
    %v7360 = vpop.f32.mrf.mxu0
    %v7361 = vadd.f32 0.0, %v7360
    %7362 = vmatmul.bf16.gmra.mxu0 %v7307
    %v7363 = vpop.f32.mrf.mxu0
    %v7364 = vadd.f32 0.0, %v7363
    %v7365 = vpop.f32.mrf.mxu0
    %v7366 = vadd.f32 0.0, %v7365
    %7367 = vmatmul.bf16.gmra.mxu0 %v7310
    %v7368 = vpop.f32.mrf.mxu0
    %v7369 = vadd.f32 0.0, %v7368
    %v7370 = vpop.f32.mrf.mxu0
    %v7371 = vadd.f32 0.0, %v7370
    %7372 = vmatmul.bf16.gmra.mxu0 %v7313
    %v7373 = vpop.f32.mrf.mxu0
    %v7374 = vadd.f32 0.0, %v7373
    %v7375 = vpop.f32.mrf.mxu0
    %v7376 = vadd.f32 0.0, %v7375
    %7377 = vmatmul.bf16.gmra.mxu0 %v7316
    %v7378 = vpop.f32.mrf.mxu0
    %v7379 = vadd.f32 0.0, %v7378
    %v7380 = vpop.f32.mrf.mxu0
    %v7381 = vadd.f32 0.0, %v7380
    %7382 = vmatmul.bf16.gmra.mxu0 %v7319
    %v7383 = vpop.f32.mrf.mxu0
    %v7384 = vadd.f32 0.0, %v7383
    %v7385 = vpop.f32.mrf.mxu0
    %v7386 = vadd.f32 0.0, %v7385
    %7387 = vmatmul.bf16.gmra.mxu0 %v7322
    %v7388 = vpop.f32.mrf.mxu0
    %v7389 = vadd.f32 0.0, %v7388
    %v7390 = vpop.f32.mrf.mxu0
    %v7391 = vadd.f32 0.0, %v7390
    %7392 = vmatmul.bf16.gmra.mxu0 %v7325
    %v7393 = vpop.f32.mrf.mxu0
    %v7394 = vadd.f32 0.0, %v7393
    %v7395 = vpop.f32.mrf.mxu0
    %v7396 = vadd.f32 0.0, %v7395
    %7397 = vmatmul.bf16.gmra.mxu0 %v7328
    %v7398 = vpop.f32.mrf.mxu0
    %v7399 = vadd.f32 0.0, %v7398
    %v7400 = vpop.f32.mrf.mxu0
    %v7401 = vadd.f32 0.0, %v7400
    %7402 = vmatmul.bf16.gmra.mxu0 %v7331
    %v7403 = vpop.f32.mrf.mxu0
    %v7404 = vadd.f32 0.0, %v7403
    %v7405 = vpop.f32.mrf.mxu0
    %v7406 = vadd.f32 0.0, %v7405
    %7407 = vmatmul.bf16.gmra.mxu0 %v7334
    %v7408 = vpop.f32.mrf.mxu0
    %v7409 = vadd.f32 0.0, %v7408
    %v7410 = vpop.f32.mrf.mxu0
    %7411 = vdwg.mxu0
    %v7412 = vadd.f32 %v7232, %v7349
    %v7413 = vadd.f32 %v7233, %v7351
    %v7414 = vadd.f32 %v7234, %v7354
    %v7415 = vadd.f32 %v7235, %v7356
    %v7416 = vadd.f32 %v7236, %v7359
    %v7417 = vadd.f32 %v7237, %v7361
    %v7418 = vadd.f32 %v7238, %v7364
    %v7419 = vadd.f32 %v7239, %v7366
    %v7420 = vadd.f32 %v7240, %v7369
    %v7421 = vadd.f32 %v7241, %v7371
    %v7422 = vadd.f32 %v7242, %v7374
    %v7423 = vadd.f32 %v7243, %v7376
    %v7424 = vadd.f32 %v7244, %v7379
    %v7425 = vadd.f32 %v7245, %v7381
    %v7426 = vadd.f32 %v7246, %v7384
    %v7427 = vadd.f32 %v7247, %v7386
    %v7428 = vadd.f32 %v7248, %v7389
    %v7429 = vadd.f32 %v7249, %v7391
    %v7430 = vadd.f32 %v7250, %v7394
    %v7431 = vadd.f32 %v7251, %v7396
    %v7432 = vadd.f32 %v7252, %v7399
    %v7433 = vadd.f32 %v7253, %v7401
    %v7434 = vadd.f32 %v7254, %v7404
    %v7435 = vadd.f32 %v7255, %v7406
    %v7436 = vadd.f32 %v7256, %v7409
    %v7437 = vld [vmem:[#allocation2 + $0x2a] sm:$0xff]
    %v7438 = vld [vmem:[#allocation2 + $0x32] sm:$0xff]
    %v7439 = vld [vmem:[#allocation2 + $0x3a] sm:$0xff]
    %v7440 = vld [vmem:[#allocation2 + $0x42] sm:$0xff]
    %v7441 = vld [vmem:[#allocation2 + $0x4a] sm:$0xff]
    %v7442 = vld [vmem:[#allocation2 + $0x52] sm:$0xff]
    %v7443 = vld [vmem:[#allocation2 + $0x5a] sm:$0xff]
    %v7444 = vld [vmem:[#allocation2 + $0x62] sm:$0xff]
    %v7445 = vld [vmem:[#allocation2 + $0x6a] sm:$0xff]
    %v7446 = vld [vmem:[#allocation2 + $0x72] sm:$0xff]
    %v7447 = vld [vmem:[#allocation2 + $0x7a] sm:$0xff]
    %v7448 = vld [vmem:[#allocation2 + $0x82] sm:$0xff]
    %v7449 = vld [vmem:[#allocation2 + $0x8a] sm:$0xff]
    %v7450 = vld [vmem:[#allocation2 + $0x92] sm:$0xff]
    %v7451 = vld [vmem:[#allocation2 + $0x9a] sm:$0xff]
    %v7452 = vld [vmem:[#allocation2 + $0xa2] sm:$0xff]
    %v7453 = vld [vmem:[#allocation2 + $0xaa] sm:$0xff]
    %v7454 = vld [vmem:[#allocation2 + $0xb2] sm:$0xff]
    %v7455 = vld [vmem:[#allocation2 + $0xba] sm:$0xff]
    %v7456 = vld [vmem:[#allocation2 + $0xc2] sm:$0xff]
    %v7457 = vld [vmem:[#allocation2 + $0xca] sm:$0xff]
    %v7458 = vld [vmem:[#allocation2 + $0xd2] sm:$0xff]
    %v7459 = vld [vmem:[#allocation2 + $0xda] sm:$0xff]
    %v7460 = vld [vmem:[#allocation2 + $0xe2] sm:$0xff]
    %v7461 = vld [vmem:[#allocation2 + $0xea] sm:$0xff]
    %v7462 = vpack.c.bf16 %v7438, %v7437
    %v7463 = vpack.c.bf16 %v7440, %v7439
    %v7464 = vpack.c.bf16 %v7442, %v7441
    %v7465 = vpack.c.bf16 %v7444, %v7443
    %v7466 = vpack.c.bf16 %v7446, %v7445
    %v7467 = vpack.c.bf16 %v7448, %v7447
    %v7468 = vpack.c.bf16 %v7450, %v7449
    %v7469 = vpack.c.bf16 %v7452, %v7451
    %v7470 = vpack.c.bf16 %v7454, %v7453
    %v7471 = vpack.c.bf16 %v7456, %v7455
    %v7472 = vpack.c.bf16 %v7458, %v7457
    %v7473 = vpack.c.bf16 %v7460, %v7459
    %v7474 = vpack.c.bf16 %v7461, %v7461
    %s7475 = scalar_lea.vmem %s5, 28
    %v7476 = vld [vmem:[%s7475] sm:$0xf]
    %v7478 = vsel %vm5615, %v7462, 0
    %v7481 = vsel %vm5615, %v7463, 0
    %v7484 = vsel %vm5615, %v7464, 0
    %v7487 = vsel %vm5615, %v7465, 0
    %v7490 = vsel %vm5615, %v7466, 0
    %v7493 = vsel %vm5615, %v7467, 0
    %v7496 = vsel %vm5615, %v7468, 0
    %v7499 = vsel %vm5615, %v7469, 0
    %v7502 = vsel %vm5615, %v7470, 0
    %v7505 = vsel %vm5615, %v7471, 0
    %v7508 = vsel %vm5615, %v7472, 0
    %v7511 = vsel %vm5615, %v7473, 0
    %v7514 = vsel %vm5615, %v7474, 0
    %v7517 = vsel %vm5664, %v7476, 0
    %7519 = vmatpush.bf16.msra.mxu0 0
    %7520 = vmatpush.bf16.msra.mxu0 0
    %7521 = vmatpush.bf16.msra.mxu0 0
    %7522 = vmatpush.bf16.msra.mxu0 0
    %7523 = vmatpush.bf16.msra.mxu0 0
    %7524 = vmatpush.bf16.msra.mxu0 0
    %7525 = vmatpush.bf16.msra.mxu0 0
    %7526 = vmatpush.bf16.msra.mxu0 %v7517
    %7527 = vmatmul.bf16.gmra.mxu0 %v7478
    %v7528 = vpop.f32.mrf.mxu0
    %v7529 = vadd.f32 0.0, %v7528
    %v7530 = vpop.f32.mrf.mxu0
    %v7531 = vadd.f32 0.0, %v7530
    %7532 = vmatmul.bf16.gmra.mxu0 %v7481
    %v7533 = vpop.f32.mrf.mxu0
    %v7534 = vadd.f32 0.0, %v7533
    %v7535 = vpop.f32.mrf.mxu0
    %v7536 = vadd.f32 0.0, %v7535
    %7537 = vmatmul.bf16.gmra.mxu0 %v7484
    %v7538 = vpop.f32.mrf.mxu0
    %v7539 = vadd.f32 0.0, %v7538
    %v7540 = vpop.f32.mrf.mxu0
    %v7541 = vadd.f32 0.0, %v7540
    %7542 = vmatmul.bf16.gmra.mxu0 %v7487
    %v7543 = vpop.f32.mrf.mxu0
    %v7544 = vadd.f32 0.0, %v7543
    %v7545 = vpop.f32.mrf.mxu0
    %v7546 = vadd.f32 0.0, %v7545
    %7547 = vmatmul.bf16.gmra.mxu0 %v7490
    %v7548 = vpop.f32.mrf.mxu0
    %v7549 = vadd.f32 0.0, %v7548
    %v7550 = vpop.f32.mrf.mxu0
    %v7551 = vadd.f32 0.0, %v7550
    %7552 = vmatmul.bf16.gmra.mxu0 %v7493
    %v7553 = vpop.f32.mrf.mxu0
    %v7554 = vadd.f32 0.0, %v7553
    %v7555 = vpop.f32.mrf.mxu0
    %v7556 = vadd.f32 0.0, %v7555
    %7557 = vmatmul.bf16.gmra.mxu0 %v7496
    %v7558 = vpop.f32.mrf.mxu0
    %v7559 = vadd.f32 0.0, %v7558
    %v7560 = vpop.f32.mrf.mxu0
    %v7561 = vadd.f32 0.0, %v7560
    %7562 = vmatmul.bf16.gmra.mxu0 %v7499
    %v7563 = vpop.f32.mrf.mxu0
    %v7564 = vadd.f32 0.0, %v7563
    %v7565 = vpop.f32.mrf.mxu0
    %v7566 = vadd.f32 0.0, %v7565
    %7567 = vmatmul.bf16.gmra.mxu0 %v7502
    %v7568 = vpop.f32.mrf.mxu0
    %v7569 = vadd.f32 0.0, %v7568
    %v7570 = vpop.f32.mrf.mxu0
    %v7571 = vadd.f32 0.0, %v7570
    %7572 = vmatmul.bf16.gmra.mxu0 %v7505
    %v7573 = vpop.f32.mrf.mxu0
    %v7574 = vadd.f32 0.0, %v7573
    %v7575 = vpop.f32.mrf.mxu0
    %v7576 = vadd.f32 0.0, %v7575
    %7577 = vmatmul.bf16.gmra.mxu0 %v7508
    %v7578 = vpop.f32.mrf.mxu0
    %v7579 = vadd.f32 0.0, %v7578
    %v7580 = vpop.f32.mrf.mxu0
    %v7581 = vadd.f32 0.0, %v7580
    %7582 = vmatmul.bf16.gmra.mxu0 %v7511
    %v7583 = vpop.f32.mrf.mxu0
    %v7584 = vadd.f32 0.0, %v7583
    %v7585 = vpop.f32.mrf.mxu0
    %v7586 = vadd.f32 0.0, %v7585
    %7587 = vmatmul.bf16.gmra.mxu0 %v7514
    %v7588 = vpop.f32.mrf.mxu0
    %v7589 = vadd.f32 0.0, %v7588
    %v7590 = vpop.f32.mrf.mxu0
    %7591 = vdwg.mxu0
    %v7592 = vadd.f32 %v7412, %v7529
    %v7593 = vadd.f32 %v7413, %v7531
    %v7594 = vadd.f32 %v7414, %v7534
    %v7595 = vadd.f32 %v7415, %v7536
    %v7596 = vadd.f32 %v7416, %v7539
    %v7597 = vadd.f32 %v7417, %v7541
    %v7598 = vadd.f32 %v7418, %v7544
    %v7599 = vadd.f32 %v7419, %v7546
    %v7600 = vadd.f32 %v7420, %v7549
    %v7601 = vadd.f32 %v7421, %v7551
    %v7602 = vadd.f32 %v7422, %v7554
    %v7603 = vadd.f32 %v7423, %v7556
    %v7604 = vadd.f32 %v7424, %v7559
    %v7605 = vadd.f32 %v7425, %v7561
    %v7606 = vadd.f32 %v7426, %v7564
    %v7607 = vadd.f32 %v7427, %v7566
    %v7608 = vadd.f32 %v7428, %v7569
    %v7609 = vadd.f32 %v7429, %v7571
    %v7610 = vadd.f32 %v7430, %v7574
    %v7611 = vadd.f32 %v7431, %v7576
    %v7612 = vadd.f32 %v7432, %v7579
    %v7613 = vadd.f32 %v7433, %v7581
    %v7614 = vadd.f32 %v7434, %v7584
    %v7615 = vadd.f32 %v7435, %v7586
    %v7616 = vadd.f32 %v7436, %v7589
    %v7617 = vld [vmem:[#allocation2 + $0x2c] sm:$0xff]
    %v7618 = vld [vmem:[#allocation2 + $0x34] sm:$0xff]
    %v7619 = vld [vmem:[#allocation2 + $0x3c] sm:$0xff]
    %v7620 = vld [vmem:[#allocation2 + $0x44] sm:$0xff]
    %v7621 = vld [vmem:[#allocation2 + $0x4c] sm:$0xff]
    %v7622 = vld [vmem:[#allocation2 + $0x54] sm:$0xff]
    %v7623 = vld [vmem:[#allocation2 + $0x5c] sm:$0xff]
    %v7624 = vld [vmem:[#allocation2 + $0x64] sm:$0xff]
    %v7625 = vld [vmem:[#allocation2 + $0x6c] sm:$0xff]
    %v7626 = vld [vmem:[#allocation2 + $0x74] sm:$0xff]
    %v7627 = vld [vmem:[#allocation2 + $0x7c] sm:$0xff]
    %v7628 = vld [vmem:[#allocation2 + $0x84] sm:$0xff]
    %v7629 = vld [vmem:[#allocation2 + $0x8c] sm:$0xff]
    %v7630 = vld [vmem:[#allocation2 + $0x94] sm:$0xff]
    %v7631 = vld [vmem:[#allocation2 + $0x9c] sm:$0xff]
    %v7632 = vld [vmem:[#allocation2 + $0xa4] sm:$0xff]
    %v7633 = vld [vmem:[#allocation2 + $0xac] sm:$0xff]
    %v7634 = vld [vmem:[#allocation2 + $0xb4] sm:$0xff]
    %v7635 = vld [vmem:[#allocation2 + $0xbc] sm:$0xff]
    %v7636 = vld [vmem:[#allocation2 + $0xc4] sm:$0xff]
    %v7637 = vld [vmem:[#allocation2 + $0xcc] sm:$0xff]
    %v7638 = vld [vmem:[#allocation2 + $0xd4] sm:$0xff]
    %v7639 = vld [vmem:[#allocation2 + $0xdc] sm:$0xff]
    %v7640 = vld [vmem:[#allocation2 + $0xe4] sm:$0xff]
    %v7641 = vld [vmem:[#allocation2 + $0xec] sm:$0xff]
    %v7642 = vpack.c.bf16 %v7618, %v7617
    %v7643 = vpack.c.bf16 %v7620, %v7619
    %v7644 = vpack.c.bf16 %v7622, %v7621
    %v7645 = vpack.c.bf16 %v7624, %v7623
    %v7646 = vpack.c.bf16 %v7626, %v7625
    %v7647 = vpack.c.bf16 %v7628, %v7627
    %v7648 = vpack.c.bf16 %v7630, %v7629
    %v7649 = vpack.c.bf16 %v7632, %v7631
    %v7650 = vpack.c.bf16 %v7634, %v7633
    %v7651 = vpack.c.bf16 %v7636, %v7635
    %v7652 = vpack.c.bf16 %v7638, %v7637
    %v7653 = vpack.c.bf16 %v7640, %v7639
    %v7654 = vpack.c.bf16 %v7641, %v7641
    %s7655 = scalar_lea.vmem %s5, 32
    %v7656 = vld [vmem:[%s7655] sm:$0xf]
    %v7658 = vsel %vm5615, %v7642, 0
    %v7661 = vsel %vm5615, %v7643, 0
    %v7664 = vsel %vm5615, %v7644, 0
    %v7667 = vsel %vm5615, %v7645, 0
    %v7670 = vsel %vm5615, %v7646, 0
    %v7673 = vsel %vm5615, %v7647, 0
    %v7676 = vsel %vm5615, %v7648, 0
    %v7679 = vsel %vm5615, %v7649, 0
    %v7682 = vsel %vm5615, %v7650, 0
    %v7685 = vsel %vm5615, %v7651, 0
    %v7688 = vsel %vm5615, %v7652, 0
    %v7691 = vsel %vm5615, %v7653, 0
    %v7694 = vsel %vm5615, %v7654, 0
    %v7697 = vsel %vm5664, %v7656, 0
    %7699 = vmatpush.bf16.msra.mxu0 0
    %7700 = vmatpush.bf16.msra.mxu0 0
    %7701 = vmatpush.bf16.msra.mxu0 0
    %7702 = vmatpush.bf16.msra.mxu0 0
    %7703 = vmatpush.bf16.msra.mxu0 0
    %7704 = vmatpush.bf16.msra.mxu0 0
    %7705 = vmatpush.bf16.msra.mxu0 0
    %7706 = vmatpush.bf16.msra.mxu0 %v7697
    %7707 = vmatmul.bf16.gmra.mxu0 %v7658
    %v7708 = vpop.f32.mrf.mxu0
    %v7709 = vadd.f32 0.0, %v7708
    %v7710 = vpop.f32.mrf.mxu0
    %v7711 = vadd.f32 0.0, %v7710
    %7712 = vmatmul.bf16.gmra.mxu0 %v7661
    %v7713 = vpop.f32.mrf.mxu0
    %v7714 = vadd.f32 0.0, %v7713
    %v7715 = vpop.f32.mrf.mxu0
    %v7716 = vadd.f32 0.0, %v7715
    %7717 = vmatmul.bf16.gmra.mxu0 %v7664
    %v7718 = vpop.f32.mrf.mxu0
    %v7719 = vadd.f32 0.0, %v7718
    %v7720 = vpop.f32.mrf.mxu0
    %v7721 = vadd.f32 0.0, %v7720
    %7722 = vmatmul.bf16.gmra.mxu0 %v7667
    %v7723 = vpop.f32.mrf.mxu0
    %v7724 = vadd.f32 0.0, %v7723
    %v7725 = vpop.f32.mrf.mxu0
    %v7726 = vadd.f32 0.0, %v7725
    %7727 = vmatmul.bf16.gmra.mxu0 %v7670
    %v7728 = vpop.f32.mrf.mxu0
    %v7729 = vadd.f32 0.0, %v7728
    %v7730 = vpop.f32.mrf.mxu0
    %v7731 = vadd.f32 0.0, %v7730
    %7732 = vmatmul.bf16.gmra.mxu0 %v7673
    %v7733 = vpop.f32.mrf.mxu0
    %v7734 = vadd.f32 0.0, %v7733
    %v7735 = vpop.f32.mrf.mxu0
    %v7736 = vadd.f32 0.0, %v7735
    %7737 = vmatmul.bf16.gmra.mxu0 %v7676
    %v7738 = vpop.f32.mrf.mxu0
    %v7739 = vadd.f32 0.0, %v7738
    %v7740 = vpop.f32.mrf.mxu0
    %v7741 = vadd.f32 0.0, %v7740
    %7742 = vmatmul.bf16.gmra.mxu0 %v7679
    %v7743 = vpop.f32.mrf.mxu0
    %v7744 = vadd.f32 0.0, %v7743
    %v7745 = vpop.f32.mrf.mxu0
    %v7746 = vadd.f32 0.0, %v7745
    %7747 = vmatmul.bf16.gmra.mxu0 %v7682
    %v7748 = vpop.f32.mrf.mxu0
    %v7749 = vadd.f32 0.0, %v7748
    %v7750 = vpop.f32.mrf.mxu0
    %v7751 = vadd.f32 0.0, %v7750
    %7752 = vmatmul.bf16.gmra.mxu0 %v7685
    %v7753 = vpop.f32.mrf.mxu0
    %v7754 = vadd.f32 0.0, %v7753
    %v7755 = vpop.f32.mrf.mxu0
    %v7756 = vadd.f32 0.0, %v7755
    %7757 = vmatmul.bf16.gmra.mxu0 %v7688
    %v7758 = vpop.f32.mrf.mxu0
    %v7759 = vadd.f32 0.0, %v7758
    %v7760 = vpop.f32.mrf.mxu0
    %v7761 = vadd.f32 0.0, %v7760
    %7762 = vmatmul.bf16.gmra.mxu0 %v7691
    %v7763 = vpop.f32.mrf.mxu0
    %v7764 = vadd.f32 0.0, %v7763
    %v7765 = vpop.f32.mrf.mxu0
    %v7766 = vadd.f32 0.0, %v7765
    %7767 = vmatmul.bf16.gmra.mxu0 %v7694
    %v7768 = vpop.f32.mrf.mxu0
    %v7769 = vadd.f32 0.0, %v7768
    %v7770 = vpop.f32.mrf.mxu0
    %7771 = vdwg.mxu0
    %v7772 = vadd.f32 %v7592, %v7709
    %v7773 = vadd.f32 %v7593, %v7711
    %v7774 = vadd.f32 %v7594, %v7714
    %v7775 = vadd.f32 %v7595, %v7716
    %v7776 = vadd.f32 %v7596, %v7719
    %v7777 = vadd.f32 %v7597, %v7721
    %v7778 = vadd.f32 %v7598, %v7724
    %v7779 = vadd.f32 %v7599, %v7726
    %v7780 = vadd.f32 %v7600, %v7729
    %v7781 = vadd.f32 %v7601, %v7731
    %v7782 = vadd.f32 %v7602, %v7734
    %v7783 = vadd.f32 %v7603, %v7736
    %v7784 = vadd.f32 %v7604, %v7739
    %v7785 = vadd.f32 %v7605, %v7741
    %v7786 = vadd.f32 %v7606, %v7744
    %v7787 = vadd.f32 %v7607, %v7746
    %v7788 = vadd.f32 %v7608, %v7749
    %v7789 = vadd.f32 %v7609, %v7751
    %v7790 = vadd.f32 %v7610, %v7754
    %v7791 = vadd.f32 %v7611, %v7756
    %v7792 = vadd.f32 %v7612, %v7759
    %v7793 = vadd.f32 %v7613, %v7761
    %v7794 = vadd.f32 %v7614, %v7764
    %v7795 = vadd.f32 %v7615, %v7766
    %v7796 = vadd.f32 %v7616, %v7769
    %v7797 = vld [vmem:[%s6] sm:$0x1]
    %v7799 = vperm.slane %v7797, 0
    %v7801 = vmul.f32 %v7772, %v7799
    %v7802 = vmul.f32 %v7773, %v7799
    %v7803 = vmul.f32 %v7774, %v7799
    %v7804 = vmul.f32 %v7775, %v7799
    %v7805 = vmul.f32 %v7776, %v7799
    %v7806 = vmul.f32 %v7777, %v7799
    %v7807 = vmul.f32 %v7778, %v7799
    %v7808 = vmul.f32 %v7779, %v7799
    %v7809 = vmul.f32 %v7780, %v7799
    %v7810 = vmul.f32 %v7781, %v7799
    %v7811 = vmul.f32 %v7782, %v7799
    %v7812 = vmul.f32 %v7783, %v7799
    %v7813 = vmul.f32 %v7784, %v7799
    %v7814 = vmul.f32 %v7785, %v7799
    %v7815 = vmul.f32 %v7786, %v7799
    %v7816 = vmul.f32 %v7787, %v7799
    %v7817 = vmul.f32 %v7788, %v7799
    %v7818 = vmul.f32 %v7789, %v7799
    %v7819 = vmul.f32 %v7790, %v7799
    %v7820 = vmul.f32 %v7791, %v7799
    %v7821 = vmul.f32 %v7792, %v7799
    %v7822 = vmul.f32 %v7793, %v7799
    %v7823 = vmul.f32 %v7794, %v7799
    %v7824 = vmul.f32 %v7795, %v7799
    %v7825 = vmul.f32 %v7796, %v7799
    %v7826 = vld [vmem:[%s7] sm:$0x1]
    %v7828 = vperm.slane %v7826, 0
    %v7830 = vadd.f32 %v7801, %v7828
    %v7831 = vadd.f32 %v7802, %v7828
    %v7832 = vadd.f32 %v7803, %v7828
    %v7833 = vadd.f32 %v7804, %v7828
    %v7834 = vadd.f32 %v7805, %v7828
    %v7835 = vadd.f32 %v7806, %v7828
    %v7836 = vadd.f32 %v7807, %v7828
    %v7837 = vadd.f32 %v7808, %v7828
    %v7838 = vadd.f32 %v7809, %v7828
    %v7839 = vadd.f32 %v7810, %v7828
    %v7840 = vadd.f32 %v7811, %v7828
    %v7841 = vadd.f32 %v7812, %v7828
    %v7842 = vadd.f32 %v7813, %v7828
    %v7843 = vadd.f32 %v7814, %v7828
    %v7844 = vadd.f32 %v7815, %v7828
    %v7845 = vadd.f32 %v7816, %v7828
    %v7846 = vadd.f32 %v7817, %v7828
    %v7847 = vadd.f32 %v7818, %v7828
    %v7848 = vadd.f32 %v7819, %v7828
    %v7849 = vadd.f32 %v7820, %v7828
    %v7850 = vadd.f32 %v7821, %v7828
    %v7851 = vadd.f32 %v7822, %v7828
    %v7852 = vadd.f32 %v7823, %v7828
    %v7853 = vadd.f32 %v7824, %v7828
    %v7854 = vadd.f32 %v7825, %v7828
    %v7855 = vmax.f32 %v7830, 0.0
    %v7856 = vmax.f32 %v7831, 0.0
    %v7857 = vmax.f32 %v7832, 0.0
    %v7858 = vmax.f32 %v7833, 0.0
    %v7859 = vmax.f32 %v7834, 0.0
    %v7860 = vmax.f32 %v7835, 0.0
    %v7861 = vmax.f32 %v7836, 0.0
    %v7862 = vmax.f32 %v7837, 0.0
    %v7863 = vmax.f32 %v7838, 0.0
    %v7864 = vmax.f32 %v7839, 0.0
    %v7865 = vmax.f32 %v7840, 0.0
    %v7866 = vmax.f32 %v7841, 0.0
    %v7867 = vmax.f32 %v7842, 0.0
    %v7868 = vmax.f32 %v7843, 0.0
    %v7869 = vmax.f32 %v7844, 0.0
    %v7870 = vmax.f32 %v7845, 0.0
    %v7871 = vmax.f32 %v7846, 0.0
    %v7872 = vmax.f32 %v7847, 0.0
    %v7873 = vmax.f32 %v7848, 0.0
    %v7874 = vmax.f32 %v7849, 0.0
    %v7875 = vmax.f32 %v7850, 0.0
    %v7876 = vmax.f32 %v7851, 0.0
    %v7877 = vmax.f32 %v7852, 0.0
    %v7878 = vmax.f32 %v7853, 0.0
    %v7879 = vmax.f32 %v7854, 0.0
    %v7880 = vld [vmem:[%s8] sm:$0xff]
    %v7881 = vld [vmem:[%s8 + $0x8] sm:$0xff]
    %v7882 = vld [vmem:[%s8 + $0x10] sm:$0xff]
    %v7883 = vld [vmem:[%s8 + $0x18] sm:$0xff]
    %v7884 = vld [vmem:[%s8 + $0x20] sm:$0xff]
    %v7885 = vld [vmem:[%s8 + $0x28] sm:$0xff]
    %v7886 = vld [vmem:[%s8 + $0x30] sm:$0xff]
    %v7887 = vld [vmem:[%s8 + $0x38] sm:$0xff]
    %v7888 = vpack.c.bf16 %v7856, %v7855
    %v7889 = vpack.c.bf16 %v7858, %v7857
    %v7890 = vpack.c.bf16 %v7860, %v7859
    %v7891 = vpack.c.bf16 %v7862, %v7861
    %v7892 = vpack.c.bf16 %v7864, %v7863
    %v7893 = vpack.c.bf16 %v7866, %v7865
    %v7894 = vpack.c.bf16 %v7868, %v7867
    %v7895 = vpack.c.bf16 %v7870, %v7869
    %v7896 = vpack.c.bf16 %v7872, %v7871
    %v7897 = vpack.c.bf16 %v7874, %v7873
    %v7898 = vpack.c.bf16 %v7876, %v7875
    %v7899 = vpack.c.bf16 %v7878, %v7877
    %v7900 = vpack.c.bf16 %v7879, %v7879
    %v7909 = vunpack.c.l.b16 %v7880
    %v7910 = vunpack.c.h.b16 %v7880
    %v7911 = vunpack.c.l.b16 %v7881
    %v7912 = vunpack.c.h.b16 %v7881
    %v7913 = vunpack.c.l.b16 %v7882
    %v7914 = vunpack.c.h.b16 %v7882
    %v7915 = vunpack.c.l.b16 %v7883
    %v7916 = vunpack.c.h.b16 %v7883
    %v7917 = vunpack.c.l.b16 %v7884
    %v7918 = vunpack.c.h.b16 %v7884
    %v7919 = vunpack.c.l.b16 %v7885
    %v7920 = vunpack.c.h.b16 %v7885
    %v7921 = vunpack.c.l.b16 %v7886
    %v7922 = vunpack.c.h.b16 %v7886
    %v7923 = vunpack.c.l.b16 %v7887
    %v7924 = vunpack.c.h.b16 %v7887
    %v7925 = vpack.c.b16 %v7911, %v7909
    %v7926 = vpack.c.b16 %v7912, %v7910
    %v7927 = vpack.c.b16 %v7915, %v7913
    %v7928 = vpack.c.b16 %v7916, %v7914
    %v7929 = vpack.c.b16 %v7919, %v7917
    %v7930 = vpack.c.b16 %v7920, %v7918
    %v7931 = vpack.c.b16 %v7923, %v7921
    %v7932 = vpack.c.b16 %v7924, %v7922
    %vm7937 = vcmask 588800
    %v7939 = vsel %vm7937, %v7926, 0
    %v7942 = vsel %vm7937, %v7928, 0
    %v7945 = vsel %vm7937, %v7930, 0
    %v7948 = vsel %vm7937, %v7932, 0
    %v7951 = vsel %vm5664, %v7900, 0
    %7953 = vmatpush.bf16.msra.mxu0 %v7895
    %7954 = vmatpush.bf16.msra.mxu0 %v7894
    %7955 = vmatpush.bf16.msra.mxu0 %v7893
    %7956 = vmatpush.bf16.msra.mxu0 %v7892
    %7957 = vmatpush.bf16.msra.mxu0 %v7891
    %7958 = vmatpush.bf16.msra.mxu0 %v7890
    %7959 = vmatpush.bf16.msra.mxu0 %v7889
    %7960 = vmatpush.bf16.msra.mxu0 %v7888
    %7961 = vmatmul.bf16.gmra.mxu0 %v7925
    %v7962 = vpop.f32.mrf.mxu0
    %v7963 = vadd.f32 0.0, %v7962
    %v7964 = vpop.f32.mrf.mxu0
    %v7965 = vadd.f32 0.0, %v7964
    %7966 = vmatmul.bf16.gmra.mxu0 %v7927
    %v7967 = vpop.f32.mrf.mxu0
    %v7968 = vadd.f32 0.0, %v7967
    %v7969 = vpop.f32.mrf.mxu0
    %v7970 = vadd.f32 0.0, %v7969
    %7971 = vmatmul.bf16.gmra.mxu0 %v7929
    %v7972 = vpop.f32.mrf.mxu0
    %v7973 = vadd.f32 0.0, %v7972
    %v7974 = vpop.f32.mrf.mxu0
    %v7975 = vadd.f32 0.0, %v7974
    %7976 = vmatmul.bf16.gmra.mxu0 %v7931
    %v7977 = vpop.f32.mrf.mxu0
    %v7978 = vadd.f32 0.0, %v7977
    %v7979 = vpop.f32.mrf.mxu0
    %v7980 = vadd.f32 0.0, %v7979
    %7981 = vdwg.mxu0
    %7982 = vmatpush.bf16.msra.mxu0 0
    %7983 = vmatpush.bf16.msra.mxu0 0
    %7984 = vmatpush.bf16.msra.mxu0 0
    %7985 = vmatpush.bf16.msra.mxu0 %v7951
    %7986 = vmatpush.bf16.msra.mxu0 %v7899
    %7987 = vmatpush.bf16.msra.mxu0 %v7898
    %7988 = vmatpush.bf16.msra.mxu0 %v7897
    %7989 = vmatpush.bf16.msra.mxu0 %v7896
    %7990 = vmatmul.bf16.gmra.mxu0 %v7939
    %v7991 = vpop.f32.mrf.mxu0
    %v7992 = vadd.f32 %v7963, %v7991
    %v7993 = vpop.f32.mrf.mxu0
    %v7994 = vadd.f32 %v7965, %v7993
    %7995 = vmatmul.bf16.gmra.mxu0 %v7942
    %v7996 = vpop.f32.mrf.mxu0
    %v7997 = vadd.f32 %v7968, %v7996
    %v7998 = vpop.f32.mrf.mxu0
    %v7999 = vadd.f32 %v7970, %v7998
    %8000 = vmatmul.bf16.gmra.mxu0 %v7945
    %v8001 = vpop.f32.mrf.mxu0
    %v8002 = vadd.f32 %v7973, %v8001
    %v8003 = vpop.f32.mrf.mxu0
    %v8004 = vadd.f32 %v7975, %v8003
    %8005 = vmatmul.bf16.gmra.mxu0 %v7948
    %v8006 = vpop.f32.mrf.mxu0
    %v8007 = vadd.f32 %v7978, %v8006
    %v8008 = vpop.f32.mrf.mxu0
    %v8009 = vadd.f32 %v7980, %v8008
    %8010 = vdwg.mxu0
    %v8011 = vpack.c.bf16 %v7994, %v7992
    %v8012 = vpack.c.bf16 %v7999, %v7997
    %v8013 = vpack.c.bf16 %v8004, %v8002
    %v8014 = vpack.c.bf16 %v8009, %v8007
    %v8015 = vld [vmem:[%s9] sm:$0xf]
    %v8016 = vld [vmem:[%s9 + $0x4] sm:$0xf]
    %v8017 = vld [vmem:[%s10] sm:$0x1]
    %v8019 = vperm.slane %v8017, 0
    %v8023 = vunpack.c.l.b16 %v8015
    %v8024 = vunpack.c.l.b16 %v8016
    %v8025 = vpack.c.b16 %v8024, %v8023
    %vm8027 = vcmask 130048
    %v8029 = vsel %vm8027, %v8011, 0
    %v8032 = vsel %vm8027, %v8012, 0
    %v8035 = vsel %vm8027, %v8013, 0
    %v8038 = vsel %vm8027, %v8014, 0
    %8040 = vmatpush.bf16.msra.mxu0 0
    %8041 = vmatpush.bf16.msra.mxu0 0
    %8042 = vmatpush.bf16.msra.mxu0 0
    %8043 = vmatpush.bf16.msra.mxu0 0
    %8044 = vmatpush.bf16.msra.mxu0 0
    %8045 = vmatpush.bf16.msra.mxu0 0
    %8046 = vmatpush.bf16.msra.mxu0 0
    %8047 = vmatpush.bf16.msra.mxu0 %v8025
    %8048 = vmatmul.bf16.gmra.mxu0 %v8029
    %v8049 = vpop.f32.mrf.mxu0
    %v8050 = vadd.f32 %v8019, %v8049
    %v8051 = vpop.f32.mrf.mxu0
    %v8052 = vadd.f32 %v8019, %v8051
    %8053 = vmatmul.bf16.gmra.mxu0 %v8032
    %v8054 = vpop.f32.mrf.mxu0
    %v8055 = vadd.f32 %v8019, %v8054
    %v8056 = vpop.f32.mrf.mxu0
    %v8057 = vadd.f32 %v8019, %v8056
    %8058 = vmatmul.bf16.gmra.mxu0 %v8035
    %v8059 = vpop.f32.mrf.mxu0
    %v8060 = vadd.f32 %v8019, %v8059
    %v8061 = vpop.f32.mrf.mxu0
    %v8062 = vadd.f32 %v8019, %v8061
    %8063 = vmatmul.bf16.gmra.mxu0 %v8038
    %v8064 = vpop.f32.mrf.mxu0
    %v8065 = vadd.f32 %v8019, %v8064
    %v8066 = vpop.f32.mrf.mxu0
    %v8067 = vadd.f32 %v8019, %v8066
    %8068 = vdwg.mxu0
    %vm8069 = vcmask 261120
    %8070 = vst.msk [vmem:[#allocation3] sm:$0xff] %vm8069, %v8050
    %8071 = vst.msk [vmem:[#allocation3 + $0x8] sm:$0xff] %vm8069, %v8052
    %8072 = vst.msk [vmem:[#allocation3 + $0x10] sm:$0xff] %vm8069, %v8055
    %8073 = vst.msk [vmem:[#allocation3 + $0x18] sm:$0xff] %vm8069, %v8057
    %8074 = vst.msk [vmem:[#allocation3 + $0x20] sm:$0xff] %vm8069, %v8060
    %8075 = vst.msk [vmem:[#allocation3 + $0x28] sm:$0xff] %vm8069, %v8062
    %8076 = vst.msk [vmem:[#allocation3 + $0x30] sm:$0xff] %vm8069, %v8065
    %8077 = vst.msk [vmem:[#allocation3 + $0x38] sm:$0xff] %vm8069, %v8067
    // Predicated region
    $region46: #{cnn_forward.1} parent=1 // pred_check
      _
    $region47: #{cnn_forward.1} parent=1 // pred_check_branch
      %8079 = sbr.rel (0) target = $region49
    $region48: #{cnn_forward.1} parent=1 // pred_region
      %8081 = vsyncadd [#allocation4], 0
      %s8082 = sshll.u32 [#allocation3], 4
      %s8083 = int_to_ptr.vmem [resolvable:$true] %s8082
      %s8084 = sshll.u32 %s11, 4
      %s8085 = int_to_ptr.hbm [resolvable:$true] %s8084
      %8090 = dma.vmem_to_hbm [thread:$0]  %s8083, 1024, %s8085, [#allocation4], 128, 128, 8
    $region49: #{cnn_forward.1} parent=1 // pred_fallthru
      _
    // Predicated region
    $region50: #{cnn_forward.1} parent=1 // pred_check
      _
    $region51: #{cnn_forward.1} parent=1 // pred_check_branch
      %8092 = sbr.rel (0) target = $region53
    $region52: #{cnn_forward.1} parent=1 // pred_region
      %8094 = dma.done [#allocation4], 1024
    $region53: #{cnn_forward.1} parent=1 // pred_fallthru
      _
    %8095 = vsyncpa [#allocation4], 1

</llo_original>
